<compile_context>
chip_gen: v7x
topology: tpu7x:2x2x1
jax: 0.10.0
libtpu: 0.0.40
codegen_flags: <defaults>
</compile_context>

<pallas_src>
import math

import jax
import jax.numpy as jnp
from jax.experimental import pallas as pl
from jax.experimental.pallas import tpu as pltpu

# ----------------------------- config ---------------------------------------
B = 2           # batch
T = 8           # sequence length
IN_DIM = 16     # input feature dim (idim)
D = 32          # attention_dim
HEADS = 4
DK = D // HEADS
MLP = 64        # linear_units / mlp_dim
DEPTH = 2       # num blocks
K_CONV = 7      # cnn_module_kernel (odd)
PAD = (K_CONV - 1) // 2
OUT_DIM = 16    # last_linear out dim
LN_EPS = 1e-12  # espnet LayerNorm eps
EMBED_LN_EPS = 1e-5
BN_EPS = 1e-5


# --------------------------- fused Pallas kernel -----------------------------
def _layer_norm(x, g, b, eps):
    mu = jnp.mean(x, axis=-1, keepdims=True)
    var = jnp.mean(jnp.square(x - mu), axis=-1, keepdims=True)
    return (x - mu) * jax.lax.rsqrt(var + eps) * g + b


def _conformer_kernel(
    x_ref, mask_ref,
    embed_w_ref, embed_b_ref, embed_ln_ref, after_ln_ref, last_w_ref, last_b_ref,
    seg_ref,
    ln_g_ref, ln_b_ref,
    ffm_w1_ref, ffm_b1_ref, ffm_w2_ref, ffm_b2_ref,
    qkv_w_ref, qkv_b_ref, bias_u_ref, bias_v_ref, p2_ref,
    wo_ref, bo_ref,
    pw1a_w_ref, pw1a_b_ref, pw1b_w_ref, pw1b_b_ref,
    dw_w_ref, bn_s_ref, bn_t_ref, pw2_w_ref, pw2_b_ref,
    ff_w1_ref, ff_b1_ref, ff_w2_ref, ff_b2_ref,
    o_ref):
    f32 = jnp.float32
    neg = jnp.finfo(f32).min
    scale = 1.0 / math.sqrt(DK)

    keep = mask_ref[0] > 0.5                              # (1, T) key mask

    # ---- input layer 'linear': Linear -> LayerNorm -> Dropout(id) -> *sqrt(D)
    x_in = x_ref[0]                                       # (T, IN_DIM)
    h = jnp.dot(x_in, embed_w_ref[...], preferred_element_type=f32) + embed_b_ref[...]
    eln = embed_ln_ref[...]
    x2 = _layer_norm(h, eln[0:1, :], eln[1:2, :], EMBED_LN_EPS) * math.sqrt(D)

    seg = seg_ref[...]                                    # (T*D, HEADS*T) const

    for l in range(DEPTH):                                # static unroll
        G = ln_g_ref[l]                                   # (5, D)
        Bb = ln_b_ref[l]                                  # (5, D)

        # -------- macaron feed-forward (0.5x) --------
        xn = _layer_norm(x2, G[0:1, :], Bb[0:1, :], LN_EPS)
        hh = jnp.dot(xn, ffm_w1_ref[l], preferred_element_type=f32) + ffm_b1_ref[l]
        hh = hh * jax.nn.sigmoid(hh)                      # Swish
        x2 = x2 + 0.5 * (jnp.dot(hh, ffm_w2_ref[l], preferred_element_type=f32)
                         + ffm_b2_ref[l])

        # -------- rel-pos multi-head self-attention --------
        xn = _layer_norm(x2, G[1:2, :], Bb[1:2, :], LN_EPS)
        qkv = jnp.dot(xn, qkv_w_ref[l], preferred_element_type=f32) + qkv_b_ref[l]
        q = qkv[:, 0:D]
        k = qkv[:, D:2 * D]
        v = qkv[:, 2 * D:3 * D]
        q_u = q + bias_u_ref[l]                           # (T, D)
        q_v = q + bias_v_ref[l]                           # (T, D)

        # matrix_bd for all heads at once; rel_shift folded into p2 outside.
        # p2[i, j*D + c] = (pos @ wp)[T-1-i+j, c];  seg segment-sums lanes of
        # each head back into an (T, HEADS*T) score slab.
        q_rep = jnp.concatenate([q_v] * T, axis=1)        # (T, T*D)
        bd_all = jnp.dot(q_rep * p2_ref[l], seg,
                         preferred_element_type=f32)      # (T, HEADS*T)

        heads = []
        for hd in range(HEADS):
            sl = slice(hd * DK, (hd + 1) * DK)
            ac = jax.lax.dot_general(q_u[:, sl], k[:, sl],
                                     (((1,), (1,)), ((), ())),
                                     preferred_element_type=f32)      # (T, T)
            scores = (ac + bd_all[:, hd * T:(hd + 1) * T]) * scale
            scores = jnp.where(keep, scores, neg)
            smax = jnp.max(scores, axis=-1, keepdims=True)
            e = jnp.exp(scores - smax)
            denom = jnp.sum(e, axis=-1, keepdims=True)
            attn = e * pl.reciprocal(denom, approx=True)
            attn = jnp.where(keep, attn, 0.0)             # masked_fill(mask, 0)
            heads.append(jnp.dot(attn, v[:, sl], preferred_element_type=f32))
        att = jnp.concatenate(heads, axis=1)              # (T, D)
        x2 = x2 + jnp.dot(att, wo_ref[l], preferred_element_type=f32) + bo_ref[l]

        # -------- convolution module --------
        xn = _layer_norm(x2, G[2:3, :], Bb[2:3, :], LN_EPS)
        a = jnp.dot(xn, pw1a_w_ref[l], preferred_element_type=f32) + pw1a_b_ref[l]
        g = jnp.dot(xn, pw1b_w_ref[l], preferred_element_type=f32) + pw1b_b_ref[l]
        hc = a * jax.nn.sigmoid(g)                        # GLU
        zpad = jnp.zeros((PAD, D), f32)
        hp = jnp.concatenate([zpad, hc, zpad], axis=0)    # (T + K - 1, D)
        dw = dw_w_ref[l]                                  # (K, D)
        acc = jnp.zeros((T, D), f32)
        for kk in range(K_CONV):                          # static unrolled taps
            acc = acc + hp[kk:kk + T, :] * dw[kk:kk + 1, :]
        y = acc * bn_s_ref[l] + bn_t_ref[l]               # eval BatchNorm folded
        y = y * jax.nn.sigmoid(y)                         # Swish
        x2 = x2 + jnp.dot(y, pw2_w_ref[l], preferred_element_type=f32) + pw2_b_ref[l]

        # -------- feed-forward (0.5x) --------
        xn = _layer_norm(x2, G[3:4, :], Bb[3:4, :], LN_EPS)
        hh = jnp.dot(xn, ff_w1_ref[l], preferred_element_type=f32) + ff_b1_ref[l]
        hh = hh * jax.nn.sigmoid(hh)
        x2 = x2 + 0.5 * (jnp.dot(hh, ff_w2_ref[l], preferred_element_type=f32)
                         + ff_b2_ref[l])

        # -------- per-layer final LayerNorm (present with conv module) --------
        x2 = _layer_norm(x2, G[4:5, :], Bb[4:5, :], LN_EPS)

    # ---- normalize_before -> after_norm, then last_linear -------------------
    aln = after_ln_ref[...]
    x2 = _layer_norm(x2, aln[0:1, :], aln[1:2, :], LN_EPS)
    # TODO(synk): pool=False branch only; the boolean-mask mean-pool path is not exercised.
    o_ref[0] = jnp.dot(x2, last_w_ref[...], preferred_element_type=f32) + last_b_ref[...]


# --------------------------- plain-JAX parameter prep ------------------------
def rel_pos_emb(seq_len, d_model):
    """ESPnet 'latest' RelPositionalEncoding table, shape (2T-1, D)."""
    pos = jnp.arange(seq_len, dtype=jnp.float32)[:, None]
    div = jnp.exp(jnp.arange(0, d_model, 2, dtype=jnp.float32) *
                  -(math.log(10000.0) / d_model))
    pe_pos = jnp.zeros((seq_len, d_model), jnp.float32)
    pe_pos = pe_pos.at[:, 0::2].set(jnp.sin(pos * div))
    pe_pos = pe_pos.at[:, 1::2].set(jnp.cos(pos * div))
    pe_neg = jnp.zeros((seq_len, d_model), jnp.float32)
    pe_neg = pe_neg.at[:, 0::2].set(jnp.sin(-pos * div))
    pe_neg = pe_neg.at[:, 1::2].set(jnp.cos(-pos * div))
    pe_pos = jnp.flip(pe_pos, axis=0)
    pe_neg = pe_neg[1:]
    return jnp.concatenate([pe_pos, pe_neg], axis=0)   # (2T-1, D)


def _prepare(params, Tn):
    """Data-independent rearrangement of params into kernel-ready slabs."""
    pos = rel_pos_emb(Tn, D)                                      # (2T-1, D)
    # rel_shift folded into an index gather: idx[i, j] = T-1-i+j
    idx = (Tn - 1) - jnp.arange(Tn)[:, None] + jnp.arange(Tn)[None, :]

    blocks = params["blocks"]

    def stack(fn):
        return jnp.stack([fn(blk) for blk in blocks], axis=0)

    ln_g = stack(lambda b: jnp.stack([b["ln_ffm_g"], b["ln_mha_g"],
                                      b["ln_conv_g"], b["ln_ff_g"],
                                      b["ln_final_g"]]))
    ln_b = stack(lambda b: jnp.stack([b["ln_ffm_b"], b["ln_mha_b"],
                                      b["ln_conv_b"], b["ln_ff_b"],
                                      b["ln_final_b"]]))

    ffm_w1 = stack(lambda b: b["ffm"]["w1"])
    ffm_b1 = stack(lambda b: b["ffm"]["b1"].reshape(1, MLP))
    ffm_w2 = stack(lambda b: b["ffm"]["w2"])
    ffm_b2 = stack(lambda b: b["ffm"]["b2"].reshape(1, D))
    ff_w1 = stack(lambda b: b["ff"]["w1"])
    ff_b1 = stack(lambda b: b["ff"]["b1"].reshape(1, MLP))
    ff_w2 = stack(lambda b: b["ff"]["w2"])
    ff_b2 = stack(lambda b: b["ff"]["b2"].reshape(1, D))

    qkv_w = stack(lambda b: jnp.concatenate(
        [b["mha"]["wq"], b["mha"]["wk"], b["mha"]["wv"]], axis=1))
    qkv_b = stack(lambda b: jnp.concatenate(
        [b["mha"]["bq"], b["mha"]["bk"], b["mha"]["bv"]]).reshape(1, 3 * D))
    bias_u = stack(lambda b: b["mha"]["pos_bias_u"].reshape(1, D))
    bias_v = stack(lambda b: b["mha"]["pos_bias_v"].reshape(1, D))
    wo = stack(lambda b: b["mha"]["wo"])
    bo = stack(lambda b: b["mha"]["bo"].reshape(1, D))
    # pre-shifted positional slab: p2[l, i, j*D + c] = (pos @ wp_l)[T-1-i+j, c]
    p2 = stack(lambda b: (pos @ b["mha"]["wp"])[idx].reshape(Tn, Tn * D))

    # GLU split: pw1_w (D, 2D) -> value / gate halves (no lane slicing in-kernel)
    pw1a_w = stack(lambda b: b["conv"]["pw1_w"][:, :D])
    pw1b_w = stack(lambda b: b["conv"]["pw1_w"][:, D:])
    pw1a_b = stack(lambda b: b["conv"]["pw1_b"][:D].reshape(1, D))
    pw1b_b = stack(lambda b: b["conv"]["pw1_b"][D:].reshape(1, D))
    dw_w = stack(lambda b: b["conv"]["dw_w"])
    # eval-mode BatchNorm1d folded into per-channel scale/shift (dw bias folded too)
    bn_s = stack(lambda b: (b["conv"]["bn_g"] /
                            jnp.sqrt(b["conv"]["bn_var"] + BN_EPS)).reshape(1, D))
    bn_t = stack(lambda b: ((b["conv"]["dw_b"] - b["conv"]["bn_mean"]) *
                            (b["conv"]["bn_g"] /
                             jnp.sqrt(b["conv"]["bn_var"] + BN_EPS)) +
                            b["conv"]["bn_b"]).reshape(1, D))
    pw2_w = stack(lambda b: b["conv"]["pw2_w"])
    pw2_b = stack(lambda b: b["conv"]["pw2_b"].reshape(1, D))

    # segment-sum matrix: seg[j*D + c, h*T + j] = 1  iff  c // DK == h
    m = jnp.arange(Tn * D)
    jj = m // D
    hh = (m % D) // DK
    n = jnp.arange(HEADS * Tn)
    col_h = n // Tn
    col_j = n % Tn
    seg = ((jj[:, None] == col_j[None, :]) &
           (hh[:, None] == col_h[None, :])).astype(jnp.float32)

    embed_ln = jnp.stack([params["embed_ln_g"], params["embed_ln_b"]])
    after_ln = jnp.stack([params["after_ln_g"], params["after_ln_b"]])

    rep_args = [
        params["embed_w"], params["embed_b"].reshape(1, D), embed_ln, after_ln,
        params["last_w"], params["last_b"].reshape(1, OUT_DIM),
        seg,
        ln_g, ln_b,
        ffm_w1, ffm_b1, ffm_w2, ffm_b2,
        qkv_w, qkv_b, bias_u, bias_v, p2,
        wo, bo,
        pw1a_w, pw1a_b, pw1b_w, pw1b_b,
        dw_w, bn_s, bn_t, pw2_w, pw2_b,
        ff_w1, ff_b1, ff_w2, ff_b2,
    ]
    return rep_args


@jax.jit
def conformer_forward(params, x, mask):
    """x: (B, T, IN_DIM) float32, mask: (B, 1, T) bool -> (B, T, OUT_DIM)."""
    Bn, Tn, _ = x.shape
    rep_args = _prepare(params, Tn)
    mask_f = mask.astype(jnp.float32)

    def rep_spec(a):
        nd = a.ndim
        return pl.BlockSpec(a.shape, lambda b, _nd=nd: (0,) * _nd)

    in_specs = ([pl.BlockSpec((1, Tn, IN_DIM), lambda b: (b, 0, 0)),
                 pl.BlockSpec((1, 1, Tn), lambda b: (b, 0, 0))] +
                [rep_spec(a) for a in rep_args])

    return pl.pallas_call(
        _conformer_kernel,
        out_shape=jax.ShapeDtypeStruct((Bn, Tn, OUT_DIM), jnp.float32),
        grid=(Bn,),
        in_specs=in_specs,
        out_specs=pl.BlockSpec((1, Tn, OUT_DIM), lambda b: (b, 0, 0)),
        compiler_params=pltpu.CompilerParams(
            dimension_semantics=("parallel",)),
    )(x, mask_f, *rep_args)


# --------------------------- deterministic params ----------------------------
def init_params(key):
    keys = iter(jax.random.split(key, 512))

    def w(shape, scale=0.05):
        return jax.random.normal(next(keys), shape, jnp.float32) * scale

    def zeros(shape):
        return jnp.zeros(shape, jnp.float32)

    def ones(shape):
        return jnp.ones(shape, jnp.float32)

    params = dict(
        embed_w=w((IN_DIM, D)), embed_b=zeros((D,)),
        embed_ln_g=ones((D,)), embed_ln_b=zeros((D,)),
        after_ln_g=ones((D,)), after_ln_b=zeros((D,)),
        last_w=w((D, OUT_DIM)), last_b=zeros((OUT_DIM,)),
        blocks=[],
    )
    for _ in range(DEPTH):
        blk = dict(
            ln_ffm_g=ones((D,)), ln_ffm_b=zeros((D,)),
            ffm=dict(w1=w((D, MLP)), b1=zeros((MLP,)),
                     w2=w((MLP, D)), b2=zeros((D,))),
            ln_mha_g=ones((D,)), ln_mha_b=zeros((D,)),
            mha=dict(wq=w((D, D)), bq=zeros((D,)),
                     wk=w((D, D)), bk=zeros((D,)),
                     wv=w((D, D)), bv=zeros((D,)),
                     wo=w((D, D)), bo=zeros((D,)),
                     wp=w((D, D)),
                     pos_bias_u=w((HEADS, DK)), pos_bias_v=w((HEADS, DK))),
            ln_conv_g=ones((D,)), ln_conv_b=zeros((D,)),
            conv=dict(pw1_w=w((D, 2 * D)), pw1_b=zeros((2 * D,)),
                      dw_w=w((K_CONV, D)), dw_b=zeros((D,)),
                      bn_g=ones((D,)), bn_b=zeros((D,)),
                      bn_mean=zeros((D,)), bn_var=ones((D,)),
                      pw2_w=w((D, D)), pw2_b=zeros((D,))),
            ln_ff_g=ones((D,)), ln_ff_b=zeros((D,)),
            ff=dict(w1=w((D, MLP)), b1=zeros((MLP,)),
                    w2=w((MLP, D)), b2=zeros((D,))),
            ln_final_g=ones((D,)), ln_final_b=zeros((D,)),
        )
        params["blocks"].append(blk)
    return params


# ------------------------------------ main -----------------------------------
if __name__ == "__main__":
    key = jax.random.PRNGKey(0)
    pkey, xkey = jax.random.split(key)
    params = init_params(pkey)

    x = jax.random.normal(xkey, (B, T, IN_DIM), jnp.float32)
    mask = jnp.ones((B, 1, T), dtype=bool)
    mask = mask.at[1, 0, T - 2:].set(False)   # pad the tail of the 2nd sample

    y = conformer_forward(params, x, mask)
    y = jax.block_until_ready(y)

    assert y.shape == (B, T, OUT_DIM), y.shape
    assert bool(jnp.all(jnp.isfinite(y)))
    print("KERNEL_OK")
</pallas_src>

<mosaic_0001>
module attributes {stable_mosaic.version = 11 : i64} {
  func.func @_conformer_kernel(%arg0: i32, %arg1: memref<1x8x16xf32, #tpu.memory_space<vmem>>, %arg2: memref<1x1x8xf32, #tpu.memory_space<vmem>>, %arg3: memref<16x32xf32, #tpu.memory_space<vmem>>, %arg4: memref<1x32xf32, #tpu.memory_space<vmem>>, %arg5: memref<2x32xf32, #tpu.memory_space<vmem>>, %arg6: memref<2x32xf32, #tpu.memory_space<vmem>>, %arg7: memref<32x16xf32, #tpu.memory_space<vmem>>, %arg8: memref<1x16xf32, #tpu.memory_space<vmem>>, %arg9: memref<256x32xf32, #tpu.memory_space<vmem>>, %arg10: memref<2x5x32xf32, #tpu.memory_space<vmem>>, %arg11: memref<2x5x32xf32, #tpu.memory_space<vmem>>, %arg12: memref<2x32x64xf32, #tpu.memory_space<vmem>>, %arg13: memref<2x1x64xf32, #tpu.memory_space<vmem>>, %arg14: memref<2x64x32xf32, #tpu.memory_space<vmem>>, %arg15: memref<2x1x32xf32, #tpu.memory_space<vmem>>, %arg16: memref<2x32x96xf32, #tpu.memory_space<vmem>>, %arg17: memref<2x1x96xf32, #tpu.memory_space<vmem>>, %arg18: memref<2x1x32xf32, #tpu.memory_space<vmem>>, %arg19: memref<2x1x32xf32, #tpu.memory_space<vmem>>, %arg20: memref<2x8x256xf32, #tpu.memory_space<vmem>>, %arg21: memref<2x32x32xf32, #tpu.memory_space<vmem>>, %arg22: memref<2x1x32xf32, #tpu.memory_space<vmem>>, %arg23: memref<2x32x32xf32, #tpu.memory_space<vmem>>, %arg24: memref<2x1x32xf32, #tpu.memory_space<vmem>>, %arg25: memref<2x32x32xf32, #tpu.memory_space<vmem>>, %arg26: memref<2x1x32xf32, #tpu.memory_space<vmem>>, %arg27: memref<2x7x32xf32, #tpu.memory_space<vmem>>, %arg28: memref<2x1x32xf32, #tpu.memory_space<vmem>>, %arg29: memref<2x1x32xf32, #tpu.memory_space<vmem>>, %arg30: memref<2x32x32xf32, #tpu.memory_space<vmem>>, %arg31: memref<2x1x32xf32, #tpu.memory_space<vmem>>, %arg32: memref<2x32x64xf32, #tpu.memory_space<vmem>>, %arg33: memref<2x1x64xf32, #tpu.memory_space<vmem>>, %arg34: memref<2x64x32xf32, #tpu.memory_space<vmem>>, %arg35: memref<2x1x32xf32, #tpu.memory_space<vmem>>, %arg36: memref<1x8x16xf32, #tpu.memory_space<vmem>>) attributes {dimension_semantics = [#tpu.dimension_semantics<parallel>], iteration_bounds = array<i64: 2>, scalar_prefetch = 0 : i64, scratch_operands = 0 : i64, tpu.core_type = #tpu.core_type<tc>, window_params = [{transform_indices = @transform_0, window_bounds = array<i64: 1, 8, 16>}, {transform_indices = @transform_1, window_bounds = array<i64: 1, 1, 8>}, {pipeline_mode = #tpu.pipeline_mode<synchronous>, transform_indices = @transform_2, window_bounds = array<i64: 16, 32>}, {pipeline_mode = #tpu.pipeline_mode<synchronous>, transform_indices = @transform_3, window_bounds = array<i64: 1, 32>}, {pipeline_mode = #tpu.pipeline_mode<synchronous>, transform_indices = @transform_4, window_bounds = array<i64: 2, 32>}, {pipeline_mode = #tpu.pipeline_mode<synchronous>, transform_indices = @transform_5, window_bounds = array<i64: 2, 32>}, {pipeline_mode = #tpu.pipeline_mode<synchronous>, transform_indices = @transform_6, window_bounds = array<i64: 32, 16>}, {pipeline_mode = #tpu.pipeline_mode<synchronous>, transform_indices = @transform_7, window_bounds = array<i64: 1, 16>}, {pipeline_mode = #tpu.pipeline_mode<synchronous>, transform_indices = @transform_8, window_bounds = array<i64: 256, 32>}, {pipeline_mode = #tpu.pipeline_mode<synchronous>, transform_indices = @transform_9, window_bounds = array<i64: 2, 5, 32>}, {pipeline_mode = #tpu.pipeline_mode<synchronous>, transform_indices = @transform_10, window_bounds = array<i64: 2, 5, 32>}, {pipeline_mode = #tpu.pipeline_mode<synchronous>, transform_indices = @transform_11, window_bounds = array<i64: 2, 32, 64>}, {pipeline_mode = #tpu.pipeline_mode<synchronous>, transform_indices = @transform_12, window_bounds = array<i64: 2, 1, 64>}, {pipeline_mode = #tpu.pipeline_mode<synchronous>, transform_indices = @transform_13, window_bounds = array<i64: 2, 64, 32>}, {pipeline_mode = #tpu.pipeline_mode<synchronous>, transform_indices = @transform_14, window_bounds = array<i64: 2, 1, 32>}, {pipeline_mode = #tpu.pipeline_mode<synchronous>, transform_indices = @transform_15, window_bounds = array<i64: 2, 32, 96>}, {pipeline_mode = #tpu.pipeline_mode<synchronous>, transform_indices = @transform_16, window_bounds = array<i64: 2, 1, 96>}, {pipeline_mode = #tpu.pipeline_mode<synchronous>, transform_indices = @transform_17, window_bounds = array<i64: 2, 1, 32>}, {pipeline_mode = #tpu.pipeline_mode<synchronous>, transform_indices = @transform_18, window_bounds = array<i64: 2, 1, 32>}, {pipeline_mode = #tpu.pipeline_mode<synchronous>, transform_indices = @transform_19, window_bounds = array<i64: 2, 8, 256>}, {pipeline_mode = #tpu.pipeline_mode<synchronous>, transform_indices = @transform_20, window_bounds = array<i64: 2, 32, 32>}, {pipeline_mode = #tpu.pipeline_mode<synchronous>, transform_indices = @transform_21, window_bounds = array<i64: 2, 1, 32>}, {pipeline_mode = #tpu.pipeline_mode<synchronous>, transform_indices = @transform_22, window_bounds = array<i64: 2, 32, 32>}, {pipeline_mode = #tpu.pipeline_mode<synchronous>, transform_indices = @transform_23, window_bounds = array<i64: 2, 1, 32>}, {pipeline_mode = #tpu.pipeline_mode<synchronous>, transform_indices = @transform_24, window_bounds = array<i64: 2, 32, 32>}, {pipeline_mode = #tpu.pipeline_mode<synchronous>, transform_indices = @transform_25, window_bounds = array<i64: 2, 1, 32>}, {pipeline_mode = #tpu.pipeline_mode<synchronous>, transform_indices = @transform_26, window_bounds = array<i64: 2, 7, 32>}, {pipeline_mode = #tpu.pipeline_mode<synchronous>, transform_indices = @transform_27, window_bounds = array<i64: 2, 1, 32>}, {pipeline_mode = #tpu.pipeline_mode<synchronous>, transform_indices = @transform_28, window_bounds = array<i64: 2, 1, 32>}, {pipeline_mode = #tpu.pipeline_mode<synchronous>, transform_indices = @transform_29, window_bounds = array<i64: 2, 32, 32>}, {pipeline_mode = #tpu.pipeline_mode<synchronous>, transform_indices = @transform_30, window_bounds = array<i64: 2, 1, 32>}, {pipeline_mode = #tpu.pipeline_mode<synchronous>, transform_indices = @transform_31, window_bounds = array<i64: 2, 32, 64>}, {pipeline_mode = #tpu.pipeline_mode<synchronous>, transform_indices = @transform_32, window_bounds = array<i64: 2, 1, 64>}, {pipeline_mode = #tpu.pipeline_mode<synchronous>, transform_indices = @transform_33, window_bounds = array<i64: 2, 64, 32>}, {pipeline_mode = #tpu.pipeline_mode<synchronous>, transform_indices = @transform_34, window_bounds = array<i64: 2, 1, 32>}, {transform_indices = @transform_35, window_bounds = array<i64: 1, 8, 16>}]} {
    %c0 = arith.constant 0 : index
    %c0_0 = arith.constant 0 : index
    %c0_1 = arith.constant 0 : index
    %0 = vector.load %arg2[%c0, %c0_0, %c0_1] : memref<1x1x8xf32, #tpu.memory_space<vmem>>, vector<1x1x8xf32>
    %1 = vector.shape_cast %0 : vector<1x1x8xf32> to vector<1x8xf32>
    %cst = arith.constant 5.000000e-01 : f32
    %2 = vector.broadcast %cst : f32 to vector<1x8xf32>
    %3 = arith.cmpf ogt, %1, %2 : vector<1x8xf32>
    %c0_2 = arith.constant 0 : index
    %c0_3 = arith.constant 0 : index
    %c0_4 = arith.constant 0 : index
    %4 = vector.load %arg1[%c0_2, %c0_3, %c0_4] : memref<1x8x16xf32, #tpu.memory_space<vmem>>, vector<1x8x16xf32>
    %5 = vector.shape_cast %4 : vector<1x8x16xf32> to vector<8x16xf32>
    %c0_5 = arith.constant 0 : index
    %c0_6 = arith.constant 0 : index
    %6 = vector.load %arg3[%c0_5, %c0_6] : memref<16x32xf32, #tpu.memory_space<vmem>>, vector<16x32xf32>
    %cst_7 = arith.constant dense<0.000000e+00> : vector<8x32xf32>
    %7 = tpu.matmul %5, %6, %cst_7 {dimension_numbers = #tpu.dot_dimension_numbers<[1], [0], [0], [1], [0, 0, 1, 1], [], []>} : vector<8x16xf32>, vector<16x32xf32>, vector<8x32xf32> -> vector<8x32xf32>
    %c0_8 = arith.constant 0 : index
    %c0_9 = arith.constant 0 : index
    %8 = vector.load %arg4[%c0_8, %c0_9] : memref<1x32xf32, #tpu.memory_space<vmem>>, vector<1x32xf32>
    %9 = vector.broadcast %8 : vector<1x32xf32> to vector<8x32xf32>
    %10 = arith.addf %7, %9 : vector<8x32xf32>
    %c0_10 = arith.constant 0 : index
    %c0_11 = arith.constant 0 : index
    %11 = vector.load %arg5[%c0_10, %c0_11] : memref<2x32xf32, #tpu.memory_space<vmem>>, vector<2x32xf32>
    %12 = vector.extract_strided_slice %11 {offsets = [0, 0], sizes = [1, 32], strides = [1, 1]} : vector<2x32xf32> to vector<1x32xf32>
    %13 = vector.extract_strided_slice %11 {offsets = [1, 0], sizes = [1, 32], strides = [1, 1]} : vector<2x32xf32> to vector<1x32xf32>
    %cst_12 = arith.constant dense<0.000000e+00> : vector<8xf32>
    %14 = vector.multi_reduction <add>, %10, %cst_12 [1] : vector<8x32xf32> to vector<8xf32>
    %15 = vector.shape_cast %14 : vector<8xf32> to vector<8x1xf32>
    %cst_13 = arith.constant 3.200000e+01 : f32
    %16 = vector.broadcast %cst_13 : f32 to vector<8x1xf32>
    %17 = arith.divf %15, %16 : vector<8x1xf32>
    %18 = vector.broadcast %17 : vector<8x1xf32> to vector<8x32xf32>
    %19 = arith.subf %10, %18 : vector<8x32xf32>
    %20 = arith.mulf %19, %19 : vector<8x32xf32>
    %cst_14 = arith.constant dense<0.000000e+00> : vector<8xf32>
    %21 = vector.multi_reduction <add>, %20, %cst_14 [1] : vector<8x32xf32> to vector<8xf32>
    %22 = vector.shape_cast %21 : vector<8xf32> to vector<8x1xf32>
    %cst_15 = arith.constant 3.200000e+01 : f32
    %23 = vector.broadcast %cst_15 : f32 to vector<8x1xf32>
    %24 = arith.divf %22, %23 : vector<8x1xf32>
    %25 = vector.broadcast %17 : vector<8x1xf32> to vector<8x32xf32>
    %26 = arith.subf %10, %25 : vector<8x32xf32>
    %cst_16 = arith.constant 9.99999974E-6 : f32
    %27 = vector.broadcast %cst_16 : f32 to vector<8x1xf32>
    %28 = arith.addf %24, %27 : vector<8x1xf32>
    %29 = math.rsqrt %28 : vector<8x1xf32>
    %30 = vector.broadcast %29 : vector<8x1xf32> to vector<8x32xf32>
    %31 = arith.mulf %26, %30 : vector<8x32xf32>
    %32 = vector.broadcast %12 : vector<1x32xf32> to vector<8x32xf32>
    %33 = arith.mulf %31, %32 : vector<8x32xf32>
    %34 = vector.broadcast %13 : vector<1x32xf32> to vector<8x32xf32>
    %35 = arith.addf %33, %34 : vector<8x32xf32>
    %cst_17 = arith.constant 5.65685415 : f32
    %36 = vector.broadcast %cst_17 : f32 to vector<8x32xf32>
    %37 = arith.mulf %35, %36 : vector<8x32xf32>
    %c0_18 = arith.constant 0 : index
    %c0_19 = arith.constant 0 : index
    %38 = vector.load %arg9[%c0_18, %c0_19] : memref<256x32xf32, #tpu.memory_space<vmem>>, vector<256x32xf32>
    %c0_20 = arith.constant 0 : index
    %c0_21 = arith.constant 0 : index
    %c0_22 = arith.constant 0 : index
    %39 = vector.load %arg10[%c0_20, %c0_21, %c0_22] : memref<2x5x32xf32, #tpu.memory_space<vmem>>, vector<1x5x32xf32>
    %40 = vector.shape_cast %39 : vector<1x5x32xf32> to vector<5x32xf32>
    %c0_23 = arith.constant 0 : index
    %c0_24 = arith.constant 0 : index
    %c0_25 = arith.constant 0 : index
    %41 = vector.load %arg11[%c0_23, %c0_24, %c0_25] : memref<2x5x32xf32, #tpu.memory_space<vmem>>, vector<1x5x32xf32>
    %42 = vector.shape_cast %41 : vector<1x5x32xf32> to vector<5x32xf32>
    %43 = vector.extract_strided_slice %40 {offsets = [0, 0], sizes = [1, 32], strides = [1, 1]} : vector<5x32xf32> to vector<1x32xf32>
    %44 = vector.extract_strided_slice %42 {offsets = [0, 0], sizes = [1, 32], strides = [1, 1]} : vector<5x32xf32> to vector<1x32xf32>
    %cst_26 = arith.constant dense<0.000000e+00> : vector<8xf32>
    %45 = vector.multi_reduction <add>, %37, %cst_26 [1] : vector<8x32xf32> to vector<8xf32>
    %46 = vector.shape_cast %45 : vector<8xf32> to vector<8x1xf32>
    %cst_27 = arith.constant 3.200000e+01 : f32
    %47 = vector.broadcast %cst_27 : f32 to vector<8x1xf32>
    %48 = arith.divf %46, %47 : vector<8x1xf32>
    %49 = vector.broadcast %48 : vector<8x1xf32> to vector<8x32xf32>
    %50 = arith.subf %37, %49 : vector<8x32xf32>
    %51 = arith.mulf %50, %50 : vector<8x32xf32>
    %cst_28 = arith.constant dense<0.000000e+00> : vector<8xf32>
    %52 = vector.multi_reduction <add>, %51, %cst_28 [1] : vector<8x32xf32> to vector<8xf32>
    %53 = vector.shape_cast %52 : vector<8xf32> to vector<8x1xf32>
    %cst_29 = arith.constant 3.200000e+01 : f32
    %54 = vector.broadcast %cst_29 : f32 to vector<8x1xf32>
    %55 = arith.divf %53, %54 : vector<8x1xf32>
    %56 = vector.broadcast %48 : vector<8x1xf32> to vector<8x32xf32>
    %57 = arith.subf %37, %56 : vector<8x32xf32>
    %cst_30 = arith.constant 9.99999996E-13 : f32
    %58 = vector.broadcast %cst_30 : f32 to vector<8x1xf32>
    %59 = arith.addf %55, %58 : vector<8x1xf32>
    %60 = math.rsqrt %59 : vector<8x1xf32>
    %61 = vector.broadcast %60 : vector<8x1xf32> to vector<8x32xf32>
    %62 = arith.mulf %57, %61 : vector<8x32xf32>
    %63 = vector.broadcast %43 : vector<1x32xf32> to vector<8x32xf32>
    %64 = arith.mulf %62, %63 : vector<8x32xf32>
    %65 = vector.broadcast %44 : vector<1x32xf32> to vector<8x32xf32>
    %66 = arith.addf %64, %65 : vector<8x32xf32>
    %c0_31 = arith.constant 0 : index
    %c0_32 = arith.constant 0 : index
    %c0_33 = arith.constant 0 : index
    %67 = vector.load %arg12[%c0_31, %c0_32, %c0_33] : memref<2x32x64xf32, #tpu.memory_space<vmem>>, vector<1x32x64xf32>
    %68 = vector.shape_cast %67 : vector<1x32x64xf32> to vector<32x64xf32>
    %cst_34 = arith.constant dense<0.000000e+00> : vector<8x64xf32>
    %69 = tpu.matmul %66, %68, %cst_34 {dimension_numbers = #tpu.dot_dimension_numbers<[1], [0], [0], [1], [0, 0, 1, 1], [], []>} : vector<8x32xf32>, vector<32x64xf32>, vector<8x64xf32> -> vector<8x64xf32>
    %c0_35 = arith.constant 0 : index
    %c0_36 = arith.constant 0 : index
    %c0_37 = arith.constant 0 : index
    %70 = vector.load %arg13[%c0_35, %c0_36, %c0_37] : memref<2x1x64xf32, #tpu.memory_space<vmem>>, vector<1x1x64xf32>
    %71 = vector.shape_cast %70 : vector<1x1x64xf32> to vector<1x64xf32>
    %72 = vector.broadcast %71 : vector<1x64xf32> to vector<8x64xf32>
    %73 = arith.addf %69, %72 : vector<8x64xf32>
    %74 = arith.negf %73 : vector<8x64xf32>
    %75 = math.exp %74 : vector<8x64xf32>
    %cst_38 = arith.constant 1.000000e+00 : f32
    %76 = vector.broadcast %cst_38 : f32 to vector<8x64xf32>
    %77 = arith.addf %76, %75 : vector<8x64xf32>
    %78 = arith.divf %76, %77 : vector<8x64xf32>
    %79 = arith.mulf %73, %78 : vector<8x64xf32>
    %c0_39 = arith.constant 0 : index
    %c0_40 = arith.constant 0 : index
    %c0_41 = arith.constant 0 : index
    %80 = vector.load %arg14[%c0_39, %c0_40, %c0_41] : memref<2x64x32xf32, #tpu.memory_space<vmem>>, vector<1x64x32xf32>
    %81 = vector.shape_cast %80 : vector<1x64x32xf32> to vector<64x32xf32>
    %cst_42 = arith.constant dense<0.000000e+00> : vector<8x32xf32>
    %82 = tpu.matmul %79, %81, %cst_42 {dimension_numbers = #tpu.dot_dimension_numbers<[1], [0], [0], [1], [0, 0, 1, 1], [], []>} : vector<8x64xf32>, vector<64x32xf32>, vector<8x32xf32> -> vector<8x32xf32>
    %c0_43 = arith.constant 0 : index
    %c0_44 = arith.constant 0 : index
    %c0_45 = arith.constant 0 : index
    %83 = vector.load %arg15[%c0_43, %c0_44, %c0_45] : memref<2x1x32xf32, #tpu.memory_space<vmem>>, vector<1x1x32xf32>
    %84 = vector.shape_cast %83 : vector<1x1x32xf32> to vector<1x32xf32>
    %85 = vector.broadcast %84 : vector<1x32xf32> to vector<8x32xf32>
    %86 = arith.addf %82, %85 : vector<8x32xf32>
    %cst_46 = arith.constant 5.000000e-01 : f32
    %87 = vector.broadcast %cst_46 : f32 to vector<8x32xf32>
    %88 = arith.mulf %87, %86 : vector<8x32xf32>
    %89 = arith.addf %37, %88 : vector<8x32xf32>
    %90 = vector.extract_strided_slice %40 {offsets = [1, 0], sizes = [1, 32], strides = [1, 1]} : vector<5x32xf32> to vector<1x32xf32>
    %91 = vector.extract_strided_slice %42 {offsets = [1, 0], sizes = [1, 32], strides = [1, 1]} : vector<5x32xf32> to vector<1x32xf32>
    %cst_47 = arith.constant dense<0.000000e+00> : vector<8xf32>
    %92 = vector.multi_reduction <add>, %89, %cst_47 [1] : vector<8x32xf32> to vector<8xf32>
    %93 = vector.shape_cast %92 : vector<8xf32> to vector<8x1xf32>
    %cst_48 = arith.constant 3.200000e+01 : f32
    %94 = vector.broadcast %cst_48 : f32 to vector<8x1xf32>
    %95 = arith.divf %93, %94 : vector<8x1xf32>
    %96 = vector.broadcast %95 : vector<8x1xf32> to vector<8x32xf32>
    %97 = arith.subf %89, %96 : vector<8x32xf32>
    %98 = arith.mulf %97, %97 : vector<8x32xf32>
    %cst_49 = arith.constant dense<0.000000e+00> : vector<8xf32>
    %99 = vector.multi_reduction <add>, %98, %cst_49 [1] : vector<8x32xf32> to vector<8xf32>
    %100 = vector.shape_cast %99 : vector<8xf32> to vector<8x1xf32>
    %cst_50 = arith.constant 3.200000e+01 : f32
    %101 = vector.broadcast %cst_50 : f32 to vector<8x1xf32>
    %102 = arith.divf %100, %101 : vector<8x1xf32>
    %103 = vector.broadcast %95 : vector<8x1xf32> to vector<8x32xf32>
    %104 = arith.subf %89, %103 : vector<8x32xf32>
    %cst_51 = arith.constant 9.99999996E-13 : f32
    %105 = vector.broadcast %cst_51 : f32 to vector<8x1xf32>
    %106 = arith.addf %102, %105 : vector<8x1xf32>
    %107 = math.rsqrt %106 : vector<8x1xf32>
    %108 = vector.broadcast %107 : vector<8x1xf32> to vector<8x32xf32>
    %109 = arith.mulf %104, %108 : vector<8x32xf32>
    %110 = vector.broadcast %90 : vector<1x32xf32> to vector<8x32xf32>
    %111 = arith.mulf %109, %110 : vector<8x32xf32>
    %112 = vector.broadcast %91 : vector<1x32xf32> to vector<8x32xf32>
    %113 = arith.addf %111, %112 : vector<8x32xf32>
    %c0_52 = arith.constant 0 : index
    %c0_53 = arith.constant 0 : index
    %c0_54 = arith.constant 0 : index
    %114 = vector.load %arg16[%c0_52, %c0_53, %c0_54] : memref<2x32x96xf32, #tpu.memory_space<vmem>>, vector<1x32x96xf32>
    %115 = vector.shape_cast %114 : vector<1x32x96xf32> to vector<32x96xf32>
    %cst_55 = arith.constant dense<0.000000e+00> : vector<8x96xf32>
    %116 = tpu.matmul %113, %115, %cst_55 {dimension_numbers = #tpu.dot_dimension_numbers<[1], [0], [0], [1], [0, 0, 1, 1], [], []>} : vector<8x32xf32>, vector<32x96xf32>, vector<8x96xf32> -> vector<8x96xf32>
    %c0_56 = arith.constant 0 : index
    %c0_57 = arith.constant 0 : index
    %c0_58 = arith.constant 0 : index
    %117 = vector.load %arg17[%c0_56, %c0_57, %c0_58] : memref<2x1x96xf32, #tpu.memory_space<vmem>>, vector<1x1x96xf32>
    %118 = vector.shape_cast %117 : vector<1x1x96xf32> to vector<1x96xf32>
    %119 = vector.broadcast %118 : vector<1x96xf32> to vector<8x96xf32>
    %120 = arith.addf %116, %119 : vector<8x96xf32>
    %121 = vector.extract_strided_slice %120 {offsets = [0, 0], sizes = [8, 32], strides = [1, 1]} : vector<8x96xf32> to vector<8x32xf32>
    %122 = vector.extract_strided_slice %120 {offsets = [0, 32], sizes = [8, 32], strides = [1, 1]} : vector<8x96xf32> to vector<8x32xf32>
    %123 = vector.extract_strided_slice %120 {offsets = [0, 64], sizes = [8, 32], strides = [1, 1]} : vector<8x96xf32> to vector<8x32xf32>
    %c0_59 = arith.constant 0 : index
    %c0_60 = arith.constant 0 : index
    %c0_61 = arith.constant 0 : index
    %124 = vector.load %arg18[%c0_59, %c0_60, %c0_61] : memref<2x1x32xf32, #tpu.memory_space<vmem>>, vector<1x1x32xf32>
    %125 = vector.shape_cast %124 : vector<1x1x32xf32> to vector<1x32xf32>
    %126 = vector.broadcast %125 : vector<1x32xf32> to vector<8x32xf32>
    %127 = arith.addf %121, %126 : vector<8x32xf32>
    %c0_62 = arith.constant 0 : index
    %c0_63 = arith.constant 0 : index
    %c0_64 = arith.constant 0 : index
    %128 = vector.load %arg19[%c0_62, %c0_63, %c0_64] : memref<2x1x32xf32, #tpu.memory_space<vmem>>, vector<1x1x32xf32>
    %129 = vector.shape_cast %128 : vector<1x1x32xf32> to vector<1x32xf32>
    %130 = vector.broadcast %129 : vector<1x32xf32> to vector<8x32xf32>
    %131 = arith.addf %121, %130 : vector<8x32xf32>
    %132 = tpu.concatenate %131, %131, %131, %131, %131, %131, %131, %131 in 1 : vector<8x32xf32>, vector<8x32xf32>, vector<8x32xf32>, vector<8x32xf32>, vector<8x32xf32>, vector<8x32xf32>, vector<8x32xf32>, vector<8x32xf32> -> vector<8x256xf32>
    %c0_65 = arith.constant 0 : index
    %c0_66 = arith.constant 0 : index
    %c0_67 = arith.constant 0 : index
    %133 = vector.load %arg20[%c0_65, %c0_66, %c0_67] : memref<2x8x256xf32, #tpu.memory_space<vmem>>, vector<1x8x256xf32>
    %134 = vector.shape_cast %133 : vector<1x8x256xf32> to vector<8x256xf32>
    %135 = arith.mulf %132, %134 : vector<8x256xf32>
    %cst_68 = arith.constant dense<0.000000e+00> : vector<8x32xf32>
    %136 = tpu.matmul %135, %38, %cst_68 {dimension_numbers = #tpu.dot_dimension_numbers<[1], [0], [0], [1], [0, 0, 1, 1], [], []>} : vector<8x256xf32>, vector<256x32xf32>, vector<8x32xf32> -> vector<8x32xf32>
    %137 = vector.extract_strided_slice %127 {offsets = [0, 0], sizes = [8, 8], strides = [1, 1]} : vector<8x32xf32> to vector<8x8xf32>
    %138 = vector.extract_strided_slice %122 {offsets = [0, 0], sizes = [8, 8], strides = [1, 1]} : vector<8x32xf32> to vector<8x8xf32>
    %cst_69 = arith.constant dense<0.000000e+00> : vector<8x8xf32>
    %139 = tpu.matmul %137, %138, %cst_69 {dimension_numbers = #tpu.dot_dimension_numbers<[1], [1], [0], [0], [0, 0, 1, 0], [], []>} : vector<8x8xf32>, vector<8x8xf32>, vector<8x8xf32> -> vector<8x8xf32>
    %140 = vector.extract_strided_slice %136 {offsets = [0, 0], sizes = [8, 8], strides = [1, 1]} : vector<8x32xf32> to vector<8x8xf32>
    %141 = arith.addf %139, %140 : vector<8x8xf32>
    %cst_70 = arith.constant 0.353553385 : f32
    %142 = vector.broadcast %cst_70 : f32 to vector<8x8xf32>
    %143 = arith.mulf %141, %142 : vector<8x8xf32>
    %cst_71 = arith.constant -3.40282347E+38 : f32
    %144 = vector.shape_cast %3 : vector<1x8xi1> to vector<1x8xi1>
    %145 = vector.broadcast %144 : vector<1x8xi1> to vector<8x8xi1>
    %146 = vector.broadcast %cst_71 : f32 to vector<8x8xf32>
    %147 = arith.select %145, %143, %146 : vector<8x8xi1>, vector<8x8xf32>
    %cst_72 = arith.constant dense<0xFF800000> : vector<8xf32>
    %148 = vector.multi_reduction <maximumf>, %147, %cst_72 [1] : vector<8x8xf32> to vector<8xf32>
    %149 = vector.shape_cast %148 : vector<8xf32> to vector<8x1xf32>
    %150 = vector.broadcast %149 : vector<8x1xf32> to vector<8x8xf32>
    %151 = arith.subf %147, %150 : vector<8x8xf32>
    %152 = math.exp %151 : vector<8x8xf32>
    %cst_73 = arith.constant dense<0.000000e+00> : vector<8xf32>
    %153 = vector.multi_reduction <add>, %152, %cst_73 [1] : vector<8x8xf32> to vector<8xf32>
    %154 = vector.shape_cast %153 : vector<8xf32> to vector<8x1xf32>
    %155 = tpu.reciprocal %154 {approx = true} : vector<8x1xf32> -> vector<8x1xf32>
    %156 = vector.broadcast %155 : vector<8x1xf32> to vector<8x8xf32>
    %157 = arith.mulf %152, %156 : vector<8x8xf32>
    %cst_74 = arith.constant 0.000000e+00 : f32
    %158 = vector.shape_cast %3 : vector<1x8xi1> to vector<1x8xi1>
    %159 = vector.broadcast %158 : vector<1x8xi1> to vector<8x8xi1>
    %160 = vector.broadcast %cst_74 : f32 to vector<8x8xf32>
    %161 = arith.select %159, %157, %160 : vector<8x8xi1>, vector<8x8xf32>
    %162 = vector.extract_strided_slice %123 {offsets = [0, 0], sizes = [8, 8], strides = [1, 1]} : vector<8x32xf32> to vector<8x8xf32>
    %cst_75 = arith.constant dense<0.000000e+00> : vector<8x8xf32>
    %163 = tpu.matmul %161, %162, %cst_75 {dimension_numbers = #tpu.dot_dimension_numbers<[1], [0], [0], [1], [0, 0, 1, 1], [], []>} : vector<8x8xf32>, vector<8x8xf32>, vector<8x8xf32> -> vector<8x8xf32>
    %164 = vector.extract_strided_slice %127 {offsets = [0, 8], sizes = [8, 8], strides = [1, 1]} : vector<8x32xf32> to vector<8x8xf32>
    %165 = vector.extract_strided_slice %122 {offsets = [0, 8], sizes = [8, 8], strides = [1, 1]} : vector<8x32xf32> to vector<8x8xf32>
    %cst_76 = arith.constant dense<0.000000e+00> : vector<8x8xf32>
    %166 = tpu.matmul %164, %165, %cst_76 {dimension_numbers = #tpu.dot_dimension_numbers<[1], [1], [0], [0], [0, 0, 1, 0], [], []>} : vector<8x8xf32>, vector<8x8xf32>, vector<8x8xf32> -> vector<8x8xf32>
    %167 = vector.extract_strided_slice %136 {offsets = [0, 8], sizes = [8, 8], strides = [1, 1]} : vector<8x32xf32> to vector<8x8xf32>
    %168 = arith.addf %166, %167 : vector<8x8xf32>
    %cst_77 = arith.constant 0.353553385 : f32
    %169 = vector.broadcast %cst_77 : f32 to vector<8x8xf32>
    %170 = arith.mulf %168, %169 : vector<8x8xf32>
    %cst_78 = arith.constant -3.40282347E+38 : f32
    %171 = vector.shape_cast %3 : vector<1x8xi1> to vector<1x8xi1>
    %172 = vector.broadcast %171 : vector<1x8xi1> to vector<8x8xi1>
    %173 = vector.broadcast %cst_78 : f32 to vector<8x8xf32>
    %174 = arith.select %172, %170, %173 : vector<8x8xi1>, vector<8x8xf32>
    %cst_79 = arith.constant dense<0xFF800000> : vector<8xf32>
    %175 = vector.multi_reduction <maximumf>, %174, %cst_79 [1] : vector<8x8xf32> to vector<8xf32>
    %176 = vector.shape_cast %175 : vector<8xf32> to vector<8x1xf32>
    %177 = vector.broadcast %176 : vector<8x1xf32> to vector<8x8xf32>
    %178 = arith.subf %174, %177 : vector<8x8xf32>
    %179 = math.exp %178 : vector<8x8xf32>
    %cst_80 = arith.constant dense<0.000000e+00> : vector<8xf32>
    %180 = vector.multi_reduction <add>, %179, %cst_80 [1] : vector<8x8xf32> to vector<8xf32>
    %181 = vector.shape_cast %180 : vector<8xf32> to vector<8x1xf32>
    %182 = tpu.reciprocal %181 {approx = true} : vector<8x1xf32> -> vector<8x1xf32>
    %183 = vector.broadcast %182 : vector<8x1xf32> to vector<8x8xf32>
    %184 = arith.mulf %179, %183 : vector<8x8xf32>
    %cst_81 = arith.constant 0.000000e+00 : f32
    %185 = vector.shape_cast %3 : vector<1x8xi1> to vector<1x8xi1>
    %186 = vector.broadcast %185 : vector<1x8xi1> to vector<8x8xi1>
    %187 = vector.broadcast %cst_81 : f32 to vector<8x8xf32>
    %188 = arith.select %186, %184, %187 : vector<8x8xi1>, vector<8x8xf32>
    %189 = vector.extract_strided_slice %123 {offsets = [0, 8], sizes = [8, 8], strides = [1, 1]} : vector<8x32xf32> to vector<8x8xf32>
    %cst_82 = arith.constant dense<0.000000e+00> : vector<8x8xf32>
    %190 = tpu.matmul %188, %189, %cst_82 {dimension_numbers = #tpu.dot_dimension_numbers<[1], [0], [0], [1], [0, 0, 1, 1], [], []>} : vector<8x8xf32>, vector<8x8xf32>, vector<8x8xf32> -> vector<8x8xf32>
    %191 = vector.extract_strided_slice %127 {offsets = [0, 16], sizes = [8, 8], strides = [1, 1]} : vector<8x32xf32> to vector<8x8xf32>
    %192 = vector.extract_strided_slice %122 {offsets = [0, 16], sizes = [8, 8], strides = [1, 1]} : vector<8x32xf32> to vector<8x8xf32>
    %cst_83 = arith.constant dense<0.000000e+00> : vector<8x8xf32>
    %193 = tpu.matmul %191, %192, %cst_83 {dimension_numbers = #tpu.dot_dimension_numbers<[1], [1], [0], [0], [0, 0, 1, 0], [], []>} : vector<8x8xf32>, vector<8x8xf32>, vector<8x8xf32> -> vector<8x8xf32>
    %194 = vector.extract_strided_slice %136 {offsets = [0, 16], sizes = [8, 8], strides = [1, 1]} : vector<8x32xf32> to vector<8x8xf32>
    %195 = arith.addf %193, %194 : vector<8x8xf32>
    %cst_84 = arith.constant 0.353553385 : f32
    %196 = vector.broadcast %cst_84 : f32 to vector<8x8xf32>
    %197 = arith.mulf %195, %196 : vector<8x8xf32>
    %cst_85 = arith.constant -3.40282347E+38 : f32
    %198 = vector.shape_cast %3 : vector<1x8xi1> to vector<1x8xi1>
    %199 = vector.broadcast %198 : vector<1x8xi1> to vector<8x8xi1>
    %200 = vector.broadcast %cst_85 : f32 to vector<8x8xf32>
    %201 = arith.select %199, %197, %200 : vector<8x8xi1>, vector<8x8xf32>
    %cst_86 = arith.constant dense<0xFF800000> : vector<8xf32>
    %202 = vector.multi_reduction <maximumf>, %201, %cst_86 [1] : vector<8x8xf32> to vector<8xf32>
    %203 = vector.shape_cast %202 : vector<8xf32> to vector<8x1xf32>
    %204 = vector.broadcast %203 : vector<8x1xf32> to vector<8x8xf32>
    %205 = arith.subf %201, %204 : vector<8x8xf32>
    %206 = math.exp %205 : vector<8x8xf32>
    %cst_87 = arith.constant dense<0.000000e+00> : vector<8xf32>
    %207 = vector.multi_reduction <add>, %206, %cst_87 [1] : vector<8x8xf32> to vector<8xf32>
    %208 = vector.shape_cast %207 : vector<8xf32> to vector<8x1xf32>
    %209 = tpu.reciprocal %208 {approx = true} : vector<8x1xf32> -> vector<8x1xf32>
    %210 = vector.broadcast %209 : vector<8x1xf32> to vector<8x8xf32>
    %211 = arith.mulf %206, %210 : vector<8x8xf32>
    %cst_88 = arith.constant 0.000000e+00 : f32
    %212 = vector.shape_cast %3 : vector<1x8xi1> to vector<1x8xi1>
    %213 = vector.broadcast %212 : vector<1x8xi1> to vector<8x8xi1>
    %214 = vector.broadcast %cst_88 : f32 to vector<8x8xf32>
    %215 = arith.select %213, %211, %214 : vector<8x8xi1>, vector<8x8xf32>
    %216 = vector.extract_strided_slice %123 {offsets = [0, 16], sizes = [8, 8], strides = [1, 1]} : vector<8x32xf32> to vector<8x8xf32>
    %cst_89 = arith.constant dense<0.000000e+00> : vector<8x8xf32>
    %217 = tpu.matmul %215, %216, %cst_89 {dimension_numbers = #tpu.dot_dimension_numbers<[1], [0], [0], [1], [0, 0, 1, 1], [], []>} : vector<8x8xf32>, vector<8x8xf32>, vector<8x8xf32> -> vector<8x8xf32>
    %218 = vector.extract_strided_slice %127 {offsets = [0, 24], sizes = [8, 8], strides = [1, 1]} : vector<8x32xf32> to vector<8x8xf32>
    %219 = vector.extract_strided_slice %122 {offsets = [0, 24], sizes = [8, 8], strides = [1, 1]} : vector<8x32xf32> to vector<8x8xf32>
    %cst_90 = arith.constant dense<0.000000e+00> : vector<8x8xf32>
    %220 = tpu.matmul %218, %219, %cst_90 {dimension_numbers = #tpu.dot_dimension_numbers<[1], [1], [0], [0], [0, 0, 1, 0], [], []>} : vector<8x8xf32>, vector<8x8xf32>, vector<8x8xf32> -> vector<8x8xf32>
    %221 = vector.extract_strided_slice %136 {offsets = [0, 24], sizes = [8, 8], strides = [1, 1]} : vector<8x32xf32> to vector<8x8xf32>
    %222 = arith.addf %220, %221 : vector<8x8xf32>
    %cst_91 = arith.constant 0.353553385 : f32
    %223 = vector.broadcast %cst_91 : f32 to vector<8x8xf32>
    %224 = arith.mulf %222, %223 : vector<8x8xf32>
    %cst_92 = arith.constant -3.40282347E+38 : f32
    %225 = vector.shape_cast %3 : vector<1x8xi1> to vector<1x8xi1>
    %226 = vector.broadcast %225 : vector<1x8xi1> to vector<8x8xi1>
    %227 = vector.broadcast %cst_92 : f32 to vector<8x8xf32>
    %228 = arith.select %226, %224, %227 : vector<8x8xi1>, vector<8x8xf32>
    %cst_93 = arith.constant dense<0xFF800000> : vector<8xf32>
    %229 = vector.multi_reduction <maximumf>, %228, %cst_93 [1] : vector<8x8xf32> to vector<8xf32>
    %230 = vector.shape_cast %229 : vector<8xf32> to vector<8x1xf32>
    %231 = vector.broadcast %230 : vector<8x1xf32> to vector<8x8xf32>
    %232 = arith.subf %228, %231 : vector<8x8xf32>
    %233 = math.exp %232 : vector<8x8xf32>
    %cst_94 = arith.constant dense<0.000000e+00> : vector<8xf32>
    %234 = vector.multi_reduction <add>, %233, %cst_94 [1] : vector<8x8xf32> to vector<8xf32>
    %235 = vector.shape_cast %234 : vector<8xf32> to vector<8x1xf32>
    %236 = tpu.reciprocal %235 {approx = true} : vector<8x1xf32> -> vector<8x1xf32>
    %237 = vector.broadcast %236 : vector<8x1xf32> to vector<8x8xf32>
    %238 = arith.mulf %233, %237 : vector<8x8xf32>
    %cst_95 = arith.constant 0.000000e+00 : f32
    %239 = vector.shape_cast %3 : vector<1x8xi1> to vector<1x8xi1>
    %240 = vector.broadcast %239 : vector<1x8xi1> to vector<8x8xi1>
    %241 = vector.broadcast %cst_95 : f32 to vector<8x8xf32>
    %242 = arith.select %240, %238, %241 : vector<8x8xi1>, vector<8x8xf32>
    %243 = vector.extract_strided_slice %123 {offsets = [0, 24], sizes = [8, 8], strides = [1, 1]} : vector<8x32xf32> to vector<8x8xf32>
    %cst_96 = arith.constant dense<0.000000e+00> : vector<8x8xf32>
    %244 = tpu.matmul %242, %243, %cst_96 {dimension_numbers = #tpu.dot_dimension_numbers<[1], [0], [0], [1], [0, 0, 1, 1], [], []>} : vector<8x8xf32>, vector<8x8xf32>, vector<8x8xf32> -> vector<8x8xf32>
    %245 = tpu.concatenate %163, %190, %217, %244 in 1 : vector<8x8xf32>, vector<8x8xf32>, vector<8x8xf32>, vector<8x8xf32> -> vector<8x32xf32>
    %c0_97 = arith.constant 0 : index
    %c0_98 = arith.constant 0 : index
    %c0_99 = arith.constant 0 : index
    %246 = vector.load %arg21[%c0_97, %c0_98, %c0_99] : memref<2x32x32xf32, #tpu.memory_space<vmem>>, vector<1x32x32xf32>
    %247 = vector.shape_cast %246 : vector<1x32x32xf32> to vector<32x32xf32>
    %cst_100 = arith.constant dense<0.000000e+00> : vector<8x32xf32>
    %248 = tpu.matmul %245, %247, %cst_100 {dimension_numbers = #tpu.dot_dimension_numbers<[1], [0], [0], [1], [0, 0, 1, 1], [], []>} : vector<8x32xf32>, vector<32x32xf32>, vector<8x32xf32> -> vector<8x32xf32>
    %249 = arith.addf %89, %248 : vector<8x32xf32>
    %c0_101 = arith.constant 0 : index
    %c0_102 = arith.constant 0 : index
    %c0_103 = arith.constant 0 : index
    %250 = vector.load %arg22[%c0_101, %c0_102, %c0_103] : memref<2x1x32xf32, #tpu.memory_space<vmem>>, vector<1x1x32xf32>
    %251 = vector.shape_cast %250 : vector<1x1x32xf32> to vector<1x32xf32>
    %252 = vector.broadcast %251 : vector<1x32xf32> to vector<8x32xf32>
    %253 = arith.addf %249, %252 : vector<8x32xf32>
    %254 = vector.extract_strided_slice %40 {offsets = [2, 0], sizes = [1, 32], strides = [1, 1]} : vector<5x32xf32> to vector<1x32xf32>
    %255 = vector.extract_strided_slice %42 {offsets = [2, 0], sizes = [1, 32], strides = [1, 1]} : vector<5x32xf32> to vector<1x32xf32>
    %cst_104 = arith.constant dense<0.000000e+00> : vector<8xf32>
    %256 = vector.multi_reduction <add>, %253, %cst_104 [1] : vector<8x32xf32> to vector<8xf32>
    %257 = vector.shape_cast %256 : vector<8xf32> to vector<8x1xf32>
    %cst_105 = arith.constant 3.200000e+01 : f32
    %258 = vector.broadcast %cst_105 : f32 to vector<8x1xf32>
    %259 = arith.divf %257, %258 : vector<8x1xf32>
    %260 = vector.broadcast %259 : vector<8x1xf32> to vector<8x32xf32>
    %261 = arith.subf %253, %260 : vector<8x32xf32>
    %262 = arith.mulf %261, %261 : vector<8x32xf32>
    %cst_106 = arith.constant dense<0.000000e+00> : vector<8xf32>
    %263 = vector.multi_reduction <add>, %262, %cst_106 [1] : vector<8x32xf32> to vector<8xf32>
    %264 = vector.shape_cast %263 : vector<8xf32> to vector<8x1xf32>
    %cst_107 = arith.constant 3.200000e+01 : f32
    %265 = vector.broadcast %cst_107 : f32 to vector<8x1xf32>
    %266 = arith.divf %264, %265 : vector<8x1xf32>
    %267 = vector.broadcast %259 : vector<8x1xf32> to vector<8x32xf32>
    %268 = arith.subf %253, %267 : vector<8x32xf32>
    %cst_108 = arith.constant 9.99999996E-13 : f32
    %269 = vector.broadcast %cst_108 : f32 to vector<8x1xf32>
    %270 = arith.addf %266, %269 : vector<8x1xf32>
    %271 = math.rsqrt %270 : vector<8x1xf32>
    %272 = vector.broadcast %271 : vector<8x1xf32> to vector<8x32xf32>
    %273 = arith.mulf %268, %272 : vector<8x32xf32>
    %274 = vector.broadcast %254 : vector<1x32xf32> to vector<8x32xf32>
    %275 = arith.mulf %273, %274 : vector<8x32xf32>
    %276 = vector.broadcast %255 : vector<1x32xf32> to vector<8x32xf32>
    %277 = arith.addf %275, %276 : vector<8x32xf32>
    %c0_109 = arith.constant 0 : index
    %c0_110 = arith.constant 0 : index
    %c0_111 = arith.constant 0 : index
    %278 = vector.load %arg23[%c0_109, %c0_110, %c0_111] : memref<2x32x32xf32, #tpu.memory_space<vmem>>, vector<1x32x32xf32>
    %279 = vector.shape_cast %278 : vector<1x32x32xf32> to vector<32x32xf32>
    %cst_112 = arith.constant dense<0.000000e+00> : vector<8x32xf32>
    %280 = tpu.matmul %277, %279, %cst_112 {dimension_numbers = #tpu.dot_dimension_numbers<[1], [0], [0], [1], [0, 0, 1, 1], [], []>} : vector<8x32xf32>, vector<32x32xf32>, vector<8x32xf32> -> vector<8x32xf32>
    %c0_113 = arith.constant 0 : index
    %c0_114 = arith.constant 0 : index
    %c0_115 = arith.constant 0 : index
    %281 = vector.load %arg24[%c0_113, %c0_114, %c0_115] : memref<2x1x32xf32, #tpu.memory_space<vmem>>, vector<1x1x32xf32>
    %282 = vector.shape_cast %281 : vector<1x1x32xf32> to vector<1x32xf32>
    %283 = vector.broadcast %282 : vector<1x32xf32> to vector<8x32xf32>
    %284 = arith.addf %280, %283 : vector<8x32xf32>
    %c0_116 = arith.constant 0 : index
    %c0_117 = arith.constant 0 : index
    %c0_118 = arith.constant 0 : index
    %285 = vector.load %arg25[%c0_116, %c0_117, %c0_118] : memref<2x32x32xf32, #tpu.memory_space<vmem>>, vector<1x32x32xf32>
    %286 = vector.shape_cast %285 : vector<1x32x32xf32> to vector<32x32xf32>
    %cst_119 = arith.constant dense<0.000000e+00> : vector<8x32xf32>
    %287 = tpu.matmul %277, %286, %cst_119 {dimension_numbers = #tpu.dot_dimension_numbers<[1], [0], [0], [1], [0, 0, 1, 1], [], []>} : vector<8x32xf32>, vector<32x32xf32>, vector<8x32xf32> -> vector<8x32xf32>
    %c0_120 = arith.constant 0 : index
    %c0_121 = arith.constant 0 : index
    %c0_122 = arith.constant 0 : index
    %288 = vector.load %arg26[%c0_120, %c0_121, %c0_122] : memref<2x1x32xf32, #tpu.memory_space<vmem>>, vector<1x1x32xf32>
    %289 = vector.shape_cast %288 : vector<1x1x32xf32> to vector<1x32xf32>
    %290 = vector.broadcast %289 : vector<1x32xf32> to vector<8x32xf32>
    %291 = arith.addf %287, %290 : vector<8x32xf32>
    %292 = arith.negf %291 : vector<8x32xf32>
    %293 = math.exp %292 : vector<8x32xf32>
    %cst_123 = arith.constant 1.000000e+00 : f32
    %294 = vector.broadcast %cst_123 : f32 to vector<8x32xf32>
    %295 = arith.addf %294, %293 : vector<8x32xf32>
    %296 = arith.divf %294, %295 : vector<8x32xf32>
    %297 = arith.mulf %284, %296 : vector<8x32xf32>
    %cst_124 = arith.constant 0.000000e+00 : f32
    %298 = vector.broadcast %cst_124 : f32 to vector<3x32xf32>
    %299 = tpu.concatenate %298, %297, %298 in 0 : vector<3x32xf32>, vector<8x32xf32>, vector<3x32xf32> -> vector<14x32xf32>
    %c0_125 = arith.constant 0 : index
    %c0_126 = arith.constant 0 : index
    %c0_127 = arith.constant 0 : index
    %300 = vector.load %arg27[%c0_125, %c0_126, %c0_127] : memref<2x7x32xf32, #tpu.memory_space<vmem>>, vector<1x7x32xf32>
    %301 = vector.shape_cast %300 : vector<1x7x32xf32> to vector<7x32xf32>
    %cst_128 = arith.constant 0.000000e+00 : f32
    %302 = vector.broadcast %cst_128 : f32 to vector<8x32xf32>
    %303 = vector.extract_strided_slice %299 {offsets = [0, 0], sizes = [8, 32], strides = [1, 1]} : vector<14x32xf32> to vector<8x32xf32>
    %304 = vector.extract_strided_slice %301 {offsets = [0, 0], sizes = [1, 32], strides = [1, 1]} : vector<7x32xf32> to vector<1x32xf32>
    %305 = vector.broadcast %304 : vector<1x32xf32> to vector<8x32xf32>
    %306 = arith.mulf %303, %305 : vector<8x32xf32>
    %307 = arith.addf %302, %306 : vector<8x32xf32>
    %308 = vector.extract_strided_slice %299 {offsets = [1, 0], sizes = [8, 32], strides = [1, 1]} : vector<14x32xf32> to vector<8x32xf32>
    %309 = vector.extract_strided_slice %301 {offsets = [1, 0], sizes = [1, 32], strides = [1, 1]} : vector<7x32xf32> to vector<1x32xf32>
    %310 = vector.broadcast %309 : vector<1x32xf32> to vector<8x32xf32>
    %311 = arith.mulf %308, %310 : vector<8x32xf32>
    %312 = arith.addf %307, %311 : vector<8x32xf32>
    %313 = vector.extract_strided_slice %299 {offsets = [2, 0], sizes = [8, 32], strides = [1, 1]} : vector<14x32xf32> to vector<8x32xf32>
    %314 = vector.extract_strided_slice %301 {offsets = [2, 0], sizes = [1, 32], strides = [1, 1]} : vector<7x32xf32> to vector<1x32xf32>
    %315 = vector.broadcast %314 : vector<1x32xf32> to vector<8x32xf32>
    %316 = arith.mulf %313, %315 : vector<8x32xf32>
    %317 = arith.addf %312, %316 : vector<8x32xf32>
    %318 = vector.extract_strided_slice %299 {offsets = [3, 0], sizes = [8, 32], strides = [1, 1]} : vector<14x32xf32> to vector<8x32xf32>
    %319 = vector.extract_strided_slice %301 {offsets = [3, 0], sizes = [1, 32], strides = [1, 1]} : vector<7x32xf32> to vector<1x32xf32>
    %320 = vector.broadcast %319 : vector<1x32xf32> to vector<8x32xf32>
    %321 = arith.mulf %318, %320 : vector<8x32xf32>
    %322 = arith.addf %317, %321 : vector<8x32xf32>
    %323 = vector.extract_strided_slice %299 {offsets = [4, 0], sizes = [8, 32], strides = [1, 1]} : vector<14x32xf32> to vector<8x32xf32>
    %324 = vector.extract_strided_slice %301 {offsets = [4, 0], sizes = [1, 32], strides = [1, 1]} : vector<7x32xf32> to vector<1x32xf32>
    %325 = vector.broadcast %324 : vector<1x32xf32> to vector<8x32xf32>
    %326 = arith.mulf %323, %325 : vector<8x32xf32>
    %327 = arith.addf %322, %326 : vector<8x32xf32>
    %328 = vector.extract_strided_slice %299 {offsets = [5, 0], sizes = [8, 32], strides = [1, 1]} : vector<14x32xf32> to vector<8x32xf32>
    %329 = vector.extract_strided_slice %301 {offsets = [5, 0], sizes = [1, 32], strides = [1, 1]} : vector<7x32xf32> to vector<1x32xf32>
    %330 = vector.broadcast %329 : vector<1x32xf32> to vector<8x32xf32>
    %331 = arith.mulf %328, %330 : vector<8x32xf32>
    %332 = arith.addf %327, %331 : vector<8x32xf32>
    %333 = vector.extract_strided_slice %299 {offsets = [6, 0], sizes = [8, 32], strides = [1, 1]} : vector<14x32xf32> to vector<8x32xf32>
    %334 = vector.extract_strided_slice %301 {offsets = [6, 0], sizes = [1, 32], strides = [1, 1]} : vector<7x32xf32> to vector<1x32xf32>
    %335 = vector.broadcast %334 : vector<1x32xf32> to vector<8x32xf32>
    %336 = arith.mulf %333, %335 : vector<8x32xf32>
    %337 = arith.addf %332, %336 : vector<8x32xf32>
    %c0_129 = arith.constant 0 : index
    %c0_130 = arith.constant 0 : index
    %c0_131 = arith.constant 0 : index
    %338 = vector.load %arg28[%c0_129, %c0_130, %c0_131] : memref<2x1x32xf32, #tpu.memory_space<vmem>>, vector<1x1x32xf32>
    %339 = vector.shape_cast %338 : vector<1x1x32xf32> to vector<1x32xf32>
    %340 = vector.broadcast %339 : vector<1x32xf32> to vector<8x32xf32>
    %341 = arith.mulf %337, %340 : vector<8x32xf32>
    %c0_132 = arith.constant 0 : index
    %c0_133 = arith.constant 0 : index
    %c0_134 = arith.constant 0 : index
    %342 = vector.load %arg29[%c0_132, %c0_133, %c0_134] : memref<2x1x32xf32, #tpu.memory_space<vmem>>, vector<1x1x32xf32>
    %343 = vector.shape_cast %342 : vector<1x1x32xf32> to vector<1x32xf32>
    %344 = vector.broadcast %343 : vector<1x32xf32> to vector<8x32xf32>
    %345 = arith.addf %341, %344 : vector<8x32xf32>
    %346 = arith.negf %345 : vector<8x32xf32>
    %347 = math.exp %346 : vector<8x32xf32>
    %cst_135 = arith.constant 1.000000e+00 : f32
    %348 = vector.broadcast %cst_135 : f32 to vector<8x32xf32>
    %349 = arith.addf %348, %347 : vector<8x32xf32>
    %350 = arith.divf %348, %349 : vector<8x32xf32>
    %351 = arith.mulf %345, %350 : vector<8x32xf32>
    %c0_136 = arith.constant 0 : index
    %c0_137 = arith.constant 0 : index
    %c0_138 = arith.constant 0 : index
    %352 = vector.load %arg30[%c0_136, %c0_137, %c0_138] : memref<2x32x32xf32, #tpu.memory_space<vmem>>, vector<1x32x32xf32>
    %353 = vector.shape_cast %352 : vector<1x32x32xf32> to vector<32x32xf32>
    %cst_139 = arith.constant dense<0.000000e+00> : vector<8x32xf32>
    %354 = tpu.matmul %351, %353, %cst_139 {dimension_numbers = #tpu.dot_dimension_numbers<[1], [0], [0], [1], [0, 0, 1, 1], [], []>} : vector<8x32xf32>, vector<32x32xf32>, vector<8x32xf32> -> vector<8x32xf32>
    %355 = arith.addf %253, %354 : vector<8x32xf32>
    %c0_140 = arith.constant 0 : index
    %c0_141 = arith.constant 0 : index
    %c0_142 = arith.constant 0 : index
    %356 = vector.load %arg31[%c0_140, %c0_141, %c0_142] : memref<2x1x32xf32, #tpu.memory_space<vmem>>, vector<1x1x32xf32>
    %357 = vector.shape_cast %356 : vector<1x1x32xf32> to vector<1x32xf32>
    %358 = vector.broadcast %357 : vector<1x32xf32> to vector<8x32xf32>
    %359 = arith.addf %355, %358 : vector<8x32xf32>
    %360 = vector.extract_strided_slice %40 {offsets = [3, 0], sizes = [1, 32], strides = [1, 1]} : vector<5x32xf32> to vector<1x32xf32>
    %361 = vector.extract_strided_slice %42 {offsets = [3, 0], sizes = [1, 32], strides = [1, 1]} : vector<5x32xf32> to vector<1x32xf32>
    %cst_143 = arith.constant dense<0.000000e+00> : vector<8xf32>
    %362 = vector.multi_reduction <add>, %359, %cst_143 [1] : vector<8x32xf32> to vector<8xf32>
    %363 = vector.shape_cast %362 : vector<8xf32> to vector<8x1xf32>
    %cst_144 = arith.constant 3.200000e+01 : f32
    %364 = vector.broadcast %cst_144 : f32 to vector<8x1xf32>
    %365 = arith.divf %363, %364 : vector<8x1xf32>
    %366 = vector.broadcast %365 : vector<8x1xf32> to vector<8x32xf32>
    %367 = arith.subf %359, %366 : vector<8x32xf32>
    %368 = arith.mulf %367, %367 : vector<8x32xf32>
    %cst_145 = arith.constant dense<0.000000e+00> : vector<8xf32>
    %369 = vector.multi_reduction <add>, %368, %cst_145 [1] : vector<8x32xf32> to vector<8xf32>
    %370 = vector.shape_cast %369 : vector<8xf32> to vector<8x1xf32>
    %cst_146 = arith.constant 3.200000e+01 : f32
    %371 = vector.broadcast %cst_146 : f32 to vector<8x1xf32>
    %372 = arith.divf %370, %371 : vector<8x1xf32>
    %373 = vector.broadcast %365 : vector<8x1xf32> to vector<8x32xf32>
    %374 = arith.subf %359, %373 : vector<8x32xf32>
    %cst_147 = arith.constant 9.99999996E-13 : f32
    %375 = vector.broadcast %cst_147 : f32 to vector<8x1xf32>
    %376 = arith.addf %372, %375 : vector<8x1xf32>
    %377 = math.rsqrt %376 : vector<8x1xf32>
    %378 = vector.broadcast %377 : vector<8x1xf32> to vector<8x32xf32>
    %379 = arith.mulf %374, %378 : vector<8x32xf32>
    %380 = vector.broadcast %360 : vector<1x32xf32> to vector<8x32xf32>
    %381 = arith.mulf %379, %380 : vector<8x32xf32>
    %382 = vector.broadcast %361 : vector<1x32xf32> to vector<8x32xf32>
    %383 = arith.addf %381, %382 : vector<8x32xf32>
    %c0_148 = arith.constant 0 : index
    %c0_149 = arith.constant 0 : index
    %c0_150 = arith.constant 0 : index
    %384 = vector.load %arg32[%c0_148, %c0_149, %c0_150] : memref<2x32x64xf32, #tpu.memory_space<vmem>>, vector<1x32x64xf32>
    %385 = vector.shape_cast %384 : vector<1x32x64xf32> to vector<32x64xf32>
    %cst_151 = arith.constant dense<0.000000e+00> : vector<8x64xf32>
    %386 = tpu.matmul %383, %385, %cst_151 {dimension_numbers = #tpu.dot_dimension_numbers<[1], [0], [0], [1], [0, 0, 1, 1], [], []>} : vector<8x32xf32>, vector<32x64xf32>, vector<8x64xf32> -> vector<8x64xf32>
    %c0_152 = arith.constant 0 : index
    %c0_153 = arith.constant 0 : index
    %c0_154 = arith.constant 0 : index
    %387 = vector.load %arg33[%c0_152, %c0_153, %c0_154] : memref<2x1x64xf32, #tpu.memory_space<vmem>>, vector<1x1x64xf32>
    %388 = vector.shape_cast %387 : vector<1x1x64xf32> to vector<1x64xf32>
    %389 = vector.broadcast %388 : vector<1x64xf32> to vector<8x64xf32>
    %390 = arith.addf %386, %389 : vector<8x64xf32>
    %391 = arith.negf %390 : vector<8x64xf32>
    %392 = math.exp %391 : vector<8x64xf32>
    %cst_155 = arith.constant 1.000000e+00 : f32
    %393 = vector.broadcast %cst_155 : f32 to vector<8x64xf32>
    %394 = arith.addf %393, %392 : vector<8x64xf32>
    %395 = arith.divf %393, %394 : vector<8x64xf32>
    %396 = arith.mulf %390, %395 : vector<8x64xf32>
    %c0_156 = arith.constant 0 : index
    %c0_157 = arith.constant 0 : index
    %c0_158 = arith.constant 0 : index
    %397 = vector.load %arg34[%c0_156, %c0_157, %c0_158] : memref<2x64x32xf32, #tpu.memory_space<vmem>>, vector<1x64x32xf32>
    %398 = vector.shape_cast %397 : vector<1x64x32xf32> to vector<64x32xf32>
    %cst_159 = arith.constant dense<0.000000e+00> : vector<8x32xf32>
    %399 = tpu.matmul %396, %398, %cst_159 {dimension_numbers = #tpu.dot_dimension_numbers<[1], [0], [0], [1], [0, 0, 1, 1], [], []>} : vector<8x64xf32>, vector<64x32xf32>, vector<8x32xf32> -> vector<8x32xf32>
    %c0_160 = arith.constant 0 : index
    %c0_161 = arith.constant 0 : index
    %c0_162 = arith.constant 0 : index
    %400 = vector.load %arg35[%c0_160, %c0_161, %c0_162] : memref<2x1x32xf32, #tpu.memory_space<vmem>>, vector<1x1x32xf32>
    %401 = vector.shape_cast %400 : vector<1x1x32xf32> to vector<1x32xf32>
    %402 = vector.broadcast %401 : vector<1x32xf32> to vector<8x32xf32>
    %403 = arith.addf %399, %402 : vector<8x32xf32>
    %cst_163 = arith.constant 5.000000e-01 : f32
    %404 = vector.broadcast %cst_163 : f32 to vector<8x32xf32>
    %405 = arith.mulf %404, %403 : vector<8x32xf32>
    %406 = arith.addf %359, %405 : vector<8x32xf32>
    %407 = vector.extract_strided_slice %40 {offsets = [4, 0], sizes = [1, 32], strides = [1, 1]} : vector<5x32xf32> to vector<1x32xf32>
    %408 = vector.extract_strided_slice %42 {offsets = [4, 0], sizes = [1, 32], strides = [1, 1]} : vector<5x32xf32> to vector<1x32xf32>
    %cst_164 = arith.constant dense<0.000000e+00> : vector<8xf32>
    %409 = vector.multi_reduction <add>, %406, %cst_164 [1] : vector<8x32xf32> to vector<8xf32>
    %410 = vector.shape_cast %409 : vector<8xf32> to vector<8x1xf32>
    %cst_165 = arith.constant 3.200000e+01 : f32
    %411 = vector.broadcast %cst_165 : f32 to vector<8x1xf32>
    %412 = arith.divf %410, %411 : vector<8x1xf32>
    %413 = vector.broadcast %412 : vector<8x1xf32> to vector<8x32xf32>
    %414 = arith.subf %406, %413 : vector<8x32xf32>
    %415 = arith.mulf %414, %414 : vector<8x32xf32>
    %cst_166 = arith.constant dense<0.000000e+00> : vector<8xf32>
    %416 = vector.multi_reduction <add>, %415, %cst_166 [1] : vector<8x32xf32> to vector<8xf32>
    %417 = vector.shape_cast %416 : vector<8xf32> to vector<8x1xf32>
    %cst_167 = arith.constant 3.200000e+01 : f32
    %418 = vector.broadcast %cst_167 : f32 to vector<8x1xf32>
    %419 = arith.divf %417, %418 : vector<8x1xf32>
    %420 = vector.broadcast %412 : vector<8x1xf32> to vector<8x32xf32>
    %421 = arith.subf %406, %420 : vector<8x32xf32>
    %cst_168 = arith.constant 9.99999996E-13 : f32
    %422 = vector.broadcast %cst_168 : f32 to vector<8x1xf32>
    %423 = arith.addf %419, %422 : vector<8x1xf32>
    %424 = math.rsqrt %423 : vector<8x1xf32>
    %425 = vector.broadcast %424 : vector<8x1xf32> to vector<8x32xf32>
    %426 = arith.mulf %421, %425 : vector<8x32xf32>
    %427 = vector.broadcast %407 : vector<1x32xf32> to vector<8x32xf32>
    %428 = arith.mulf %426, %427 : vector<8x32xf32>
    %429 = vector.broadcast %408 : vector<1x32xf32> to vector<8x32xf32>
    %430 = arith.addf %428, %429 : vector<8x32xf32>
    %c1 = arith.constant 1 : index
    %c0_169 = arith.constant 0 : index
    %c0_170 = arith.constant 0 : index
    %431 = vector.load %arg10[%c1, %c0_169, %c0_170] : memref<2x5x32xf32, #tpu.memory_space<vmem>>, vector<1x5x32xf32>
    %432 = vector.shape_cast %431 : vector<1x5x32xf32> to vector<5x32xf32>
    %c1_171 = arith.constant 1 : index
    %c0_172 = arith.constant 0 : index
    %c0_173 = arith.constant 0 : index
    %433 = vector.load %arg11[%c1_171, %c0_172, %c0_173] : memref<2x5x32xf32, #tpu.memory_space<vmem>>, vector<1x5x32xf32>
    %434 = vector.shape_cast %433 : vector<1x5x32xf32> to vector<5x32xf32>
    %435 = vector.extract_strided_slice %432 {offsets = [0, 0], sizes = [1, 32], strides = [1, 1]} : vector<5x32xf32> to vector<1x32xf32>
    %436 = vector.extract_strided_slice %434 {offsets = [0, 0], sizes = [1, 32], strides = [1, 1]} : vector<5x32xf32> to vector<1x32xf32>
    %cst_174 = arith.constant dense<0.000000e+00> : vector<8xf32>
    %437 = vector.multi_reduction <add>, %430, %cst_174 [1] : vector<8x32xf32> to vector<8xf32>
    %438 = vector.shape_cast %437 : vector<8xf32> to vector<8x1xf32>
    %cst_175 = arith.constant 3.200000e+01 : f32
    %439 = vector.broadcast %cst_175 : f32 to vector<8x1xf32>
    %440 = arith.divf %438, %439 : vector<8x1xf32>
    %441 = vector.broadcast %440 : vector<8x1xf32> to vector<8x32xf32>
    %442 = arith.subf %430, %441 : vector<8x32xf32>
    %443 = arith.mulf %442, %442 : vector<8x32xf32>
    %cst_176 = arith.constant dense<0.000000e+00> : vector<8xf32>
    %444 = vector.multi_reduction <add>, %443, %cst_176 [1] : vector<8x32xf32> to vector<8xf32>
    %445 = vector.shape_cast %444 : vector<8xf32> to vector<8x1xf32>
    %cst_177 = arith.constant 3.200000e+01 : f32
    %446 = vector.broadcast %cst_177 : f32 to vector<8x1xf32>
    %447 = arith.divf %445, %446 : vector<8x1xf32>
    %448 = vector.broadcast %440 : vector<8x1xf32> to vector<8x32xf32>
    %449 = arith.subf %430, %448 : vector<8x32xf32>
    %cst_178 = arith.constant 9.99999996E-13 : f32
    %450 = vector.broadcast %cst_178 : f32 to vector<8x1xf32>
    %451 = arith.addf %447, %450 : vector<8x1xf32>
    %452 = math.rsqrt %451 : vector<8x1xf32>
    %453 = vector.broadcast %452 : vector<8x1xf32> to vector<8x32xf32>
    %454 = arith.mulf %449, %453 : vector<8x32xf32>
    %455 = vector.broadcast %435 : vector<1x32xf32> to vector<8x32xf32>
    %456 = arith.mulf %454, %455 : vector<8x32xf32>
    %457 = vector.broadcast %436 : vector<1x32xf32> to vector<8x32xf32>
    %458 = arith.addf %456, %457 : vector<8x32xf32>
    %c1_179 = arith.constant 1 : index
    %c0_180 = arith.constant 0 : index
    %c0_181 = arith.constant 0 : index
    %459 = vector.load %arg12[%c1_179, %c0_180, %c0_181] : memref<2x32x64xf32, #tpu.memory_space<vmem>>, vector<1x32x64xf32>
    %460 = vector.shape_cast %459 : vector<1x32x64xf32> to vector<32x64xf32>
    %cst_182 = arith.constant dense<0.000000e+00> : vector<8x64xf32>
    %461 = tpu.matmul %458, %460, %cst_182 {dimension_numbers = #tpu.dot_dimension_numbers<[1], [0], [0], [1], [0, 0, 1, 1], [], []>} : vector<8x32xf32>, vector<32x64xf32>, vector<8x64xf32> -> vector<8x64xf32>
    %c1_183 = arith.constant 1 : index
    %c0_184 = arith.constant 0 : index
    %c0_185 = arith.constant 0 : index
    %462 = vector.load %arg13[%c1_183, %c0_184, %c0_185] : memref<2x1x64xf32, #tpu.memory_space<vmem>>, vector<1x1x64xf32>
    %463 = vector.shape_cast %462 : vector<1x1x64xf32> to vector<1x64xf32>
    %464 = vector.broadcast %463 : vector<1x64xf32> to vector<8x64xf32>
    %465 = arith.addf %461, %464 : vector<8x64xf32>
    %466 = arith.negf %465 : vector<8x64xf32>
    %467 = math.exp %466 : vector<8x64xf32>
    %cst_186 = arith.constant 1.000000e+00 : f32
    %468 = vector.broadcast %cst_186 : f32 to vector<8x64xf32>
    %469 = arith.addf %468, %467 : vector<8x64xf32>
    %470 = arith.divf %468, %469 : vector<8x64xf32>
    %471 = arith.mulf %465, %470 : vector<8x64xf32>
    %c1_187 = arith.constant 1 : index
    %c0_188 = arith.constant 0 : index
    %c0_189 = arith.constant 0 : index
    %472 = vector.load %arg14[%c1_187, %c0_188, %c0_189] : memref<2x64x32xf32, #tpu.memory_space<vmem>>, vector<1x64x32xf32>
    %473 = vector.shape_cast %472 : vector<1x64x32xf32> to vector<64x32xf32>
    %cst_190 = arith.constant dense<0.000000e+00> : vector<8x32xf32>
    %474 = tpu.matmul %471, %473, %cst_190 {dimension_numbers = #tpu.dot_dimension_numbers<[1], [0], [0], [1], [0, 0, 1, 1], [], []>} : vector<8x64xf32>, vector<64x32xf32>, vector<8x32xf32> -> vector<8x32xf32>
    %c1_191 = arith.constant 1 : index
    %c0_192 = arith.constant 0 : index
    %c0_193 = arith.constant 0 : index
    %475 = vector.load %arg15[%c1_191, %c0_192, %c0_193] : memref<2x1x32xf32, #tpu.memory_space<vmem>>, vector<1x1x32xf32>
    %476 = vector.shape_cast %475 : vector<1x1x32xf32> to vector<1x32xf32>
    %477 = vector.broadcast %476 : vector<1x32xf32> to vector<8x32xf32>
    %478 = arith.addf %474, %477 : vector<8x32xf32>
    %cst_194 = arith.constant 5.000000e-01 : f32
    %479 = vector.broadcast %cst_194 : f32 to vector<8x32xf32>
    %480 = arith.mulf %479, %478 : vector<8x32xf32>
    %481 = arith.addf %430, %480 : vector<8x32xf32>
    %482 = vector.extract_strided_slice %432 {offsets = [1, 0], sizes = [1, 32], strides = [1, 1]} : vector<5x32xf32> to vector<1x32xf32>
    %483 = vector.extract_strided_slice %434 {offsets = [1, 0], sizes = [1, 32], strides = [1, 1]} : vector<5x32xf32> to vector<1x32xf32>
    %cst_195 = arith.constant dense<0.000000e+00> : vector<8xf32>
    %484 = vector.multi_reduction <add>, %481, %cst_195 [1] : vector<8x32xf32> to vector<8xf32>
    %485 = vector.shape_cast %484 : vector<8xf32> to vector<8x1xf32>
    %cst_196 = arith.constant 3.200000e+01 : f32
    %486 = vector.broadcast %cst_196 : f32 to vector<8x1xf32>
    %487 = arith.divf %485, %486 : vector<8x1xf32>
    %488 = vector.broadcast %487 : vector<8x1xf32> to vector<8x32xf32>
    %489 = arith.subf %481, %488 : vector<8x32xf32>
    %490 = arith.mulf %489, %489 : vector<8x32xf32>
    %cst_197 = arith.constant dense<0.000000e+00> : vector<8xf32>
    %491 = vector.multi_reduction <add>, %490, %cst_197 [1] : vector<8x32xf32> to vector<8xf32>
    %492 = vector.shape_cast %491 : vector<8xf32> to vector<8x1xf32>
    %cst_198 = arith.constant 3.200000e+01 : f32
    %493 = vector.broadcast %cst_198 : f32 to vector<8x1xf32>
    %494 = arith.divf %492, %493 : vector<8x1xf32>
    %495 = vector.broadcast %487 : vector<8x1xf32> to vector<8x32xf32>
    %496 = arith.subf %481, %495 : vector<8x32xf32>
    %cst_199 = arith.constant 9.99999996E-13 : f32
    %497 = vector.broadcast %cst_199 : f32 to vector<8x1xf32>
    %498 = arith.addf %494, %497 : vector<8x1xf32>
    %499 = math.rsqrt %498 : vector<8x1xf32>
    %500 = vector.broadcast %499 : vector<8x1xf32> to vector<8x32xf32>
    %501 = arith.mulf %496, %500 : vector<8x32xf32>
    %502 = vector.broadcast %482 : vector<1x32xf32> to vector<8x32xf32>
    %503 = arith.mulf %501, %502 : vector<8x32xf32>
    %504 = vector.broadcast %483 : vector<1x32xf32> to vector<8x32xf32>
    %505 = arith.addf %503, %504 : vector<8x32xf32>
    %c1_200 = arith.constant 1 : index
    %c0_201 = arith.constant 0 : index
    %c0_202 = arith.constant 0 : index
    %506 = vector.load %arg16[%c1_200, %c0_201, %c0_202] : memref<2x32x96xf32, #tpu.memory_space<vmem>>, vector<1x32x96xf32>
    %507 = vector.shape_cast %506 : vector<1x32x96xf32> to vector<32x96xf32>
    %cst_203 = arith.constant dense<0.000000e+00> : vector<8x96xf32>
    %508 = tpu.matmul %505, %507, %cst_203 {dimension_numbers = #tpu.dot_dimension_numbers<[1], [0], [0], [1], [0, 0, 1, 1], [], []>} : vector<8x32xf32>, vector<32x96xf32>, vector<8x96xf32> -> vector<8x96xf32>
    %c1_204 = arith.constant 1 : index
    %c0_205 = arith.constant 0 : index
    %c0_206 = arith.constant 0 : index
    %509 = vector.load %arg17[%c1_204, %c0_205, %c0_206] : memref<2x1x96xf32, #tpu.memory_space<vmem>>, vector<1x1x96xf32>
    %510 = vector.shape_cast %509 : vector<1x1x96xf32> to vector<1x96xf32>
    %511 = vector.broadcast %510 : vector<1x96xf32> to vector<8x96xf32>
    %512 = arith.addf %508, %511 : vector<8x96xf32>
    %513 = vector.extract_strided_slice %512 {offsets = [0, 0], sizes = [8, 32], strides = [1, 1]} : vector<8x96xf32> to vector<8x32xf32>
    %514 = vector.extract_strided_slice %512 {offsets = [0, 32], sizes = [8, 32], strides = [1, 1]} : vector<8x96xf32> to vector<8x32xf32>
    %515 = vector.extract_strided_slice %512 {offsets = [0, 64], sizes = [8, 32], strides = [1, 1]} : vector<8x96xf32> to vector<8x32xf32>
    %c1_207 = arith.constant 1 : index
    %c0_208 = arith.constant 0 : index
    %c0_209 = arith.constant 0 : index
    %516 = vector.load %arg18[%c1_207, %c0_208, %c0_209] : memref<2x1x32xf32, #tpu.memory_space<vmem>>, vector<1x1x32xf32>
    %517 = vector.shape_cast %516 : vector<1x1x32xf32> to vector<1x32xf32>
    %518 = vector.broadcast %517 : vector<1x32xf32> to vector<8x32xf32>
    %519 = arith.addf %513, %518 : vector<8x32xf32>
    %c1_210 = arith.constant 1 : index
    %c0_211 = arith.constant 0 : index
    %c0_212 = arith.constant 0 : index
    %520 = vector.load %arg19[%c1_210, %c0_211, %c0_212] : memref<2x1x32xf32, #tpu.memory_space<vmem>>, vector<1x1x32xf32>
    %521 = vector.shape_cast %520 : vector<1x1x32xf32> to vector<1x32xf32>
    %522 = vector.broadcast %521 : vector<1x32xf32> to vector<8x32xf32>
    %523 = arith.addf %513, %522 : vector<8x32xf32>
    %524 = tpu.concatenate %523, %523, %523, %523, %523, %523, %523, %523 in 1 : vector<8x32xf32>, vector<8x32xf32>, vector<8x32xf32>, vector<8x32xf32>, vector<8x32xf32>, vector<8x32xf32>, vector<8x32xf32>, vector<8x32xf32> -> vector<8x256xf32>
    %c1_213 = arith.constant 1 : index
    %c0_214 = arith.constant 0 : index
    %c0_215 = arith.constant 0 : index
    %525 = vector.load %arg20[%c1_213, %c0_214, %c0_215] : memref<2x8x256xf32, #tpu.memory_space<vmem>>, vector<1x8x256xf32>
    %526 = vector.shape_cast %525 : vector<1x8x256xf32> to vector<8x256xf32>
    %527 = arith.mulf %524, %526 : vector<8x256xf32>
    %cst_216 = arith.constant dense<0.000000e+00> : vector<8x32xf32>
    %528 = tpu.matmul %527, %38, %cst_216 {dimension_numbers = #tpu.dot_dimension_numbers<[1], [0], [0], [1], [0, 0, 1, 1], [], []>} : vector<8x256xf32>, vector<256x32xf32>, vector<8x32xf32> -> vector<8x32xf32>
    %529 = vector.extract_strided_slice %519 {offsets = [0, 0], sizes = [8, 8], strides = [1, 1]} : vector<8x32xf32> to vector<8x8xf32>
    %530 = vector.extract_strided_slice %514 {offsets = [0, 0], sizes = [8, 8], strides = [1, 1]} : vector<8x32xf32> to vector<8x8xf32>
    %cst_217 = arith.constant dense<0.000000e+00> : vector<8x8xf32>
    %531 = tpu.matmul %529, %530, %cst_217 {dimension_numbers = #tpu.dot_dimension_numbers<[1], [1], [0], [0], [0, 0, 1, 0], [], []>} : vector<8x8xf32>, vector<8x8xf32>, vector<8x8xf32> -> vector<8x8xf32>
    %532 = vector.extract_strided_slice %528 {offsets = [0, 0], sizes = [8, 8], strides = [1, 1]} : vector<8x32xf32> to vector<8x8xf32>
    %533 = arith.addf %531, %532 : vector<8x8xf32>
    %cst_218 = arith.constant 0.353553385 : f32
    %534 = vector.broadcast %cst_218 : f32 to vector<8x8xf32>
    %535 = arith.mulf %533, %534 : vector<8x8xf32>
    %cst_219 = arith.constant -3.40282347E+38 : f32
    %536 = vector.shape_cast %3 : vector<1x8xi1> to vector<1x8xi1>
    %537 = vector.broadcast %536 : vector<1x8xi1> to vector<8x8xi1>
    %538 = vector.broadcast %cst_219 : f32 to vector<8x8xf32>
    %539 = arith.select %537, %535, %538 : vector<8x8xi1>, vector<8x8xf32>
    %cst_220 = arith.constant dense<0xFF800000> : vector<8xf32>
    %540 = vector.multi_reduction <maximumf>, %539, %cst_220 [1] : vector<8x8xf32> to vector<8xf32>
    %541 = vector.shape_cast %540 : vector<8xf32> to vector<8x1xf32>
    %542 = vector.broadcast %541 : vector<8x1xf32> to vector<8x8xf32>
    %543 = arith.subf %539, %542 : vector<8x8xf32>
    %544 = math.exp %543 : vector<8x8xf32>
    %cst_221 = arith.constant dense<0.000000e+00> : vector<8xf32>
    %545 = vector.multi_reduction <add>, %544, %cst_221 [1] : vector<8x8xf32> to vector<8xf32>
    %546 = vector.shape_cast %545 : vector<8xf32> to vector<8x1xf32>
    %547 = tpu.reciprocal %546 {approx = true} : vector<8x1xf32> -> vector<8x1xf32>
    %548 = vector.broadcast %547 : vector<8x1xf32> to vector<8x8xf32>
    %549 = arith.mulf %544, %548 : vector<8x8xf32>
    %cst_222 = arith.constant 0.000000e+00 : f32
    %550 = vector.shape_cast %3 : vector<1x8xi1> to vector<1x8xi1>
    %551 = vector.broadcast %550 : vector<1x8xi1> to vector<8x8xi1>
    %552 = vector.broadcast %cst_222 : f32 to vector<8x8xf32>
    %553 = arith.select %551, %549, %552 : vector<8x8xi1>, vector<8x8xf32>
    %554 = vector.extract_strided_slice %515 {offsets = [0, 0], sizes = [8, 8], strides = [1, 1]} : vector<8x32xf32> to vector<8x8xf32>
    %cst_223 = arith.constant dense<0.000000e+00> : vector<8x8xf32>
    %555 = tpu.matmul %553, %554, %cst_223 {dimension_numbers = #tpu.dot_dimension_numbers<[1], [0], [0], [1], [0, 0, 1, 1], [], []>} : vector<8x8xf32>, vector<8x8xf32>, vector<8x8xf32> -> vector<8x8xf32>
    %556 = vector.extract_strided_slice %519 {offsets = [0, 8], sizes = [8, 8], strides = [1, 1]} : vector<8x32xf32> to vector<8x8xf32>
    %557 = vector.extract_strided_slice %514 {offsets = [0, 8], sizes = [8, 8], strides = [1, 1]} : vector<8x32xf32> to vector<8x8xf32>
    %cst_224 = arith.constant dense<0.000000e+00> : vector<8x8xf32>
    %558 = tpu.matmul %556, %557, %cst_224 {dimension_numbers = #tpu.dot_dimension_numbers<[1], [1], [0], [0], [0, 0, 1, 0], [], []>} : vector<8x8xf32>, vector<8x8xf32>, vector<8x8xf32> -> vector<8x8xf32>
    %559 = vector.extract_strided_slice %528 {offsets = [0, 8], sizes = [8, 8], strides = [1, 1]} : vector<8x32xf32> to vector<8x8xf32>
    %560 = arith.addf %558, %559 : vector<8x8xf32>
    %cst_225 = arith.constant 0.353553385 : f32
    %561 = vector.broadcast %cst_225 : f32 to vector<8x8xf32>
    %562 = arith.mulf %560, %561 : vector<8x8xf32>
    %cst_226 = arith.constant -3.40282347E+38 : f32
    %563 = vector.shape_cast %3 : vector<1x8xi1> to vector<1x8xi1>
    %564 = vector.broadcast %563 : vector<1x8xi1> to vector<8x8xi1>
    %565 = vector.broadcast %cst_226 : f32 to vector<8x8xf32>
    %566 = arith.select %564, %562, %565 : vector<8x8xi1>, vector<8x8xf32>
    %cst_227 = arith.constant dense<0xFF800000> : vector<8xf32>
    %567 = vector.multi_reduction <maximumf>, %566, %cst_227 [1] : vector<8x8xf32> to vector<8xf32>
    %568 = vector.shape_cast %567 : vector<8xf32> to vector<8x1xf32>
    %569 = vector.broadcast %568 : vector<8x1xf32> to vector<8x8xf32>
    %570 = arith.subf %566, %569 : vector<8x8xf32>
    %571 = math.exp %570 : vector<8x8xf32>
    %cst_228 = arith.constant dense<0.000000e+00> : vector<8xf32>
    %572 = vector.multi_reduction <add>, %571, %cst_228 [1] : vector<8x8xf32> to vector<8xf32>
    %573 = vector.shape_cast %572 : vector<8xf32> to vector<8x1xf32>
    %574 = tpu.reciprocal %573 {approx = true} : vector<8x1xf32> -> vector<8x1xf32>
    %575 = vector.broadcast %574 : vector<8x1xf32> to vector<8x8xf32>
    %576 = arith.mulf %571, %575 : vector<8x8xf32>
    %cst_229 = arith.constant 0.000000e+00 : f32
    %577 = vector.shape_cast %3 : vector<1x8xi1> to vector<1x8xi1>
    %578 = vector.broadcast %577 : vector<1x8xi1> to vector<8x8xi1>
    %579 = vector.broadcast %cst_229 : f32 to vector<8x8xf32>
    %580 = arith.select %578, %576, %579 : vector<8x8xi1>, vector<8x8xf32>
    %581 = vector.extract_strided_slice %515 {offsets = [0, 8], sizes = [8, 8], strides = [1, 1]} : vector<8x32xf32> to vector<8x8xf32>
    %cst_230 = arith.constant dense<0.000000e+00> : vector<8x8xf32>
    %582 = tpu.matmul %580, %581, %cst_230 {dimension_numbers = #tpu.dot_dimension_numbers<[1], [0], [0], [1], [0, 0, 1, 1], [], []>} : vector<8x8xf32>, vector<8x8xf32>, vector<8x8xf32> -> vector<8x8xf32>
    %583 = vector.extract_strided_slice %519 {offsets = [0, 16], sizes = [8, 8], strides = [1, 1]} : vector<8x32xf32> to vector<8x8xf32>
    %584 = vector.extract_strided_slice %514 {offsets = [0, 16], sizes = [8, 8], strides = [1, 1]} : vector<8x32xf32> to vector<8x8xf32>
    %cst_231 = arith.constant dense<0.000000e+00> : vector<8x8xf32>
    %585 = tpu.matmul %583, %584, %cst_231 {dimension_numbers = #tpu.dot_dimension_numbers<[1], [1], [0], [0], [0, 0, 1, 0], [], []>} : vector<8x8xf32>, vector<8x8xf32>, vector<8x8xf32> -> vector<8x8xf32>
    %586 = vector.extract_strided_slice %528 {offsets = [0, 16], sizes = [8, 8], strides = [1, 1]} : vector<8x32xf32> to vector<8x8xf32>
    %587 = arith.addf %585, %586 : vector<8x8xf32>
    %cst_232 = arith.constant 0.353553385 : f32
    %588 = vector.broadcast %cst_232 : f32 to vector<8x8xf32>
    %589 = arith.mulf %587, %588 : vector<8x8xf32>
    %cst_233 = arith.constant -3.40282347E+38 : f32
    %590 = vector.shape_cast %3 : vector<1x8xi1> to vector<1x8xi1>
    %591 = vector.broadcast %590 : vector<1x8xi1> to vector<8x8xi1>
    %592 = vector.broadcast %cst_233 : f32 to vector<8x8xf32>
    %593 = arith.select %591, %589, %592 : vector<8x8xi1>, vector<8x8xf32>
    %cst_234 = arith.constant dense<0xFF800000> : vector<8xf32>
    %594 = vector.multi_reduction <maximumf>, %593, %cst_234 [1] : vector<8x8xf32> to vector<8xf32>
    %595 = vector.shape_cast %594 : vector<8xf32> to vector<8x1xf32>
    %596 = vector.broadcast %595 : vector<8x1xf32> to vector<8x8xf32>
    %597 = arith.subf %593, %596 : vector<8x8xf32>
    %598 = math.exp %597 : vector<8x8xf32>
    %cst_235 = arith.constant dense<0.000000e+00> : vector<8xf32>
    %599 = vector.multi_reduction <add>, %598, %cst_235 [1] : vector<8x8xf32> to vector<8xf32>
    %600 = vector.shape_cast %599 : vector<8xf32> to vector<8x1xf32>
    %601 = tpu.reciprocal %600 {approx = true} : vector<8x1xf32> -> vector<8x1xf32>
    %602 = vector.broadcast %601 : vector<8x1xf32> to vector<8x8xf32>
    %603 = arith.mulf %598, %602 : vector<8x8xf32>
    %cst_236 = arith.constant 0.000000e+00 : f32
    %604 = vector.shape_cast %3 : vector<1x8xi1> to vector<1x8xi1>
    %605 = vector.broadcast %604 : vector<1x8xi1> to vector<8x8xi1>
    %606 = vector.broadcast %cst_236 : f32 to vector<8x8xf32>
    %607 = arith.select %605, %603, %606 : vector<8x8xi1>, vector<8x8xf32>
    %608 = vector.extract_strided_slice %515 {offsets = [0, 16], sizes = [8, 8], strides = [1, 1]} : vector<8x32xf32> to vector<8x8xf32>
    %cst_237 = arith.constant dense<0.000000e+00> : vector<8x8xf32>
    %609 = tpu.matmul %607, %608, %cst_237 {dimension_numbers = #tpu.dot_dimension_numbers<[1], [0], [0], [1], [0, 0, 1, 1], [], []>} : vector<8x8xf32>, vector<8x8xf32>, vector<8x8xf32> -> vector<8x8xf32>
    %610 = vector.extract_strided_slice %519 {offsets = [0, 24], sizes = [8, 8], strides = [1, 1]} : vector<8x32xf32> to vector<8x8xf32>
    %611 = vector.extract_strided_slice %514 {offsets = [0, 24], sizes = [8, 8], strides = [1, 1]} : vector<8x32xf32> to vector<8x8xf32>
    %cst_238 = arith.constant dense<0.000000e+00> : vector<8x8xf32>
    %612 = tpu.matmul %610, %611, %cst_238 {dimension_numbers = #tpu.dot_dimension_numbers<[1], [1], [0], [0], [0, 0, 1, 0], [], []>} : vector<8x8xf32>, vector<8x8xf32>, vector<8x8xf32> -> vector<8x8xf32>
    %613 = vector.extract_strided_slice %528 {offsets = [0, 24], sizes = [8, 8], strides = [1, 1]} : vector<8x32xf32> to vector<8x8xf32>
    %614 = arith.addf %612, %613 : vector<8x8xf32>
    %cst_239 = arith.constant 0.353553385 : f32
    %615 = vector.broadcast %cst_239 : f32 to vector<8x8xf32>
    %616 = arith.mulf %614, %615 : vector<8x8xf32>
    %cst_240 = arith.constant -3.40282347E+38 : f32
    %617 = vector.shape_cast %3 : vector<1x8xi1> to vector<1x8xi1>
    %618 = vector.broadcast %617 : vector<1x8xi1> to vector<8x8xi1>
    %619 = vector.broadcast %cst_240 : f32 to vector<8x8xf32>
    %620 = arith.select %618, %616, %619 : vector<8x8xi1>, vector<8x8xf32>
    %cst_241 = arith.constant dense<0xFF800000> : vector<8xf32>
    %621 = vector.multi_reduction <maximumf>, %620, %cst_241 [1] : vector<8x8xf32> to vector<8xf32>
    %622 = vector.shape_cast %621 : vector<8xf32> to vector<8x1xf32>
    %623 = vector.broadcast %622 : vector<8x1xf32> to vector<8x8xf32>
    %624 = arith.subf %620, %623 : vector<8x8xf32>
    %625 = math.exp %624 : vector<8x8xf32>
    %cst_242 = arith.constant dense<0.000000e+00> : vector<8xf32>
    %626 = vector.multi_reduction <add>, %625, %cst_242 [1] : vector<8x8xf32> to vector<8xf32>
    %627 = vector.shape_cast %626 : vector<8xf32> to vector<8x1xf32>
    %628 = tpu.reciprocal %627 {approx = true} : vector<8x1xf32> -> vector<8x1xf32>
    %629 = vector.broadcast %628 : vector<8x1xf32> to vector<8x8xf32>
    %630 = arith.mulf %625, %629 : vector<8x8xf32>
    %cst_243 = arith.constant 0.000000e+00 : f32
    %631 = vector.shape_cast %3 : vector<1x8xi1> to vector<1x8xi1>
    %632 = vector.broadcast %631 : vector<1x8xi1> to vector<8x8xi1>
    %633 = vector.broadcast %cst_243 : f32 to vector<8x8xf32>
    %634 = arith.select %632, %630, %633 : vector<8x8xi1>, vector<8x8xf32>
    %635 = vector.extract_strided_slice %515 {offsets = [0, 24], sizes = [8, 8], strides = [1, 1]} : vector<8x32xf32> to vector<8x8xf32>
    %cst_244 = arith.constant dense<0.000000e+00> : vector<8x8xf32>
    %636 = tpu.matmul %634, %635, %cst_244 {dimension_numbers = #tpu.dot_dimension_numbers<[1], [0], [0], [1], [0, 0, 1, 1], [], []>} : vector<8x8xf32>, vector<8x8xf32>, vector<8x8xf32> -> vector<8x8xf32>
    %637 = tpu.concatenate %555, %582, %609, %636 in 1 : vector<8x8xf32>, vector<8x8xf32>, vector<8x8xf32>, vector<8x8xf32> -> vector<8x32xf32>
    %c1_245 = arith.constant 1 : index
    %c0_246 = arith.constant 0 : index
    %c0_247 = arith.constant 0 : index
    %638 = vector.load %arg21[%c1_245, %c0_246, %c0_247] : memref<2x32x32xf32, #tpu.memory_space<vmem>>, vector<1x32x32xf32>
    %639 = vector.shape_cast %638 : vector<1x32x32xf32> to vector<32x32xf32>
    %cst_248 = arith.constant dense<0.000000e+00> : vector<8x32xf32>
    %640 = tpu.matmul %637, %639, %cst_248 {dimension_numbers = #tpu.dot_dimension_numbers<[1], [0], [0], [1], [0, 0, 1, 1], [], []>} : vector<8x32xf32>, vector<32x32xf32>, vector<8x32xf32> -> vector<8x32xf32>
    %641 = arith.addf %481, %640 : vector<8x32xf32>
    %c1_249 = arith.constant 1 : index
    %c0_250 = arith.constant 0 : index
    %c0_251 = arith.constant 0 : index
    %642 = vector.load %arg22[%c1_249, %c0_250, %c0_251] : memref<2x1x32xf32, #tpu.memory_space<vmem>>, vector<1x1x32xf32>
    %643 = vector.shape_cast %642 : vector<1x1x32xf32> to vector<1x32xf32>
    %644 = vector.broadcast %643 : vector<1x32xf32> to vector<8x32xf32>
    %645 = arith.addf %641, %644 : vector<8x32xf32>
    %646 = vector.extract_strided_slice %432 {offsets = [2, 0], sizes = [1, 32], strides = [1, 1]} : vector<5x32xf32> to vector<1x32xf32>
    %647 = vector.extract_strided_slice %434 {offsets = [2, 0], sizes = [1, 32], strides = [1, 1]} : vector<5x32xf32> to vector<1x32xf32>
    %cst_252 = arith.constant dense<0.000000e+00> : vector<8xf32>
    %648 = vector.multi_reduction <add>, %645, %cst_252 [1] : vector<8x32xf32> to vector<8xf32>
    %649 = vector.shape_cast %648 : vector<8xf32> to vector<8x1xf32>
    %cst_253 = arith.constant 3.200000e+01 : f32
    %650 = vector.broadcast %cst_253 : f32 to vector<8x1xf32>
    %651 = arith.divf %649, %650 : vector<8x1xf32>
    %652 = vector.broadcast %651 : vector<8x1xf32> to vector<8x32xf32>
    %653 = arith.subf %645, %652 : vector<8x32xf32>
    %654 = arith.mulf %653, %653 : vector<8x32xf32>
    %cst_254 = arith.constant dense<0.000000e+00> : vector<8xf32>
    %655 = vector.multi_reduction <add>, %654, %cst_254 [1] : vector<8x32xf32> to vector<8xf32>
    %656 = vector.shape_cast %655 : vector<8xf32> to vector<8x1xf32>
    %cst_255 = arith.constant 3.200000e+01 : f32
    %657 = vector.broadcast %cst_255 : f32 to vector<8x1xf32>
    %658 = arith.divf %656, %657 : vector<8x1xf32>
    %659 = vector.broadcast %651 : vector<8x1xf32> to vector<8x32xf32>
    %660 = arith.subf %645, %659 : vector<8x32xf32>
    %cst_256 = arith.constant 9.99999996E-13 : f32
    %661 = vector.broadcast %cst_256 : f32 to vector<8x1xf32>
    %662 = arith.addf %658, %661 : vector<8x1xf32>
    %663 = math.rsqrt %662 : vector<8x1xf32>
    %664 = vector.broadcast %663 : vector<8x1xf32> to vector<8x32xf32>
    %665 = arith.mulf %660, %664 : vector<8x32xf32>
    %666 = vector.broadcast %646 : vector<1x32xf32> to vector<8x32xf32>
    %667 = arith.mulf %665, %666 : vector<8x32xf32>
    %668 = vector.broadcast %647 : vector<1x32xf32> to vector<8x32xf32>
    %669 = arith.addf %667, %668 : vector<8x32xf32>
    %c1_257 = arith.constant 1 : index
    %c0_258 = arith.constant 0 : index
    %c0_259 = arith.constant 0 : index
    %670 = vector.load %arg23[%c1_257, %c0_258, %c0_259] : memref<2x32x32xf32, #tpu.memory_space<vmem>>, vector<1x32x32xf32>
    %671 = vector.shape_cast %670 : vector<1x32x32xf32> to vector<32x32xf32>
    %cst_260 = arith.constant dense<0.000000e+00> : vector<8x32xf32>
    %672 = tpu.matmul %669, %671, %cst_260 {dimension_numbers = #tpu.dot_dimension_numbers<[1], [0], [0], [1], [0, 0, 1, 1], [], []>} : vector<8x32xf32>, vector<32x32xf32>, vector<8x32xf32> -> vector<8x32xf32>
    %c1_261 = arith.constant 1 : index
    %c0_262 = arith.constant 0 : index
    %c0_263 = arith.constant 0 : index
    %673 = vector.load %arg24[%c1_261, %c0_262, %c0_263] : memref<2x1x32xf32, #tpu.memory_space<vmem>>, vector<1x1x32xf32>
    %674 = vector.shape_cast %673 : vector<1x1x32xf32> to vector<1x32xf32>
    %675 = vector.broadcast %674 : vector<1x32xf32> to vector<8x32xf32>
    %676 = arith.addf %672, %675 : vector<8x32xf32>
    %c1_264 = arith.constant 1 : index
    %c0_265 = arith.constant 0 : index
    %c0_266 = arith.constant 0 : index
    %677 = vector.load %arg25[%c1_264, %c0_265, %c0_266] : memref<2x32x32xf32, #tpu.memory_space<vmem>>, vector<1x32x32xf32>
    %678 = vector.shape_cast %677 : vector<1x32x32xf32> to vector<32x32xf32>
    %cst_267 = arith.constant dense<0.000000e+00> : vector<8x32xf32>
    %679 = tpu.matmul %669, %678, %cst_267 {dimension_numbers = #tpu.dot_dimension_numbers<[1], [0], [0], [1], [0, 0, 1, 1], [], []>} : vector<8x32xf32>, vector<32x32xf32>, vector<8x32xf32> -> vector<8x32xf32>
    %c1_268 = arith.constant 1 : index
    %c0_269 = arith.constant 0 : index
    %c0_270 = arith.constant 0 : index
    %680 = vector.load %arg26[%c1_268, %c0_269, %c0_270] : memref<2x1x32xf32, #tpu.memory_space<vmem>>, vector<1x1x32xf32>
    %681 = vector.shape_cast %680 : vector<1x1x32xf32> to vector<1x32xf32>
    %682 = vector.broadcast %681 : vector<1x32xf32> to vector<8x32xf32>
    %683 = arith.addf %679, %682 : vector<8x32xf32>
    %684 = arith.negf %683 : vector<8x32xf32>
    %685 = math.exp %684 : vector<8x32xf32>
    %cst_271 = arith.constant 1.000000e+00 : f32
    %686 = vector.broadcast %cst_271 : f32 to vector<8x32xf32>
    %687 = arith.addf %686, %685 : vector<8x32xf32>
    %688 = arith.divf %686, %687 : vector<8x32xf32>
    %689 = arith.mulf %676, %688 : vector<8x32xf32>
    %cst_272 = arith.constant 0.000000e+00 : f32
    %690 = vector.broadcast %cst_272 : f32 to vector<3x32xf32>
    %691 = tpu.concatenate %690, %689, %690 in 0 : vector<3x32xf32>, vector<8x32xf32>, vector<3x32xf32> -> vector<14x32xf32>
    %c1_273 = arith.constant 1 : index
    %c0_274 = arith.constant 0 : index
    %c0_275 = arith.constant 0 : index
    %692 = vector.load %arg27[%c1_273, %c0_274, %c0_275] : memref<2x7x32xf32, #tpu.memory_space<vmem>>, vector<1x7x32xf32>
    %693 = vector.shape_cast %692 : vector<1x7x32xf32> to vector<7x32xf32>
    %cst_276 = arith.constant 0.000000e+00 : f32
    %694 = vector.broadcast %cst_276 : f32 to vector<8x32xf32>
    %695 = vector.extract_strided_slice %691 {offsets = [0, 0], sizes = [8, 32], strides = [1, 1]} : vector<14x32xf32> to vector<8x32xf32>
    %696 = vector.extract_strided_slice %693 {offsets = [0, 0], sizes = [1, 32], strides = [1, 1]} : vector<7x32xf32> to vector<1x32xf32>
    %697 = vector.broadcast %696 : vector<1x32xf32> to vector<8x32xf32>
    %698 = arith.mulf %695, %697 : vector<8x32xf32>
    %699 = arith.addf %694, %698 : vector<8x32xf32>
    %700 = vector.extract_strided_slice %691 {offsets = [1, 0], sizes = [8, 32], strides = [1, 1]} : vector<14x32xf32> to vector<8x32xf32>
    %701 = vector.extract_strided_slice %693 {offsets = [1, 0], sizes = [1, 32], strides = [1, 1]} : vector<7x32xf32> to vector<1x32xf32>
    %702 = vector.broadcast %701 : vector<1x32xf32> to vector<8x32xf32>
    %703 = arith.mulf %700, %702 : vector<8x32xf32>
    %704 = arith.addf %699, %703 : vector<8x32xf32>
    %705 = vector.extract_strided_slice %691 {offsets = [2, 0], sizes = [8, 32], strides = [1, 1]} : vector<14x32xf32> to vector<8x32xf32>
    %706 = vector.extract_strided_slice %693 {offsets = [2, 0], sizes = [1, 32], strides = [1, 1]} : vector<7x32xf32> to vector<1x32xf32>
    %707 = vector.broadcast %706 : vector<1x32xf32> to vector<8x32xf32>
    %708 = arith.mulf %705, %707 : vector<8x32xf32>
    %709 = arith.addf %704, %708 : vector<8x32xf32>
    %710 = vector.extract_strided_slice %691 {offsets = [3, 0], sizes = [8, 32], strides = [1, 1]} : vector<14x32xf32> to vector<8x32xf32>
    %711 = vector.extract_strided_slice %693 {offsets = [3, 0], sizes = [1, 32], strides = [1, 1]} : vector<7x32xf32> to vector<1x32xf32>
    %712 = vector.broadcast %711 : vector<1x32xf32> to vector<8x32xf32>
    %713 = arith.mulf %710, %712 : vector<8x32xf32>
    %714 = arith.addf %709, %713 : vector<8x32xf32>
    %715 = vector.extract_strided_slice %691 {offsets = [4, 0], sizes = [8, 32], strides = [1, 1]} : vector<14x32xf32> to vector<8x32xf32>
    %716 = vector.extract_strided_slice %693 {offsets = [4, 0], sizes = [1, 32], strides = [1, 1]} : vector<7x32xf32> to vector<1x32xf32>
    %717 = vector.broadcast %716 : vector<1x32xf32> to vector<8x32xf32>
    %718 = arith.mulf %715, %717 : vector<8x32xf32>
    %719 = arith.addf %714, %718 : vector<8x32xf32>
    %720 = vector.extract_strided_slice %691 {offsets = [5, 0], sizes = [8, 32], strides = [1, 1]} : vector<14x32xf32> to vector<8x32xf32>
    %721 = vector.extract_strided_slice %693 {offsets = [5, 0], sizes = [1, 32], strides = [1, 1]} : vector<7x32xf32> to vector<1x32xf32>
    %722 = vector.broadcast %721 : vector<1x32xf32> to vector<8x32xf32>
    %723 = arith.mulf %720, %722 : vector<8x32xf32>
    %724 = arith.addf %719, %723 : vector<8x32xf32>
    %725 = vector.extract_strided_slice %691 {offsets = [6, 0], sizes = [8, 32], strides = [1, 1]} : vector<14x32xf32> to vector<8x32xf32>
    %726 = vector.extract_strided_slice %693 {offsets = [6, 0], sizes = [1, 32], strides = [1, 1]} : vector<7x32xf32> to vector<1x32xf32>
    %727 = vector.broadcast %726 : vector<1x32xf32> to vector<8x32xf32>
    %728 = arith.mulf %725, %727 : vector<8x32xf32>
    %729 = arith.addf %724, %728 : vector<8x32xf32>
    %c1_277 = arith.constant 1 : index
    %c0_278 = arith.constant 0 : index
    %c0_279 = arith.constant 0 : index
    %730 = vector.load %arg28[%c1_277, %c0_278, %c0_279] : memref<2x1x32xf32, #tpu.memory_space<vmem>>, vector<1x1x32xf32>
    %731 = vector.shape_cast %730 : vector<1x1x32xf32> to vector<1x32xf32>
    %732 = vector.broadcast %731 : vector<1x32xf32> to vector<8x32xf32>
    %733 = arith.mulf %729, %732 : vector<8x32xf32>
    %c1_280 = arith.constant 1 : index
    %c0_281 = arith.constant 0 : index
    %c0_282 = arith.constant 0 : index
    %734 = vector.load %arg29[%c1_280, %c0_281, %c0_282] : memref<2x1x32xf32, #tpu.memory_space<vmem>>, vector<1x1x32xf32>
    %735 = vector.shape_cast %734 : vector<1x1x32xf32> to vector<1x32xf32>
    %736 = vector.broadcast %735 : vector<1x32xf32> to vector<8x32xf32>
    %737 = arith.addf %733, %736 : vector<8x32xf32>
    %738 = arith.negf %737 : vector<8x32xf32>
    %739 = math.exp %738 : vector<8x32xf32>
    %cst_283 = arith.constant 1.000000e+00 : f32
    %740 = vector.broadcast %cst_283 : f32 to vector<8x32xf32>
    %741 = arith.addf %740, %739 : vector<8x32xf32>
    %742 = arith.divf %740, %741 : vector<8x32xf32>
    %743 = arith.mulf %737, %742 : vector<8x32xf32>
    %c1_284 = arith.constant 1 : index
    %c0_285 = arith.constant 0 : index
    %c0_286 = arith.constant 0 : index
    %744 = vector.load %arg30[%c1_284, %c0_285, %c0_286] : memref<2x32x32xf32, #tpu.memory_space<vmem>>, vector<1x32x32xf32>
    %745 = vector.shape_cast %744 : vector<1x32x32xf32> to vector<32x32xf32>
    %cst_287 = arith.constant dense<0.000000e+00> : vector<8x32xf32>
    %746 = tpu.matmul %743, %745, %cst_287 {dimension_numbers = #tpu.dot_dimension_numbers<[1], [0], [0], [1], [0, 0, 1, 1], [], []>} : vector<8x32xf32>, vector<32x32xf32>, vector<8x32xf32> -> vector<8x32xf32>
    %747 = arith.addf %645, %746 : vector<8x32xf32>
    %c1_288 = arith.constant 1 : index
    %c0_289 = arith.constant 0 : index
    %c0_290 = arith.constant 0 : index
    %748 = vector.load %arg31[%c1_288, %c0_289, %c0_290] : memref<2x1x32xf32, #tpu.memory_space<vmem>>, vector<1x1x32xf32>
    %749 = vector.shape_cast %748 : vector<1x1x32xf32> to vector<1x32xf32>
    %750 = vector.broadcast %749 : vector<1x32xf32> to vector<8x32xf32>
    %751 = arith.addf %747, %750 : vector<8x32xf32>
    %752 = vector.extract_strided_slice %432 {offsets = [3, 0], sizes = [1, 32], strides = [1, 1]} : vector<5x32xf32> to vector<1x32xf32>
    %753 = vector.extract_strided_slice %434 {offsets = [3, 0], sizes = [1, 32], strides = [1, 1]} : vector<5x32xf32> to vector<1x32xf32>
    %cst_291 = arith.constant dense<0.000000e+00> : vector<8xf32>
    %754 = vector.multi_reduction <add>, %751, %cst_291 [1] : vector<8x32xf32> to vector<8xf32>
    %755 = vector.shape_cast %754 : vector<8xf32> to vector<8x1xf32>
    %cst_292 = arith.constant 3.200000e+01 : f32
    %756 = vector.broadcast %cst_292 : f32 to vector<8x1xf32>
    %757 = arith.divf %755, %756 : vector<8x1xf32>
    %758 = vector.broadcast %757 : vector<8x1xf32> to vector<8x32xf32>
    %759 = arith.subf %751, %758 : vector<8x32xf32>
    %760 = arith.mulf %759, %759 : vector<8x32xf32>
    %cst_293 = arith.constant dense<0.000000e+00> : vector<8xf32>
    %761 = vector.multi_reduction <add>, %760, %cst_293 [1] : vector<8x32xf32> to vector<8xf32>
    %762 = vector.shape_cast %761 : vector<8xf32> to vector<8x1xf32>
    %cst_294 = arith.constant 3.200000e+01 : f32
    %763 = vector.broadcast %cst_294 : f32 to vector<8x1xf32>
    %764 = arith.divf %762, %763 : vector<8x1xf32>
    %765 = vector.broadcast %757 : vector<8x1xf32> to vector<8x32xf32>
    %766 = arith.subf %751, %765 : vector<8x32xf32>
    %cst_295 = arith.constant 9.99999996E-13 : f32
    %767 = vector.broadcast %cst_295 : f32 to vector<8x1xf32>
    %768 = arith.addf %764, %767 : vector<8x1xf32>
    %769 = math.rsqrt %768 : vector<8x1xf32>
    %770 = vector.broadcast %769 : vector<8x1xf32> to vector<8x32xf32>
    %771 = arith.mulf %766, %770 : vector<8x32xf32>
    %772 = vector.broadcast %752 : vector<1x32xf32> to vector<8x32xf32>
    %773 = arith.mulf %771, %772 : vector<8x32xf32>
    %774 = vector.broadcast %753 : vector<1x32xf32> to vector<8x32xf32>
    %775 = arith.addf %773, %774 : vector<8x32xf32>
    %c1_296 = arith.constant 1 : index
    %c0_297 = arith.constant 0 : index
    %c0_298 = arith.constant 0 : index
    %776 = vector.load %arg32[%c1_296, %c0_297, %c0_298] : memref<2x32x64xf32, #tpu.memory_space<vmem>>, vector<1x32x64xf32>
    %777 = vector.shape_cast %776 : vector<1x32x64xf32> to vector<32x64xf32>
    %cst_299 = arith.constant dense<0.000000e+00> : vector<8x64xf32>
    %778 = tpu.matmul %775, %777, %cst_299 {dimension_numbers = #tpu.dot_dimension_numbers<[1], [0], [0], [1], [0, 0, 1, 1], [], []>} : vector<8x32xf32>, vector<32x64xf32>, vector<8x64xf32> -> vector<8x64xf32>
    %c1_300 = arith.constant 1 : index
    %c0_301 = arith.constant 0 : index
    %c0_302 = arith.constant 0 : index
    %779 = vector.load %arg33[%c1_300, %c0_301, %c0_302] : memref<2x1x64xf32, #tpu.memory_space<vmem>>, vector<1x1x64xf32>
    %780 = vector.shape_cast %779 : vector<1x1x64xf32> to vector<1x64xf32>
    %781 = vector.broadcast %780 : vector<1x64xf32> to vector<8x64xf32>
    %782 = arith.addf %778, %781 : vector<8x64xf32>
    %783 = arith.negf %782 : vector<8x64xf32>
    %784 = math.exp %783 : vector<8x64xf32>
    %cst_303 = arith.constant 1.000000e+00 : f32
    %785 = vector.broadcast %cst_303 : f32 to vector<8x64xf32>
    %786 = arith.addf %785, %784 : vector<8x64xf32>
    %787 = arith.divf %785, %786 : vector<8x64xf32>
    %788 = arith.mulf %782, %787 : vector<8x64xf32>
    %c1_304 = arith.constant 1 : index
    %c0_305 = arith.constant 0 : index
    %c0_306 = arith.constant 0 : index
    %789 = vector.load %arg34[%c1_304, %c0_305, %c0_306] : memref<2x64x32xf32, #tpu.memory_space<vmem>>, vector<1x64x32xf32>
    %790 = vector.shape_cast %789 : vector<1x64x32xf32> to vector<64x32xf32>
    %cst_307 = arith.constant dense<0.000000e+00> : vector<8x32xf32>
    %791 = tpu.matmul %788, %790, %cst_307 {dimension_numbers = #tpu.dot_dimension_numbers<[1], [0], [0], [1], [0, 0, 1, 1], [], []>} : vector<8x64xf32>, vector<64x32xf32>, vector<8x32xf32> -> vector<8x32xf32>
    %c1_308 = arith.constant 1 : index
    %c0_309 = arith.constant 0 : index
    %c0_310 = arith.constant 0 : index
    %792 = vector.load %arg35[%c1_308, %c0_309, %c0_310] : memref<2x1x32xf32, #tpu.memory_space<vmem>>, vector<1x1x32xf32>
    %793 = vector.shape_cast %792 : vector<1x1x32xf32> to vector<1x32xf32>
    %794 = vector.broadcast %793 : vector<1x32xf32> to vector<8x32xf32>
    %795 = arith.addf %791, %794 : vector<8x32xf32>
    %cst_311 = arith.constant 5.000000e-01 : f32
    %796 = vector.broadcast %cst_311 : f32 to vector<8x32xf32>
    %797 = arith.mulf %796, %795 : vector<8x32xf32>
    %798 = arith.addf %751, %797 : vector<8x32xf32>
    %799 = vector.extract_strided_slice %432 {offsets = [4, 0], sizes = [1, 32], strides = [1, 1]} : vector<5x32xf32> to vector<1x32xf32>
    %800 = vector.extract_strided_slice %434 {offsets = [4, 0], sizes = [1, 32], strides = [1, 1]} : vector<5x32xf32> to vector<1x32xf32>
    %cst_312 = arith.constant dense<0.000000e+00> : vector<8xf32>
    %801 = vector.multi_reduction <add>, %798, %cst_312 [1] : vector<8x32xf32> to vector<8xf32>
    %802 = vector.shape_cast %801 : vector<8xf32> to vector<8x1xf32>
    %cst_313 = arith.constant 3.200000e+01 : f32
    %803 = vector.broadcast %cst_313 : f32 to vector<8x1xf32>
    %804 = arith.divf %802, %803 : vector<8x1xf32>
    %805 = vector.broadcast %804 : vector<8x1xf32> to vector<8x32xf32>
    %806 = arith.subf %798, %805 : vector<8x32xf32>
    %807 = arith.mulf %806, %806 : vector<8x32xf32>
    %cst_314 = arith.constant dense<0.000000e+00> : vector<8xf32>
    %808 = vector.multi_reduction <add>, %807, %cst_314 [1] : vector<8x32xf32> to vector<8xf32>
    %809 = vector.shape_cast %808 : vector<8xf32> to vector<8x1xf32>
    %cst_315 = arith.constant 3.200000e+01 : f32
    %810 = vector.broadcast %cst_315 : f32 to vector<8x1xf32>
    %811 = arith.divf %809, %810 : vector<8x1xf32>
    %812 = vector.broadcast %804 : vector<8x1xf32> to vector<8x32xf32>
    %813 = arith.subf %798, %812 : vector<8x32xf32>
    %cst_316 = arith.constant 9.99999996E-13 : f32
    %814 = vector.broadcast %cst_316 : f32 to vector<8x1xf32>
    %815 = arith.addf %811, %814 : vector<8x1xf32>
    %816 = math.rsqrt %815 : vector<8x1xf32>
    %817 = vector.broadcast %816 : vector<8x1xf32> to vector<8x32xf32>
    %818 = arith.mulf %813, %817 : vector<8x32xf32>
    %819 = vector.broadcast %799 : vector<1x32xf32> to vector<8x32xf32>
    %820 = arith.mulf %818, %819 : vector<8x32xf32>
    %821 = vector.broadcast %800 : vector<1x32xf32> to vector<8x32xf32>
    %822 = arith.addf %820, %821 : vector<8x32xf32>
    %c0_317 = arith.constant 0 : index
    %c0_318 = arith.constant 0 : index
    %823 = vector.load %arg6[%c0_317, %c0_318] : memref<2x32xf32, #tpu.memory_space<vmem>>, vector<2x32xf32>
    %824 = vector.extract_strided_slice %823 {offsets = [0, 0], sizes = [1, 32], strides = [1, 1]} : vector<2x32xf32> to vector<1x32xf32>
    %825 = vector.extract_strided_slice %823 {offsets = [1, 0], sizes = [1, 32], strides = [1, 1]} : vector<2x32xf32> to vector<1x32xf32>
    %cst_319 = arith.constant dense<0.000000e+00> : vector<8xf32>
    %826 = vector.multi_reduction <add>, %822, %cst_319 [1] : vector<8x32xf32> to vector<8xf32>
    %827 = vector.shape_cast %826 : vector<8xf32> to vector<8x1xf32>
    %cst_320 = arith.constant 3.200000e+01 : f32
    %828 = vector.broadcast %cst_320 : f32 to vector<8x1xf32>
    %829 = arith.divf %827, %828 : vector<8x1xf32>
    %830 = vector.broadcast %829 : vector<8x1xf32> to vector<8x32xf32>
    %831 = arith.subf %822, %830 : vector<8x32xf32>
    %832 = arith.mulf %831, %831 : vector<8x32xf32>
    %cst_321 = arith.constant dense<0.000000e+00> : vector<8xf32>
    %833 = vector.multi_reduction <add>, %832, %cst_321 [1] : vector<8x32xf32> to vector<8xf32>
    %834 = vector.shape_cast %833 : vector<8xf32> to vector<8x1xf32>
    %cst_322 = arith.constant 3.200000e+01 : f32
    %835 = vector.broadcast %cst_322 : f32 to vector<8x1xf32>
    %836 = arith.divf %834, %835 : vector<8x1xf32>
    %837 = vector.broadcast %829 : vector<8x1xf32> to vector<8x32xf32>
    %838 = arith.subf %822, %837 : vector<8x32xf32>
    %cst_323 = arith.constant 9.99999996E-13 : f32
    %839 = vector.broadcast %cst_323 : f32 to vector<8x1xf32>
    %840 = arith.addf %836, %839 : vector<8x1xf32>
    %841 = math.rsqrt %840 : vector<8x1xf32>
    %842 = vector.broadcast %841 : vector<8x1xf32> to vector<8x32xf32>
    %843 = arith.mulf %838, %842 : vector<8x32xf32>
    %844 = vector.broadcast %824 : vector<1x32xf32> to vector<8x32xf32>
    %845 = arith.mulf %843, %844 : vector<8x32xf32>
    %846 = vector.broadcast %825 : vector<1x32xf32> to vector<8x32xf32>
    %847 = arith.addf %845, %846 : vector<8x32xf32>
    %c0_324 = arith.constant 0 : index
    %c0_325 = arith.constant 0 : index
    %848 = vector.load %arg7[%c0_324, %c0_325] : memref<32x16xf32, #tpu.memory_space<vmem>>, vector<32x16xf32>
    %cst_326 = arith.constant dense<0.000000e+00> : vector<8x16xf32>
    %849 = tpu.matmul %847, %848, %cst_326 {dimension_numbers = #tpu.dot_dimension_numbers<[1], [0], [0], [1], [0, 0, 1, 1], [], []>} : vector<8x32xf32>, vector<32x16xf32>, vector<8x16xf32> -> vector<8x16xf32>
    %c0_327 = arith.constant 0 : index
    %c0_328 = arith.constant 0 : index
    %850 = vector.load %arg8[%c0_327, %c0_328] : memref<1x16xf32, #tpu.memory_space<vmem>>, vector<1x16xf32>
    %851 = vector.broadcast %850 : vector<1x16xf32> to vector<8x16xf32>
    %852 = arith.addf %849, %851 : vector<8x16xf32>
    %c0_329 = arith.constant 0 : index
    %c0_330 = arith.constant 0 : index
    %c0_331 = arith.constant 0 : index
    %853 = vector.load %arg36[%c0_329, %c0_330, %c0_331] : memref<1x8x16xf32, #tpu.memory_space<vmem>>, vector<1x8x16xf32>
    %854 = vector.shape_cast %853 : vector<1x8x16xf32> to vector<8x16xf32>
    %855 = vector.shape_cast %852 : vector<8x16xf32> to vector<1x8x16xf32>
    tpu.vector_store %arg36[%c0_329, %c0_330, %c0_331], %855 {strides = array<i32>} : memref<1x8x16xf32, #tpu.memory_space<vmem>>, vector<1x8x16xf32>,
    return
  }
  func.func @transform_0(%arg0: i32) -> (i32, i32, i32) {
    %c0_i32 = arith.constant 0 : i32
    %c0_i32_0 = arith.constant 0 : i32
    %c0_i32_1 = arith.constant 0 : i32
    return %arg0, %c0_i32, %c0_i32_0 : i32, i32, i32
  }
  func.func @transform_1(%arg0: i32) -> (i32, i32, i32) {
    %c0_i32 = arith.constant 0 : i32
    %c0_i32_0 = arith.constant 0 : i32
    %c0_i32_1 = arith.constant 0 : i32
    return %arg0, %c0_i32, %c0_i32_0 : i32, i32, i32
  }
  func.func @transform_2(%arg0: i32) -> (i32, i32) {
    %c0_i32 = arith.constant 0 : i32
    %c0_i32_0 = arith.constant 0 : i32
    %c0_i32_1 = arith.constant 0 : i32
    return %c0_i32, %c0_i32_0 : i32, i32
  }
  func.func @transform_3(%arg0: i32) -> (i32, i32) {
    %c0_i32 = arith.constant 0 : i32
    %c0_i32_0 = arith.constant 0 : i32
    %c0_i32_1 = arith.constant 0 : i32
    return %c0_i32, %c0_i32_0 : i32, i32
  }
  func.func @transform_4(%arg0: i32) -> (i32, i32) {
    %c0_i32 = arith.constant 0 : i32
    %c0_i32_0 = arith.constant 0 : i32
    %c0_i32_1 = arith.constant 0 : i32
    return %c0_i32, %c0_i32_0 : i32, i32
  }
  func.func @transform_5(%arg0: i32) -> (i32, i32) {
    %c0_i32 = arith.constant 0 : i32
    %c0_i32_0 = arith.constant 0 : i32
    %c0_i32_1 = arith.constant 0 : i32
    return %c0_i32, %c0_i32_0 : i32, i32
  }
  func.func @transform_6(%arg0: i32) -> (i32, i32) {
    %c0_i32 = arith.constant 0 : i32
    %c0_i32_0 = arith.constant 0 : i32
    %c0_i32_1 = arith.constant 0 : i32
    return %c0_i32, %c0_i32_0 : i32, i32
  }
  func.func @transform_7(%arg0: i32) -> (i32, i32) {
    %c0_i32 = arith.constant 0 : i32
    %c0_i32_0 = arith.constant 0 : i32
    %c0_i32_1 = arith.constant 0 : i32
    return %c0_i32, %c0_i32_0 : i32, i32
  }
  func.func @transform_8(%arg0: i32) -> (i32, i32) {
    %c0_i32 = arith.constant 0 : i32
    %c0_i32_0 = arith.constant 0 : i32
    %c0_i32_1 = arith.constant 0 : i32
    return %c0_i32, %c0_i32_0 : i32, i32
  }
  func.func @transform_9(%arg0: i32) -> (i32, i32, i32) {
    %c0_i32 = arith.constant 0 : i32
    %c0_i32_0 = arith.constant 0 : i32
    %c0_i32_1 = arith.constant 0 : i32
    %c0_i32_2 = arith.constant 0 : i32
    return %c0_i32, %c0_i32_0, %c0_i32_1 : i32, i32, i32
  }
  func.func @transform_10(%arg0: i32) -> (i32, i32, i32) {
    %c0_i32 = arith.constant 0 : i32
    %c0_i32_0 = arith.constant 0 : i32
    %c0_i32_1 = arith.constant 0 : i32
    %c0_i32_2 = arith.constant 0 : i32
    return %c0_i32, %c0_i32_0, %c0_i32_1 : i32, i32, i32
  }
  func.func @transform_11(%arg0: i32) -> (i32, i32, i32) {
    %c0_i32 = arith.constant 0 : i32
    %c0_i32_0 = arith.constant 0 : i32
    %c0_i32_1 = arith.constant 0 : i32
    %c0_i32_2 = arith.constant 0 : i32
    return %c0_i32, %c0_i32_0, %c0_i32_1 : i32, i32, i32
  }
  func.func @transform_12(%arg0: i32) -> (i32, i32, i32) {
    %c0_i32 = arith.constant 0 : i32
    %c0_i32_0 = arith.constant 0 : i32
    %c0_i32_1 = arith.constant 0 : i32
    %c0_i32_2 = arith.constant 0 : i32
    return %c0_i32, %c0_i32_0, %c0_i32_1 : i32, i32, i32
  }
  func.func @transform_13(%arg0: i32) -> (i32, i32, i32) {
    %c0_i32 = arith.constant 0 : i32
    %c0_i32_0 = arith.constant 0 : i32
    %c0_i32_1 = arith.constant 0 : i32
    %c0_i32_2 = arith.constant 0 : i32
    return %c0_i32, %c0_i32_0, %c0_i32_1 : i32, i32, i32
  }
  func.func @transform_14(%arg0: i32) -> (i32, i32, i32) {
    %c0_i32 = arith.constant 0 : i32
    %c0_i32_0 = arith.constant 0 : i32
    %c0_i32_1 = arith.constant 0 : i32
    %c0_i32_2 = arith.constant 0 : i32
    return %c0_i32, %c0_i32_0, %c0_i32_1 : i32, i32, i32
  }
  func.func @transform_15(%arg0: i32) -> (i32, i32, i32) {
    %c0_i32 = arith.constant 0 : i32
    %c0_i32_0 = arith.constant 0 : i32
    %c0_i32_1 = arith.constant 0 : i32
    %c0_i32_2 = arith.constant 0 : i32
    return %c0_i32, %c0_i32_0, %c0_i32_1 : i32, i32, i32
  }
  func.func @transform_16(%arg0: i32) -> (i32, i32, i32) {
    %c0_i32 = arith.constant 0 : i32
    %c0_i32_0 = arith.constant 0 : i32
    %c0_i32_1 = arith.constant 0 : i32
    %c0_i32_2 = arith.constant 0 : i32
    return %c0_i32, %c0_i32_0, %c0_i32_1 : i32, i32, i32
  }
  func.func @transform_17(%arg0: i32) -> (i32, i32, i32) {
    %c0_i32 = arith.constant 0 : i32
    %c0_i32_0 = arith.constant 0 : i32
    %c0_i32_1 = arith.constant 0 : i32
    %c0_i32_2 = arith.constant 0 : i32
    return %c0_i32, %c0_i32_0, %c0_i32_1 : i32, i32, i32
  }
  func.func @transform_18(%arg0: i32) -> (i32, i32, i32) {
    %c0_i32 = arith.constant 0 : i32
    %c0_i32_0 = arith.constant 0 : i32
    %c0_i32_1 = arith.constant 0 : i32
    %c0_i32_2 = arith.constant 0 : i32
    return %c0_i32, %c0_i32_0, %c0_i32_1 : i32, i32, i32
  }
  func.func @transform_19(%arg0: i32) -> (i32, i32, i32) {
    %c0_i32 = arith.constant 0 : i32
    %c0_i32_0 = arith.constant 0 : i32
    %c0_i32_1 = arith.constant 0 : i32
    %c0_i32_2 = arith.constant 0 : i32
    return %c0_i32, %c0_i32_0, %c0_i32_1 : i32, i32, i32
  }
  func.func @transform_20(%arg0: i32) -> (i32, i32, i32) {
    %c0_i32 = arith.constant 0 : i32
    %c0_i32_0 = arith.constant 0 : i32
    %c0_i32_1 = arith.constant 0 : i32
    %c0_i32_2 = arith.constant 0 : i32
    return %c0_i32, %c0_i32_0, %c0_i32_1 : i32, i32, i32
  }
  func.func @transform_21(%arg0: i32) -> (i32, i32, i32) {
    %c0_i32 = arith.constant 0 : i32
    %c0_i32_0 = arith.constant 0 : i32
    %c0_i32_1 = arith.constant 0 : i32
    %c0_i32_2 = arith.constant 0 : i32
    return %c0_i32, %c0_i32_0, %c0_i32_1 : i32, i32, i32
  }
  func.func @transform_22(%arg0: i32) -> (i32, i32, i32) {
    %c0_i32 = arith.constant 0 : i32
    %c0_i32_0 = arith.constant 0 : i32
    %c0_i32_1 = arith.constant 0 : i32
    %c0_i32_2 = arith.constant 0 : i32
    return %c0_i32, %c0_i32_0, %c0_i32_1 : i32, i32, i32
  }
  func.func @transform_23(%arg0: i32) -> (i32, i32, i32) {
    %c0_i32 = arith.constant 0 : i32
    %c0_i32_0 = arith.constant 0 : i32
    %c0_i32_1 = arith.constant 0 : i32
    %c0_i32_2 = arith.constant 0 : i32
    return %c0_i32, %c0_i32_0, %c0_i32_1 : i32, i32, i32
  }
  func.func @transform_24(%arg0: i32) -> (i32, i32, i32) {
    %c0_i32 = arith.constant 0 : i32
    %c0_i32_0 = arith.constant 0 : i32
    %c0_i32_1 = arith.constant 0 : i32
    %c0_i32_2 = arith.constant 0 : i32
    return %c0_i32, %c0_i32_0, %c0_i32_1 : i32, i32, i32
  }
  func.func @transform_25(%arg0: i32) -> (i32, i32, i32) {
    %c0_i32 = arith.constant 0 : i32
    %c0_i32_0 = arith.constant 0 : i32
    %c0_i32_1 = arith.constant 0 : i32
    %c0_i32_2 = arith.constant 0 : i32
    return %c0_i32, %c0_i32_0, %c0_i32_1 : i32, i32, i32
  }
  func.func @transform_26(%arg0: i32) -> (i32, i32, i32) {
    %c0_i32 = arith.constant 0 : i32
    %c0_i32_0 = arith.constant 0 : i32
    %c0_i32_1 = arith.constant 0 : i32
    %c0_i32_2 = arith.constant 0 : i32
    return %c0_i32, %c0_i32_0, %c0_i32_1 : i32, i32, i32
  }
  func.func @transform_27(%arg0: i32) -> (i32, i32, i32) {
    %c0_i32 = arith.constant 0 : i32
    %c0_i32_0 = arith.constant 0 : i32
    %c0_i32_1 = arith.constant 0 : i32
    %c0_i32_2 = arith.constant 0 : i32
    return %c0_i32, %c0_i32_0, %c0_i32_1 : i32, i32, i32
  }
  func.func @transform_28(%arg0: i32) -> (i32, i32, i32) {
    %c0_i32 = arith.constant 0 : i32
    %c0_i32_0 = arith.constant 0 : i32
    %c0_i32_1 = arith.constant 0 : i32
    %c0_i32_2 = arith.constant 0 : i32
    return %c0_i32, %c0_i32_0, %c0_i32_1 : i32, i32, i32
  }
  func.func @transform_29(%arg0: i32) -> (i32, i32, i32) {
    %c0_i32 = arith.constant 0 : i32
    %c0_i32_0 = arith.constant 0 : i32
    %c0_i32_1 = arith.constant 0 : i32
    %c0_i32_2 = arith.constant 0 : i32
    return %c0_i32, %c0_i32_0, %c0_i32_1 : i32, i32, i32
  }
  func.func @transform_30(%arg0: i32) -> (i32, i32, i32) {
    %c0_i32 = arith.constant 0 : i32
    %c0_i32_0 = arith.constant 0 : i32
    %c0_i32_1 = arith.constant 0 : i32
    %c0_i32_2 = arith.constant 0 : i32
    return %c0_i32, %c0_i32_0, %c0_i32_1 : i32, i32, i32
  }
  func.func @transform_31(%arg0: i32) -> (i32, i32, i32) {
    %c0_i32 = arith.constant 0 : i32
    %c0_i32_0 = arith.constant 0 : i32
    %c0_i32_1 = arith.constant 0 : i32
    %c0_i32_2 = arith.constant 0 : i32
    return %c0_i32, %c0_i32_0, %c0_i32_1 : i32, i32, i32
  }
  func.func @transform_32(%arg0: i32) -> (i32, i32, i32) {
    %c0_i32 = arith.constant 0 : i32
    %c0_i32_0 = arith.constant 0 : i32
    %c0_i32_1 = arith.constant 0 : i32
    %c0_i32_2 = arith.constant 0 : i32
    return %c0_i32, %c0_i32_0, %c0_i32_1 : i32, i32, i32
  }
  func.func @transform_33(%arg0: i32) -> (i32, i32, i32) {
    %c0_i32 = arith.constant 0 : i32
    %c0_i32_0 = arith.constant 0 : i32
    %c0_i32_1 = arith.constant 0 : i32
    %c0_i32_2 = arith.constant 0 : i32
    return %c0_i32, %c0_i32_0, %c0_i32_1 : i32, i32, i32
  }
  func.func @transform_34(%arg0: i32) -> (i32, i32, i32) {
    %c0_i32 = arith.constant 0 : i32
    %c0_i32_0 = arith.constant 0 : i32
    %c0_i32_1 = arith.constant 0 : i32
    %c0_i32_2 = arith.constant 0 : i32
    return %c0_i32, %c0_i32_0, %c0_i32_1 : i32, i32, i32
  }
  func.func @transform_35(%arg0: i32) -> (i32, i32, i32) {
    %c0_i32 = arith.constant 0 : i32
    %c0_i32_0 = arith.constant 0 : i32
    %c0_i32_1 = arith.constant 0 : i32
    return %arg0, %c0_i32, %c0_i32_0 : i32, i32, i32
  }
}

</mosaic_0001>

<llo_original>
// kernel: conformer_forward.1
$region0: #{conformer_forward.1}
  #allocation0 [shape = 'u32[]', space=smem, size = 0x4, offset = 0x4, fixed_abs, tag = 'smem constant byte address 0x4 - core index']
  #allocation1 [shape = 'u32[144,128]{1,0:T(1,128)}', space=vmem, size = 0x12000, scoped, tag = 'internal scratch']
  %s0 = inlined_call_operand.smem [shape: u32[36], index: -1, kind: input, shape index: {}]
  %s1 = sld [smem:[%s0]]
  %s2 = scalar_lea.smem %s0, 1
  %s3 = sld [smem:[%s2]]
  %s4 = scalar_lea.smem %s0, 2
  %s5 = sld [smem:[%s4]]
  %s6 = scalar_lea.smem %s0, 3
  %s7 = sld [smem:[%s6]]
  %s8 = scalar_lea.smem %s0, 4
  %s9 = sld [smem:[%s8]]
  %s10 = scalar_lea.smem %s0, 5
  %s11 = sld [smem:[%s10]]
  %s12 = scalar_lea.smem %s0, 6
  %s13 = sld [smem:[%s12]]
  %s14 = scalar_lea.smem %s0, 7
  %s15 = sld [smem:[%s14]]
  %s16 = scalar_lea.smem %s0, 8
  %s17 = sld [smem:[%s16]]
  %s18 = scalar_lea.smem %s0, 9
  %s19 = sld [smem:[%s18]]
  %s20 = scalar_lea.smem %s0, 10
  %s21 = sld [smem:[%s20]]
  %s22 = scalar_lea.smem %s0, 11
  %s23 = sld [smem:[%s22]]
  %s24 = scalar_lea.smem %s0, 12
  %s25 = sld [smem:[%s24]]
  %s26 = scalar_lea.smem %s0, 13
  %s27 = sld [smem:[%s26]]
  %s28 = scalar_lea.smem %s0, 14
  %s29 = sld [smem:[%s28]]
  %s30 = scalar_lea.smem %s0, 15
  %s31 = sld [smem:[%s30]]
  %s32 = scalar_lea.smem %s0, 16
  %s33 = sld [smem:[%s32]]
  %s34 = scalar_lea.smem %s0, 17
  %s35 = sld [smem:[%s34]]
  %s36 = scalar_lea.smem %s0, 18
  %s37 = sld [smem:[%s36]]
  %s38 = scalar_lea.smem %s0, 19
  %s39 = sld [smem:[%s38]]
  %s40 = scalar_lea.smem %s0, 20
  %s41 = sld [smem:[%s40]]
  %s42 = scalar_lea.smem %s0, 21
  %s43 = sld [smem:[%s42]]
  %s44 = scalar_lea.smem %s0, 22
  %s45 = sld [smem:[%s44]]
  %s46 = scalar_lea.smem %s0, 23
  %s47 = sld [smem:[%s46]]
  %s48 = scalar_lea.smem %s0, 24
  %s49 = sld [smem:[%s48]]
  %s50 = scalar_lea.smem %s0, 25
  %s51 = sld [smem:[%s50]]
  %s52 = scalar_lea.smem %s0, 26
  %s53 = sld [smem:[%s52]]
  %s54 = scalar_lea.smem %s0, 27
  %s55 = sld [smem:[%s54]]
  %s56 = scalar_lea.smem %s0, 28
  %s57 = sld [smem:[%s56]]
  %s58 = scalar_lea.smem %s0, 29
  %s59 = sld [smem:[%s58]]
  %s60 = scalar_lea.smem %s0, 30
  %s61 = sld [smem:[%s60]]
  %s62 = scalar_lea.smem %s0, 31
  %s63 = sld [smem:[%s62]]
  %s64 = scalar_lea.smem %s0, 32
  %s65 = sld [smem:[%s64]]
  %s66 = scalar_lea.smem %s0, 33
  %s67 = sld [smem:[%s66]]
  %s68 = scalar_lea.smem %s0, 34
  %s69 = sld [smem:[%s68]]
  %s70 = scalar_lea.smem %s0, 35
  %s71 = sld [smem:[%s70]]
  %s72 = sld [smem:[#allocation0]]
  $region173: #{conformer_forward.1} parent=0
    _
  %s74 = ssub.s32 1, %s72
  %s75 = scalar_select 0, %s74, %s72
  $region1: #{conformer_forward.1} parent=0
    #allocation2 [shape = 'u8[8192]{0}', space=vmem, size = 0x2000, scoped, tag = 'output window, operand 0']
    #allocation3 [shape = 's32[2]{0}', space=sflag, size = 0x8, scoped, tag = 'scoped memory for conformer_forward.1']
    %76 = vsyncpa [#allocation3], 0
    %s77 = scalar_lea.sflag [#allocation3], 1
    %78 = vsyncpa %s77, 0
    loop: start=0, step=1, limit=4
    $region2: #{conformer_forward.1} parent=1 // loop_pre_header
      _
    $region3: #{conformer_forward.1} parent=1 // loop_header
      %s80 = sphi 0, %s84
      %p81 = scmp.ge.s32.totalorder %s80, 4
      %s90 = sphi 0, %s92
      %s93 = sphi 0, %s90
      %s94 = sphi 0, %s93
      %s110 = sphi 0, %s94
      %s116 = sphi 0, %s118
      %s119 = sphi 0, %s116
      %s120 = sphi 0, %s119
      %s136 = sphi 0, %s120
      %s140 = sphi 0, %s140
      %s142 = sphi 0, %s140
      %s143 = sphi 0, %s142
      %s157 = sphi 0, %s143
      %s161 = sphi 0, %s161
      %s163 = sphi 0, %s161
      %s164 = sphi 0, %s163
      %s178 = sphi 0, %s164
      %s182 = sphi 0, %s182
      %s184 = sphi 0, %s182
      %s185 = sphi 0, %s184
      %s199 = sphi 0, %s185
      %s203 = sphi 0, %s203
      %s205 = sphi 0, %s203
      %s206 = sphi 0, %s205
      %s220 = sphi 0, %s206
      %s224 = sphi 0, %s224
      %s226 = sphi 0, %s224
      %s227 = sphi 0, %s226
      %s241 = sphi 0, %s227
      %s245 = sphi 0, %s245
      %s247 = sphi 0, %s245
      %s248 = sphi 0, %s247
      %s262 = sphi 0, %s248
      %s266 = sphi 0, %s266
      %s268 = sphi 0, %s266
      %s269 = sphi 0, %s268
      %s283 = sphi 0, %s269
      %s287 = sphi 0, %s287
      %s289 = sphi 0, %s287
      %s290 = sphi 0, %s289
      %s304 = sphi 0, %s290
      %s308 = sphi 0, %s308
      %s310 = sphi 0, %s308
      %s311 = sphi 0, %s310
      %s325 = sphi 0, %s311
      %s329 = sphi 0, %s329
      %s331 = sphi 0, %s329
      %s332 = sphi 0, %s331
      %s346 = sphi 0, %s332
      %s350 = sphi 0, %s350
      %s352 = sphi 0, %s350
      %s353 = sphi 0, %s352
      %s367 = sphi 0, %s353
      %s371 = sphi 0, %s371
      %s373 = sphi 0, %s371
      %s374 = sphi 0, %s373
      %s388 = sphi 0, %s374
      %s392 = sphi 0, %s392
      %s394 = sphi 0, %s392
      %s395 = sphi 0, %s394
      %s409 = sphi 0, %s395
      %s413 = sphi 0, %s413
      %s415 = sphi 0, %s413
      %s416 = sphi 0, %s415
      %s430 = sphi 0, %s416
      %s434 = sphi 0, %s434
      %s436 = sphi 0, %s434
      %s437 = sphi 0, %s436
      %s451 = sphi 0, %s437
      %s455 = sphi 0, %s455
      %s457 = sphi 0, %s455
      %s458 = sphi 0, %s457
      %s472 = sphi 0, %s458
      %s476 = sphi 0, %s476
      %s478 = sphi 0, %s476
      %s479 = sphi 0, %s478
      %s493 = sphi 0, %s479
      %s497 = sphi 0, %s497
      %s499 = sphi 0, %s497
      %s500 = sphi 0, %s499
      %s514 = sphi 0, %s500
      %s518 = sphi 0, %s518
      %s520 = sphi 0, %s518
      %s521 = sphi 0, %s520
      %s535 = sphi 0, %s521
      %s539 = sphi 0, %s539
      %s541 = sphi 0, %s539
      %s542 = sphi 0, %s541
      %s556 = sphi 0, %s542
      %s560 = sphi 0, %s560
      %s562 = sphi 0, %s560
      %s563 = sphi 0, %s562
      %s577 = sphi 0, %s563
      %s581 = sphi 0, %s581
      %s583 = sphi 0, %s581
      %s584 = sphi 0, %s583
      %s598 = sphi 0, %s584
      %s602 = sphi 0, %s602
      %s604 = sphi 0, %s602
      %s605 = sphi 0, %s604
      %s619 = sphi 0, %s605
      %s623 = sphi 0, %s623
      %s625 = sphi 0, %s623
      %s626 = sphi 0, %s625
      %s640 = sphi 0, %s626
      %s644 = sphi 0, %s644
      %s646 = sphi 0, %s644
      %s647 = sphi 0, %s646
      %s661 = sphi 0, %s647
      %s665 = sphi 0, %s665
      %s667 = sphi 0, %s665
      %s668 = sphi 0, %s667
      %s682 = sphi 0, %s668
      %s686 = sphi 0, %s686
      %s688 = sphi 0, %s686
      %s689 = sphi 0, %s688
      %s703 = sphi 0, %s689
      %s707 = sphi 0, %s707
      %s709 = sphi 0, %s707
      %s710 = sphi 0, %s709
      %s724 = sphi 0, %s710
      %s728 = sphi 0, %s728
      %s730 = sphi 0, %s728
      %s731 = sphi 0, %s730
      %s745 = sphi 0, %s731
      %s749 = sphi 0, %s749
      %s751 = sphi 0, %s749
      %s752 = sphi 0, %s751
      %s766 = sphi 0, %s752
      %s770 = sphi 0, %s770
      %s772 = sphi 0, %s770
      %s773 = sphi 0, %s772
      %s787 = sphi 0, %s773
      %s791 = sphi 0, %s791
      %s793 = sphi 0, %s791
      %s794 = sphi 0, %s793
      %s808 = sphi 0, %s794
      %s812 = sphi 0, %s812
      %s814 = sphi 0, %s812
      %s815 = sphi 0, %s814
      %s829 = sphi 0, %s815
      %s835 = sphi 0, %s837
      %s838 = sphi 0, %s835
      %s839 = sphi 0, %s838
      %s855 = sphi 0, %s839
    $region4: #{conformer_forward.1} parent=1 // loop_header_branch
      %83 = sbr.rel (%p81) target = $region8
    $region5: #{conformer_forward.1} parent=1 // loop_body
      %s85 = ssub.s32 %s80, 1
      %s86 = ssub.s32 %s80, 2
      %s87 = sadd.s32 %s80, 1
      %s88 = ssub.s32 %s80, %s87
      %p89 = scmp.eq.s32.totalorder %s88, 0
      %s91 = sadd.s32 %s90, 1
      %s92 = scalar_select %p89, %s90, %s91
      %p95 = pneg %p89
      %p96 = scmp.eq.s32.totalorder %s80, 1
      %p97 = por %p95, %p96
      %p98 = scmp.ne.s32.totalorder %s90, %s93
      %p99 = scmp.eq.s32.totalorder %s80, 0
      %p100 = por %p98, %p99
      %p101 = scmp.ne.s32.totalorder %s90, %s93
      %p102 = scmp.eq.s32.totalorder %s85, 1
      %p103 = por %p101, %p102
      %p104 = scmp.ne.s32.totalorder %s93, %s94
      %p105 = scmp.eq.s32.totalorder %s85, 0
      %p106 = por %p104, %p105
      %p107 = scmp.ne.s32.totalorder %s93, %s94
      %p108 = scmp.eq.s32.totalorder %s86, 1
      %p109 = por %p107, %p108
      %p111 = scmp.ne.s32.totalorder %s94, %s110
      %p112 = scmp.eq.s32.totalorder %s86, 0
      %p113 = por %p111, %p112
      %s114 = ssub.s32 %s80, %s87
      %p115 = scmp.eq.s32.totalorder %s114, 0
      %s117 = sadd.s32 %s116, 1
      %s118 = scalar_select %p115, %s116, %s117
      %p121 = pneg %p115
      %p122 = scmp.eq.s32.totalorder %s80, 1
      %p123 = por %p121, %p122
      %p124 = scmp.ne.s32.totalorder %s116, %s119
      %p125 = scmp.eq.s32.totalorder %s80, 0
      %p126 = por %p124, %p125
      %p127 = scmp.ne.s32.totalorder %s116, %s119
      %p128 = scmp.eq.s32.totalorder %s85, 1
      %p129 = por %p127, %p128
      %p130 = scmp.ne.s32.totalorder %s119, %s120
      %p131 = scmp.eq.s32.totalorder %s85, 0
      %p132 = por %p130, %p131
      %p133 = scmp.ne.s32.totalorder %s119, %s120
      %p134 = scmp.eq.s32.totalorder %s86, 1
      %p135 = por %p133, %p134
      %p137 = scmp.ne.s32.totalorder %s120, %s136
      %p138 = scmp.eq.s32.totalorder %s86, 0
      %p139 = por %p137, %p138
      %s141 = sadd.s32 %s140, 1
      %p144 = scmp.eq.s32.totalorder %s80, 1
      %p145 = scmp.ne.s32.totalorder %s140, %s142
      %p146 = scmp.eq.s32.totalorder %s80, 0
      %p147 = por %p145, %p146
      %p148 = scmp.ne.s32.totalorder %s140, %s142
      %p149 = scmp.eq.s32.totalorder %s85, 1
      %p150 = por %p148, %p149
      %p151 = scmp.ne.s32.totalorder %s142, %s143
      %p152 = scmp.eq.s32.totalorder %s85, 0
      %p153 = por %p151, %p152
      %p154 = scmp.ne.s32.totalorder %s142, %s143
      %p155 = scmp.eq.s32.totalorder %s86, 1
      %p156 = por %p154, %p155
      %p158 = scmp.ne.s32.totalorder %s143, %s157
      %p159 = scmp.eq.s32.totalorder %s86, 0
      %p160 = por %p158, %p159
      %s162 = sadd.s32 %s161, 1
      %p165 = scmp.eq.s32.totalorder %s80, 1
      %p166 = scmp.ne.s32.totalorder %s161, %s163
      %p167 = scmp.eq.s32.totalorder %s80, 0
      %p168 = por %p166, %p167
      %p169 = scmp.ne.s32.totalorder %s161, %s163
      %p170 = scmp.eq.s32.totalorder %s85, 1
      %p171 = por %p169, %p170
      %p172 = scmp.ne.s32.totalorder %s163, %s164
      %p173 = scmp.eq.s32.totalorder %s85, 0
      %p174 = por %p172, %p173
      %p175 = scmp.ne.s32.totalorder %s163, %s164
      %p176 = scmp.eq.s32.totalorder %s86, 1
      %p177 = por %p175, %p176
      %p179 = scmp.ne.s32.totalorder %s164, %s178
      %p180 = scmp.eq.s32.totalorder %s86, 0
      %p181 = por %p179, %p180
      %s183 = sadd.s32 %s182, 1
      %p186 = scmp.eq.s32.totalorder %s80, 1
      %p187 = scmp.ne.s32.totalorder %s182, %s184
      %p188 = scmp.eq.s32.totalorder %s80, 0
      %p189 = por %p187, %p188
      %p190 = scmp.ne.s32.totalorder %s182, %s184
      %p191 = scmp.eq.s32.totalorder %s85, 1
      %p192 = por %p190, %p191
      %p193 = scmp.ne.s32.totalorder %s184, %s185
      %p194 = scmp.eq.s32.totalorder %s85, 0
      %p195 = por %p193, %p194
      %p196 = scmp.ne.s32.totalorder %s184, %s185
      %p197 = scmp.eq.s32.totalorder %s86, 1
      %p198 = por %p196, %p197
      %p200 = scmp.ne.s32.totalorder %s185, %s199
      %p201 = scmp.eq.s32.totalorder %s86, 0
      %p202 = por %p200, %p201
      %s204 = sadd.s32 %s203, 1
      %p207 = scmp.eq.s32.totalorder %s80, 1
      %p208 = scmp.ne.s32.totalorder %s203, %s205
      %p209 = scmp.eq.s32.totalorder %s80, 0
      %p210 = por %p208, %p209
      %p211 = scmp.ne.s32.totalorder %s203, %s205
      %p212 = scmp.eq.s32.totalorder %s85, 1
      %p213 = por %p211, %p212
      %p214 = scmp.ne.s32.totalorder %s205, %s206
      %p215 = scmp.eq.s32.totalorder %s85, 0
      %p216 = por %p214, %p215
      %p217 = scmp.ne.s32.totalorder %s205, %s206
      %p218 = scmp.eq.s32.totalorder %s86, 1
      %p219 = por %p217, %p218
      %p221 = scmp.ne.s32.totalorder %s206, %s220
      %p222 = scmp.eq.s32.totalorder %s86, 0
      %p223 = por %p221, %p222
      %s225 = sadd.s32 %s224, 1
      %p228 = scmp.eq.s32.totalorder %s80, 1
      %p229 = scmp.ne.s32.totalorder %s224, %s226
      %p230 = scmp.eq.s32.totalorder %s80, 0
      %p231 = por %p229, %p230
      %p232 = scmp.ne.s32.totalorder %s224, %s226
      %p233 = scmp.eq.s32.totalorder %s85, 1
      %p234 = por %p232, %p233
      %p235 = scmp.ne.s32.totalorder %s226, %s227
      %p236 = scmp.eq.s32.totalorder %s85, 0
      %p237 = por %p235, %p236
      %p238 = scmp.ne.s32.totalorder %s226, %s227
      %p239 = scmp.eq.s32.totalorder %s86, 1
      %p240 = por %p238, %p239
      %p242 = scmp.ne.s32.totalorder %s227, %s241
      %p243 = scmp.eq.s32.totalorder %s86, 0
      %p244 = por %p242, %p243
      %s246 = sadd.s32 %s245, 1
      %p249 = scmp.eq.s32.totalorder %s80, 1
      %p250 = scmp.ne.s32.totalorder %s245, %s247
      %p251 = scmp.eq.s32.totalorder %s80, 0
      %p252 = por %p250, %p251
      %p253 = scmp.ne.s32.totalorder %s245, %s247
      %p254 = scmp.eq.s32.totalorder %s85, 1
      %p255 = por %p253, %p254
      %p256 = scmp.ne.s32.totalorder %s247, %s248
      %p257 = scmp.eq.s32.totalorder %s85, 0
      %p258 = por %p256, %p257
      %p259 = scmp.ne.s32.totalorder %s247, %s248
      %p260 = scmp.eq.s32.totalorder %s86, 1
      %p261 = por %p259, %p260
      %p263 = scmp.ne.s32.totalorder %s248, %s262
      %p264 = scmp.eq.s32.totalorder %s86, 0
      %p265 = por %p263, %p264
      %s267 = sadd.s32 %s266, 1
      %p270 = scmp.eq.s32.totalorder %s80, 1
      %p271 = scmp.ne.s32.totalorder %s266, %s268
      %p272 = scmp.eq.s32.totalorder %s80, 0
      %p273 = por %p271, %p272
      %p274 = scmp.ne.s32.totalorder %s266, %s268
      %p275 = scmp.eq.s32.totalorder %s85, 1
      %p276 = por %p274, %p275
      %p277 = scmp.ne.s32.totalorder %s268, %s269
      %p278 = scmp.eq.s32.totalorder %s85, 0
      %p279 = por %p277, %p278
      %p280 = scmp.ne.s32.totalorder %s268, %s269
      %p281 = scmp.eq.s32.totalorder %s86, 1
      %p282 = por %p280, %p281
      %p284 = scmp.ne.s32.totalorder %s269, %s283
      %p285 = scmp.eq.s32.totalorder %s86, 0
      %p286 = por %p284, %p285
      %s288 = sadd.s32 %s287, 1
      %p291 = scmp.eq.s32.totalorder %s80, 1
      %p292 = scmp.ne.s32.totalorder %s287, %s289
      %p293 = scmp.eq.s32.totalorder %s80, 0
      %p294 = por %p292, %p293
      %p295 = scmp.ne.s32.totalorder %s287, %s289
      %p296 = scmp.eq.s32.totalorder %s85, 1
      %p297 = por %p295, %p296
      %p298 = scmp.ne.s32.totalorder %s289, %s290
      %p299 = scmp.eq.s32.totalorder %s85, 0
      %p300 = por %p298, %p299
      %p301 = scmp.ne.s32.totalorder %s289, %s290
      %p302 = scmp.eq.s32.totalorder %s86, 1
      %p303 = por %p301, %p302
      %p305 = scmp.ne.s32.totalorder %s290, %s304
      %p306 = scmp.eq.s32.totalorder %s86, 0
      %p307 = por %p305, %p306
      %s309 = sadd.s32 %s308, 1
      %p312 = scmp.eq.s32.totalorder %s80, 1
      %p313 = scmp.ne.s32.totalorder %s308, %s310
      %p314 = scmp.eq.s32.totalorder %s80, 0
      %p315 = por %p313, %p314
      %p316 = scmp.ne.s32.totalorder %s308, %s310
      %p317 = scmp.eq.s32.totalorder %s85, 1
      %p318 = por %p316, %p317
      %p319 = scmp.ne.s32.totalorder %s310, %s311
      %p320 = scmp.eq.s32.totalorder %s85, 0
      %p321 = por %p319, %p320
      %p322 = scmp.ne.s32.totalorder %s310, %s311
      %p323 = scmp.eq.s32.totalorder %s86, 1
      %p324 = por %p322, %p323
      %p326 = scmp.ne.s32.totalorder %s311, %s325
      %p327 = scmp.eq.s32.totalorder %s86, 0
      %p328 = por %p326, %p327
      %s330 = sadd.s32 %s329, 1
      %p333 = scmp.eq.s32.totalorder %s80, 1
      %p334 = scmp.ne.s32.totalorder %s329, %s331
      %p335 = scmp.eq.s32.totalorder %s80, 0
      %p336 = por %p334, %p335
      %p337 = scmp.ne.s32.totalorder %s329, %s331
      %p338 = scmp.eq.s32.totalorder %s85, 1
      %p339 = por %p337, %p338
      %p340 = scmp.ne.s32.totalorder %s331, %s332
      %p341 = scmp.eq.s32.totalorder %s85, 0
      %p342 = por %p340, %p341
      %p343 = scmp.ne.s32.totalorder %s331, %s332
      %p344 = scmp.eq.s32.totalorder %s86, 1
      %p345 = por %p343, %p344
      %p347 = scmp.ne.s32.totalorder %s332, %s346
      %p348 = scmp.eq.s32.totalorder %s86, 0
      %p349 = por %p347, %p348
      %s351 = sadd.s32 %s350, 1
      %p354 = scmp.eq.s32.totalorder %s80, 1
      %p355 = scmp.ne.s32.totalorder %s350, %s352
      %p356 = scmp.eq.s32.totalorder %s80, 0
      %p357 = por %p355, %p356
      %p358 = scmp.ne.s32.totalorder %s350, %s352
      %p359 = scmp.eq.s32.totalorder %s85, 1
      %p360 = por %p358, %p359
      %p361 = scmp.ne.s32.totalorder %s352, %s353
      %p362 = scmp.eq.s32.totalorder %s85, 0
      %p363 = por %p361, %p362
      %p364 = scmp.ne.s32.totalorder %s352, %s353
      %p365 = scmp.eq.s32.totalorder %s86, 1
      %p366 = por %p364, %p365
      %p368 = scmp.ne.s32.totalorder %s353, %s367
      %p369 = scmp.eq.s32.totalorder %s86, 0
      %p370 = por %p368, %p369
      %s372 = sadd.s32 %s371, 1
      %p375 = scmp.eq.s32.totalorder %s80, 1
      %p376 = scmp.ne.s32.totalorder %s371, %s373
      %p377 = scmp.eq.s32.totalorder %s80, 0
      %p378 = por %p376, %p377
      %p379 = scmp.ne.s32.totalorder %s371, %s373
      %p380 = scmp.eq.s32.totalorder %s85, 1
      %p381 = por %p379, %p380
      %p382 = scmp.ne.s32.totalorder %s373, %s374
      %p383 = scmp.eq.s32.totalorder %s85, 0
      %p384 = por %p382, %p383
      %p385 = scmp.ne.s32.totalorder %s373, %s374
      %p386 = scmp.eq.s32.totalorder %s86, 1
      %p387 = por %p385, %p386
      %p389 = scmp.ne.s32.totalorder %s374, %s388
      %p390 = scmp.eq.s32.totalorder %s86, 0
      %p391 = por %p389, %p390
      %s393 = sadd.s32 %s392, 1
      %p396 = scmp.eq.s32.totalorder %s80, 1
      %p397 = scmp.ne.s32.totalorder %s392, %s394
      %p398 = scmp.eq.s32.totalorder %s80, 0
      %p399 = por %p397, %p398
      %p400 = scmp.ne.s32.totalorder %s392, %s394
      %p401 = scmp.eq.s32.totalorder %s85, 1
      %p402 = por %p400, %p401
      %p403 = scmp.ne.s32.totalorder %s394, %s395
      %p404 = scmp.eq.s32.totalorder %s85, 0
      %p405 = por %p403, %p404
      %p406 = scmp.ne.s32.totalorder %s394, %s395
      %p407 = scmp.eq.s32.totalorder %s86, 1
      %p408 = por %p406, %p407
      %p410 = scmp.ne.s32.totalorder %s395, %s409
      %p411 = scmp.eq.s32.totalorder %s86, 0
      %p412 = por %p410, %p411
      %s414 = sadd.s32 %s413, 1
      %p417 = scmp.eq.s32.totalorder %s80, 1
      %p418 = scmp.ne.s32.totalorder %s413, %s415
      %p419 = scmp.eq.s32.totalorder %s80, 0
      %p420 = por %p418, %p419
      %p421 = scmp.ne.s32.totalorder %s413, %s415
      %p422 = scmp.eq.s32.totalorder %s85, 1
      %p423 = por %p421, %p422
      %p424 = scmp.ne.s32.totalorder %s415, %s416
      %p425 = scmp.eq.s32.totalorder %s85, 0
      %p426 = por %p424, %p425
      %p427 = scmp.ne.s32.totalorder %s415, %s416
      %p428 = scmp.eq.s32.totalorder %s86, 1
      %p429 = por %p427, %p428
      %p431 = scmp.ne.s32.totalorder %s416, %s430
      %p432 = scmp.eq.s32.totalorder %s86, 0
      %p433 = por %p431, %p432
      %s435 = sadd.s32 %s434, 1
      %p438 = scmp.eq.s32.totalorder %s80, 1
      %p439 = scmp.ne.s32.totalorder %s434, %s436
      %p440 = scmp.eq.s32.totalorder %s80, 0
      %p441 = por %p439, %p440
      %p442 = scmp.ne.s32.totalorder %s434, %s436
      %p443 = scmp.eq.s32.totalorder %s85, 1
      %p444 = por %p442, %p443
      %p445 = scmp.ne.s32.totalorder %s436, %s437
      %p446 = scmp.eq.s32.totalorder %s85, 0
      %p447 = por %p445, %p446
      %p448 = scmp.ne.s32.totalorder %s436, %s437
      %p449 = scmp.eq.s32.totalorder %s86, 1
      %p450 = por %p448, %p449
      %p452 = scmp.ne.s32.totalorder %s437, %s451
      %p453 = scmp.eq.s32.totalorder %s86, 0
      %p454 = por %p452, %p453
      %s456 = sadd.s32 %s455, 1
      %p459 = scmp.eq.s32.totalorder %s80, 1
      %p460 = scmp.ne.s32.totalorder %s455, %s457
      %p461 = scmp.eq.s32.totalorder %s80, 0
      %p462 = por %p460, %p461
      %p463 = scmp.ne.s32.totalorder %s455, %s457
      %p464 = scmp.eq.s32.totalorder %s85, 1
      %p465 = por %p463, %p464
      %p466 = scmp.ne.s32.totalorder %s457, %s458
      %p467 = scmp.eq.s32.totalorder %s85, 0
      %p468 = por %p466, %p467
      %p469 = scmp.ne.s32.totalorder %s457, %s458
      %p470 = scmp.eq.s32.totalorder %s86, 1
      %p471 = por %p469, %p470
      %p473 = scmp.ne.s32.totalorder %s458, %s472
      %p474 = scmp.eq.s32.totalorder %s86, 0
      %p475 = por %p473, %p474
      %s477 = sadd.s32 %s476, 1
      %p480 = scmp.eq.s32.totalorder %s80, 1
      %p481 = scmp.ne.s32.totalorder %s476, %s478
      %p482 = scmp.eq.s32.totalorder %s80, 0
      %p483 = por %p481, %p482
      %p484 = scmp.ne.s32.totalorder %s476, %s478
      %p485 = scmp.eq.s32.totalorder %s85, 1
      %p486 = por %p484, %p485
      %p487 = scmp.ne.s32.totalorder %s478, %s479
      %p488 = scmp.eq.s32.totalorder %s85, 0
      %p489 = por %p487, %p488
      %p490 = scmp.ne.s32.totalorder %s478, %s479
      %p491 = scmp.eq.s32.totalorder %s86, 1
      %p492 = por %p490, %p491
      %p494 = scmp.ne.s32.totalorder %s479, %s493
      %p495 = scmp.eq.s32.totalorder %s86, 0
      %p496 = por %p494, %p495
      %s498 = sadd.s32 %s497, 1
      %p501 = scmp.eq.s32.totalorder %s80, 1
      %p502 = scmp.ne.s32.totalorder %s497, %s499
      %p503 = scmp.eq.s32.totalorder %s80, 0
      %p504 = por %p502, %p503
      %p505 = scmp.ne.s32.totalorder %s497, %s499
      %p506 = scmp.eq.s32.totalorder %s85, 1
      %p507 = por %p505, %p506
      %p508 = scmp.ne.s32.totalorder %s499, %s500
      %p509 = scmp.eq.s32.totalorder %s85, 0
      %p510 = por %p508, %p509
      %p511 = scmp.ne.s32.totalorder %s499, %s500
      %p512 = scmp.eq.s32.totalorder %s86, 1
      %p513 = por %p511, %p512
      %p515 = scmp.ne.s32.totalorder %s500, %s514
      %p516 = scmp.eq.s32.totalorder %s86, 0
      %p517 = por %p515, %p516
      %s519 = sadd.s32 %s518, 1
      %p522 = scmp.eq.s32.totalorder %s80, 1
      %p523 = scmp.ne.s32.totalorder %s518, %s520
      %p524 = scmp.eq.s32.totalorder %s80, 0
      %p525 = por %p523, %p524
      %p526 = scmp.ne.s32.totalorder %s518, %s520
      %p527 = scmp.eq.s32.totalorder %s85, 1
      %p528 = por %p526, %p527
      %p529 = scmp.ne.s32.totalorder %s520, %s521
      %p530 = scmp.eq.s32.totalorder %s85, 0
      %p531 = por %p529, %p530
      %p532 = scmp.ne.s32.totalorder %s520, %s521
      %p533 = scmp.eq.s32.totalorder %s86, 1
      %p534 = por %p532, %p533
      %p536 = scmp.ne.s32.totalorder %s521, %s535
      %p537 = scmp.eq.s32.totalorder %s86, 0
      %p538 = por %p536, %p537
      %s540 = sadd.s32 %s539, 1
      %p543 = scmp.eq.s32.totalorder %s80, 1
      %p544 = scmp.ne.s32.totalorder %s539, %s541
      %p545 = scmp.eq.s32.totalorder %s80, 0
      %p546 = por %p544, %p545
      %p547 = scmp.ne.s32.totalorder %s539, %s541
      %p548 = scmp.eq.s32.totalorder %s85, 1
      %p549 = por %p547, %p548
      %p550 = scmp.ne.s32.totalorder %s541, %s542
      %p551 = scmp.eq.s32.totalorder %s85, 0
      %p552 = por %p550, %p551
      %p553 = scmp.ne.s32.totalorder %s541, %s542
      %p554 = scmp.eq.s32.totalorder %s86, 1
      %p555 = por %p553, %p554
      %p557 = scmp.ne.s32.totalorder %s542, %s556
      %p558 = scmp.eq.s32.totalorder %s86, 0
      %p559 = por %p557, %p558
      %s561 = sadd.s32 %s560, 1
      %p564 = scmp.eq.s32.totalorder %s80, 1
      %p565 = scmp.ne.s32.totalorder %s560, %s562
      %p566 = scmp.eq.s32.totalorder %s80, 0
      %p567 = por %p565, %p566
      %p568 = scmp.ne.s32.totalorder %s560, %s562
      %p569 = scmp.eq.s32.totalorder %s85, 1
      %p570 = por %p568, %p569
      %p571 = scmp.ne.s32.totalorder %s562, %s563
      %p572 = scmp.eq.s32.totalorder %s85, 0
      %p573 = por %p571, %p572
      %p574 = scmp.ne.s32.totalorder %s562, %s563
      %p575 = scmp.eq.s32.totalorder %s86, 1
      %p576 = por %p574, %p575
      %p578 = scmp.ne.s32.totalorder %s563, %s577
      %p579 = scmp.eq.s32.totalorder %s86, 0
      %p580 = por %p578, %p579
      %s582 = sadd.s32 %s581, 1
      %p585 = scmp.eq.s32.totalorder %s80, 1
      %p586 = scmp.ne.s32.totalorder %s581, %s583
      %p587 = scmp.eq.s32.totalorder %s80, 0
      %p588 = por %p586, %p587
      %p589 = scmp.ne.s32.totalorder %s581, %s583
      %p590 = scmp.eq.s32.totalorder %s85, 1
      %p591 = por %p589, %p590
      %p592 = scmp.ne.s32.totalorder %s583, %s584
      %p593 = scmp.eq.s32.totalorder %s85, 0
      %p594 = por %p592, %p593
      %p595 = scmp.ne.s32.totalorder %s583, %s584
      %p596 = scmp.eq.s32.totalorder %s86, 1
      %p597 = por %p595, %p596
      %p599 = scmp.ne.s32.totalorder %s584, %s598
      %p600 = scmp.eq.s32.totalorder %s86, 0
      %p601 = por %p599, %p600
      %s603 = sadd.s32 %s602, 1
      %p606 = scmp.eq.s32.totalorder %s80, 1
      %p607 = scmp.ne.s32.totalorder %s602, %s604
      %p608 = scmp.eq.s32.totalorder %s80, 0
      %p609 = por %p607, %p608
      %p610 = scmp.ne.s32.totalorder %s602, %s604
      %p611 = scmp.eq.s32.totalorder %s85, 1
      %p612 = por %p610, %p611
      %p613 = scmp.ne.s32.totalorder %s604, %s605
      %p614 = scmp.eq.s32.totalorder %s85, 0
      %p615 = por %p613, %p614
      %p616 = scmp.ne.s32.totalorder %s604, %s605
      %p617 = scmp.eq.s32.totalorder %s86, 1
      %p618 = por %p616, %p617
      %p620 = scmp.ne.s32.totalorder %s605, %s619
      %p621 = scmp.eq.s32.totalorder %s86, 0
      %p622 = por %p620, %p621
      %s624 = sadd.s32 %s623, 1
      %p627 = scmp.eq.s32.totalorder %s80, 1
      %p628 = scmp.ne.s32.totalorder %s623, %s625
      %p629 = scmp.eq.s32.totalorder %s80, 0
      %p630 = por %p628, %p629
      %p631 = scmp.ne.s32.totalorder %s623, %s625
      %p632 = scmp.eq.s32.totalorder %s85, 1
      %p633 = por %p631, %p632
      %p634 = scmp.ne.s32.totalorder %s625, %s626
      %p635 = scmp.eq.s32.totalorder %s85, 0
      %p636 = por %p634, %p635
      %p637 = scmp.ne.s32.totalorder %s625, %s626
      %p638 = scmp.eq.s32.totalorder %s86, 1
      %p639 = por %p637, %p638
      %p641 = scmp.ne.s32.totalorder %s626, %s640
      %p642 = scmp.eq.s32.totalorder %s86, 0
      %p643 = por %p641, %p642
      %s645 = sadd.s32 %s644, 1
      %p648 = scmp.eq.s32.totalorder %s80, 1
      %p649 = scmp.ne.s32.totalorder %s644, %s646
      %p650 = scmp.eq.s32.totalorder %s80, 0
      %p651 = por %p649, %p650
      %p652 = scmp.ne.s32.totalorder %s644, %s646
      %p653 = scmp.eq.s32.totalorder %s85, 1
      %p654 = por %p652, %p653
      %p655 = scmp.ne.s32.totalorder %s646, %s647
      %p656 = scmp.eq.s32.totalorder %s85, 0
      %p657 = por %p655, %p656
      %p658 = scmp.ne.s32.totalorder %s646, %s647
      %p659 = scmp.eq.s32.totalorder %s86, 1
      %p660 = por %p658, %p659
      %p662 = scmp.ne.s32.totalorder %s647, %s661
      %p663 = scmp.eq.s32.totalorder %s86, 0
      %p664 = por %p662, %p663
      %s666 = sadd.s32 %s665, 1
      %p669 = scmp.eq.s32.totalorder %s80, 1
      %p670 = scmp.ne.s32.totalorder %s665, %s667
      %p671 = scmp.eq.s32.totalorder %s80, 0
      %p672 = por %p670, %p671
      %p673 = scmp.ne.s32.totalorder %s665, %s667
      %p674 = scmp.eq.s32.totalorder %s85, 1
      %p675 = por %p673, %p674
      %p676 = scmp.ne.s32.totalorder %s667, %s668
      %p677 = scmp.eq.s32.totalorder %s85, 0
      %p678 = por %p676, %p677
      %p679 = scmp.ne.s32.totalorder %s667, %s668
      %p680 = scmp.eq.s32.totalorder %s86, 1
      %p681 = por %p679, %p680
      %p683 = scmp.ne.s32.totalorder %s668, %s682
      %p684 = scmp.eq.s32.totalorder %s86, 0
      %p685 = por %p683, %p684
      %s687 = sadd.s32 %s686, 1
      %p690 = scmp.eq.s32.totalorder %s80, 1
      %p691 = scmp.ne.s32.totalorder %s686, %s688
      %p692 = scmp.eq.s32.totalorder %s80, 0
      %p693 = por %p691, %p692
      %p694 = scmp.ne.s32.totalorder %s686, %s688
      %p695 = scmp.eq.s32.totalorder %s85, 1
      %p696 = por %p694, %p695
      %p697 = scmp.ne.s32.totalorder %s688, %s689
      %p698 = scmp.eq.s32.totalorder %s85, 0
      %p699 = por %p697, %p698
      %p700 = scmp.ne.s32.totalorder %s688, %s689
      %p701 = scmp.eq.s32.totalorder %s86, 1
      %p702 = por %p700, %p701
      %p704 = scmp.ne.s32.totalorder %s689, %s703
      %p705 = scmp.eq.s32.totalorder %s86, 0
      %p706 = por %p704, %p705
      %s708 = sadd.s32 %s707, 1
      %p711 = scmp.eq.s32.totalorder %s80, 1
      %p712 = scmp.ne.s32.totalorder %s707, %s709
      %p713 = scmp.eq.s32.totalorder %s80, 0
      %p714 = por %p712, %p713
      %p715 = scmp.ne.s32.totalorder %s707, %s709
      %p716 = scmp.eq.s32.totalorder %s85, 1
      %p717 = por %p715, %p716
      %p718 = scmp.ne.s32.totalorder %s709, %s710
      %p719 = scmp.eq.s32.totalorder %s85, 0
      %p720 = por %p718, %p719
      %p721 = scmp.ne.s32.totalorder %s709, %s710
      %p722 = scmp.eq.s32.totalorder %s86, 1
      %p723 = por %p721, %p722
      %p725 = scmp.ne.s32.totalorder %s710, %s724
      %p726 = scmp.eq.s32.totalorder %s86, 0
      %p727 = por %p725, %p726
      %s729 = sadd.s32 %s728, 1
      %p732 = scmp.eq.s32.totalorder %s80, 1
      %p733 = scmp.ne.s32.totalorder %s728, %s730
      %p734 = scmp.eq.s32.totalorder %s80, 0
      %p735 = por %p733, %p734
      %p736 = scmp.ne.s32.totalorder %s728, %s730
      %p737 = scmp.eq.s32.totalorder %s85, 1
      %p738 = por %p736, %p737
      %p739 = scmp.ne.s32.totalorder %s730, %s731
      %p740 = scmp.eq.s32.totalorder %s85, 0
      %p741 = por %p739, %p740
      %p742 = scmp.ne.s32.totalorder %s730, %s731
      %p743 = scmp.eq.s32.totalorder %s86, 1
      %p744 = por %p742, %p743
      %p746 = scmp.ne.s32.totalorder %s731, %s745
      %p747 = scmp.eq.s32.totalorder %s86, 0
      %p748 = por %p746, %p747
      %s750 = sadd.s32 %s749, 1
      %p753 = scmp.eq.s32.totalorder %s80, 1
      %p754 = scmp.ne.s32.totalorder %s749, %s751
      %p755 = scmp.eq.s32.totalorder %s80, 0
      %p756 = por %p754, %p755
      %p757 = scmp.ne.s32.totalorder %s749, %s751
      %p758 = scmp.eq.s32.totalorder %s85, 1
      %p759 = por %p757, %p758
      %p760 = scmp.ne.s32.totalorder %s751, %s752
      %p761 = scmp.eq.s32.totalorder %s85, 0
      %p762 = por %p760, %p761
      %p763 = scmp.ne.s32.totalorder %s751, %s752
      %p764 = scmp.eq.s32.totalorder %s86, 1
      %p765 = por %p763, %p764
      %p767 = scmp.ne.s32.totalorder %s752, %s766
      %p768 = scmp.eq.s32.totalorder %s86, 0
      %p769 = por %p767, %p768
      %s771 = sadd.s32 %s770, 1
      %p774 = scmp.eq.s32.totalorder %s80, 1
      %p775 = scmp.ne.s32.totalorder %s770, %s772
      %p776 = scmp.eq.s32.totalorder %s80, 0
      %p777 = por %p775, %p776
      %p778 = scmp.ne.s32.totalorder %s770, %s772
      %p779 = scmp.eq.s32.totalorder %s85, 1
      %p780 = por %p778, %p779
      %p781 = scmp.ne.s32.totalorder %s772, %s773
      %p782 = scmp.eq.s32.totalorder %s85, 0
      %p783 = por %p781, %p782
      %p784 = scmp.ne.s32.totalorder %s772, %s773
      %p785 = scmp.eq.s32.totalorder %s86, 1
      %p786 = por %p784, %p785
      %p788 = scmp.ne.s32.totalorder %s773, %s787
      %p789 = scmp.eq.s32.totalorder %s86, 0
      %p790 = por %p788, %p789
      %s792 = sadd.s32 %s791, 1
      %p795 = scmp.eq.s32.totalorder %s80, 1
      %p796 = scmp.ne.s32.totalorder %s791, %s793
      %p797 = scmp.eq.s32.totalorder %s80, 0
      %p798 = por %p796, %p797
      %p799 = scmp.ne.s32.totalorder %s791, %s793
      %p800 = scmp.eq.s32.totalorder %s85, 1
      %p801 = por %p799, %p800
      %p802 = scmp.ne.s32.totalorder %s793, %s794
      %p803 = scmp.eq.s32.totalorder %s85, 0
      %p804 = por %p802, %p803
      %p805 = scmp.ne.s32.totalorder %s793, %s794
      %p806 = scmp.eq.s32.totalorder %s86, 1
      %p807 = por %p805, %p806
      %p809 = scmp.ne.s32.totalorder %s794, %s808
      %p810 = scmp.eq.s32.totalorder %s86, 0
      %p811 = por %p809, %p810
      %s813 = sadd.s32 %s812, 1
      %p816 = scmp.eq.s32.totalorder %s80, 1
      %p817 = scmp.ne.s32.totalorder %s812, %s814
      %p818 = scmp.eq.s32.totalorder %s80, 0
      %p819 = por %p817, %p818
      %p820 = scmp.ne.s32.totalorder %s812, %s814
      %p821 = scmp.eq.s32.totalorder %s85, 1
      %p822 = por %p820, %p821
      %p823 = scmp.ne.s32.totalorder %s814, %s815
      %p824 = scmp.eq.s32.totalorder %s85, 0
      %p825 = por %p823, %p824
      %p826 = scmp.ne.s32.totalorder %s814, %s815
      %p827 = scmp.eq.s32.totalorder %s86, 1
      %p828 = por %p826, %p827
      %p830 = scmp.ne.s32.totalorder %s815, %s829
      %p831 = scmp.eq.s32.totalorder %s86, 0
      %p832 = por %p830, %p831
      %s833 = ssub.s32 %s80, %s87
      %p834 = scmp.eq.s32.totalorder %s833, 0
      %s836 = sadd.s32 %s835, 1
      %s837 = scalar_select %p834, %s835, %s836
      %p840 = pneg %p834
      %p841 = scmp.eq.s32.totalorder %s80, 1
      %p842 = por %p840, %p841
      %p843 = scmp.ne.s32.totalorder %s835, %s838
      %p844 = scmp.eq.s32.totalorder %s80, 0
      %p845 = por %p843, %p844
      %p846 = scmp.ne.s32.totalorder %s835, %s838
      %p847 = scmp.eq.s32.totalorder %s85, 1
      %p848 = por %p846, %p847
      %p849 = scmp.ne.s32.totalorder %s838, %s839
      %p850 = scmp.eq.s32.totalorder %s85, 0
      %p851 = por %p849, %p850
      %p852 = scmp.ne.s32.totalorder %s838, %s839
      %p853 = scmp.eq.s32.totalorder %s86, 1
      %p854 = por %p852, %p853
      %p856 = scmp.ne.s32.totalorder %s839, %s855
      %p857 = scmp.eq.s32.totalorder %s86, 0
      %p858 = por %p856, %p857
      %p859 = scmp.le.s32.totalorder 1, %s80
      %p860 = scmp.lt.s32.totalorder %s80, 3
      %p861 = pnand %p859, %p860
      %p862 = pneg %p861
      // Predicated region
      $region9: #{conformer_forward.1} parent=5 // pred_check
        _
      $region10: #{conformer_forward.1} parent=5 // pred_check_branch
        %864 = sbr.rel (%p861) target = $region12
      $region11: #{conformer_forward.1} parent=5 // pred_region
        %s865 = ssub.s32 %s80, 1
        // Predicated region
        $region13: #{conformer_forward.1} parent=11 // pred_check
          %p866 = pneg %p153
        $region14: #{conformer_forward.1} parent=11 // pred_check_branch
          %868 = sbr.rel (%p866) target = $region16
        $region15: #{conformer_forward.1} parent=11 // pred_region
          _
        $region16: #{conformer_forward.1} parent=11 // pred_fallthru
          _
        // Predicated region
        $region17: #{conformer_forward.1} parent=11 // pred_check
          %p869 = pneg %p174
        $region18: #{conformer_forward.1} parent=11 // pred_check_branch
          %871 = sbr.rel (%p869) target = $region20
        $region19: #{conformer_forward.1} parent=11 // pred_region
          _
        $region20: #{conformer_forward.1} parent=11 // pred_fallthru
          _
        // Predicated region
        $region21: #{conformer_forward.1} parent=11 // pred_check
          %p872 = pneg %p195
        $region22: #{conformer_forward.1} parent=11 // pred_check_branch
          %874 = sbr.rel (%p872) target = $region24
        $region23: #{conformer_forward.1} parent=11 // pred_region
          _
        $region24: #{conformer_forward.1} parent=11 // pred_fallthru
          _
        // Predicated region
        $region25: #{conformer_forward.1} parent=11 // pred_check
          %p875 = pneg %p216
        $region26: #{conformer_forward.1} parent=11 // pred_check_branch
          %877 = sbr.rel (%p875) target = $region28
        $region27: #{conformer_forward.1} parent=11 // pred_region
          _
        $region28: #{conformer_forward.1} parent=11 // pred_fallthru
          _
        // Predicated region
        $region29: #{conformer_forward.1} parent=11 // pred_check
          %p878 = pneg %p237
        $region30: #{conformer_forward.1} parent=11 // pred_check_branch
          %880 = sbr.rel (%p878) target = $region32
        $region31: #{conformer_forward.1} parent=11 // pred_region
          _
        $region32: #{conformer_forward.1} parent=11 // pred_fallthru
          _
        // Predicated region
        $region33: #{conformer_forward.1} parent=11 // pred_check
          %p881 = pneg %p258
        $region34: #{conformer_forward.1} parent=11 // pred_check_branch
          %883 = sbr.rel (%p881) target = $region36
        $region35: #{conformer_forward.1} parent=11 // pred_region
          _
        $region36: #{conformer_forward.1} parent=11 // pred_fallthru
          _
        // Predicated region
        $region37: #{conformer_forward.1} parent=11 // pred_check
          %p884 = pneg %p279
        $region38: #{conformer_forward.1} parent=11 // pred_check_branch
          %886 = sbr.rel (%p884) target = $region40
        $region39: #{conformer_forward.1} parent=11 // pred_region
          _
        $region40: #{conformer_forward.1} parent=11 // pred_fallthru
          _
        // Predicated region
        $region41: #{conformer_forward.1} parent=11 // pred_check
          %p887 = pneg %p300
        $region42: #{conformer_forward.1} parent=11 // pred_check_branch
          %889 = sbr.rel (%p887) target = $region44
        $region43: #{conformer_forward.1} parent=11 // pred_region
          _
        $region44: #{conformer_forward.1} parent=11 // pred_fallthru
          _
        // Predicated region
        $region45: #{conformer_forward.1} parent=11 // pred_check
          %p890 = pneg %p321
        $region46: #{conformer_forward.1} parent=11 // pred_check_branch
          %892 = sbr.rel (%p890) target = $region48
        $region47: #{conformer_forward.1} parent=11 // pred_region
          _
        $region48: #{conformer_forward.1} parent=11 // pred_fallthru
          _
        // Predicated region
        $region49: #{conformer_forward.1} parent=11 // pred_check
          %p893 = pneg %p342
        $region50: #{conformer_forward.1} parent=11 // pred_check_branch
          %895 = sbr.rel (%p893) target = $region52
        $region51: #{conformer_forward.1} parent=11 // pred_region
          _
        $region52: #{conformer_forward.1} parent=11 // pred_fallthru
          _
        // Predicated region
        $region53: #{conformer_forward.1} parent=11 // pred_check
          %p896 = pneg %p363
        $region54: #{conformer_forward.1} parent=11 // pred_check_branch
          %898 = sbr.rel (%p896) target = $region56
        $region55: #{conformer_forward.1} parent=11 // pred_region
          _
        $region56: #{conformer_forward.1} parent=11 // pred_fallthru
          _
        // Predicated region
        $region57: #{conformer_forward.1} parent=11 // pred_check
          %p899 = pneg %p384
        $region58: #{conformer_forward.1} parent=11 // pred_check_branch
          %901 = sbr.rel (%p899) target = $region60
        $region59: #{conformer_forward.1} parent=11 // pred_region
          _
        $region60: #{conformer_forward.1} parent=11 // pred_fallthru
          _
        // Predicated region
        $region61: #{conformer_forward.1} parent=11 // pred_check
          %p902 = pneg %p405
        $region62: #{conformer_forward.1} parent=11 // pred_check_branch
          %904 = sbr.rel (%p902) target = $region64
        $region63: #{conformer_forward.1} parent=11 // pred_region
          _
        $region64: #{conformer_forward.1} parent=11 // pred_fallthru
          _
        // Predicated region
        $region65: #{conformer_forward.1} parent=11 // pred_check
          %p905 = pneg %p426
        $region66: #{conformer_forward.1} parent=11 // pred_check_branch
          %907 = sbr.rel (%p905) target = $region68
        $region67: #{conformer_forward.1} parent=11 // pred_region
          _
        $region68: #{conformer_forward.1} parent=11 // pred_fallthru
          _
        // Predicated region
        $region69: #{conformer_forward.1} parent=11 // pred_check
          %p908 = pneg %p447
        $region70: #{conformer_forward.1} parent=11 // pred_check_branch
          %910 = sbr.rel (%p908) target = $region72
        $region71: #{conformer_forward.1} parent=11 // pred_region
          _
        $region72: #{conformer_forward.1} parent=11 // pred_fallthru
          _
        // Predicated region
        $region73: #{conformer_forward.1} parent=11 // pred_check
          %p911 = pneg %p468
        $region74: #{conformer_forward.1} parent=11 // pred_check_branch
          %913 = sbr.rel (%p911) target = $region76
        $region75: #{conformer_forward.1} parent=11 // pred_region
          _
        $region76: #{conformer_forward.1} parent=11 // pred_fallthru
          _
        // Predicated region
        $region77: #{conformer_forward.1} parent=11 // pred_check
          %p914 = pneg %p489
        $region78: #{conformer_forward.1} parent=11 // pred_check_branch
          %916 = sbr.rel (%p914) target = $region80
        $region79: #{conformer_forward.1} parent=11 // pred_region
          _
        $region80: #{conformer_forward.1} parent=11 // pred_fallthru
          _
        // Predicated region
        $region81: #{conformer_forward.1} parent=11 // pred_check
          %p917 = pneg %p510
        $region82: #{conformer_forward.1} parent=11 // pred_check_branch
          %919 = sbr.rel (%p917) target = $region84
        $region83: #{conformer_forward.1} parent=11 // pred_region
          _
        $region84: #{conformer_forward.1} parent=11 // pred_fallthru
          _
        // Predicated region
        $region85: #{conformer_forward.1} parent=11 // pred_check
          %p920 = pneg %p531
        $region86: #{conformer_forward.1} parent=11 // pred_check_branch
          %922 = sbr.rel (%p920) target = $region88
        $region87: #{conformer_forward.1} parent=11 // pred_region
          _
        $region88: #{conformer_forward.1} parent=11 // pred_fallthru
          _
        // Predicated region
        $region89: #{conformer_forward.1} parent=11 // pred_check
          %p923 = pneg %p552
        $region90: #{conformer_forward.1} parent=11 // pred_check_branch
          %925 = sbr.rel (%p923) target = $region92
        $region91: #{conformer_forward.1} parent=11 // pred_region
          _
        $region92: #{conformer_forward.1} parent=11 // pred_fallthru
          _
        // Predicated region
        $region93: #{conformer_forward.1} parent=11 // pred_check
          %p926 = pneg %p573
        $region94: #{conformer_forward.1} parent=11 // pred_check_branch
          %928 = sbr.rel (%p926) target = $region96
        $region95: #{conformer_forward.1} parent=11 // pred_region
          _
        $region96: #{conformer_forward.1} parent=11 // pred_fallthru
          _
        // Predicated region
        $region97: #{conformer_forward.1} parent=11 // pred_check
          %p929 = pneg %p594
        $region98: #{conformer_forward.1} parent=11 // pred_check_branch
          %931 = sbr.rel (%p929) target = $region100
        $region99: #{conformer_forward.1} parent=11 // pred_region
          _
        $region100: #{conformer_forward.1} parent=11 // pred_fallthru
          _
        // Predicated region
        $region101: #{conformer_forward.1} parent=11 // pred_check
          %p932 = pneg %p615
        $region102: #{conformer_forward.1} parent=11 // pred_check_branch
          %934 = sbr.rel (%p932) target = $region104
        $region103: #{conformer_forward.1} parent=11 // pred_region
          _
        $region104: #{conformer_forward.1} parent=11 // pred_fallthru
          _
        // Predicated region
        $region105: #{conformer_forward.1} parent=11 // pred_check
          %p935 = pneg %p636
        $region106: #{conformer_forward.1} parent=11 // pred_check_branch
          %937 = sbr.rel (%p935) target = $region108
        $region107: #{conformer_forward.1} parent=11 // pred_region
          _
        $region108: #{conformer_forward.1} parent=11 // pred_fallthru
          _
        // Predicated region
        $region109: #{conformer_forward.1} parent=11 // pred_check
          %p938 = pneg %p657
        $region110: #{conformer_forward.1} parent=11 // pred_check_branch
          %940 = sbr.rel (%p938) target = $region112
        $region111: #{conformer_forward.1} parent=11 // pred_region
          _
        $region112: #{conformer_forward.1} parent=11 // pred_fallthru
          _
        // Predicated region
        $region113: #{conformer_forward.1} parent=11 // pred_check
          %p941 = pneg %p678
        $region114: #{conformer_forward.1} parent=11 // pred_check_branch
          %943 = sbr.rel (%p941) target = $region116
        $region115: #{conformer_forward.1} parent=11 // pred_region
          _
        $region116: #{conformer_forward.1} parent=11 // pred_fallthru
          _
        // Predicated region
        $region117: #{conformer_forward.1} parent=11 // pred_check
          %p944 = pneg %p699
        $region118: #{conformer_forward.1} parent=11 // pred_check_branch
          %946 = sbr.rel (%p944) target = $region120
        $region119: #{conformer_forward.1} parent=11 // pred_region
          _
        $region120: #{conformer_forward.1} parent=11 // pred_fallthru
          _
        // Predicated region
        $region121: #{conformer_forward.1} parent=11 // pred_check
          %p947 = pneg %p720
        $region122: #{conformer_forward.1} parent=11 // pred_check_branch
          %949 = sbr.rel (%p947) target = $region124
        $region123: #{conformer_forward.1} parent=11 // pred_region
          _
        $region124: #{conformer_forward.1} parent=11 // pred_fallthru
          _
        // Predicated region
        $region125: #{conformer_forward.1} parent=11 // pred_check
          %p950 = pneg %p741
        $region126: #{conformer_forward.1} parent=11 // pred_check_branch
          %952 = sbr.rel (%p950) target = $region128
        $region127: #{conformer_forward.1} parent=11 // pred_region
          _
        $region128: #{conformer_forward.1} parent=11 // pred_fallthru
          _
        // Predicated region
        $region129: #{conformer_forward.1} parent=11 // pred_check
          %p953 = pneg %p762
        $region130: #{conformer_forward.1} parent=11 // pred_check_branch
          %955 = sbr.rel (%p953) target = $region132
        $region131: #{conformer_forward.1} parent=11 // pred_region
          _
        $region132: #{conformer_forward.1} parent=11 // pred_fallthru
          _
        // Predicated region
        $region133: #{conformer_forward.1} parent=11 // pred_check
          %p956 = pneg %p783
        $region134: #{conformer_forward.1} parent=11 // pred_check_branch
          %958 = sbr.rel (%p956) target = $region136
        $region135: #{conformer_forward.1} parent=11 // pred_region
          _
        $region136: #{conformer_forward.1} parent=11 // pred_fallthru
          _
        // Predicated region
        $region137: #{conformer_forward.1} parent=11 // pred_check
          %p959 = pneg %p804
        $region138: #{conformer_forward.1} parent=11 // pred_check_branch
          %961 = sbr.rel (%p959) target = $region140
        $region139: #{conformer_forward.1} parent=11 // pred_region
          _
        $region140: #{conformer_forward.1} parent=11 // pred_fallthru
          _
        // Predicated region
        $region141: #{conformer_forward.1} parent=11 // pred_check
          %p962 = pneg %p825
        $region142: #{conformer_forward.1} parent=11 // pred_check_branch
          %964 = sbr.rel (%p962) target = $region144
        $region143: #{conformer_forward.1} parent=11 // pred_region
          _
        $region144: #{conformer_forward.1} parent=11 // pred_fallthru
          _
      $region12: #{conformer_forward.1} parent=5 // pred_fallthru
        _
      %p965 = scmp.lt.s32.totalorder %s80, 2
      // Predicated region
      $region145: #{conformer_forward.1} parent=5 // pred_check
        %p966 = pneg %p965
      $region146: #{conformer_forward.1} parent=5 // pred_check_branch
        %968 = sbr.rel (%p966) target = $region148
      $region147: #{conformer_forward.1} parent=5 // pred_region
        // Predicated region
        $region149: #{conformer_forward.1} parent=147 // pred_check
          %p969 = pneg %p100
        $region150: #{conformer_forward.1} parent=147 // pred_check_branch
          %971 = sbr.rel (%p969) target = $region152
        $region151: #{conformer_forward.1} parent=147 // pred_region
          %p972 = scmp.lt.s32.totalorder %s80, 1
          %s973 = scalar_select %p972, %s80, 1
          %s974 = smul.addr %s973, 8
          %s975 = scalar_lea.vmem %s1, %s974
        $region152: #{conformer_forward.1} parent=147 // pred_fallthru
          _
        // Predicated region
        $region153: #{conformer_forward.1} parent=147 // pred_check
          %p976 = pneg %p126
        $region154: #{conformer_forward.1} parent=147 // pred_check_branch
          %978 = sbr.rel (%p976) target = $region156
        $region155: #{conformer_forward.1} parent=147 // pred_region
          %p979 = scmp.lt.s32.totalorder %s80, 1
          %s980 = scalar_select %p979, %s80, 1
          %s981 = scalar_lea.vmem %s3, %s980
        $region156: #{conformer_forward.1} parent=147 // pred_fallthru
          _
      $region148: #{conformer_forward.1} parent=5 // pred_fallthru
        _
      %p982 = scmp.le.s32.totalorder 1, %s80
      %p983 = scmp.lt.s32.totalorder %s80, 3
      %p984 = pnand %p982, %p983
      %p985 = pneg %p984
      // Predicated region
      $region157: #{conformer_forward.1} parent=5 // pred_check
        _
      $region158: #{conformer_forward.1} parent=5 // pred_check_branch
        %987 = sbr.rel (%p984) target = $region160
      $region159: #{conformer_forward.1} parent=5 // pred_region
        %s988 = ssub.s32 %s80, 1
        %p989 = scmp.lt.s32.totalorder %s85, 1
        %s990 = scalar_select %p989, %s85, 1
        %s991 = smul.addr %s990, 8
        %s992 = scalar_lea.vmem %s1, %s991
        %p993 = pneg %p106
        %p994 = pneg %p103
        %p995 = scmp.lt.s32.totalorder %s85, 1
        %s996 = scalar_select %p995, %s85, 1
        %s997 = scalar_lea.vmem %s3, %s996
        %p998 = pneg %p132
        %p999 = pneg %p129
        %p1000 = pneg %p153
        %p1001 = pneg %p150
        %p1002 = pneg %p174
        %p1003 = pneg %p171
        %p1004 = pneg %p195
        %p1005 = pneg %p192
        %p1006 = pneg %p216
        %p1007 = pneg %p213
        %p1008 = pneg %p237
        %p1009 = pneg %p234
        %p1010 = pneg %p258
        %p1011 = pneg %p255
        %p1012 = pneg %p279
        %p1013 = pneg %p276
        %p1014 = pneg %p300
        %p1015 = pneg %p297
        %p1016 = pneg %p321
        %p1017 = pneg %p318
        %p1018 = pneg %p342
        %p1019 = pneg %p339
        %p1020 = pneg %p363
        %p1021 = pneg %p360
        %p1022 = pneg %p384
        %p1023 = pneg %p381
        %p1024 = pneg %p405
        %p1025 = pneg %p402
        %p1026 = pneg %p426
        %p1027 = pneg %p423
        %p1028 = pneg %p447
        %p1029 = pneg %p444
        %p1030 = pneg %p468
        %p1031 = pneg %p465
        %p1032 = pneg %p489
        %p1033 = pneg %p486
        %p1034 = pneg %p510
        %p1035 = pneg %p507
        %p1036 = pneg %p531
        %p1037 = pneg %p528
        %p1038 = pneg %p552
        %p1039 = pneg %p549
        %p1040 = pneg %p573
        %p1041 = pneg %p570
        %p1042 = pneg %p594
        %p1043 = pneg %p591
        %p1044 = pneg %p615
        %p1045 = pneg %p612
        %p1046 = pneg %p636
        %p1047 = pneg %p633
        %p1048 = pneg %p657
        %p1049 = pneg %p654
        %p1050 = pneg %p678
        %p1051 = pneg %p675
        %p1052 = pneg %p699
        %p1053 = pneg %p696
        %p1054 = pneg %p720
        %p1055 = pneg %p717
        %p1056 = pneg %p741
        %p1057 = pneg %p738
        %p1058 = pneg %p762
        %p1059 = pneg %p759
        %p1060 = pneg %p783
        %p1061 = pneg %p780
        %p1062 = pneg %p804
        %p1063 = pneg %p801
        %p1064 = pneg %p825
        %p1065 = pneg %p822
        %p1066 = pneg %p851
        %p1067 = pneg %p848
        %s1068 = sand.u32 %s838, 1
        %s1069 = scalar_lea.sflag [#allocation3], %s1068
        %s1070 = sand.u32 %s838, 1
        %s1071 = smul.addr %s1070, 8
        %s1072 = scalar_lea.vmem [#allocation2], %s1071
        %p1073 = scmp.lt.s32.totalorder %s85, 1
        %s1074 = scalar_select %p1073, %s85, 1
        %s1075 = smul.addr %s1074, 8
        %s1076 = scalar_lea.vmem %s1, %s1075
        %p1077 = scmp.lt.s32.totalorder %s85, 1
        %s1078 = scalar_select %p1077, %s85, 1
        %s1079 = scalar_lea.vmem %s3, %s1078
        %v1080 = vld [vmem:[%s1079] sm:$0x1]
        %vm1081 = vcmp.gt.f32.partialorder %v1080, 0.5
        %v1082 = vld [vmem:[%s1076] sm:$0xff]
        %v1083 = vld [vmem:[%s5] sm:$0xff]
        %v1084 = vld [vmem:[%s5 + $0x8] sm:$0xff]
        %v1085 = vld [vmem:[%s7] sm:$0x1]
        %v1087 = vlaneseq
        %v1088 = vshrl.u32 %v1087, 7
        %v1089 = vsub.s32 0, %v1088
        %v1090 = vrot.slane %v1085, %v1089
        %vm1092 = vcmask 130048
        %v1094 = vsel %vm1092, %v1082, 0
        %1096 = vmatprep.subr.mxu0 0.0
        %1097 = vmatpush1.msra.mxu0 %v1083
        %1098 = vmatprep.subr.mxu0 0.0
        %1099 = vmatpush1.msra.mxu0 %v1084
        %1100 = vmatprep.subr.mxu0 0.0
        %1101 = vmatpush1.msra.mxu0 0.0
        %1102 = vmatprep.subr.mxu0 0.0
        %1103 = vmatpush1.msra.mxu0 0.0
        %1104 = vmatprep.subr.mxu0 0.0
        %1105 = vmatpush1.msra.mxu0 0.0
        %1106 = vmatprep.subr.mxu0 0.0
        %1107 = vmatpush1.msra.mxu0 0.0
        %1108 = vmatprep.subr.mxu0 0.0
        %1109 = vmatpush1.msra.mxu0 0.0
        %1110 = vmatprep.subr.mxu0 0.0
        %1111 = vmatpush1.msra.mxu0 0.0
        %1112 = vmatprep.subr.mxu0 0.0
        %1113 = vmatpush1.msra.mxu0 0.0
        %1114 = vmatprep.subr.mxu0 0.0
        %1115 = vmatpush1.msra.mxu0 0.0
        %1116 = vmatprep.subr.mxu0 0.0
        %1117 = vmatpush1.msra.mxu0 0.0
        %1118 = vmatprep.subr.mxu0 0.0
        %1119 = vmatpush1.msra.mxu0 0.0
        %1120 = vmatprep.subr.mxu0 0.0
        %1121 = vmatpush1.msra.mxu0 0.0
        %1122 = vmatprep.subr.mxu0 0.0
        %1123 = vmatpush1.msra.mxu0 0.0
        %1124 = vmatprep.subr.mxu0 0.0
        %1125 = vmatpush1.msra.mxu0 0.0
        %1126 = vmatprep.subr.mxu0 0.0
        %1127 = vmatpush1.msra.mxu0 0.0
        %1128 = vmatprep.subr.mxu0 0.0
        %1129 = vmatpush1.msra.mxu0 0.0
        %1130 = vmatprep.subr.mxu0 0.0
        %1131 = vmatpush1.msra.mxu0 0.0
        %1132 = vmatprep.subr.mxu0 0.0
        %1133 = vmatpush1.msra.mxu0 0.0
        %1134 = vmatprep.subr.mxu0 0.0
        %1135 = vmatpush1.msra.mxu0 0.0
        %1136 = vmatprep.subr.mxu0 0.0
        %1137 = vmatpush1.msra.mxu0 0.0
        %1138 = vmatprep.subr.mxu0 0.0
        %1139 = vmatpush1.msra.mxu0 0.0
        %1140 = vmatprep.subr.mxu0 0.0
        %1141 = vmatpush1.msra.mxu0 0.0
        %1142 = vmatprep.subr.mxu0 0.0
        %1143 = vmatpush1.msra.mxu0 0.0
        %1144 = vmatprep.subr.mxu0 0.0
        %1145 = vmatpush1.msra.mxu0 0.0
        %1146 = vmatprep.subr.mxu0 0.0
        %1147 = vmatpush1.msra.mxu0 0.0
        %1148 = vmatprep.subr.mxu0 0.0
        %1149 = vmatpush1.msra.mxu0 0.0
        %1150 = vmatprep.subr.mxu0 0.0
        %1151 = vmatpush1.msra.mxu0 0.0
        %1152 = vmatprep.subr.mxu0 0.0
        %1153 = vmatpush1.msra.mxu0 0.0
        %1154 = vmatprep.subr.mxu0 0.0
        %1155 = vmatpush1.msra.mxu0 0.0
        %1156 = vmatprep.subr.mxu0 0.0
        %1157 = vmatpush1.msra.mxu0 0.0
        %1158 = vmatprep.subr.mxu0 0.0
        %1159 = vmatpush1.msra.mxu0 0.0
        %1160 = vmatprep.mubr.f32.mxu0 0.0
        %1161 = vmatmul.mubr.f32.gmra.mrb[0].mxu0 %v1094
        %v1162 = vpop.f32.mrb[0].mxu0
        %v1163 = vadd.f32 %v1090, %v1162
        %v1164 = vpop.f32.mrb[0].mxu0
        %1165 = vdwg.mxu0
        %v1166 = vld [vmem:[%s9] sm:$0x3]
        %vm1167 = vcmask 261120
        %v1168 = vsel %vm1167, %v1163, 0.0
        %1169 = vadd.xlane.f32.xlu0 %v1168
        %v1170 = vpop.xlane.xlu0 %1169
        %v1171 = vrcp.pop 32.0
        %v1172 = vmul.f32 %v1170, %v1171
        %v1173 = vsub.f32 %v1163, %v1172
        %v1174 = vmul.f32 %v1173, %v1173
        %v1175 = vsel %vm1167, %v1174, 0.0
        %1176 = vadd.xlane.f32.xlu0 %v1175
        %v1177 = vpop.xlane.xlu0 %1176
        %v1178 = vmul.f32 %v1177, %v1171
        %v1179 = vadd.f32 %v1178, 1e-05
        %v1180 = vrsqrt.pop %v1179
        %v1181 = vmul.f32 %v1173, %v1180
        %v1182 = vlaneseq
        %v1183 = vshrl.u32 %v1182, 7
        %v1184 = vsub.s32 0, %v1183
        %v1185 = vrot.slane %v1166, %v1184
        %v1186 = vmul.f32 %v1181, %v1185
        %v1187 = vlaneseq
        %v1188 = vshrl.u32 %v1187, 7
        %v1189 = vsub.s32 1, %v1188
        %v1190 = vrot.slane %v1166, %v1189
        %v1191 = vadd.f32 %v1186, %v1190
        %v1192 = vmul.f32 %v1191, 5.656854
        %v1193 = vld [vmem:[%s17] sm:$0xff]
        %v1194 = vld [vmem:[%s17 + $0x8] sm:$0xff]
        %v1195 = vld [vmem:[%s17 + $0x10] sm:$0xff]
        %v1196 = vld [vmem:[%s17 + $0x18] sm:$0xff]
        %v1197 = vld [vmem:[%s17 + $0x20] sm:$0xff]
        %v1198 = vld [vmem:[%s17 + $0x28] sm:$0xff]
        %v1199 = vld [vmem:[%s17 + $0x30] sm:$0xff]
        %v1200 = vld [vmem:[%s17 + $0x38] sm:$0xff]
        %v1201 = vld [vmem:[%s17 + $0x40] sm:$0xff]
        %v1202 = vld [vmem:[%s17 + $0x48] sm:$0xff]
        %v1203 = vld [vmem:[%s17 + $0x50] sm:$0xff]
        %v1204 = vld [vmem:[%s17 + $0x58] sm:$0xff]
        %v1205 = vld [vmem:[%s17 + $0x60] sm:$0xff]
        %v1206 = vld [vmem:[%s17 + $0x68] sm:$0xff]
        %v1207 = vld [vmem:[%s17 + $0x70] sm:$0xff]
        %v1208 = vld [vmem:[%s17 + $0x78] sm:$0xff]
        %v1209 = vld [vmem:[%s17 + $0x80] sm:$0xff]
        %v1210 = vld [vmem:[%s17 + $0x88] sm:$0xff]
        %v1211 = vld [vmem:[%s17 + $0x90] sm:$0xff]
        %v1212 = vld [vmem:[%s17 + $0x98] sm:$0xff]
        %v1213 = vld [vmem:[%s17 + $0xa0] sm:$0xff]
        %v1214 = vld [vmem:[%s17 + $0xa8] sm:$0xff]
        %v1215 = vld [vmem:[%s17 + $0xb0] sm:$0xff]
        %v1216 = vld [vmem:[%s17 + $0xb8] sm:$0xff]
        %v1217 = vld [vmem:[%s17 + $0xc0] sm:$0xff]
        %v1218 = vld [vmem:[%s17 + $0xc8] sm:$0xff]
        %v1219 = vld [vmem:[%s17 + $0xd0] sm:$0xff]
        %v1220 = vld [vmem:[%s17 + $0xd8] sm:$0xff]
        %v1221 = vld [vmem:[%s17 + $0xe0] sm:$0xff]
        %v1222 = vld [vmem:[%s17 + $0xe8] sm:$0xff]
        %v1223 = vld [vmem:[%s17 + $0xf0] sm:$0xff]
        %v1224 = vld [vmem:[%s17 + $0xf8] sm:$0xff]
        %v1225 = vld [vmem:[%s19] sm:$0x1f]
        %v1226 = vld [vmem:[%s21] sm:$0x1f]
        %v1227 = vsel %vm1167, %v1192, 0.0
        %1228 = vadd.xlane.f32.xlu0 %v1227
        %v1229 = vpop.xlane.xlu0 %1228
        %v1230 = vmul.f32 %v1229, %v1171
        %v1231 = vsub.f32 %v1192, %v1230
        %v1232 = vmul.f32 %v1231, %v1231
        %v1233 = vsel %vm1167, %v1232, 0.0
        %1234 = vadd.xlane.f32.xlu0 %v1233
        %v1235 = vpop.xlane.xlu0 %1234
        %v1236 = vmul.f32 %v1235, %v1171
        %v1237 = vadd.f32 %v1236, 1e-12
        %v1238 = vrsqrt.pop %v1237
        %v1239 = vmul.f32 %v1231, %v1238
        %v1240 = vlaneseq
        %v1241 = vshrl.u32 %v1240, 7
        %v1242 = vsub.s32 0, %v1241
        %v1243 = vrot.slane %v1225, %v1242
        %v1244 = vmul.f32 %v1239, %v1243
        %v1245 = vlaneseq
        %v1246 = vshrl.u32 %v1245, 7
        %v1247 = vsub.s32 0, %v1246
        %v1248 = vrot.slane %v1226, %v1247
        %v1249 = vadd.f32 %v1244, %v1248
        %v1250 = vld [vmem:[%s23] sm:$0xff]
        %v1251 = vld [vmem:[%s23 + $0x8] sm:$0xff]
        %v1252 = vld [vmem:[%s23 + $0x10] sm:$0xff]
        %v1253 = vld [vmem:[%s23 + $0x18] sm:$0xff]
        %v1254 = vld [vmem:[%s25] sm:$0x1]
        %v1256 = vlaneseq
        %v1257 = vshrl.u32 %v1256, 7
        %v1258 = vsub.s32 0, %v1257
        %v1259 = vrot.slane %v1254, %v1258
        %v1262 = vsel %vm1167, %v1249, 0
        %1264 = vmatprep.subr.mxu0 0.0
        %1265 = vmatpush1.msra.mxu0 %v1250
        %1266 = vmatprep.subr.mxu0 0.0
        %1267 = vmatpush1.msra.mxu0 %v1251
        %1268 = vmatprep.subr.mxu0 0.0
        %1269 = vmatpush1.msra.mxu0 %v1252
        %1270 = vmatprep.subr.mxu0 0.0
        %1271 = vmatpush1.msra.mxu0 %v1253
        %1272 = vmatprep.subr.mxu0 0.0
        %1273 = vmatpush1.msra.mxu0 0.0
        %1274 = vmatprep.subr.mxu0 0.0
        %1275 = vmatpush1.msra.mxu0 0.0
        %1276 = vmatprep.subr.mxu0 0.0
        %1277 = vmatpush1.msra.mxu0 0.0
        %1278 = vmatprep.subr.mxu0 0.0
        %1279 = vmatpush1.msra.mxu0 0.0
        %1280 = vmatprep.subr.mxu0 0.0
        %1281 = vmatpush1.msra.mxu0 0.0
        %1282 = vmatprep.subr.mxu0 0.0
        %1283 = vmatpush1.msra.mxu0 0.0
        %1284 = vmatprep.subr.mxu0 0.0
        %1285 = vmatpush1.msra.mxu0 0.0
        %1286 = vmatprep.subr.mxu0 0.0
        %1287 = vmatpush1.msra.mxu0 0.0
        %1288 = vmatprep.subr.mxu0 0.0
        %1289 = vmatpush1.msra.mxu0 0.0
        %1290 = vmatprep.subr.mxu0 0.0
        %1291 = vmatpush1.msra.mxu0 0.0
        %1292 = vmatprep.subr.mxu0 0.0
        %1293 = vmatpush1.msra.mxu0 0.0
        %1294 = vmatprep.subr.mxu0 0.0
        %1295 = vmatpush1.msra.mxu0 0.0
        %1296 = vmatprep.subr.mxu0 0.0
        %1297 = vmatpush1.msra.mxu0 0.0
        %1298 = vmatprep.subr.mxu0 0.0
        %1299 = vmatpush1.msra.mxu0 0.0
        %1300 = vmatprep.subr.mxu0 0.0
        %1301 = vmatpush1.msra.mxu0 0.0
        %1302 = vmatprep.subr.mxu0 0.0
        %1303 = vmatpush1.msra.mxu0 0.0
        %1304 = vmatprep.subr.mxu0 0.0
        %1305 = vmatpush1.msra.mxu0 0.0
        %1306 = vmatprep.subr.mxu0 0.0
        %1307 = vmatpush1.msra.mxu0 0.0
        %1308 = vmatprep.subr.mxu0 0.0
        %1309 = vmatpush1.msra.mxu0 0.0
        %1310 = vmatprep.subr.mxu0 0.0
        %1311 = vmatpush1.msra.mxu0 0.0
        %1312 = vmatprep.subr.mxu0 0.0
        %1313 = vmatpush1.msra.mxu0 0.0
        %1314 = vmatprep.subr.mxu0 0.0
        %1315 = vmatpush1.msra.mxu0 0.0
        %1316 = vmatprep.subr.mxu0 0.0
        %1317 = vmatpush1.msra.mxu0 0.0
        %1318 = vmatprep.subr.mxu0 0.0
        %1319 = vmatpush1.msra.mxu0 0.0
        %1320 = vmatprep.subr.mxu0 0.0
        %1321 = vmatpush1.msra.mxu0 0.0
        %1322 = vmatprep.subr.mxu0 0.0
        %1323 = vmatpush1.msra.mxu0 0.0
        %1324 = vmatprep.subr.mxu0 0.0
        %1325 = vmatpush1.msra.mxu0 0.0
        %1326 = vmatprep.subr.mxu0 0.0
        %1327 = vmatpush1.msra.mxu0 0.0
        %1328 = vmatprep.mubr.f32.mxu0 0.0
        %1329 = vmatmul.mubr.f32.gmra.mrb[0].mxu0 %v1262
        %v1330 = vpop.f32.mrb[0].mxu0
        %v1331 = vadd.f32 %v1259, %v1330
        %v1332 = vpop.f32.mrb[0].mxu0
        %1333 = vdwg.mxu0
        %v1334 = vxor.u32 %v1331, 2147483648
        %v1335 = vmul.f32 %v1334, 1.442695
        %v1336 = vpow.pop %v1335
        %v1337 = vadd.f32 %v1336, 1.0
        %v1338 = vrcp.pop %v1337
        %v1339 = vmul.f32 1.0, %v1338
        %v1340 = vmul.f32 %v1331, %v1339
        %v1341 = vld [vmem:[%s27] sm:$0xff]
        %v1342 = vld [vmem:[%s27 + $0x8] sm:$0xff]
        %v1343 = vld [vmem:[%s27 + $0x10] sm:$0xff]
        %v1344 = vld [vmem:[%s27 + $0x18] sm:$0xff]
        %v1345 = vld [vmem:[%s27 + $0x20] sm:$0xff]
        %v1346 = vld [vmem:[%s27 + $0x28] sm:$0xff]
        %v1347 = vld [vmem:[%s27 + $0x30] sm:$0xff]
        %v1348 = vld [vmem:[%s27 + $0x38] sm:$0xff]
        %v1349 = vld [vmem:[%s29] sm:$0x1]
        %v1351 = vlaneseq
        %v1352 = vshrl.u32 %v1351, 7
        %v1353 = vsub.s32 0, %v1352
        %v1354 = vrot.slane %v1349, %v1353
        %vm1356 = vcmask 523264
        %v1358 = vsel %vm1356, %v1340, 0
        %1360 = vmatprep.subr.mxu0 0.0
        %1361 = vmatpush1.msra.mxu0 %v1341
        %1362 = vmatprep.subr.mxu0 0.0
        %1363 = vmatpush1.msra.mxu0 %v1342
        %1364 = vmatprep.subr.mxu0 0.0
        %1365 = vmatpush1.msra.mxu0 %v1343
        %1366 = vmatprep.subr.mxu0 0.0
        %1367 = vmatpush1.msra.mxu0 %v1344
        %1368 = vmatprep.subr.mxu0 0.0
        %1369 = vmatpush1.msra.mxu0 %v1345
        %1370 = vmatprep.subr.mxu0 0.0
        %1371 = vmatpush1.msra.mxu0 %v1346
        %1372 = vmatprep.subr.mxu0 0.0
        %1373 = vmatpush1.msra.mxu0 %v1347
        %1374 = vmatprep.subr.mxu0 0.0
        %1375 = vmatpush1.msra.mxu0 %v1348
        %1376 = vmatprep.subr.mxu0 0.0
        %1377 = vmatpush1.msra.mxu0 0.0
        %1378 = vmatprep.subr.mxu0 0.0
        %1379 = vmatpush1.msra.mxu0 0.0
        %1380 = vmatprep.subr.mxu0 0.0
        %1381 = vmatpush1.msra.mxu0 0.0
        %1382 = vmatprep.subr.mxu0 0.0
        %1383 = vmatpush1.msra.mxu0 0.0
        %1384 = vmatprep.subr.mxu0 0.0
        %1385 = vmatpush1.msra.mxu0 0.0
        %1386 = vmatprep.subr.mxu0 0.0
        %1387 = vmatpush1.msra.mxu0 0.0
        %1388 = vmatprep.subr.mxu0 0.0
        %1389 = vmatpush1.msra.mxu0 0.0
        %1390 = vmatprep.subr.mxu0 0.0
        %1391 = vmatpush1.msra.mxu0 0.0
        %1392 = vmatprep.subr.mxu0 0.0
        %1393 = vmatpush1.msra.mxu0 0.0
        %1394 = vmatprep.subr.mxu0 0.0
        %1395 = vmatpush1.msra.mxu0 0.0
        %1396 = vmatprep.subr.mxu0 0.0
        %1397 = vmatpush1.msra.mxu0 0.0
        %1398 = vmatprep.subr.mxu0 0.0
        %1399 = vmatpush1.msra.mxu0 0.0
        %1400 = vmatprep.subr.mxu0 0.0
        %1401 = vmatpush1.msra.mxu0 0.0
        %1402 = vmatprep.subr.mxu0 0.0
        %1403 = vmatpush1.msra.mxu0 0.0
        %1404 = vmatprep.subr.mxu0 0.0
        %1405 = vmatpush1.msra.mxu0 0.0
        %1406 = vmatprep.subr.mxu0 0.0
        %1407 = vmatpush1.msra.mxu0 0.0
        %1408 = vmatprep.subr.mxu0 0.0
        %1409 = vmatpush1.msra.mxu0 0.0
        %1410 = vmatprep.subr.mxu0 0.0
        %1411 = vmatpush1.msra.mxu0 0.0
        %1412 = vmatprep.subr.mxu0 0.0
        %1413 = vmatpush1.msra.mxu0 0.0
        %1414 = vmatprep.subr.mxu0 0.0
        %1415 = vmatpush1.msra.mxu0 0.0
        %1416 = vmatprep.subr.mxu0 0.0
        %1417 = vmatpush1.msra.mxu0 0.0
        %1418 = vmatprep.subr.mxu0 0.0
        %1419 = vmatpush1.msra.mxu0 0.0
        %1420 = vmatprep.subr.mxu0 0.0
        %1421 = vmatpush1.msra.mxu0 0.0
        %1422 = vmatprep.subr.mxu0 0.0
        %1423 = vmatpush1.msra.mxu0 0.0
        %1424 = vmatprep.mubr.f32.mxu0 0.0
        %1425 = vmatmul.mubr.f32.gmra.mrb[0].mxu0 %v1358
        %v1426 = vpop.f32.mrb[0].mxu0
        %v1427 = vadd.f32 %v1354, %v1426
        %v1428 = vpop.f32.mrb[0].mxu0
        %1429 = vdwg.mxu0
        %v1430 = vmul.f32 %v1427, 0.5
        %v1431 = vadd.f32 %v1192, %v1430
        %v1432 = vsel %vm1167, %v1431, 0.0
        %1433 = vadd.xlane.f32.xlu0 %v1432
        %v1434 = vpop.xlane.xlu0 %1433
        %v1435 = vmul.f32 %v1434, %v1171
        %v1436 = vsub.f32 %v1431, %v1435
        %v1437 = vmul.f32 %v1436, %v1436
        %v1438 = vsel %vm1167, %v1437, 0.0
        %1439 = vadd.xlane.f32.xlu0 %v1438
        %v1440 = vpop.xlane.xlu0 %1439
        %v1441 = vmul.f32 %v1440, %v1171
        %v1442 = vadd.f32 %v1441, 1e-12
        %v1443 = vrsqrt.pop %v1442
        %v1444 = vmul.f32 %v1436, %v1443
        %v1445 = vlaneseq
        %v1446 = vshrl.u32 %v1445, 7
        %v1447 = vsub.s32 1, %v1446
        %v1448 = vrot.slane %v1225, %v1447
        %v1449 = vmul.f32 %v1444, %v1448
        %v1450 = vlaneseq
        %v1451 = vshrl.u32 %v1450, 7
        %v1452 = vsub.s32 1, %v1451
        %v1453 = vrot.slane %v1226, %v1452
        %v1454 = vadd.f32 %v1449, %v1453
        %v1455 = vld [vmem:[%s31] sm:$0xff]
        %v1456 = vld [vmem:[%s31 + $0x8] sm:$0xff]
        %v1457 = vld [vmem:[%s31 + $0x10] sm:$0xff]
        %v1458 = vld [vmem:[%s31 + $0x18] sm:$0xff]
        %v1459 = vld [vmem:[%s33] sm:$0x1]
        %v1461 = vlaneseq
        %v1462 = vshrl.u32 %v1461, 7
        %v1463 = vsub.s32 0, %v1462
        %v1464 = vrot.slane %v1459, %v1463
        %v1467 = vsel %vm1167, %v1454, 0
        %1469 = vmatprep.subr.mxu0 0.0
        %1470 = vmatpush1.msra.mxu0 %v1455
        %1471 = vmatprep.subr.mxu0 0.0
        %1472 = vmatpush1.msra.mxu0 %v1456
        %1473 = vmatprep.subr.mxu0 0.0
        %1474 = vmatpush1.msra.mxu0 %v1457
        %1475 = vmatprep.subr.mxu0 0.0
        %1476 = vmatpush1.msra.mxu0 %v1458
        %1477 = vmatprep.subr.mxu0 0.0
        %1478 = vmatpush1.msra.mxu0 0.0
        %1479 = vmatprep.subr.mxu0 0.0
        %1480 = vmatpush1.msra.mxu0 0.0
        %1481 = vmatprep.subr.mxu0 0.0
        %1482 = vmatpush1.msra.mxu0 0.0
        %1483 = vmatprep.subr.mxu0 0.0
        %1484 = vmatpush1.msra.mxu0 0.0
        %1485 = vmatprep.subr.mxu0 0.0
        %1486 = vmatpush1.msra.mxu0 0.0
        %1487 = vmatprep.subr.mxu0 0.0
        %1488 = vmatpush1.msra.mxu0 0.0
        %1489 = vmatprep.subr.mxu0 0.0
        %1490 = vmatpush1.msra.mxu0 0.0
        %1491 = vmatprep.subr.mxu0 0.0
        %1492 = vmatpush1.msra.mxu0 0.0
        %1493 = vmatprep.subr.mxu0 0.0
        %1494 = vmatpush1.msra.mxu0 0.0
        %1495 = vmatprep.subr.mxu0 0.0
        %1496 = vmatpush1.msra.mxu0 0.0
        %1497 = vmatprep.subr.mxu0 0.0
        %1498 = vmatpush1.msra.mxu0 0.0
        %1499 = vmatprep.subr.mxu0 0.0
        %1500 = vmatpush1.msra.mxu0 0.0
        %1501 = vmatprep.subr.mxu0 0.0
        %1502 = vmatpush1.msra.mxu0 0.0
        %1503 = vmatprep.subr.mxu0 0.0
        %1504 = vmatpush1.msra.mxu0 0.0
        %1505 = vmatprep.subr.mxu0 0.0
        %1506 = vmatpush1.msra.mxu0 0.0
        %1507 = vmatprep.subr.mxu0 0.0
        %1508 = vmatpush1.msra.mxu0 0.0
        %1509 = vmatprep.subr.mxu0 0.0
        %1510 = vmatpush1.msra.mxu0 0.0
        %1511 = vmatprep.subr.mxu0 0.0
        %1512 = vmatpush1.msra.mxu0 0.0
        %1513 = vmatprep.subr.mxu0 0.0
        %1514 = vmatpush1.msra.mxu0 0.0
        %1515 = vmatprep.subr.mxu0 0.0
        %1516 = vmatpush1.msra.mxu0 0.0
        %1517 = vmatprep.subr.mxu0 0.0
        %1518 = vmatpush1.msra.mxu0 0.0
        %1519 = vmatprep.subr.mxu0 0.0
        %1520 = vmatpush1.msra.mxu0 0.0
        %1521 = vmatprep.subr.mxu0 0.0
        %1522 = vmatpush1.msra.mxu0 0.0
        %1523 = vmatprep.subr.mxu0 0.0
        %1524 = vmatpush1.msra.mxu0 0.0
        %1525 = vmatprep.subr.mxu0 0.0
        %1526 = vmatpush1.msra.mxu0 0.0
        %1527 = vmatprep.subr.mxu0 0.0
        %1528 = vmatpush1.msra.mxu0 0.0
        %1529 = vmatprep.subr.mxu0 0.0
        %1530 = vmatpush1.msra.mxu0 0.0
        %1531 = vmatprep.subr.mxu0 0.0
        %1532 = vmatpush1.msra.mxu0 0.0
        %1533 = vmatprep.mubr.f32.mxu0 0.0
        %1534 = vmatmul.mubr.f32.gmra.mrb[0].mxu0 %v1467
        %v1535 = vpop.f32.mrb[0].mxu0
        %v1536 = vadd.f32 %v1464, %v1535
        %v1537 = vpop.f32.mrb[0].mxu0
        %1538 = vdwg.mxu0
        %v1539 = vld [vmem:[%s35] sm:$0x1]
        %v1541 = vlaneseq
        %v1542 = vshrl.u32 %v1541, 7
        %v1543 = vsub.s32 0, %v1542
        %v1544 = vrot.slane %v1539, %v1543
        %v1546 = vadd.f32 %v1536, %v1544
        %v1547 = vld [vmem:[%s37] sm:$0x1]
        %v1549 = vlaneseq
        %v1550 = vshrl.u32 %v1549, 7
        %v1551 = vsub.s32 0, %v1550
        %v1552 = vrot.slane %v1547, %v1551
        %v1554 = vadd.f32 %v1536, %v1552
        %1556 = vrot.lane.b32.xlu0 %v1554, 32
        %v1557 = vpop.permute.xlu0 %1556
        %1559 = vrot.lane.b32.xlu0 %v1554, 64
        %v1560 = vpop.permute.xlu0 %1559
        %1562 = vrot.lane.b32.xlu0 %v1554, 96
        %v1563 = vpop.permute.xlu0 %1562
        %v1565 = vsel %vm1167, %v1554, %v1557
        %v1566 = vsel %vm1356, %v1565, %v1560
        %vm1567 = vcmask 785408
        %v1568 = vsel %vm1567, %v1566, %v1563
        %v1569 = vld [vmem:[%s39] sm:$0xff]
        %v1570 = vld [vmem:[%s39 + $0x8] sm:$0xff]
        %v1571 = vmul.f32 %v1568, %v1569
        %v1572 = vmul.f32 %v1568, %v1570
        %1573 = vmatprep.subr.mxu0 0.0
        %1574 = vmatpush1.msra.mxu0 %v1193
        %1575 = vmatprep.subr.mxu0 0.0
        %1576 = vmatpush1.msra.mxu0 %v1194
        %1577 = vmatprep.subr.mxu0 0.0
        %1578 = vmatpush1.msra.mxu0 %v1195
        %1579 = vmatprep.subr.mxu0 0.0
        %1580 = vmatpush1.msra.mxu0 %v1196
        %1581 = vmatprep.subr.mxu0 0.0
        %1582 = vmatpush1.msra.mxu0 %v1197
        %1583 = vmatprep.subr.mxu0 0.0
        %1584 = vmatpush1.msra.mxu0 %v1198
        %1585 = vmatprep.subr.mxu0 0.0
        %1586 = vmatpush1.msra.mxu0 %v1199
        %1587 = vmatprep.subr.mxu0 0.0
        %1588 = vmatpush1.msra.mxu0 %v1200
        %1589 = vmatprep.subr.mxu0 0.0
        %1590 = vmatpush1.msra.mxu0 %v1201
        %1591 = vmatprep.subr.mxu0 0.0
        %1592 = vmatpush1.msra.mxu0 %v1202
        %1593 = vmatprep.subr.mxu0 0.0
        %1594 = vmatpush1.msra.mxu0 %v1203
        %1595 = vmatprep.subr.mxu0 0.0
        %1596 = vmatpush1.msra.mxu0 %v1204
        %1597 = vmatprep.subr.mxu0 0.0
        %1598 = vmatpush1.msra.mxu0 %v1205
        %1599 = vmatprep.subr.mxu0 0.0
        %1600 = vmatpush1.msra.mxu0 %v1206
        %1601 = vmatprep.subr.mxu0 0.0
        %1602 = vmatpush1.msra.mxu0 %v1207
        %1603 = vmatprep.subr.mxu0 0.0
        %1604 = vmatpush1.msra.mxu0 %v1208
        %1605 = vmatprep.subr.mxu0 0.0
        %1606 = vmatpush1.msra.mxu0 %v1209
        %1607 = vmatprep.subr.mxu0 0.0
        %1608 = vmatpush1.msra.mxu0 %v1210
        %1609 = vmatprep.subr.mxu0 0.0
        %1610 = vmatpush1.msra.mxu0 %v1211
        %1611 = vmatprep.subr.mxu0 0.0
        %1612 = vmatpush1.msra.mxu0 %v1212
        %1613 = vmatprep.subr.mxu0 0.0
        %1614 = vmatpush1.msra.mxu0 %v1213
        %1615 = vmatprep.subr.mxu0 0.0
        %1616 = vmatpush1.msra.mxu0 %v1214
        %1617 = vmatprep.subr.mxu0 0.0
        %1618 = vmatpush1.msra.mxu0 %v1215
        %1619 = vmatprep.subr.mxu0 0.0
        %1620 = vmatpush1.msra.mxu0 %v1216
        %1621 = vmatprep.subr.mxu0 0.0
        %1622 = vmatpush1.msra.mxu0 %v1217
        %1623 = vmatprep.subr.mxu0 0.0
        %1624 = vmatpush1.msra.mxu0 %v1218
        %1625 = vmatprep.subr.mxu0 0.0
        %1626 = vmatpush1.msra.mxu0 %v1219
        %1627 = vmatprep.subr.mxu0 0.0
        %1628 = vmatpush1.msra.mxu0 %v1220
        %1629 = vmatprep.subr.mxu0 0.0
        %1630 = vmatpush1.msra.mxu0 %v1221
        %1631 = vmatprep.subr.mxu0 0.0
        %1632 = vmatpush1.msra.mxu0 %v1222
        %1633 = vmatprep.subr.mxu0 0.0
        %1634 = vmatpush1.msra.mxu0 %v1223
        %1635 = vmatprep.subr.mxu0 0.0
        %1636 = vmatpush1.msra.mxu0 %v1224
        %1637 = vmatprep.mubr.f32.mxu0 %v1572
        %1638 = vmatmul.mubr.f32.gmra.mrb[0].mxu0 %v1571
        %v1639 = vpop.f32.mrb[0].mxu0
        %v1640 = vadd.f32 0.0, %v1639
        %v1641 = vpop.f32.mrb[0].mxu0
        %1642 = vdwg.mxu0
        %1644 = vrot.lane.b32.xlu0 %v1536, 96
        %v1645 = vpop.permute.xlu0 %1644
        %vm1646 = vcmask 64512
        %v1648 = vsel %vm1646, %v1546, 0
        %v1650 = vsel %vm1646, %v1645, 0
        %1652 = vmatprep.subr.mxu0 0.0
        %1653 = vmatpush1.xpose.msra.mxu0 %v1650
        %1654 = vmatprep.subr.mxu0 0.0
        %1655 = vmatpush1.xpose.msra.mxu0 0.0
        %1656 = vmatprep.subr.mxu0 0.0
        %1657 = vmatpush1.xpose.msra.mxu0 0.0
        %1658 = vmatprep.subr.mxu0 0.0
        %1659 = vmatpush1.xpose.msra.mxu0 0.0
        %1660 = vmatprep.subr.mxu0 0.0
        %1661 = vmatpush1.xpose.msra.mxu0 0.0
        %1662 = vmatprep.subr.mxu0 0.0
        %1663 = vmatpush1.xpose.msra.mxu0 0.0
        %1664 = vmatprep.subr.mxu0 0.0
        %1665 = vmatpush1.xpose.msra.mxu0 0.0
        %1666 = vmatprep.subr.mxu0 0.0
        %1667 = vmatpush1.xpose.msra.mxu0 0.0
        %1668 = vmatprep.subr.mxu0 0.0
        %1669 = vmatpush1.xpose.msra.mxu0 0.0
        %1670 = vmatprep.subr.mxu0 0.0
        %1671 = vmatpush1.xpose.msra.mxu0 0.0
        %1672 = vmatprep.subr.mxu0 0.0
        %1673 = vmatpush1.xpose.msra.mxu0 0.0
        %1674 = vmatprep.subr.mxu0 0.0
        %1675 = vmatpush1.xpose.msra.mxu0 0.0
        %1676 = vmatprep.subr.mxu0 0.0
        %1677 = vmatpush1.xpose.msra.mxu0 0.0
        %1678 = vmatprep.subr.mxu0 0.0
        %1679 = vmatpush1.xpose.msra.mxu0 0.0
        %1680 = vmatprep.subr.mxu0 0.0
        %1681 = vmatpush1.xpose.msra.mxu0 0.0
        %1682 = vmatprep.subr.mxu0 0.0
        %1683 = vmatpush1.xpose.msra.mxu0 0.0
        %1684 = vmatprep.subr.mxu0 0.0
        %1685 = vmatpush1.xpose.msra.mxu0 0.0
        %1686 = vmatprep.subr.mxu0 0.0
        %1687 = vmatpush1.xpose.msra.mxu0 0.0
        %1688 = vmatprep.subr.mxu0 0.0
        %1689 = vmatpush1.xpose.msra.mxu0 0.0
        %1690 = vmatprep.subr.mxu0 0.0
        %1691 = vmatpush1.xpose.msra.mxu0 0.0
        %1692 = vmatprep.subr.mxu0 0.0
        %1693 = vmatpush1.xpose.msra.mxu0 0.0
        %1694 = vmatprep.subr.mxu0 0.0
        %1695 = vmatpush1.xpose.msra.mxu0 0.0
        %1696 = vmatprep.subr.mxu0 0.0
        %1697 = vmatpush1.xpose.msra.mxu0 0.0
        %1698 = vmatprep.subr.mxu0 0.0
        %1699 = vmatpush1.xpose.msra.mxu0 0.0
        %1700 = vmatprep.subr.mxu0 0.0
        %1701 = vmatpush1.xpose.msra.mxu0 0.0
        %1702 = vmatprep.subr.mxu0 0.0
        %1703 = vmatpush1.xpose.msra.mxu0 0.0
        %1704 = vmatprep.subr.mxu0 0.0
        %1705 = vmatpush1.xpose.msra.mxu0 0.0
        %1706 = vmatprep.subr.mxu0 0.0
        %1707 = vmatpush1.xpose.msra.mxu0 0.0
        %1708 = vmatprep.subr.mxu0 0.0
        %1709 = vmatpush1.xpose.msra.mxu0 0.0
        %1710 = vmatprep.subr.mxu0 0.0
        %1711 = vmatpush1.xpose.msra.mxu0 0.0
        %1712 = vmatprep.subr.mxu0 0.0
        %1713 = vmatpush1.xpose.msra.mxu0 0.0
        %1714 = vmatprep.subr.mxu0 0.0
        %1715 = vmatpush1.xpose.msra.mxu0 0.0
        %1716 = vmatprep.mubr.f32.mxu0 0.0
        %1717 = vmatmul.mubr.f32.gmra.mrb[0].mxu0 %v1648
        %v1718 = vpop.f32.mrb[0].mxu0
        %v1719 = vadd.f32 %v1640, %v1718
        %v1720 = vpop.f32.mrb[0].mxu0
        %1721 = vdwg.mxu0
        %v1722 = vmul.f32 %v1719, 0.35355338
        %v1723 = vsel %vm1081, 1, 0
        %v1724 = vlaneseq
        %v1725 = vshrl.u32 %v1724, 7
        %v1726 = vsub.s32 0, %v1725
        %v1727 = vrot.slane %v1723, %v1726
        %vm1728 = vcmp.eq.s32.totalorder %v1727, 1
        %v1729 = vsel %vm1728, %v1722, -3.4028235e+38
        %v1730 = vsel %vm1646, %v1729, -inf
        %1731 = vmax.xlane.f32.xlu0 %v1730
        %v1732 = vpop.xlane.xlu0 %1731
        %v1733 = vsub.f32 %v1729, %v1732
        %v1734 = vmul.f32 %v1733, 1.442695
        %v1735 = vpow.pop %v1734
        %v1736 = vsel %vm1646, %v1735, 0.0
        %1737 = vadd.xlane.f32.xlu0 %v1736
        %v1738 = vpop.xlane.xlu0 %1737
        %v1739 = vrcp.pop %v1738
        %v1740 = vmul.f32 %v1735, %v1739
        %v1741 = vsel %vm1728, %v1740, 0.0
        %1742 = vrot.lane.b32.xlu0 %v1536, 64
        %v1743 = vpop.permute.xlu0 %1742
        %v1746 = vsel %vm1646, %v1741, 0
        %1748 = vmatprep.subr.mxu0 0.0
        %1749 = vmatpush1.msra.mxu0 %v1743
        %1750 = vmatprep.subr.mxu0 0.0
        %1751 = vmatpush1.msra.mxu0 0.0
        %1752 = vmatprep.subr.mxu0 0.0
        %1753 = vmatpush1.msra.mxu0 0.0
        %1754 = vmatprep.subr.mxu0 0.0
        %1755 = vmatpush1.msra.mxu0 0.0
        %1756 = vmatprep.subr.mxu0 0.0
        %1757 = vmatpush1.msra.mxu0 0.0
        %1758 = vmatprep.subr.mxu0 0.0
        %1759 = vmatpush1.msra.mxu0 0.0
        %1760 = vmatprep.subr.mxu0 0.0
        %1761 = vmatpush1.msra.mxu0 0.0
        %1762 = vmatprep.subr.mxu0 0.0
        %1763 = vmatpush1.msra.mxu0 0.0
        %1764 = vmatprep.subr.mxu0 0.0
        %1765 = vmatpush1.msra.mxu0 0.0
        %1766 = vmatprep.subr.mxu0 0.0
        %1767 = vmatpush1.msra.mxu0 0.0
        %1768 = vmatprep.subr.mxu0 0.0
        %1769 = vmatpush1.msra.mxu0 0.0
        %1770 = vmatprep.subr.mxu0 0.0
        %1771 = vmatpush1.msra.mxu0 0.0
        %1772 = vmatprep.subr.mxu0 0.0
        %1773 = vmatpush1.msra.mxu0 0.0
        %1774 = vmatprep.subr.mxu0 0.0
        %1775 = vmatpush1.msra.mxu0 0.0
        %1776 = vmatprep.subr.mxu0 0.0
        %1777 = vmatpush1.msra.mxu0 0.0
        %1778 = vmatprep.subr.mxu0 0.0
        %1779 = vmatpush1.msra.mxu0 0.0
        %1780 = vmatprep.subr.mxu0 0.0
        %1781 = vmatpush1.msra.mxu0 0.0
        %1782 = vmatprep.subr.mxu0 0.0
        %1783 = vmatpush1.msra.mxu0 0.0
        %1784 = vmatprep.subr.mxu0 0.0
        %1785 = vmatpush1.msra.mxu0 0.0
        %1786 = vmatprep.subr.mxu0 0.0
        %1787 = vmatpush1.msra.mxu0 0.0
        %1788 = vmatprep.subr.mxu0 0.0
        %1789 = vmatpush1.msra.mxu0 0.0
        %1790 = vmatprep.subr.mxu0 0.0
        %1791 = vmatpush1.msra.mxu0 0.0
        %1792 = vmatprep.subr.mxu0 0.0
        %1793 = vmatpush1.msra.mxu0 0.0
        %1794 = vmatprep.subr.mxu0 0.0
        %1795 = vmatpush1.msra.mxu0 0.0
        %1796 = vmatprep.subr.mxu0 0.0
        %1797 = vmatpush1.msra.mxu0 0.0
        %1798 = vmatprep.subr.mxu0 0.0
        %1799 = vmatpush1.msra.mxu0 0.0
        %1800 = vmatprep.subr.mxu0 0.0
        %1801 = vmatpush1.msra.mxu0 0.0
        %1802 = vmatprep.subr.mxu0 0.0
        %1803 = vmatpush1.msra.mxu0 0.0
        %1804 = vmatprep.subr.mxu0 0.0
        %1805 = vmatpush1.msra.mxu0 0.0
        %1806 = vmatprep.subr.mxu0 0.0
        %1807 = vmatpush1.msra.mxu0 0.0
        %1808 = vmatprep.subr.mxu0 0.0
        %1809 = vmatpush1.msra.mxu0 0.0
        %1810 = vmatprep.subr.mxu0 0.0
        %1811 = vmatpush1.msra.mxu0 0.0
        %1812 = vmatprep.mubr.f32.mxu0 0.0
        %1813 = vmatmul.mubr.f32.gmra.mrb[0].mxu0 %v1746
        %v1814 = vpop.f32.mrb[0].mxu0
        %v1815 = vadd.f32 0.0, %v1814
        %v1816 = vpop.f32.mrb[0].mxu0
        %1817 = vdwg.mxu0
        %1818 = vrot.lane.b32.xlu0 %v1546, 120
        %v1819 = vpop.permute.xlu0 %1818
        %1820 = vrot.lane.b32.xlu0 %v1536, 88
        %v1821 = vpop.permute.xlu0 %1820
        %1823 = vrot.lane.b32.xlu0 %v1640, 120
        %v1824 = vpop.permute.xlu0 %1823
        %v1826 = vsel %vm1646, %v1819, 0
        %v1828 = vsel %vm1646, %v1821, 0
        %1830 = vmatprep.subr.mxu0 0.0
        %1831 = vmatpush1.xpose.msra.mxu0 %v1828
        %1832 = vmatprep.subr.mxu0 0.0
        %1833 = vmatpush1.xpose.msra.mxu0 0.0
        %1834 = vmatprep.subr.mxu0 0.0
        %1835 = vmatpush1.xpose.msra.mxu0 0.0
        %1836 = vmatprep.subr.mxu0 0.0
        %1837 = vmatpush1.xpose.msra.mxu0 0.0
        %1838 = vmatprep.subr.mxu0 0.0
        %1839 = vmatpush1.xpose.msra.mxu0 0.0
        %1840 = vmatprep.subr.mxu0 0.0
        %1841 = vmatpush1.xpose.msra.mxu0 0.0
        %1842 = vmatprep.subr.mxu0 0.0
        %1843 = vmatpush1.xpose.msra.mxu0 0.0
        %1844 = vmatprep.subr.mxu0 0.0
        %1845 = vmatpush1.xpose.msra.mxu0 0.0
        %1846 = vmatprep.subr.mxu0 0.0
        %1847 = vmatpush1.xpose.msra.mxu0 0.0
        %1848 = vmatprep.subr.mxu0 0.0
        %1849 = vmatpush1.xpose.msra.mxu0 0.0
        %1850 = vmatprep.subr.mxu0 0.0
        %1851 = vmatpush1.xpose.msra.mxu0 0.0
        %1852 = vmatprep.subr.mxu0 0.0
        %1853 = vmatpush1.xpose.msra.mxu0 0.0
        %1854 = vmatprep.subr.mxu0 0.0
        %1855 = vmatpush1.xpose.msra.mxu0 0.0
        %1856 = vmatprep.subr.mxu0 0.0
        %1857 = vmatpush1.xpose.msra.mxu0 0.0
        %1858 = vmatprep.subr.mxu0 0.0
        %1859 = vmatpush1.xpose.msra.mxu0 0.0
        %1860 = vmatprep.subr.mxu0 0.0
        %1861 = vmatpush1.xpose.msra.mxu0 0.0
        %1862 = vmatprep.subr.mxu0 0.0
        %1863 = vmatpush1.xpose.msra.mxu0 0.0
        %1864 = vmatprep.subr.mxu0 0.0
        %1865 = vmatpush1.xpose.msra.mxu0 0.0
        %1866 = vmatprep.subr.mxu0 0.0
        %1867 = vmatpush1.xpose.msra.mxu0 0.0
        %1868 = vmatprep.subr.mxu0 0.0
        %1869 = vmatpush1.xpose.msra.mxu0 0.0
        %1870 = vmatprep.subr.mxu0 0.0
        %1871 = vmatpush1.xpose.msra.mxu0 0.0
        %1872 = vmatprep.subr.mxu0 0.0
        %1873 = vmatpush1.xpose.msra.mxu0 0.0
        %1874 = vmatprep.subr.mxu0 0.0
        %1875 = vmatpush1.xpose.msra.mxu0 0.0
        %1876 = vmatprep.subr.mxu0 0.0
        %1877 = vmatpush1.xpose.msra.mxu0 0.0
        %1878 = vmatprep.subr.mxu0 0.0
        %1879 = vmatpush1.xpose.msra.mxu0 0.0
        %1880 = vmatprep.subr.mxu0 0.0
        %1881 = vmatpush1.xpose.msra.mxu0 0.0
        %1882 = vmatprep.subr.mxu0 0.0
        %1883 = vmatpush1.xpose.msra.mxu0 0.0
        %1884 = vmatprep.subr.mxu0 0.0
        %1885 = vmatpush1.xpose.msra.mxu0 0.0
        %1886 = vmatprep.subr.mxu0 0.0
        %1887 = vmatpush1.xpose.msra.mxu0 0.0
        %1888 = vmatprep.subr.mxu0 0.0
        %1889 = vmatpush1.xpose.msra.mxu0 0.0
        %1890 = vmatprep.subr.mxu0 0.0
        %1891 = vmatpush1.xpose.msra.mxu0 0.0
        %1892 = vmatprep.subr.mxu0 0.0
        %1893 = vmatpush1.xpose.msra.mxu0 0.0
        %1894 = vmatprep.mubr.f32.mxu0 0.0
        %1895 = vmatmul.mubr.f32.gmra.mrb[0].mxu0 %v1826
        %v1896 = vpop.f32.mrb[0].mxu0
        %v1897 = vadd.f32 %v1824, %v1896
        %v1898 = vpop.f32.mrb[0].mxu0
        %1899 = vdwg.mxu0
        %v1900 = vmul.f32 %v1897, 0.35355338
        %v1901 = vsel %vm1728, %v1900, -3.4028235e+38
        %v1902 = vsel %vm1646, %v1901, -inf
        %1903 = vmax.xlane.f32.xlu0 %v1902
        %v1904 = vpop.xlane.xlu0 %1903
        %v1905 = vsub.f32 %v1901, %v1904
        %v1906 = vmul.f32 %v1905, 1.442695
        %v1907 = vpow.pop %v1906
        %v1908 = vsel %vm1646, %v1907, 0.0
        %1909 = vadd.xlane.f32.xlu0 %v1908
        %v1910 = vpop.xlane.xlu0 %1909
        %v1911 = vrcp.pop %v1910
        %v1912 = vmul.f32 %v1907, %v1911
        %v1913 = vsel %vm1728, %v1912, 0.0
        %1914 = vrot.lane.b32.xlu0 %v1536, 56
        %v1915 = vpop.permute.xlu0 %1914
        %v1918 = vsel %vm1646, %v1913, 0
        %1920 = vmatprep.subr.mxu0 0.0
        %1921 = vmatpush1.msra.mxu0 %v1915
        %1922 = vmatprep.subr.mxu0 0.0
        %1923 = vmatpush1.msra.mxu0 0.0
        %1924 = vmatprep.subr.mxu0 0.0
        %1925 = vmatpush1.msra.mxu0 0.0
        %1926 = vmatprep.subr.mxu0 0.0
        %1927 = vmatpush1.msra.mxu0 0.0
        %1928 = vmatprep.subr.mxu0 0.0
        %1929 = vmatpush1.msra.mxu0 0.0
        %1930 = vmatprep.subr.mxu0 0.0
        %1931 = vmatpush1.msra.mxu0 0.0
        %1932 = vmatprep.subr.mxu0 0.0
        %1933 = vmatpush1.msra.mxu0 0.0
        %1934 = vmatprep.subr.mxu0 0.0
        %1935 = vmatpush1.msra.mxu0 0.0
        %1936 = vmatprep.subr.mxu0 0.0
        %1937 = vmatpush1.msra.mxu0 0.0
        %1938 = vmatprep.subr.mxu0 0.0
        %1939 = vmatpush1.msra.mxu0 0.0
        %1940 = vmatprep.subr.mxu0 0.0
        %1941 = vmatpush1.msra.mxu0 0.0
        %1942 = vmatprep.subr.mxu0 0.0
        %1943 = vmatpush1.msra.mxu0 0.0
        %1944 = vmatprep.subr.mxu0 0.0
        %1945 = vmatpush1.msra.mxu0 0.0
        %1946 = vmatprep.subr.mxu0 0.0
        %1947 = vmatpush1.msra.mxu0 0.0
        %1948 = vmatprep.subr.mxu0 0.0
        %1949 = vmatpush1.msra.mxu0 0.0
        %1950 = vmatprep.subr.mxu0 0.0
        %1951 = vmatpush1.msra.mxu0 0.0
        %1952 = vmatprep.subr.mxu0 0.0
        %1953 = vmatpush1.msra.mxu0 0.0
        %1954 = vmatprep.subr.mxu0 0.0
        %1955 = vmatpush1.msra.mxu0 0.0
        %1956 = vmatprep.subr.mxu0 0.0
        %1957 = vmatpush1.msra.mxu0 0.0
        %1958 = vmatprep.subr.mxu0 0.0
        %1959 = vmatpush1.msra.mxu0 0.0
        %1960 = vmatprep.subr.mxu0 0.0
        %1961 = vmatpush1.msra.mxu0 0.0
        %1962 = vmatprep.subr.mxu0 0.0
        %1963 = vmatpush1.msra.mxu0 0.0
        %1964 = vmatprep.subr.mxu0 0.0
        %1965 = vmatpush1.msra.mxu0 0.0
        %1966 = vmatprep.subr.mxu0 0.0
        %1967 = vmatpush1.msra.mxu0 0.0
        %1968 = vmatprep.subr.mxu0 0.0
        %1969 = vmatpush1.msra.mxu0 0.0
        %1970 = vmatprep.subr.mxu0 0.0
        %1971 = vmatpush1.msra.mxu0 0.0
        %1972 = vmatprep.subr.mxu0 0.0
        %1973 = vmatpush1.msra.mxu0 0.0
        %1974 = vmatprep.subr.mxu0 0.0
        %1975 = vmatpush1.msra.mxu0 0.0
        %1976 = vmatprep.subr.mxu0 0.0
        %1977 = vmatpush1.msra.mxu0 0.0
        %1978 = vmatprep.subr.mxu0 0.0
        %1979 = vmatpush1.msra.mxu0 0.0
        %1980 = vmatprep.subr.mxu0 0.0
        %1981 = vmatpush1.msra.mxu0 0.0
        %1982 = vmatprep.subr.mxu0 0.0
        %1983 = vmatpush1.msra.mxu0 0.0
        %1984 = vmatprep.mubr.f32.mxu0 0.0
        %1985 = vmatmul.mubr.f32.gmra.mrb[0].mxu0 %v1918
        %v1986 = vpop.f32.mrb[0].mxu0
        %v1987 = vadd.f32 0.0, %v1986
        %v1988 = vpop.f32.mrb[0].mxu0
        %1989 = vdwg.mxu0
        %1990 = vrot.lane.b32.xlu0 %v1546, 112
        %v1991 = vpop.permute.xlu0 %1990
        %1992 = vrot.lane.b32.xlu0 %v1536, 80
        %v1993 = vpop.permute.xlu0 %1992
        %1994 = vrot.lane.b32.xlu0 %v1640, 112
        %v1995 = vpop.permute.xlu0 %1994
        %v1997 = vsel %vm1646, %v1991, 0
        %v1999 = vsel %vm1646, %v1993, 0
        %2001 = vmatprep.subr.mxu0 0.0
        %2002 = vmatpush1.xpose.msra.mxu0 %v1999
        %2003 = vmatprep.subr.mxu0 0.0
        %2004 = vmatpush1.xpose.msra.mxu0 0.0
        %2005 = vmatprep.subr.mxu0 0.0
        %2006 = vmatpush1.xpose.msra.mxu0 0.0
        %2007 = vmatprep.subr.mxu0 0.0
        %2008 = vmatpush1.xpose.msra.mxu0 0.0
        %2009 = vmatprep.subr.mxu0 0.0
        %2010 = vmatpush1.xpose.msra.mxu0 0.0
        %2011 = vmatprep.subr.mxu0 0.0
        %2012 = vmatpush1.xpose.msra.mxu0 0.0
        %2013 = vmatprep.subr.mxu0 0.0
        %2014 = vmatpush1.xpose.msra.mxu0 0.0
        %2015 = vmatprep.subr.mxu0 0.0
        %2016 = vmatpush1.xpose.msra.mxu0 0.0
        %2017 = vmatprep.subr.mxu0 0.0
        %2018 = vmatpush1.xpose.msra.mxu0 0.0
        %2019 = vmatprep.subr.mxu0 0.0
        %2020 = vmatpush1.xpose.msra.mxu0 0.0
        %2021 = vmatprep.subr.mxu0 0.0
        %2022 = vmatpush1.xpose.msra.mxu0 0.0
        %2023 = vmatprep.subr.mxu0 0.0
        %2024 = vmatpush1.xpose.msra.mxu0 0.0
        %2025 = vmatprep.subr.mxu0 0.0
        %2026 = vmatpush1.xpose.msra.mxu0 0.0
        %2027 = vmatprep.subr.mxu0 0.0
        %2028 = vmatpush1.xpose.msra.mxu0 0.0
        %2029 = vmatprep.subr.mxu0 0.0
        %2030 = vmatpush1.xpose.msra.mxu0 0.0
        %2031 = vmatprep.subr.mxu0 0.0
        %2032 = vmatpush1.xpose.msra.mxu0 0.0
        %2033 = vmatprep.subr.mxu0 0.0
        %2034 = vmatpush1.xpose.msra.mxu0 0.0
        %2035 = vmatprep.subr.mxu0 0.0
        %2036 = vmatpush1.xpose.msra.mxu0 0.0
        %2037 = vmatprep.subr.mxu0 0.0
        %2038 = vmatpush1.xpose.msra.mxu0 0.0
        %2039 = vmatprep.subr.mxu0 0.0
        %2040 = vmatpush1.xpose.msra.mxu0 0.0
        %2041 = vmatprep.subr.mxu0 0.0
        %2042 = vmatpush1.xpose.msra.mxu0 0.0
        %2043 = vmatprep.subr.mxu0 0.0
        %2044 = vmatpush1.xpose.msra.mxu0 0.0
        %2045 = vmatprep.subr.mxu0 0.0
        %2046 = vmatpush1.xpose.msra.mxu0 0.0
        %2047 = vmatprep.subr.mxu0 0.0
        %2048 = vmatpush1.xpose.msra.mxu0 0.0
        %2049 = vmatprep.subr.mxu0 0.0
        %2050 = vmatpush1.xpose.msra.mxu0 0.0
        %2051 = vmatprep.subr.mxu0 0.0
        %2052 = vmatpush1.xpose.msra.mxu0 0.0
        %2053 = vmatprep.subr.mxu0 0.0
        %2054 = vmatpush1.xpose.msra.mxu0 0.0
        %2055 = vmatprep.subr.mxu0 0.0
        %2056 = vmatpush1.xpose.msra.mxu0 0.0
        %2057 = vmatprep.subr.mxu0 0.0
        %2058 = vmatpush1.xpose.msra.mxu0 0.0
        %2059 = vmatprep.subr.mxu0 0.0
        %2060 = vmatpush1.xpose.msra.mxu0 0.0
        %2061 = vmatprep.subr.mxu0 0.0
        %2062 = vmatpush1.xpose.msra.mxu0 0.0
        %2063 = vmatprep.subr.mxu0 0.0
        %2064 = vmatpush1.xpose.msra.mxu0 0.0
        %2065 = vmatprep.mubr.f32.mxu0 0.0
        %2066 = vmatmul.mubr.f32.gmra.mrb[0].mxu0 %v1997
        %v2067 = vpop.f32.mrb[0].mxu0
        %v2068 = vadd.f32 %v1995, %v2067
        %v2069 = vpop.f32.mrb[0].mxu0
        %2070 = vdwg.mxu0
        %v2071 = vmul.f32 %v2068, 0.35355338
        %v2072 = vsel %vm1728, %v2071, -3.4028235e+38
        %v2073 = vsel %vm1646, %v2072, -inf
        %2074 = vmax.xlane.f32.xlu0 %v2073
        %v2075 = vpop.xlane.xlu0 %2074
        %v2076 = vsub.f32 %v2072, %v2075
        %v2077 = vmul.f32 %v2076, 1.442695
        %v2078 = vpow.pop %v2077
        %v2079 = vsel %vm1646, %v2078, 0.0
        %2080 = vadd.xlane.f32.xlu0 %v2079
        %v2081 = vpop.xlane.xlu0 %2080
        %v2082 = vrcp.pop %v2081
        %v2083 = vmul.f32 %v2078, %v2082
        %v2084 = vsel %vm1728, %v2083, 0.0
        %2085 = vrot.lane.b32.xlu0 %v1536, 48
        %v2086 = vpop.permute.xlu0 %2085
        %v2089 = vsel %vm1646, %v2084, 0
        %2091 = vmatprep.subr.mxu0 0.0
        %2092 = vmatpush1.msra.mxu0 %v2086
        %2093 = vmatprep.subr.mxu0 0.0
        %2094 = vmatpush1.msra.mxu0 0.0
        %2095 = vmatprep.subr.mxu0 0.0
        %2096 = vmatpush1.msra.mxu0 0.0
        %2097 = vmatprep.subr.mxu0 0.0
        %2098 = vmatpush1.msra.mxu0 0.0
        %2099 = vmatprep.subr.mxu0 0.0
        %2100 = vmatpush1.msra.mxu0 0.0
        %2101 = vmatprep.subr.mxu0 0.0
        %2102 = vmatpush1.msra.mxu0 0.0
        %2103 = vmatprep.subr.mxu0 0.0
        %2104 = vmatpush1.msra.mxu0 0.0
        %2105 = vmatprep.subr.mxu0 0.0
        %2106 = vmatpush1.msra.mxu0 0.0
        %2107 = vmatprep.subr.mxu0 0.0
        %2108 = vmatpush1.msra.mxu0 0.0
        %2109 = vmatprep.subr.mxu0 0.0
        %2110 = vmatpush1.msra.mxu0 0.0
        %2111 = vmatprep.subr.mxu0 0.0
        %2112 = vmatpush1.msra.mxu0 0.0
        %2113 = vmatprep.subr.mxu0 0.0
        %2114 = vmatpush1.msra.mxu0 0.0
        %2115 = vmatprep.subr.mxu0 0.0
        %2116 = vmatpush1.msra.mxu0 0.0
        %2117 = vmatprep.subr.mxu0 0.0
        %2118 = vmatpush1.msra.mxu0 0.0
        %2119 = vmatprep.subr.mxu0 0.0
        %2120 = vmatpush1.msra.mxu0 0.0
        %2121 = vmatprep.subr.mxu0 0.0
        %2122 = vmatpush1.msra.mxu0 0.0
        %2123 = vmatprep.subr.mxu0 0.0
        %2124 = vmatpush1.msra.mxu0 0.0
        %2125 = vmatprep.subr.mxu0 0.0
        %2126 = vmatpush1.msra.mxu0 0.0
        %2127 = vmatprep.subr.mxu0 0.0
        %2128 = vmatpush1.msra.mxu0 0.0
        %2129 = vmatprep.subr.mxu0 0.0
        %2130 = vmatpush1.msra.mxu0 0.0
        %2131 = vmatprep.subr.mxu0 0.0
        %2132 = vmatpush1.msra.mxu0 0.0
        %2133 = vmatprep.subr.mxu0 0.0
        %2134 = vmatpush1.msra.mxu0 0.0
        %2135 = vmatprep.subr.mxu0 0.0
        %2136 = vmatpush1.msra.mxu0 0.0
        %2137 = vmatprep.subr.mxu0 0.0
        %2138 = vmatpush1.msra.mxu0 0.0
        %2139 = vmatprep.subr.mxu0 0.0
        %2140 = vmatpush1.msra.mxu0 0.0
        %2141 = vmatprep.subr.mxu0 0.0
        %2142 = vmatpush1.msra.mxu0 0.0
        %2143 = vmatprep.subr.mxu0 0.0
        %2144 = vmatpush1.msra.mxu0 0.0
        %2145 = vmatprep.subr.mxu0 0.0
        %2146 = vmatpush1.msra.mxu0 0.0
        %2147 = vmatprep.subr.mxu0 0.0
        %2148 = vmatpush1.msra.mxu0 0.0
        %2149 = vmatprep.subr.mxu0 0.0
        %2150 = vmatpush1.msra.mxu0 0.0
        %2151 = vmatprep.subr.mxu0 0.0
        %2152 = vmatpush1.msra.mxu0 0.0
        %2153 = vmatprep.subr.mxu0 0.0
        %2154 = vmatpush1.msra.mxu0 0.0
        %2155 = vmatprep.mubr.f32.mxu0 0.0
        %2156 = vmatmul.mubr.f32.gmra.mrb[0].mxu0 %v2089
        %v2157 = vpop.f32.mrb[0].mxu0
        %v2158 = vadd.f32 0.0, %v2157
        %v2159 = vpop.f32.mrb[0].mxu0
        %2160 = vdwg.mxu0
        %2161 = vrot.lane.b32.xlu0 %v1546, 104
        %v2162 = vpop.permute.xlu0 %2161
        %2163 = vrot.lane.b32.xlu0 %v1536, 72
        %v2164 = vpop.permute.xlu0 %2163
        %2165 = vrot.lane.b32.xlu0 %v1640, 104
        %v2166 = vpop.permute.xlu0 %2165
        %v2168 = vsel %vm1646, %v2162, 0
        %v2170 = vsel %vm1646, %v2164, 0
        %2172 = vmatprep.subr.mxu0 0.0
        %2173 = vmatpush1.xpose.msra.mxu0 %v2170
        %2174 = vmatprep.subr.mxu0 0.0
        %2175 = vmatpush1.xpose.msra.mxu0 0.0
        %2176 = vmatprep.subr.mxu0 0.0
        %2177 = vmatpush1.xpose.msra.mxu0 0.0
        %2178 = vmatprep.subr.mxu0 0.0
        %2179 = vmatpush1.xpose.msra.mxu0 0.0
        %2180 = vmatprep.subr.mxu0 0.0
        %2181 = vmatpush1.xpose.msra.mxu0 0.0
        %2182 = vmatprep.subr.mxu0 0.0
        %2183 = vmatpush1.xpose.msra.mxu0 0.0
        %2184 = vmatprep.subr.mxu0 0.0
        %2185 = vmatpush1.xpose.msra.mxu0 0.0
        %2186 = vmatprep.subr.mxu0 0.0
        %2187 = vmatpush1.xpose.msra.mxu0 0.0
        %2188 = vmatprep.subr.mxu0 0.0
        %2189 = vmatpush1.xpose.msra.mxu0 0.0
        %2190 = vmatprep.subr.mxu0 0.0
        %2191 = vmatpush1.xpose.msra.mxu0 0.0
        %2192 = vmatprep.subr.mxu0 0.0
        %2193 = vmatpush1.xpose.msra.mxu0 0.0
        %2194 = vmatprep.subr.mxu0 0.0
        %2195 = vmatpush1.xpose.msra.mxu0 0.0
        %2196 = vmatprep.subr.mxu0 0.0
        %2197 = vmatpush1.xpose.msra.mxu0 0.0
        %2198 = vmatprep.subr.mxu0 0.0
        %2199 = vmatpush1.xpose.msra.mxu0 0.0
        %2200 = vmatprep.subr.mxu0 0.0
        %2201 = vmatpush1.xpose.msra.mxu0 0.0
        %2202 = vmatprep.subr.mxu0 0.0
        %2203 = vmatpush1.xpose.msra.mxu0 0.0
        %2204 = vmatprep.subr.mxu0 0.0
        %2205 = vmatpush1.xpose.msra.mxu0 0.0
        %2206 = vmatprep.subr.mxu0 0.0
        %2207 = vmatpush1.xpose.msra.mxu0 0.0
        %2208 = vmatprep.subr.mxu0 0.0
        %2209 = vmatpush1.xpose.msra.mxu0 0.0
        %2210 = vmatprep.subr.mxu0 0.0
        %2211 = vmatpush1.xpose.msra.mxu0 0.0
        %2212 = vmatprep.subr.mxu0 0.0
        %2213 = vmatpush1.xpose.msra.mxu0 0.0
        %2214 = vmatprep.subr.mxu0 0.0
        %2215 = vmatpush1.xpose.msra.mxu0 0.0
        %2216 = vmatprep.subr.mxu0 0.0
        %2217 = vmatpush1.xpose.msra.mxu0 0.0
        %2218 = vmatprep.subr.mxu0 0.0
        %2219 = vmatpush1.xpose.msra.mxu0 0.0
        %2220 = vmatprep.subr.mxu0 0.0
        %2221 = vmatpush1.xpose.msra.mxu0 0.0
        %2222 = vmatprep.subr.mxu0 0.0
        %2223 = vmatpush1.xpose.msra.mxu0 0.0
        %2224 = vmatprep.subr.mxu0 0.0
        %2225 = vmatpush1.xpose.msra.mxu0 0.0
        %2226 = vmatprep.subr.mxu0 0.0
        %2227 = vmatpush1.xpose.msra.mxu0 0.0
        %2228 = vmatprep.subr.mxu0 0.0
        %2229 = vmatpush1.xpose.msra.mxu0 0.0
        %2230 = vmatprep.subr.mxu0 0.0
        %2231 = vmatpush1.xpose.msra.mxu0 0.0
        %2232 = vmatprep.subr.mxu0 0.0
        %2233 = vmatpush1.xpose.msra.mxu0 0.0
        %2234 = vmatprep.subr.mxu0 0.0
        %2235 = vmatpush1.xpose.msra.mxu0 0.0
        %2236 = vmatprep.mubr.f32.mxu0 0.0
        %2237 = vmatmul.mubr.f32.gmra.mrb[0].mxu0 %v2168
        %v2238 = vpop.f32.mrb[0].mxu0
        %v2239 = vadd.f32 %v2166, %v2238
        %v2240 = vpop.f32.mrb[0].mxu0
        %2241 = vdwg.mxu0
        %v2242 = vmul.f32 %v2239, 0.35355338
        %v2243 = vsel %vm1728, %v2242, -3.4028235e+38
        %v2244 = vsel %vm1646, %v2243, -inf
        %2245 = vmax.xlane.f32.xlu0 %v2244
        %v2246 = vpop.xlane.xlu0 %2245
        %v2247 = vsub.f32 %v2243, %v2246
        %v2248 = vmul.f32 %v2247, 1.442695
        %v2249 = vpow.pop %v2248
        %v2250 = vsel %vm1646, %v2249, 0.0
        %2251 = vadd.xlane.f32.xlu0 %v2250
        %v2252 = vpop.xlane.xlu0 %2251
        %v2253 = vrcp.pop %v2252
        %v2254 = vmul.f32 %v2249, %v2253
        %v2255 = vsel %vm1728, %v2254, 0.0
        %2256 = vrot.lane.b32.xlu0 %v1536, 40
        %v2257 = vpop.permute.xlu0 %2256
        %v2260 = vsel %vm1646, %v2255, 0
        %2262 = vmatprep.subr.mxu0 0.0
        %2263 = vmatpush1.msra.mxu0 %v2257
        %2264 = vmatprep.subr.mxu0 0.0
        %2265 = vmatpush1.msra.mxu0 0.0
        %2266 = vmatprep.subr.mxu0 0.0
        %2267 = vmatpush1.msra.mxu0 0.0
        %2268 = vmatprep.subr.mxu0 0.0
        %2269 = vmatpush1.msra.mxu0 0.0
        %2270 = vmatprep.subr.mxu0 0.0
        %2271 = vmatpush1.msra.mxu0 0.0
        %2272 = vmatprep.subr.mxu0 0.0
        %2273 = vmatpush1.msra.mxu0 0.0
        %2274 = vmatprep.subr.mxu0 0.0
        %2275 = vmatpush1.msra.mxu0 0.0
        %2276 = vmatprep.subr.mxu0 0.0
        %2277 = vmatpush1.msra.mxu0 0.0
        %2278 = vmatprep.subr.mxu0 0.0
        %2279 = vmatpush1.msra.mxu0 0.0
        %2280 = vmatprep.subr.mxu0 0.0
        %2281 = vmatpush1.msra.mxu0 0.0
        %2282 = vmatprep.subr.mxu0 0.0
        %2283 = vmatpush1.msra.mxu0 0.0
        %2284 = vmatprep.subr.mxu0 0.0
        %2285 = vmatpush1.msra.mxu0 0.0
        %2286 = vmatprep.subr.mxu0 0.0
        %2287 = vmatpush1.msra.mxu0 0.0
        %2288 = vmatprep.subr.mxu0 0.0
        %2289 = vmatpush1.msra.mxu0 0.0
        %2290 = vmatprep.subr.mxu0 0.0
        %2291 = vmatpush1.msra.mxu0 0.0
        %2292 = vmatprep.subr.mxu0 0.0
        %2293 = vmatpush1.msra.mxu0 0.0
        %2294 = vmatprep.subr.mxu0 0.0
        %2295 = vmatpush1.msra.mxu0 0.0
        %2296 = vmatprep.subr.mxu0 0.0
        %2297 = vmatpush1.msra.mxu0 0.0
        %2298 = vmatprep.subr.mxu0 0.0
        %2299 = vmatpush1.msra.mxu0 0.0
        %2300 = vmatprep.subr.mxu0 0.0
        %2301 = vmatpush1.msra.mxu0 0.0
        %2302 = vmatprep.subr.mxu0 0.0
        %2303 = vmatpush1.msra.mxu0 0.0
        %2304 = vmatprep.subr.mxu0 0.0
        %2305 = vmatpush1.msra.mxu0 0.0
        %2306 = vmatprep.subr.mxu0 0.0
        %2307 = vmatpush1.msra.mxu0 0.0
        %2308 = vmatprep.subr.mxu0 0.0
        %2309 = vmatpush1.msra.mxu0 0.0
        %2310 = vmatprep.subr.mxu0 0.0
        %2311 = vmatpush1.msra.mxu0 0.0
        %2312 = vmatprep.subr.mxu0 0.0
        %2313 = vmatpush1.msra.mxu0 0.0
        %2314 = vmatprep.subr.mxu0 0.0
        %2315 = vmatpush1.msra.mxu0 0.0
        %2316 = vmatprep.subr.mxu0 0.0
        %2317 = vmatpush1.msra.mxu0 0.0
        %2318 = vmatprep.subr.mxu0 0.0
        %2319 = vmatpush1.msra.mxu0 0.0
        %2320 = vmatprep.subr.mxu0 0.0
        %2321 = vmatpush1.msra.mxu0 0.0
        %2322 = vmatprep.subr.mxu0 0.0
        %2323 = vmatpush1.msra.mxu0 0.0
        %2324 = vmatprep.subr.mxu0 0.0
        %2325 = vmatpush1.msra.mxu0 0.0
        %2326 = vmatprep.mubr.f32.mxu0 0.0
        %2327 = vmatmul.mubr.f32.gmra.mrb[0].mxu0 %v2260
        %v2328 = vpop.f32.mrb[0].mxu0
        %v2329 = vadd.f32 0.0, %v2328
        %v2330 = vpop.f32.mrb[0].mxu0
        %2331 = vdwg.mxu0
        %2333 = vrot.lane.b32.xlu0 %v1987, 8
        %v2334 = vpop.permute.xlu0 %2333
        %2337 = vrot.lane.b32.xlu0 %v2158, 16
        %v2338 = vpop.permute.xlu0 %2337
        %2341 = vrot.lane.b32.xlu0 %v2329, 24
        %v2342 = vpop.permute.xlu0 %2341
        %v2344 = vsel %vm1646, %v1815, %v2334
        %v2345 = vsel %vm1092, %v2344, %v2338
        %vm2346 = vcmask 195584
        %v2347 = vsel %vm2346, %v2345, %v2342
        %v2348 = vld [vmem:[%s41] sm:$0xff]
        %v2349 = vld [vmem:[%s41 + $0x8] sm:$0xff]
        %v2350 = vld [vmem:[%s41 + $0x10] sm:$0xff]
        %v2351 = vld [vmem:[%s41 + $0x18] sm:$0xff]
        %v2353 = vsel %vm1167, %v2347, 0
        %2355 = vmatprep.subr.mxu0 0.0
        %2356 = vmatpush1.msra.mxu0 %v2348
        %2357 = vmatprep.subr.mxu0 0.0
        %2358 = vmatpush1.msra.mxu0 %v2349
        %2359 = vmatprep.subr.mxu0 0.0
        %2360 = vmatpush1.msra.mxu0 %v2350
        %2361 = vmatprep.subr.mxu0 0.0
        %2362 = vmatpush1.msra.mxu0 %v2351
        %2363 = vmatprep.subr.mxu0 0.0
        %2364 = vmatpush1.msra.mxu0 0.0
        %2365 = vmatprep.subr.mxu0 0.0
        %2366 = vmatpush1.msra.mxu0 0.0
        %2367 = vmatprep.subr.mxu0 0.0
        %2368 = vmatpush1.msra.mxu0 0.0
        %2369 = vmatprep.subr.mxu0 0.0
        %2370 = vmatpush1.msra.mxu0 0.0
        %2371 = vmatprep.subr.mxu0 0.0
        %2372 = vmatpush1.msra.mxu0 0.0
        %2373 = vmatprep.subr.mxu0 0.0
        %2374 = vmatpush1.msra.mxu0 0.0
        %2375 = vmatprep.subr.mxu0 0.0
        %2376 = vmatpush1.msra.mxu0 0.0
        %2377 = vmatprep.subr.mxu0 0.0
        %2378 = vmatpush1.msra.mxu0 0.0
        %2379 = vmatprep.subr.mxu0 0.0
        %2380 = vmatpush1.msra.mxu0 0.0
        %2381 = vmatprep.subr.mxu0 0.0
        %2382 = vmatpush1.msra.mxu0 0.0
        %2383 = vmatprep.subr.mxu0 0.0
        %2384 = vmatpush1.msra.mxu0 0.0
        %2385 = vmatprep.subr.mxu0 0.0
        %2386 = vmatpush1.msra.mxu0 0.0
        %2387 = vmatprep.subr.mxu0 0.0
        %2388 = vmatpush1.msra.mxu0 0.0
        %2389 = vmatprep.subr.mxu0 0.0
        %2390 = vmatpush1.msra.mxu0 0.0
        %2391 = vmatprep.subr.mxu0 0.0
        %2392 = vmatpush1.msra.mxu0 0.0
        %2393 = vmatprep.subr.mxu0 0.0
        %2394 = vmatpush1.msra.mxu0 0.0
        %2395 = vmatprep.subr.mxu0 0.0
        %2396 = vmatpush1.msra.mxu0 0.0
        %2397 = vmatprep.subr.mxu0 0.0
        %2398 = vmatpush1.msra.mxu0 0.0
        %2399 = vmatprep.subr.mxu0 0.0
        %2400 = vmatpush1.msra.mxu0 0.0
        %2401 = vmatprep.subr.mxu0 0.0
        %2402 = vmatpush1.msra.mxu0 0.0
        %2403 = vmatprep.subr.mxu0 0.0
        %2404 = vmatpush1.msra.mxu0 0.0
        %2405 = vmatprep.subr.mxu0 0.0
        %2406 = vmatpush1.msra.mxu0 0.0
        %2407 = vmatprep.subr.mxu0 0.0
        %2408 = vmatpush1.msra.mxu0 0.0
        %2409 = vmatprep.subr.mxu0 0.0
        %2410 = vmatpush1.msra.mxu0 0.0
        %2411 = vmatprep.subr.mxu0 0.0
        %2412 = vmatpush1.msra.mxu0 0.0
        %2413 = vmatprep.subr.mxu0 0.0
        %2414 = vmatpush1.msra.mxu0 0.0
        %2415 = vmatprep.subr.mxu0 0.0
        %2416 = vmatpush1.msra.mxu0 0.0
        %2417 = vmatprep.subr.mxu0 0.0
        %2418 = vmatpush1.msra.mxu0 0.0
        %2419 = vmatprep.mubr.f32.mxu0 0.0
        %2420 = vmatmul.mubr.f32.gmra.mrb[0].mxu0 %v2353
        %v2421 = vpop.f32.mrb[0].mxu0
        %v2422 = vadd.f32 0.0, %v2421
        %v2423 = vpop.f32.mrb[0].mxu0
        %2424 = vdwg.mxu0
        %v2425 = vadd.f32 %v1431, %v2422
        %v2426 = vld [vmem:[%s43] sm:$0x1]
        %v2428 = vlaneseq
        %v2429 = vshrl.u32 %v2428, 7
        %v2430 = vsub.s32 0, %v2429
        %v2431 = vrot.slane %v2426, %v2430
        %v2433 = vadd.f32 %v2425, %v2431
        %v2434 = vsel %vm1167, %v2433, 0.0
        %2435 = vadd.xlane.f32.xlu0 %v2434
        %v2436 = vpop.xlane.xlu0 %2435
        %v2437 = vmul.f32 %v2436, %v1171
        %v2438 = vsub.f32 %v2433, %v2437
        %v2439 = vmul.f32 %v2438, %v2438
        %v2440 = vsel %vm1167, %v2439, 0.0
        %2441 = vadd.xlane.f32.xlu0 %v2440
        %v2442 = vpop.xlane.xlu0 %2441
        %v2443 = vmul.f32 %v2442, %v1171
        %v2444 = vadd.f32 %v2443, 1e-12
        %v2445 = vrsqrt.pop %v2444
        %v2446 = vmul.f32 %v2438, %v2445
        %v2447 = vlaneseq
        %v2448 = vshrl.u32 %v2447, 7
        %v2449 = vsub.s32 2, %v2448
        %v2450 = vrot.slane %v1225, %v2449
        %v2451 = vmul.f32 %v2446, %v2450
        %v2452 = vlaneseq
        %v2453 = vshrl.u32 %v2452, 7
        %v2454 = vsub.s32 2, %v2453
        %v2455 = vrot.slane %v1226, %v2454
        %v2456 = vadd.f32 %v2451, %v2455
        %v2457 = vld [vmem:[%s45] sm:$0xff]
        %v2458 = vld [vmem:[%s45 + $0x8] sm:$0xff]
        %v2459 = vld [vmem:[%s45 + $0x10] sm:$0xff]
        %v2460 = vld [vmem:[%s45 + $0x18] sm:$0xff]
        %v2461 = vld [vmem:[%s47] sm:$0x1]
        %v2463 = vlaneseq
        %v2464 = vshrl.u32 %v2463, 7
        %v2465 = vsub.s32 0, %v2464
        %v2466 = vrot.slane %v2461, %v2465
        %v2469 = vsel %vm1167, %v2456, 0
        %2471 = vmatprep.subr.mxu0 0.0
        %2472 = vmatpush1.msra.mxu0 %v2457
        %2473 = vmatprep.subr.mxu0 0.0
        %2474 = vmatpush1.msra.mxu0 %v2458
        %2475 = vmatprep.subr.mxu0 0.0
        %2476 = vmatpush1.msra.mxu0 %v2459
        %2477 = vmatprep.subr.mxu0 0.0
        %2478 = vmatpush1.msra.mxu0 %v2460
        %2479 = vmatprep.subr.mxu0 0.0
        %2480 = vmatpush1.msra.mxu0 0.0
        %2481 = vmatprep.subr.mxu0 0.0
        %2482 = vmatpush1.msra.mxu0 0.0
        %2483 = vmatprep.subr.mxu0 0.0
        %2484 = vmatpush1.msra.mxu0 0.0
        %2485 = vmatprep.subr.mxu0 0.0
        %2486 = vmatpush1.msra.mxu0 0.0
        %2487 = vmatprep.subr.mxu0 0.0
        %2488 = vmatpush1.msra.mxu0 0.0
        %2489 = vmatprep.subr.mxu0 0.0
        %2490 = vmatpush1.msra.mxu0 0.0
        %2491 = vmatprep.subr.mxu0 0.0
        %2492 = vmatpush1.msra.mxu0 0.0
        %2493 = vmatprep.subr.mxu0 0.0
        %2494 = vmatpush1.msra.mxu0 0.0
        %2495 = vmatprep.subr.mxu0 0.0
        %2496 = vmatpush1.msra.mxu0 0.0
        %2497 = vmatprep.subr.mxu0 0.0
        %2498 = vmatpush1.msra.mxu0 0.0
        %2499 = vmatprep.subr.mxu0 0.0
        %2500 = vmatpush1.msra.mxu0 0.0
        %2501 = vmatprep.subr.mxu0 0.0
        %2502 = vmatpush1.msra.mxu0 0.0
        %2503 = vmatprep.subr.mxu0 0.0
        %2504 = vmatpush1.msra.mxu0 0.0
        %2505 = vmatprep.subr.mxu0 0.0
        %2506 = vmatpush1.msra.mxu0 0.0
        %2507 = vmatprep.subr.mxu0 0.0
        %2508 = vmatpush1.msra.mxu0 0.0
        %2509 = vmatprep.subr.mxu0 0.0
        %2510 = vmatpush1.msra.mxu0 0.0
        %2511 = vmatprep.subr.mxu0 0.0
        %2512 = vmatpush1.msra.mxu0 0.0
        %2513 = vmatprep.subr.mxu0 0.0
        %2514 = vmatpush1.msra.mxu0 0.0
        %2515 = vmatprep.subr.mxu0 0.0
        %2516 = vmatpush1.msra.mxu0 0.0
        %2517 = vmatprep.subr.mxu0 0.0
        %2518 = vmatpush1.msra.mxu0 0.0
        %2519 = vmatprep.subr.mxu0 0.0
        %2520 = vmatpush1.msra.mxu0 0.0
        %2521 = vmatprep.subr.mxu0 0.0
        %2522 = vmatpush1.msra.mxu0 0.0
        %2523 = vmatprep.subr.mxu0 0.0
        %2524 = vmatpush1.msra.mxu0 0.0
        %2525 = vmatprep.subr.mxu0 0.0
        %2526 = vmatpush1.msra.mxu0 0.0
        %2527 = vmatprep.subr.mxu0 0.0
        %2528 = vmatpush1.msra.mxu0 0.0
        %2529 = vmatprep.subr.mxu0 0.0
        %2530 = vmatpush1.msra.mxu0 0.0
        %2531 = vmatprep.subr.mxu0 0.0
        %2532 = vmatpush1.msra.mxu0 0.0
        %2533 = vmatprep.subr.mxu0 0.0
        %2534 = vmatpush1.msra.mxu0 0.0
        %2535 = vmatprep.mubr.f32.mxu0 0.0
        %2536 = vmatmul.mubr.f32.gmra.mrb[0].mxu0 %v2469
        %v2537 = vpop.f32.mrb[0].mxu0
        %v2538 = vadd.f32 %v2466, %v2537
        %v2539 = vpop.f32.mrb[0].mxu0
        %2540 = vdwg.mxu0
        %v2541 = vld [vmem:[%s49] sm:$0xff]
        %v2542 = vld [vmem:[%s49 + $0x8] sm:$0xff]
        %v2543 = vld [vmem:[%s49 + $0x10] sm:$0xff]
        %v2544 = vld [vmem:[%s49 + $0x18] sm:$0xff]
        %v2545 = vld [vmem:[%s51] sm:$0x1]
        %v2547 = vlaneseq
        %v2548 = vshrl.u32 %v2547, 7
        %v2549 = vsub.s32 0, %v2548
        %v2550 = vrot.slane %v2545, %v2549
        %2552 = vmatprep.subr.mxu0 0.0
        %2553 = vmatpush1.msra.mxu0 %v2541
        %2554 = vmatprep.subr.mxu0 0.0
        %2555 = vmatpush1.msra.mxu0 %v2542
        %2556 = vmatprep.subr.mxu0 0.0
        %2557 = vmatpush1.msra.mxu0 %v2543
        %2558 = vmatprep.subr.mxu0 0.0
        %2559 = vmatpush1.msra.mxu0 %v2544
        %2560 = vmatprep.subr.mxu0 0.0
        %2561 = vmatpush1.msra.mxu0 0.0
        %2562 = vmatprep.subr.mxu0 0.0
        %2563 = vmatpush1.msra.mxu0 0.0
        %2564 = vmatprep.subr.mxu0 0.0
        %2565 = vmatpush1.msra.mxu0 0.0
        %2566 = vmatprep.subr.mxu0 0.0
        %2567 = vmatpush1.msra.mxu0 0.0
        %2568 = vmatprep.subr.mxu0 0.0
        %2569 = vmatpush1.msra.mxu0 0.0
        %2570 = vmatprep.subr.mxu0 0.0
        %2571 = vmatpush1.msra.mxu0 0.0
        %2572 = vmatprep.subr.mxu0 0.0
        %2573 = vmatpush1.msra.mxu0 0.0
        %2574 = vmatprep.subr.mxu0 0.0
        %2575 = vmatpush1.msra.mxu0 0.0
        %2576 = vmatprep.subr.mxu0 0.0
        %2577 = vmatpush1.msra.mxu0 0.0
        %2578 = vmatprep.subr.mxu0 0.0
        %2579 = vmatpush1.msra.mxu0 0.0
        %2580 = vmatprep.subr.mxu0 0.0
        %2581 = vmatpush1.msra.mxu0 0.0
        %2582 = vmatprep.subr.mxu0 0.0
        %2583 = vmatpush1.msra.mxu0 0.0
        %2584 = vmatprep.subr.mxu0 0.0
        %2585 = vmatpush1.msra.mxu0 0.0
        %2586 = vmatprep.subr.mxu0 0.0
        %2587 = vmatpush1.msra.mxu0 0.0
        %2588 = vmatprep.subr.mxu0 0.0
        %2589 = vmatpush1.msra.mxu0 0.0
        %2590 = vmatprep.subr.mxu0 0.0
        %2591 = vmatpush1.msra.mxu0 0.0
        %2592 = vmatprep.subr.mxu0 0.0
        %2593 = vmatpush1.msra.mxu0 0.0
        %2594 = vmatprep.subr.mxu0 0.0
        %2595 = vmatpush1.msra.mxu0 0.0
        %2596 = vmatprep.subr.mxu0 0.0
        %2597 = vmatpush1.msra.mxu0 0.0
        %2598 = vmatprep.subr.mxu0 0.0
        %2599 = vmatpush1.msra.mxu0 0.0
        %2600 = vmatprep.subr.mxu0 0.0
        %2601 = vmatpush1.msra.mxu0 0.0
        %2602 = vmatprep.subr.mxu0 0.0
        %2603 = vmatpush1.msra.mxu0 0.0
        %2604 = vmatprep.subr.mxu0 0.0
        %2605 = vmatpush1.msra.mxu0 0.0
        %2606 = vmatprep.subr.mxu0 0.0
        %2607 = vmatpush1.msra.mxu0 0.0
        %2608 = vmatprep.subr.mxu0 0.0
        %2609 = vmatpush1.msra.mxu0 0.0
        %2610 = vmatprep.subr.mxu0 0.0
        %2611 = vmatpush1.msra.mxu0 0.0
        %2612 = vmatprep.subr.mxu0 0.0
        %2613 = vmatpush1.msra.mxu0 0.0
        %2614 = vmatprep.subr.mxu0 0.0
        %2615 = vmatpush1.msra.mxu0 0.0
        %2616 = vmatprep.mubr.f32.mxu0 0.0
        %2617 = vmatmul.mubr.f32.gmra.mrb[0].mxu0 %v2469
        %v2618 = vpop.f32.mrb[0].mxu0
        %v2619 = vadd.f32 %v2550, %v2618
        %v2620 = vpop.f32.mrb[0].mxu0
        %2621 = vdwg.mxu0
        %v2622 = vxor.u32 %v2619, 2147483648
        %v2623 = vmul.f32 %v2622, 1.442695
        %v2624 = vpow.pop %v2623
        %v2625 = vadd.f32 %v2624, 1.0
        %v2626 = vrcp.pop %v2625
        %v2627 = vmul.f32 1.0, %v2626
        %v2628 = vmul.f32 %v2538, %v2627
        %v2630 = vrot.slane %v2628, 5
        %vm2632 = vcmask 1042432
        %v2633 = vsel %vm2632, 0.0, %v2630
        %v2634 = vsel %vm2632, %v2630, 0.0
        %v2635 = vld [vmem:[%s53] sm:$0x7f]
        %v2636 = vlaneseq
        %v2637 = vshrl.u32 %v2636, 7
        %v2638 = vsub.s32 0, %v2637
        %v2639 = vrot.slane %v2635, %v2638
        %v2640 = vmul.f32 %v2633, %v2639
        %v2641 = vadd.f32 %v2640, 0.0
        %v2642 = vlaneseq
        %v2643 = vshrl.u32 %v2642, 7
        %v2644 = vsub.s32 1, %v2643
        %v2645 = vrot.slane %v2635, %v2644
        %v2646 = vmul.f32 %v2633, %v2645
        %v2647 = vmul.f32 %v2634, %v2645
        %vm2650 = vcmask 1046528
        %v2651 = vrot.slane %v2646, 1
        %v2652 = vrot.slane %v2647, 1
        %v2653 = vsel %vm2650, %v2651, %v2652
        %v2655 = vadd.f32 %v2641, %v2653
        %v2656 = vlaneseq
        %v2657 = vshrl.u32 %v2656, 7
        %v2658 = vsub.s32 2, %v2657
        %v2659 = vrot.slane %v2635, %v2658
        %v2660 = vmul.f32 %v2633, %v2659
        %v2661 = vmul.f32 %v2634, %v2659
        %vm2664 = vcmask 1045504
        %v2665 = vrot.slane %v2660, 2
        %v2666 = vrot.slane %v2661, 2
        %v2667 = vsel %vm2664, %v2665, %v2666
        %v2669 = vadd.f32 %v2655, %v2667
        %v2670 = vlaneseq
        %v2671 = vshrl.u32 %v2670, 7
        %v2672 = vsub.s32 3, %v2671
        %v2673 = vrot.slane %v2635, %v2672
        %v2674 = vmul.f32 %v2633, %v2673
        %v2675 = vmul.f32 %v2634, %v2673
        %vm2678 = vcmask 1044480
        %v2679 = vrot.slane %v2674, 3
        %v2680 = vrot.slane %v2675, 3
        %v2681 = vsel %vm2678, %v2679, %v2680
        %v2683 = vadd.f32 %v2669, %v2681
        %v2684 = vlaneseq
        %v2685 = vshrl.u32 %v2684, 7
        %v2686 = vsub.s32 4, %v2685
        %v2687 = vrot.slane %v2635, %v2686
        %v2688 = vmul.f32 %v2633, %v2687
        %v2689 = vmul.f32 %v2634, %v2687
        %vm2692 = vcmask 1043456
        %v2693 = vrot.slane %v2688, 4
        %v2694 = vrot.slane %v2689, 4
        %v2695 = vsel %vm2692, %v2693, %v2694
        %v2697 = vadd.f32 %v2683, %v2695
        %v2698 = vlaneseq
        %v2699 = vshrl.u32 %v2698, 7
        %v2700 = vsub.s32 5, %v2699
        %v2701 = vrot.slane %v2635, %v2700
        %v2702 = vmul.f32 %v2633, %v2701
        %v2703 = vmul.f32 %v2634, %v2701
        %v2706 = vrot.slane %v2702, 5
        %v2707 = vrot.slane %v2703, 5
        %v2708 = vsel %vm2632, %v2706, %v2707
        %v2710 = vadd.f32 %v2697, %v2708
        %v2711 = vlaneseq
        %v2712 = vshrl.u32 %v2711, 7
        %v2713 = vsub.s32 6, %v2712
        %v2714 = vrot.slane %v2635, %v2713
        %v2715 = vmul.f32 %v2633, %v2714
        %v2716 = vmul.f32 %v2634, %v2714
        %vm2719 = vcmask 1041408
        %v2720 = vrot.slane %v2715, 6
        %v2721 = vrot.slane %v2716, 6
        %v2722 = vsel %vm2719, %v2720, %v2721
        %v2724 = vadd.f32 %v2710, %v2722
        %v2725 = vld [vmem:[%s55] sm:$0x1]
        %v2727 = vlaneseq
        %v2728 = vshrl.u32 %v2727, 7
        %v2729 = vsub.s32 0, %v2728
        %v2730 = vrot.slane %v2725, %v2729
        %v2732 = vmul.f32 %v2724, %v2730
        %v2733 = vld [vmem:[%s57] sm:$0x1]
        %v2735 = vlaneseq
        %v2736 = vshrl.u32 %v2735, 7
        %v2737 = vsub.s32 0, %v2736
        %v2738 = vrot.slane %v2733, %v2737
        %v2740 = vadd.f32 %v2732, %v2738
        %v2741 = vxor.u32 %v2740, 2147483648
        %v2742 = vmul.f32 %v2741, 1.442695
        %v2743 = vpow.pop %v2742
        %v2744 = vadd.f32 %v2743, 1.0
        %v2745 = vrcp.pop %v2744
        %v2746 = vmul.f32 1.0, %v2745
        %v2747 = vmul.f32 %v2740, %v2746
        %v2748 = vld [vmem:[%s59] sm:$0xff]
        %v2749 = vld [vmem:[%s59 + $0x8] sm:$0xff]
        %v2750 = vld [vmem:[%s59 + $0x10] sm:$0xff]
        %v2751 = vld [vmem:[%s59 + $0x18] sm:$0xff]
        %v2753 = vsel %vm1167, %v2747, 0
        %2755 = vmatprep.subr.mxu0 0.0
        %2756 = vmatpush1.msra.mxu0 %v2748
        %2757 = vmatprep.subr.mxu0 0.0
        %2758 = vmatpush1.msra.mxu0 %v2749
        %2759 = vmatprep.subr.mxu0 0.0
        %2760 = vmatpush1.msra.mxu0 %v2750
        %2761 = vmatprep.subr.mxu0 0.0
        %2762 = vmatpush1.msra.mxu0 %v2751
        %2763 = vmatprep.subr.mxu0 0.0
        %2764 = vmatpush1.msra.mxu0 0.0
        %2765 = vmatprep.subr.mxu0 0.0
        %2766 = vmatpush1.msra.mxu0 0.0
        %2767 = vmatprep.subr.mxu0 0.0
        %2768 = vmatpush1.msra.mxu0 0.0
        %2769 = vmatprep.subr.mxu0 0.0
        %2770 = vmatpush1.msra.mxu0 0.0
        %2771 = vmatprep.subr.mxu0 0.0
        %2772 = vmatpush1.msra.mxu0 0.0
        %2773 = vmatprep.subr.mxu0 0.0
        %2774 = vmatpush1.msra.mxu0 0.0
        %2775 = vmatprep.subr.mxu0 0.0
        %2776 = vmatpush1.msra.mxu0 0.0
        %2777 = vmatprep.subr.mxu0 0.0
        %2778 = vmatpush1.msra.mxu0 0.0
        %2779 = vmatprep.subr.mxu0 0.0
        %2780 = vmatpush1.msra.mxu0 0.0
        %2781 = vmatprep.subr.mxu0 0.0
        %2782 = vmatpush1.msra.mxu0 0.0
        %2783 = vmatprep.subr.mxu0 0.0
        %2784 = vmatpush1.msra.mxu0 0.0
        %2785 = vmatprep.subr.mxu0 0.0
        %2786 = vmatpush1.msra.mxu0 0.0
        %2787 = vmatprep.subr.mxu0 0.0
        %2788 = vmatpush1.msra.mxu0 0.0
        %2789 = vmatprep.subr.mxu0 0.0
        %2790 = vmatpush1.msra.mxu0 0.0
        %2791 = vmatprep.subr.mxu0 0.0
        %2792 = vmatpush1.msra.mxu0 0.0
        %2793 = vmatprep.subr.mxu0 0.0
        %2794 = vmatpush1.msra.mxu0 0.0
        %2795 = vmatprep.subr.mxu0 0.0
        %2796 = vmatpush1.msra.mxu0 0.0
        %2797 = vmatprep.subr.mxu0 0.0
        %2798 = vmatpush1.msra.mxu0 0.0
        %2799 = vmatprep.subr.mxu0 0.0
        %2800 = vmatpush1.msra.mxu0 0.0
        %2801 = vmatprep.subr.mxu0 0.0
        %2802 = vmatpush1.msra.mxu0 0.0
        %2803 = vmatprep.subr.mxu0 0.0
        %2804 = vmatpush1.msra.mxu0 0.0
        %2805 = vmatprep.subr.mxu0 0.0
        %2806 = vmatpush1.msra.mxu0 0.0
        %2807 = vmatprep.subr.mxu0 0.0
        %2808 = vmatpush1.msra.mxu0 0.0
        %2809 = vmatprep.subr.mxu0 0.0
        %2810 = vmatpush1.msra.mxu0 0.0
        %2811 = vmatprep.subr.mxu0 0.0
        %2812 = vmatpush1.msra.mxu0 0.0
        %2813 = vmatprep.subr.mxu0 0.0
        %2814 = vmatpush1.msra.mxu0 0.0
        %2815 = vmatprep.subr.mxu0 0.0
        %2816 = vmatpush1.msra.mxu0 0.0
        %2817 = vmatprep.subr.mxu0 0.0
        %2818 = vmatpush1.msra.mxu0 0.0
        %2819 = vmatprep.mubr.f32.mxu0 0.0
        %2820 = vmatmul.mubr.f32.gmra.mrb[0].mxu0 %v2753
        %v2821 = vpop.f32.mrb[0].mxu0
        %v2822 = vadd.f32 0.0, %v2821
        %v2823 = vpop.f32.mrb[0].mxu0
        %2824 = vdwg.mxu0
        %v2825 = vadd.f32 %v2433, %v2822
        %v2826 = vld [vmem:[%s61] sm:$0x1]
        %v2828 = vlaneseq
        %v2829 = vshrl.u32 %v2828, 7
        %v2830 = vsub.s32 0, %v2829
        %v2831 = vrot.slane %v2826, %v2830
        %v2833 = vadd.f32 %v2825, %v2831
        %v2834 = vsel %vm1167, %v2833, 0.0
        %2835 = vadd.xlane.f32.xlu0 %v2834
        %v2836 = vpop.xlane.xlu0 %2835
        %v2837 = vmul.f32 %v2836, %v1171
        %v2838 = vsub.f32 %v2833, %v2837
        %v2839 = vmul.f32 %v2838, %v2838
        %v2840 = vsel %vm1167, %v2839, 0.0
        %2841 = vadd.xlane.f32.xlu0 %v2840
        %v2842 = vpop.xlane.xlu0 %2841
        %v2843 = vmul.f32 %v2842, %v1171
        %v2844 = vadd.f32 %v2843, 1e-12
        %v2845 = vrsqrt.pop %v2844
        %v2846 = vmul.f32 %v2838, %v2845
        %v2847 = vlaneseq
        %v2848 = vshrl.u32 %v2847, 7
        %v2849 = vsub.s32 3, %v2848
        %v2850 = vrot.slane %v1225, %v2849
        %v2851 = vmul.f32 %v2846, %v2850
        %v2852 = vlaneseq
        %v2853 = vshrl.u32 %v2852, 7
        %v2854 = vsub.s32 3, %v2853
        %v2855 = vrot.slane %v1226, %v2854
        %v2856 = vadd.f32 %v2851, %v2855
        %v2857 = vld [vmem:[%s63] sm:$0xff]
        %v2858 = vld [vmem:[%s63 + $0x8] sm:$0xff]
        %v2859 = vld [vmem:[%s63 + $0x10] sm:$0xff]
        %v2860 = vld [vmem:[%s63 + $0x18] sm:$0xff]
        %v2861 = vld [vmem:[%s65] sm:$0x1]
        %v2863 = vlaneseq
        %v2864 = vshrl.u32 %v2863, 7
        %v2865 = vsub.s32 0, %v2864
        %v2866 = vrot.slane %v2861, %v2865
        %v2869 = vsel %vm1167, %v2856, 0
        %2871 = vmatprep.subr.mxu0 0.0
        %2872 = vmatpush1.msra.mxu0 %v2857
        %2873 = vmatprep.subr.mxu0 0.0
        %2874 = vmatpush1.msra.mxu0 %v2858
        %2875 = vmatprep.subr.mxu0 0.0
        %2876 = vmatpush1.msra.mxu0 %v2859
        %2877 = vmatprep.subr.mxu0 0.0
        %2878 = vmatpush1.msra.mxu0 %v2860
        %2879 = vmatprep.subr.mxu0 0.0
        %2880 = vmatpush1.msra.mxu0 0.0
        %2881 = vmatprep.subr.mxu0 0.0
        %2882 = vmatpush1.msra.mxu0 0.0
        %2883 = vmatprep.subr.mxu0 0.0
        %2884 = vmatpush1.msra.mxu0 0.0
        %2885 = vmatprep.subr.mxu0 0.0
        %2886 = vmatpush1.msra.mxu0 0.0
        %2887 = vmatprep.subr.mxu0 0.0
        %2888 = vmatpush1.msra.mxu0 0.0
        %2889 = vmatprep.subr.mxu0 0.0
        %2890 = vmatpush1.msra.mxu0 0.0
        %2891 = vmatprep.subr.mxu0 0.0
        %2892 = vmatpush1.msra.mxu0 0.0
        %2893 = vmatprep.subr.mxu0 0.0
        %2894 = vmatpush1.msra.mxu0 0.0
        %2895 = vmatprep.subr.mxu0 0.0
        %2896 = vmatpush1.msra.mxu0 0.0
        %2897 = vmatprep.subr.mxu0 0.0
        %2898 = vmatpush1.msra.mxu0 0.0
        %2899 = vmatprep.subr.mxu0 0.0
        %2900 = vmatpush1.msra.mxu0 0.0
        %2901 = vmatprep.subr.mxu0 0.0
        %2902 = vmatpush1.msra.mxu0 0.0
        %2903 = vmatprep.subr.mxu0 0.0
        %2904 = vmatpush1.msra.mxu0 0.0
        %2905 = vmatprep.subr.mxu0 0.0
        %2906 = vmatpush1.msra.mxu0 0.0
        %2907 = vmatprep.subr.mxu0 0.0
        %2908 = vmatpush1.msra.mxu0 0.0
        %2909 = vmatprep.subr.mxu0 0.0
        %2910 = vmatpush1.msra.mxu0 0.0
        %2911 = vmatprep.subr.mxu0 0.0
        %2912 = vmatpush1.msra.mxu0 0.0
        %2913 = vmatprep.subr.mxu0 0.0
        %2914 = vmatpush1.msra.mxu0 0.0
        %2915 = vmatprep.subr.mxu0 0.0
        %2916 = vmatpush1.msra.mxu0 0.0
        %2917 = vmatprep.subr.mxu0 0.0
        %2918 = vmatpush1.msra.mxu0 0.0
        %2919 = vmatprep.subr.mxu0 0.0
        %2920 = vmatpush1.msra.mxu0 0.0
        %2921 = vmatprep.subr.mxu0 0.0
        %2922 = vmatpush1.msra.mxu0 0.0
        %2923 = vmatprep.subr.mxu0 0.0
        %2924 = vmatpush1.msra.mxu0 0.0
        %2925 = vmatprep.subr.mxu0 0.0
        %2926 = vmatpush1.msra.mxu0 0.0
        %2927 = vmatprep.subr.mxu0 0.0
        %2928 = vmatpush1.msra.mxu0 0.0
        %2929 = vmatprep.subr.mxu0 0.0
        %2930 = vmatpush1.msra.mxu0 0.0
        %2931 = vmatprep.subr.mxu0 0.0
        %2932 = vmatpush1.msra.mxu0 0.0
        %2933 = vmatprep.subr.mxu0 0.0
        %2934 = vmatpush1.msra.mxu0 0.0
        %2935 = vmatprep.mubr.f32.mxu0 0.0
        %2936 = vmatmul.mubr.f32.gmra.mrb[0].mxu0 %v2869
        %v2937 = vpop.f32.mrb[0].mxu0
        %v2938 = vadd.f32 %v2866, %v2937
        %v2939 = vpop.f32.mrb[0].mxu0
        %2940 = vdwg.mxu0
        %v2941 = vxor.u32 %v2938, 2147483648
        %v2942 = vmul.f32 %v2941, 1.442695
        %v2943 = vpow.pop %v2942
        %v2944 = vadd.f32 %v2943, 1.0
        %v2945 = vrcp.pop %v2944
        %v2946 = vmul.f32 1.0, %v2945
        %v2947 = vmul.f32 %v2938, %v2946
        %v2948 = vld [vmem:[%s67] sm:$0xff]
        %v2949 = vld [vmem:[%s67 + $0x8] sm:$0xff]
        %v2950 = vld [vmem:[%s67 + $0x10] sm:$0xff]
        %v2951 = vld [vmem:[%s67 + $0x18] sm:$0xff]
        %v2952 = vld [vmem:[%s67 + $0x20] sm:$0xff]
        %v2953 = vld [vmem:[%s67 + $0x28] sm:$0xff]
        %v2954 = vld [vmem:[%s67 + $0x30] sm:$0xff]
        %v2955 = vld [vmem:[%s67 + $0x38] sm:$0xff]
        %v2956 = vld [vmem:[%s69] sm:$0x1]
        %v2958 = vlaneseq
        %v2959 = vshrl.u32 %v2958, 7
        %v2960 = vsub.s32 0, %v2959
        %v2961 = vrot.slane %v2956, %v2960
        %v2964 = vsel %vm1356, %v2947, 0
        %2966 = vmatprep.subr.mxu0 0.0
        %2967 = vmatpush1.msra.mxu0 %v2948
        %2968 = vmatprep.subr.mxu0 0.0
        %2969 = vmatpush1.msra.mxu0 %v2949
        %2970 = vmatprep.subr.mxu0 0.0
        %2971 = vmatpush1.msra.mxu0 %v2950
        %2972 = vmatprep.subr.mxu0 0.0
        %2973 = vmatpush1.msra.mxu0 %v2951
        %2974 = vmatprep.subr.mxu0 0.0
        %2975 = vmatpush1.msra.mxu0 %v2952
        %2976 = vmatprep.subr.mxu0 0.0
        %2977 = vmatpush1.msra.mxu0 %v2953
        %2978 = vmatprep.subr.mxu0 0.0
        %2979 = vmatpush1.msra.mxu0 %v2954
        %2980 = vmatprep.subr.mxu0 0.0
        %2981 = vmatpush1.msra.mxu0 %v2955
        %2982 = vmatprep.subr.mxu0 0.0
        %2983 = vmatpush1.msra.mxu0 0.0
        %2984 = vmatprep.subr.mxu0 0.0
        %2985 = vmatpush1.msra.mxu0 0.0
        %2986 = vmatprep.subr.mxu0 0.0
        %2987 = vmatpush1.msra.mxu0 0.0
        %2988 = vmatprep.subr.mxu0 0.0
        %2989 = vmatpush1.msra.mxu0 0.0
        %2990 = vmatprep.subr.mxu0 0.0
        %2991 = vmatpush1.msra.mxu0 0.0
        %2992 = vmatprep.subr.mxu0 0.0
        %2993 = vmatpush1.msra.mxu0 0.0
        %2994 = vmatprep.subr.mxu0 0.0
        %2995 = vmatpush1.msra.mxu0 0.0
        %2996 = vmatprep.subr.mxu0 0.0
        %2997 = vmatpush1.msra.mxu0 0.0
        %2998 = vmatprep.subr.mxu0 0.0
        %2999 = vmatpush1.msra.mxu0 0.0
        %3000 = vmatprep.subr.mxu0 0.0
        %3001 = vmatpush1.msra.mxu0 0.0
        %3002 = vmatprep.subr.mxu0 0.0
        %3003 = vmatpush1.msra.mxu0 0.0
        %3004 = vmatprep.subr.mxu0 0.0
        %3005 = vmatpush1.msra.mxu0 0.0
        %3006 = vmatprep.subr.mxu0 0.0
        %3007 = vmatpush1.msra.mxu0 0.0
        %3008 = vmatprep.subr.mxu0 0.0
        %3009 = vmatpush1.msra.mxu0 0.0
        %3010 = vmatprep.subr.mxu0 0.0
        %3011 = vmatpush1.msra.mxu0 0.0
        %3012 = vmatprep.subr.mxu0 0.0
        %3013 = vmatpush1.msra.mxu0 0.0
        %3014 = vmatprep.subr.mxu0 0.0
        %3015 = vmatpush1.msra.mxu0 0.0
        %3016 = vmatprep.subr.mxu0 0.0
        %3017 = vmatpush1.msra.mxu0 0.0
        %3018 = vmatprep.subr.mxu0 0.0
        %3019 = vmatpush1.msra.mxu0 0.0
        %3020 = vmatprep.subr.mxu0 0.0
        %3021 = vmatpush1.msra.mxu0 0.0
        %3022 = vmatprep.subr.mxu0 0.0
        %3023 = vmatpush1.msra.mxu0 0.0
        %3024 = vmatprep.subr.mxu0 0.0
        %3025 = vmatpush1.msra.mxu0 0.0
        %3026 = vmatprep.subr.mxu0 0.0
        %3027 = vmatpush1.msra.mxu0 0.0
        %3028 = vmatprep.subr.mxu0 0.0
        %3029 = vmatpush1.msra.mxu0 0.0
        %3030 = vmatprep.mubr.f32.mxu0 0.0
        %3031 = vmatmul.mubr.f32.gmra.mrb[0].mxu0 %v2964
        %v3032 = vpop.f32.mrb[0].mxu0
        %v3033 = vadd.f32 %v2961, %v3032
        %v3034 = vpop.f32.mrb[0].mxu0
        %3035 = vdwg.mxu0
        %v3036 = vmul.f32 %v3033, 0.5
        %v3037 = vadd.f32 %v2833, %v3036
        %v3038 = vsel %vm1167, %v3037, 0.0
        %3039 = vadd.xlane.f32.xlu0 %v3038
        %v3040 = vpop.xlane.xlu0 %3039
        %v3041 = vmul.f32 %v3040, %v1171
        %v3042 = vsub.f32 %v3037, %v3041
        %v3043 = vmul.f32 %v3042, %v3042
        %v3044 = vsel %vm1167, %v3043, 0.0
        %3045 = vadd.xlane.f32.xlu0 %v3044
        %v3046 = vpop.xlane.xlu0 %3045
        %v3047 = vmul.f32 %v3046, %v1171
        %v3048 = vadd.f32 %v3047, 1e-12
        %v3049 = vrsqrt.pop %v3048
        %v3050 = vmul.f32 %v3042, %v3049
        %v3051 = vlaneseq
        %v3052 = vshrl.u32 %v3051, 7
        %v3053 = vsub.s32 4, %v3052
        %v3054 = vrot.slane %v1225, %v3053
        %v3055 = vmul.f32 %v3050, %v3054
        %v3056 = vlaneseq
        %v3057 = vshrl.u32 %v3056, 7
        %v3058 = vsub.s32 4, %v3057
        %v3059 = vrot.slane %v1226, %v3058
        %v3060 = vadd.f32 %v3055, %v3059
        %s3061 = scalar_lea.vmem %s19, 8
        %v3062 = vld [vmem:[%s3061] sm:$0x1f]
        %s3063 = scalar_lea.vmem %s21, 8
        %v3064 = vld [vmem:[%s3063] sm:$0x1f]
        %v3065 = vsel %vm1167, %v3060, 0.0
        %3066 = vadd.xlane.f32.xlu0 %v3065
        %v3067 = vpop.xlane.xlu0 %3066
        %v3068 = vmul.f32 %v3067, %v1171
        %v3069 = vsub.f32 %v3060, %v3068
        %v3070 = vmul.f32 %v3069, %v3069
        %v3071 = vsel %vm1167, %v3070, 0.0
        %3072 = vadd.xlane.f32.xlu0 %v3071
        %v3073 = vpop.xlane.xlu0 %3072
        %v3074 = vmul.f32 %v3073, %v1171
        %v3075 = vadd.f32 %v3074, 1e-12
        %v3076 = vrsqrt.pop %v3075
        %v3077 = vmul.f32 %v3069, %v3076
        %v3078 = vlaneseq
        %v3079 = vshrl.u32 %v3078, 7
        %v3080 = vsub.s32 0, %v3079
        %v3081 = vrot.slane %v3062, %v3080
        %v3082 = vmul.f32 %v3077, %v3081
        %v3083 = vlaneseq
        %v3084 = vshrl.u32 %v3083, 7
        %v3085 = vsub.s32 0, %v3084
        %v3086 = vrot.slane %v3064, %v3085
        %v3087 = vadd.f32 %v3082, %v3086
        %s3088 = scalar_lea.vmem %s23, 32
        %v3089 = vld [vmem:[%s3088] sm:$0xff]
        %v3090 = vld [vmem:[%s3088 + $0x8] sm:$0xff]
        %v3091 = vld [vmem:[%s3088 + $0x10] sm:$0xff]
        %v3092 = vld [vmem:[%s3088 + $0x18] sm:$0xff]
        %s3093 = scalar_lea.vmem %s25, 1
        %v3094 = vld [vmem:[%s3093] sm:$0x1]
        %v3096 = vlaneseq
        %v3097 = vshrl.u32 %v3096, 7
        %v3098 = vsub.s32 0, %v3097
        %v3099 = vrot.slane %v3094, %v3098
        %v3102 = vsel %vm1167, %v3087, 0
        %3104 = vmatprep.subr.mxu0 0.0
        %3105 = vmatpush1.msra.mxu0 %v3089
        %3106 = vmatprep.subr.mxu0 0.0
        %3107 = vmatpush1.msra.mxu0 %v3090
        %3108 = vmatprep.subr.mxu0 0.0
        %3109 = vmatpush1.msra.mxu0 %v3091
        %3110 = vmatprep.subr.mxu0 0.0
        %3111 = vmatpush1.msra.mxu0 %v3092
        %3112 = vmatprep.subr.mxu0 0.0
        %3113 = vmatpush1.msra.mxu0 0.0
        %3114 = vmatprep.subr.mxu0 0.0
        %3115 = vmatpush1.msra.mxu0 0.0
        %3116 = vmatprep.subr.mxu0 0.0
        %3117 = vmatpush1.msra.mxu0 0.0
        %3118 = vmatprep.subr.mxu0 0.0
        %3119 = vmatpush1.msra.mxu0 0.0
        %3120 = vmatprep.subr.mxu0 0.0
        %3121 = vmatpush1.msra.mxu0 0.0
        %3122 = vmatprep.subr.mxu0 0.0
        %3123 = vmatpush1.msra.mxu0 0.0
        %3124 = vmatprep.subr.mxu0 0.0
        %3125 = vmatpush1.msra.mxu0 0.0
        %3126 = vmatprep.subr.mxu0 0.0
        %3127 = vmatpush1.msra.mxu0 0.0
        %3128 = vmatprep.subr.mxu0 0.0
        %3129 = vmatpush1.msra.mxu0 0.0
        %3130 = vmatprep.subr.mxu0 0.0
        %3131 = vmatpush1.msra.mxu0 0.0
        %3132 = vmatprep.subr.mxu0 0.0
        %3133 = vmatpush1.msra.mxu0 0.0
        %3134 = vmatprep.subr.mxu0 0.0
        %3135 = vmatpush1.msra.mxu0 0.0
        %3136 = vmatprep.subr.mxu0 0.0
        %3137 = vmatpush1.msra.mxu0 0.0
        %3138 = vmatprep.subr.mxu0 0.0
        %3139 = vmatpush1.msra.mxu0 0.0
        %3140 = vmatprep.subr.mxu0 0.0
        %3141 = vmatpush1.msra.mxu0 0.0
        %3142 = vmatprep.subr.mxu0 0.0
        %3143 = vmatpush1.msra.mxu0 0.0
        %3144 = vmatprep.subr.mxu0 0.0
        %3145 = vmatpush1.msra.mxu0 0.0
        %3146 = vmatprep.subr.mxu0 0.0
        %3147 = vmatpush1.msra.mxu0 0.0
        %3148 = vmatprep.subr.mxu0 0.0
        %3149 = vmatpush1.msra.mxu0 0.0
        %3150 = vmatprep.subr.mxu0 0.0
        %3151 = vmatpush1.msra.mxu0 0.0
        %3152 = vmatprep.subr.mxu0 0.0
        %3153 = vmatpush1.msra.mxu0 0.0
        %3154 = vmatprep.subr.mxu0 0.0
        %3155 = vmatpush1.msra.mxu0 0.0
        %3156 = vmatprep.subr.mxu0 0.0
        %3157 = vmatpush1.msra.mxu0 0.0
        %3158 = vmatprep.subr.mxu0 0.0
        %3159 = vmatpush1.msra.mxu0 0.0
        %3160 = vmatprep.subr.mxu0 0.0
        %3161 = vmatpush1.msra.mxu0 0.0
        %3162 = vmatprep.subr.mxu0 0.0
        %3163 = vmatpush1.msra.mxu0 0.0
        %3164 = vmatprep.subr.mxu0 0.0
        %3165 = vmatpush1.msra.mxu0 0.0
        %3166 = vmatprep.subr.mxu0 0.0
        %3167 = vmatpush1.msra.mxu0 0.0
        %3168 = vmatprep.mubr.f32.mxu0 0.0
        %3169 = vmatmul.mubr.f32.gmra.mrb[0].mxu0 %v3102
        %v3170 = vpop.f32.mrb[0].mxu0
        %v3171 = vadd.f32 %v3099, %v3170
        %v3172 = vpop.f32.mrb[0].mxu0
        %3173 = vdwg.mxu0
        %v3174 = vxor.u32 %v3171, 2147483648
        %v3175 = vmul.f32 %v3174, 1.442695
        %v3176 = vpow.pop %v3175
        %v3177 = vadd.f32 %v3176, 1.0
        %v3178 = vrcp.pop %v3177
        %v3179 = vmul.f32 1.0, %v3178
        %v3180 = vmul.f32 %v3171, %v3179
        %s3181 = scalar_lea.vmem %s27, 64
        %v3182 = vld [vmem:[%s3181] sm:$0xff]
        %v3183 = vld [vmem:[%s3181 + $0x8] sm:$0xff]
        %v3184 = vld [vmem:[%s3181 + $0x10] sm:$0xff]
        %v3185 = vld [vmem:[%s3181 + $0x18] sm:$0xff]
        %v3186 = vld [vmem:[%s3181 + $0x20] sm:$0xff]
        %v3187 = vld [vmem:[%s3181 + $0x28] sm:$0xff]
        %v3188 = vld [vmem:[%s3181 + $0x30] sm:$0xff]
        %v3189 = vld [vmem:[%s3181 + $0x38] sm:$0xff]
        %s3190 = scalar_lea.vmem %s29, 1
        %v3191 = vld [vmem:[%s3190] sm:$0x1]
        %v3193 = vlaneseq
        %v3194 = vshrl.u32 %v3193, 7
        %v3195 = vsub.s32 0, %v3194
        %v3196 = vrot.slane %v3191, %v3195
        %v3199 = vsel %vm1356, %v3180, 0
        %3201 = vmatprep.subr.mxu0 0.0
        %3202 = vmatpush1.msra.mxu0 %v3182
        %3203 = vmatprep.subr.mxu0 0.0
        %3204 = vmatpush1.msra.mxu0 %v3183
        %3205 = vmatprep.subr.mxu0 0.0
        %3206 = vmatpush1.msra.mxu0 %v3184
        %3207 = vmatprep.subr.mxu0 0.0
        %3208 = vmatpush1.msra.mxu0 %v3185
        %3209 = vmatprep.subr.mxu0 0.0
        %3210 = vmatpush1.msra.mxu0 %v3186
        %3211 = vmatprep.subr.mxu0 0.0
        %3212 = vmatpush1.msra.mxu0 %v3187
        %3213 = vmatprep.subr.mxu0 0.0
        %3214 = vmatpush1.msra.mxu0 %v3188
        %3215 = vmatprep.subr.mxu0 0.0
        %3216 = vmatpush1.msra.mxu0 %v3189
        %3217 = vmatprep.subr.mxu0 0.0
        %3218 = vmatpush1.msra.mxu0 0.0
        %3219 = vmatprep.subr.mxu0 0.0
        %3220 = vmatpush1.msra.mxu0 0.0
        %3221 = vmatprep.subr.mxu0 0.0
        %3222 = vmatpush1.msra.mxu0 0.0
        %3223 = vmatprep.subr.mxu0 0.0
        %3224 = vmatpush1.msra.mxu0 0.0
        %3225 = vmatprep.subr.mxu0 0.0
        %3226 = vmatpush1.msra.mxu0 0.0
        %3227 = vmatprep.subr.mxu0 0.0
        %3228 = vmatpush1.msra.mxu0 0.0
        %3229 = vmatprep.subr.mxu0 0.0
        %3230 = vmatpush1.msra.mxu0 0.0
        %3231 = vmatprep.subr.mxu0 0.0
        %3232 = vmatpush1.msra.mxu0 0.0
        %3233 = vmatprep.subr.mxu0 0.0
        %3234 = vmatpush1.msra.mxu0 0.0
        %3235 = vmatprep.subr.mxu0 0.0
        %3236 = vmatpush1.msra.mxu0 0.0
        %3237 = vmatprep.subr.mxu0 0.0
        %3238 = vmatpush1.msra.mxu0 0.0
        %3239 = vmatprep.subr.mxu0 0.0
        %3240 = vmatpush1.msra.mxu0 0.0
        %3241 = vmatprep.subr.mxu0 0.0
        %3242 = vmatpush1.msra.mxu0 0.0
        %3243 = vmatprep.subr.mxu0 0.0
        %3244 = vmatpush1.msra.mxu0 0.0
        %3245 = vmatprep.subr.mxu0 0.0
        %3246 = vmatpush1.msra.mxu0 0.0
        %3247 = vmatprep.subr.mxu0 0.0
        %3248 = vmatpush1.msra.mxu0 0.0
        %3249 = vmatprep.subr.mxu0 0.0
        %3250 = vmatpush1.msra.mxu0 0.0
        %3251 = vmatprep.subr.mxu0 0.0
        %3252 = vmatpush1.msra.mxu0 0.0
        %3253 = vmatprep.subr.mxu0 0.0
        %3254 = vmatpush1.msra.mxu0 0.0
        %3255 = vmatprep.subr.mxu0 0.0
        %3256 = vmatpush1.msra.mxu0 0.0
        %3257 = vmatprep.subr.mxu0 0.0
        %3258 = vmatpush1.msra.mxu0 0.0
        %3259 = vmatprep.subr.mxu0 0.0
        %3260 = vmatpush1.msra.mxu0 0.0
        %3261 = vmatprep.subr.mxu0 0.0
        %3262 = vmatpush1.msra.mxu0 0.0
        %3263 = vmatprep.subr.mxu0 0.0
        %3264 = vmatpush1.msra.mxu0 0.0
        %3265 = vmatprep.mubr.f32.mxu0 0.0
        %3266 = vmatmul.mubr.f32.gmra.mrb[0].mxu0 %v3199
        %v3267 = vpop.f32.mrb[0].mxu0
        %v3268 = vadd.f32 %v3196, %v3267
        %v3269 = vpop.f32.mrb[0].mxu0
        %3270 = vdwg.mxu0
        %v3271 = vmul.f32 %v3268, 0.5
        %v3272 = vadd.f32 %v3060, %v3271
        %v3273 = vsel %vm1167, %v3272, 0.0
        %3274 = vadd.xlane.f32.xlu0 %v3273
        %v3275 = vpop.xlane.xlu0 %3274
        %v3276 = vmul.f32 %v3275, %v1171
        %v3277 = vsub.f32 %v3272, %v3276
        %v3278 = vmul.f32 %v3277, %v3277
        %v3279 = vsel %vm1167, %v3278, 0.0
        %3280 = vadd.xlane.f32.xlu0 %v3279
        %v3281 = vpop.xlane.xlu0 %3280
        %v3282 = vmul.f32 %v3281, %v1171
        %v3283 = vadd.f32 %v3282, 1e-12
        %v3284 = vrsqrt.pop %v3283
        %v3285 = vmul.f32 %v3277, %v3284
        %v3286 = vlaneseq
        %v3287 = vshrl.u32 %v3286, 7
        %v3288 = vsub.s32 1, %v3287
        %v3289 = vrot.slane %v3062, %v3288
        %v3290 = vmul.f32 %v3285, %v3289
        %v3291 = vlaneseq
        %v3292 = vshrl.u32 %v3291, 7
        %v3293 = vsub.s32 1, %v3292
        %v3294 = vrot.slane %v3064, %v3293
        %v3295 = vadd.f32 %v3290, %v3294
        %s3296 = scalar_lea.vmem %s31, 32
        %v3297 = vld [vmem:[%s3296] sm:$0xff]
        %v3298 = vld [vmem:[%s3296 + $0x8] sm:$0xff]
        %v3299 = vld [vmem:[%s3296 + $0x10] sm:$0xff]
        %v3300 = vld [vmem:[%s3296 + $0x18] sm:$0xff]
        %s3301 = scalar_lea.vmem %s33, 1
        %v3302 = vld [vmem:[%s3301] sm:$0x1]
        %v3304 = vlaneseq
        %v3305 = vshrl.u32 %v3304, 7
        %v3306 = vsub.s32 0, %v3305
        %v3307 = vrot.slane %v3302, %v3306
        %v3310 = vsel %vm1167, %v3295, 0
        %3312 = vmatprep.subr.mxu0 0.0
        %3313 = vmatpush1.msra.mxu0 %v3297
        %3314 = vmatprep.subr.mxu0 0.0
        %3315 = vmatpush1.msra.mxu0 %v3298
        %3316 = vmatprep.subr.mxu0 0.0
        %3317 = vmatpush1.msra.mxu0 %v3299
        %3318 = vmatprep.subr.mxu0 0.0
        %3319 = vmatpush1.msra.mxu0 %v3300
        %3320 = vmatprep.subr.mxu0 0.0
        %3321 = vmatpush1.msra.mxu0 0.0
        %3322 = vmatprep.subr.mxu0 0.0
        %3323 = vmatpush1.msra.mxu0 0.0
        %3324 = vmatprep.subr.mxu0 0.0
        %3325 = vmatpush1.msra.mxu0 0.0
        %3326 = vmatprep.subr.mxu0 0.0
        %3327 = vmatpush1.msra.mxu0 0.0
        %3328 = vmatprep.subr.mxu0 0.0
        %3329 = vmatpush1.msra.mxu0 0.0
        %3330 = vmatprep.subr.mxu0 0.0
        %3331 = vmatpush1.msra.mxu0 0.0
        %3332 = vmatprep.subr.mxu0 0.0
        %3333 = vmatpush1.msra.mxu0 0.0
        %3334 = vmatprep.subr.mxu0 0.0
        %3335 = vmatpush1.msra.mxu0 0.0
        %3336 = vmatprep.subr.mxu0 0.0
        %3337 = vmatpush1.msra.mxu0 0.0
        %3338 = vmatprep.subr.mxu0 0.0
        %3339 = vmatpush1.msra.mxu0 0.0
        %3340 = vmatprep.subr.mxu0 0.0
        %3341 = vmatpush1.msra.mxu0 0.0
        %3342 = vmatprep.subr.mxu0 0.0
        %3343 = vmatpush1.msra.mxu0 0.0
        %3344 = vmatprep.subr.mxu0 0.0
        %3345 = vmatpush1.msra.mxu0 0.0
        %3346 = vmatprep.subr.mxu0 0.0
        %3347 = vmatpush1.msra.mxu0 0.0
        %3348 = vmatprep.subr.mxu0 0.0
        %3349 = vmatpush1.msra.mxu0 0.0
        %3350 = vmatprep.subr.mxu0 0.0
        %3351 = vmatpush1.msra.mxu0 0.0
        %3352 = vmatprep.subr.mxu0 0.0
        %3353 = vmatpush1.msra.mxu0 0.0
        %3354 = vmatprep.subr.mxu0 0.0
        %3355 = vmatpush1.msra.mxu0 0.0
        %3356 = vmatprep.subr.mxu0 0.0
        %3357 = vmatpush1.msra.mxu0 0.0
        %3358 = vmatprep.subr.mxu0 0.0
        %3359 = vmatpush1.msra.mxu0 0.0
        %3360 = vmatprep.subr.mxu0 0.0
        %3361 = vmatpush1.msra.mxu0 0.0
        %3362 = vmatprep.subr.mxu0 0.0
        %3363 = vmatpush1.msra.mxu0 0.0
        %3364 = vmatprep.subr.mxu0 0.0
        %3365 = vmatpush1.msra.mxu0 0.0
        %3366 = vmatprep.subr.mxu0 0.0
        %3367 = vmatpush1.msra.mxu0 0.0
        %3368 = vmatprep.subr.mxu0 0.0
        %3369 = vmatpush1.msra.mxu0 0.0
        %3370 = vmatprep.subr.mxu0 0.0
        %3371 = vmatpush1.msra.mxu0 0.0
        %3372 = vmatprep.subr.mxu0 0.0
        %3373 = vmatpush1.msra.mxu0 0.0
        %3374 = vmatprep.subr.mxu0 0.0
        %3375 = vmatpush1.msra.mxu0 0.0
        %3376 = vmatprep.mubr.f32.mxu0 0.0
        %3377 = vmatmul.mubr.f32.gmra.mrb[0].mxu0 %v3310
        %v3378 = vpop.f32.mrb[0].mxu0
        %v3379 = vadd.f32 %v3307, %v3378
        %v3380 = vpop.f32.mrb[0].mxu0
        %3381 = vdwg.mxu0
        %s3382 = scalar_lea.vmem %s35, 1
        %v3383 = vld [vmem:[%s3382] sm:$0x1]
        %v3385 = vlaneseq
        %v3386 = vshrl.u32 %v3385, 7
        %v3387 = vsub.s32 0, %v3386
        %v3388 = vrot.slane %v3383, %v3387
        %v3390 = vadd.f32 %v3379, %v3388
        %s3391 = scalar_lea.vmem %s37, 1
        %v3392 = vld [vmem:[%s3391] sm:$0x1]
        %v3394 = vlaneseq
        %v3395 = vshrl.u32 %v3394, 7
        %v3396 = vsub.s32 0, %v3395
        %v3397 = vrot.slane %v3392, %v3396
        %v3399 = vadd.f32 %v3379, %v3397
        %3401 = vrot.lane.b32.xlu0 %v3399, 32
        %v3402 = vpop.permute.xlu0 %3401
        %3404 = vrot.lane.b32.xlu0 %v3399, 64
        %v3405 = vpop.permute.xlu0 %3404
        %3407 = vrot.lane.b32.xlu0 %v3399, 96
        %v3408 = vpop.permute.xlu0 %3407
        %v3410 = vsel %vm1167, %v3399, %v3402
        %v3411 = vsel %vm1356, %v3410, %v3405
        %v3412 = vsel %vm1567, %v3411, %v3408
        %s3413 = scalar_lea.vmem %s39, 16
        %v3414 = vld [vmem:[%s3413] sm:$0xff]
        %v3415 = vld [vmem:[%s3413 + $0x8] sm:$0xff]
        %v3416 = vmul.f32 %v3412, %v3414
        %v3417 = vmul.f32 %v3412, %v3415
        %3418 = vmatprep.subr.mxu0 0.0
        %3419 = vmatpush1.msra.mxu0 %v1193
        %3420 = vmatprep.subr.mxu0 0.0
        %3421 = vmatpush1.msra.mxu0 %v1194
        %3422 = vmatprep.subr.mxu0 0.0
        %3423 = vmatpush1.msra.mxu0 %v1195
        %3424 = vmatprep.subr.mxu0 0.0
        %3425 = vmatpush1.msra.mxu0 %v1196
        %3426 = vmatprep.subr.mxu0 0.0
        %3427 = vmatpush1.msra.mxu0 %v1197
        %3428 = vmatprep.subr.mxu0 0.0
        %3429 = vmatpush1.msra.mxu0 %v1198
        %3430 = vmatprep.subr.mxu0 0.0
        %3431 = vmatpush1.msra.mxu0 %v1199
        %3432 = vmatprep.subr.mxu0 0.0
        %3433 = vmatpush1.msra.mxu0 %v1200
        %3434 = vmatprep.subr.mxu0 0.0
        %3435 = vmatpush1.msra.mxu0 %v1201
        %3436 = vmatprep.subr.mxu0 0.0
        %3437 = vmatpush1.msra.mxu0 %v1202
        %3438 = vmatprep.subr.mxu0 0.0
        %3439 = vmatpush1.msra.mxu0 %v1203
        %3440 = vmatprep.subr.mxu0 0.0
        %3441 = vmatpush1.msra.mxu0 %v1204
        %3442 = vmatprep.subr.mxu0 0.0
        %3443 = vmatpush1.msra.mxu0 %v1205
        %3444 = vmatprep.subr.mxu0 0.0
        %3445 = vmatpush1.msra.mxu0 %v1206
        %3446 = vmatprep.subr.mxu0 0.0
        %3447 = vmatpush1.msra.mxu0 %v1207
        %3448 = vmatprep.subr.mxu0 0.0
        %3449 = vmatpush1.msra.mxu0 %v1208
        %3450 = vmatprep.subr.mxu0 0.0
        %3451 = vmatpush1.msra.mxu0 %v1209
        %3452 = vmatprep.subr.mxu0 0.0
        %3453 = vmatpush1.msra.mxu0 %v1210
        %3454 = vmatprep.subr.mxu0 0.0
        %3455 = vmatpush1.msra.mxu0 %v1211
        %3456 = vmatprep.subr.mxu0 0.0
        %3457 = vmatpush1.msra.mxu0 %v1212
        %3458 = vmatprep.subr.mxu0 0.0
        %3459 = vmatpush1.msra.mxu0 %v1213
        %3460 = vmatprep.subr.mxu0 0.0
        %3461 = vmatpush1.msra.mxu0 %v1214
        %3462 = vmatprep.subr.mxu0 0.0
        %3463 = vmatpush1.msra.mxu0 %v1215
        %3464 = vmatprep.subr.mxu0 0.0
        %3465 = vmatpush1.msra.mxu0 %v1216
        %3466 = vmatprep.subr.mxu0 0.0
        %3467 = vmatpush1.msra.mxu0 %v1217
        %3468 = vmatprep.subr.mxu0 0.0
        %3469 = vmatpush1.msra.mxu0 %v1218
        %3470 = vmatprep.subr.mxu0 0.0
        %3471 = vmatpush1.msra.mxu0 %v1219
        %3472 = vmatprep.subr.mxu0 0.0
        %3473 = vmatpush1.msra.mxu0 %v1220
        %3474 = vmatprep.subr.mxu0 0.0
        %3475 = vmatpush1.msra.mxu0 %v1221
        %3476 = vmatprep.subr.mxu0 0.0
        %3477 = vmatpush1.msra.mxu0 %v1222
        %3478 = vmatprep.subr.mxu0 0.0
        %3479 = vmatpush1.msra.mxu0 %v1223
        %3480 = vmatprep.subr.mxu0 0.0
        %3481 = vmatpush1.msra.mxu0 %v1224
        %3482 = vmatprep.mubr.f32.mxu0 %v3417
        %3483 = vmatmul.mubr.f32.gmra.mrb[0].mxu0 %v3416
        %v3484 = vpop.f32.mrb[0].mxu0
        %v3485 = vadd.f32 0.0, %v3484
        %v3486 = vpop.f32.mrb[0].mxu0
        %3487 = vdwg.mxu0
        %3489 = vrot.lane.b32.xlu0 %v3379, 96
        %v3490 = vpop.permute.xlu0 %3489
        %v3492 = vsel %vm1646, %v3390, 0
        %v3494 = vsel %vm1646, %v3490, 0
        %3496 = vmatprep.subr.mxu0 0.0
        %3497 = vmatpush1.xpose.msra.mxu0 %v3494
        %3498 = vmatprep.subr.mxu0 0.0
        %3499 = vmatpush1.xpose.msra.mxu0 0.0
        %3500 = vmatprep.subr.mxu0 0.0
        %3501 = vmatpush1.xpose.msra.mxu0 0.0
        %3502 = vmatprep.subr.mxu0 0.0
        %3503 = vmatpush1.xpose.msra.mxu0 0.0
        %3504 = vmatprep.subr.mxu0 0.0
        %3505 = vmatpush1.xpose.msra.mxu0 0.0
        %3506 = vmatprep.subr.mxu0 0.0
        %3507 = vmatpush1.xpose.msra.mxu0 0.0
        %3508 = vmatprep.subr.mxu0 0.0
        %3509 = vmatpush1.xpose.msra.mxu0 0.0
        %3510 = vmatprep.subr.mxu0 0.0
        %3511 = vmatpush1.xpose.msra.mxu0 0.0
        %3512 = vmatprep.subr.mxu0 0.0
        %3513 = vmatpush1.xpose.msra.mxu0 0.0
        %3514 = vmatprep.subr.mxu0 0.0
        %3515 = vmatpush1.xpose.msra.mxu0 0.0
        %3516 = vmatprep.subr.mxu0 0.0
        %3517 = vmatpush1.xpose.msra.mxu0 0.0
        %3518 = vmatprep.subr.mxu0 0.0
        %3519 = vmatpush1.xpose.msra.mxu0 0.0
        %3520 = vmatprep.subr.mxu0 0.0
        %3521 = vmatpush1.xpose.msra.mxu0 0.0
        %3522 = vmatprep.subr.mxu0 0.0
        %3523 = vmatpush1.xpose.msra.mxu0 0.0
        %3524 = vmatprep.subr.mxu0 0.0
        %3525 = vmatpush1.xpose.msra.mxu0 0.0
        %3526 = vmatprep.subr.mxu0 0.0
        %3527 = vmatpush1.xpose.msra.mxu0 0.0
        %3528 = vmatprep.subr.mxu0 0.0
        %3529 = vmatpush1.xpose.msra.mxu0 0.0
        %3530 = vmatprep.subr.mxu0 0.0
        %3531 = vmatpush1.xpose.msra.mxu0 0.0
        %3532 = vmatprep.subr.mxu0 0.0
        %3533 = vmatpush1.xpose.msra.mxu0 0.0
        %3534 = vmatprep.subr.mxu0 0.0
        %3535 = vmatpush1.xpose.msra.mxu0 0.0
        %3536 = vmatprep.subr.mxu0 0.0
        %3537 = vmatpush1.xpose.msra.mxu0 0.0
        %3538 = vmatprep.subr.mxu0 0.0
        %3539 = vmatpush1.xpose.msra.mxu0 0.0
        %3540 = vmatprep.subr.mxu0 0.0
        %3541 = vmatpush1.xpose.msra.mxu0 0.0
        %3542 = vmatprep.subr.mxu0 0.0
        %3543 = vmatpush1.xpose.msra.mxu0 0.0
        %3544 = vmatprep.subr.mxu0 0.0
        %3545 = vmatpush1.xpose.msra.mxu0 0.0
        %3546 = vmatprep.subr.mxu0 0.0
        %3547 = vmatpush1.xpose.msra.mxu0 0.0
        %3548 = vmatprep.subr.mxu0 0.0
        %3549 = vmatpush1.xpose.msra.mxu0 0.0
        %3550 = vmatprep.subr.mxu0 0.0
        %3551 = vmatpush1.xpose.msra.mxu0 0.0
        %3552 = vmatprep.subr.mxu0 0.0
        %3553 = vmatpush1.xpose.msra.mxu0 0.0
        %3554 = vmatprep.subr.mxu0 0.0
        %3555 = vmatpush1.xpose.msra.mxu0 0.0
        %3556 = vmatprep.subr.mxu0 0.0
        %3557 = vmatpush1.xpose.msra.mxu0 0.0
        %3558 = vmatprep.subr.mxu0 0.0
        %3559 = vmatpush1.xpose.msra.mxu0 0.0
        %3560 = vmatprep.mubr.f32.mxu0 0.0
        %3561 = vmatmul.mubr.f32.gmra.mrb[0].mxu0 %v3492
        %v3562 = vpop.f32.mrb[0].mxu0
        %v3563 = vadd.f32 %v3485, %v3562
        %v3564 = vpop.f32.mrb[0].mxu0
        %3565 = vdwg.mxu0
        %v3566 = vmul.f32 %v3563, 0.35355338
        %v3567 = vsel %vm1728, %v3566, -3.4028235e+38
        %v3568 = vsel %vm1646, %v3567, -inf
        %3569 = vmax.xlane.f32.xlu0 %v3568
        %v3570 = vpop.xlane.xlu0 %3569
        %v3571 = vsub.f32 %v3567, %v3570
        %v3572 = vmul.f32 %v3571, 1.442695
        %v3573 = vpow.pop %v3572
        %v3574 = vsel %vm1646, %v3573, 0.0
        %3575 = vadd.xlane.f32.xlu0 %v3574
        %v3576 = vpop.xlane.xlu0 %3575
        %v3577 = vrcp.pop %v3576
        %v3578 = vmul.f32 %v3573, %v3577
        %v3579 = vsel %vm1728, %v3578, 0.0
        %3580 = vrot.lane.b32.xlu0 %v3379, 64
        %v3581 = vpop.permute.xlu0 %3580
        %v3584 = vsel %vm1646, %v3579, 0
        %3586 = vmatprep.subr.mxu0 0.0
        %3587 = vmatpush1.msra.mxu0 %v3581
        %3588 = vmatprep.subr.mxu0 0.0
        %3589 = vmatpush1.msra.mxu0 0.0
        %3590 = vmatprep.subr.mxu0 0.0
        %3591 = vmatpush1.msra.mxu0 0.0
        %3592 = vmatprep.subr.mxu0 0.0
        %3593 = vmatpush1.msra.mxu0 0.0
        %3594 = vmatprep.subr.mxu0 0.0
        %3595 = vmatpush1.msra.mxu0 0.0
        %3596 = vmatprep.subr.mxu0 0.0
        %3597 = vmatpush1.msra.mxu0 0.0
        %3598 = vmatprep.subr.mxu0 0.0
        %3599 = vmatpush1.msra.mxu0 0.0
        %3600 = vmatprep.subr.mxu0 0.0
        %3601 = vmatpush1.msra.mxu0 0.0
        %3602 = vmatprep.subr.mxu0 0.0
        %3603 = vmatpush1.msra.mxu0 0.0
        %3604 = vmatprep.subr.mxu0 0.0
        %3605 = vmatpush1.msra.mxu0 0.0
        %3606 = vmatprep.subr.mxu0 0.0
        %3607 = vmatpush1.msra.mxu0 0.0
        %3608 = vmatprep.subr.mxu0 0.0
        %3609 = vmatpush1.msra.mxu0 0.0
        %3610 = vmatprep.subr.mxu0 0.0
        %3611 = vmatpush1.msra.mxu0 0.0
        %3612 = vmatprep.subr.mxu0 0.0
        %3613 = vmatpush1.msra.mxu0 0.0
        %3614 = vmatprep.subr.mxu0 0.0
        %3615 = vmatpush1.msra.mxu0 0.0
        %3616 = vmatprep.subr.mxu0 0.0
        %3617 = vmatpush1.msra.mxu0 0.0
        %3618 = vmatprep.subr.mxu0 0.0
        %3619 = vmatpush1.msra.mxu0 0.0
        %3620 = vmatprep.subr.mxu0 0.0
        %3621 = vmatpush1.msra.mxu0 0.0
        %3622 = vmatprep.subr.mxu0 0.0
        %3623 = vmatpush1.msra.mxu0 0.0
        %3624 = vmatprep.subr.mxu0 0.0
        %3625 = vmatpush1.msra.mxu0 0.0
        %3626 = vmatprep.subr.mxu0 0.0
        %3627 = vmatpush1.msra.mxu0 0.0
        %3628 = vmatprep.subr.mxu0 0.0
        %3629 = vmatpush1.msra.mxu0 0.0
        %3630 = vmatprep.subr.mxu0 0.0
        %3631 = vmatpush1.msra.mxu0 0.0
        %3632 = vmatprep.subr.mxu0 0.0
        %3633 = vmatpush1.msra.mxu0 0.0
        %3634 = vmatprep.subr.mxu0 0.0
        %3635 = vmatpush1.msra.mxu0 0.0
        %3636 = vmatprep.subr.mxu0 0.0
        %3637 = vmatpush1.msra.mxu0 0.0
        %3638 = vmatprep.subr.mxu0 0.0
        %3639 = vmatpush1.msra.mxu0 0.0
        %3640 = vmatprep.subr.mxu0 0.0
        %3641 = vmatpush1.msra.mxu0 0.0
        %3642 = vmatprep.subr.mxu0 0.0
        %3643 = vmatpush1.msra.mxu0 0.0
        %3644 = vmatprep.subr.mxu0 0.0
        %3645 = vmatpush1.msra.mxu0 0.0
        %3646 = vmatprep.subr.mxu0 0.0
        %3647 = vmatpush1.msra.mxu0 0.0
        %3648 = vmatprep.subr.mxu0 0.0
        %3649 = vmatpush1.msra.mxu0 0.0
        %3650 = vmatprep.mubr.f32.mxu0 0.0
        %3651 = vmatmul.mubr.f32.gmra.mrb[0].mxu0 %v3584
        %v3652 = vpop.f32.mrb[0].mxu0
        %v3653 = vadd.f32 0.0, %v3652
        %v3654 = vpop.f32.mrb[0].mxu0
        %3655 = vdwg.mxu0
        %3656 = vrot.lane.b32.xlu0 %v3390, 120
        %v3657 = vpop.permute.xlu0 %3656
        %3658 = vrot.lane.b32.xlu0 %v3379, 88
        %v3659 = vpop.permute.xlu0 %3658
        %3661 = vrot.lane.b32.xlu0 %v3485, 120
        %v3662 = vpop.permute.xlu0 %3661
        %v3664 = vsel %vm1646, %v3657, 0
        %v3666 = vsel %vm1646, %v3659, 0
        %3668 = vmatprep.subr.mxu0 0.0
        %3669 = vmatpush1.xpose.msra.mxu0 %v3666
        %3670 = vmatprep.subr.mxu0 0.0
        %3671 = vmatpush1.xpose.msra.mxu0 0.0
        %3672 = vmatprep.subr.mxu0 0.0
        %3673 = vmatpush1.xpose.msra.mxu0 0.0
        %3674 = vmatprep.subr.mxu0 0.0
        %3675 = vmatpush1.xpose.msra.mxu0 0.0
        %3676 = vmatprep.subr.mxu0 0.0
        %3677 = vmatpush1.xpose.msra.mxu0 0.0
        %3678 = vmatprep.subr.mxu0 0.0
        %3679 = vmatpush1.xpose.msra.mxu0 0.0
        %3680 = vmatprep.subr.mxu0 0.0
        %3681 = vmatpush1.xpose.msra.mxu0 0.0
        %3682 = vmatprep.subr.mxu0 0.0
        %3683 = vmatpush1.xpose.msra.mxu0 0.0
        %3684 = vmatprep.subr.mxu0 0.0
        %3685 = vmatpush1.xpose.msra.mxu0 0.0
        %3686 = vmatprep.subr.mxu0 0.0
        %3687 = vmatpush1.xpose.msra.mxu0 0.0
        %3688 = vmatprep.subr.mxu0 0.0
        %3689 = vmatpush1.xpose.msra.mxu0 0.0
        %3690 = vmatprep.subr.mxu0 0.0
        %3691 = vmatpush1.xpose.msra.mxu0 0.0
        %3692 = vmatprep.subr.mxu0 0.0
        %3693 = vmatpush1.xpose.msra.mxu0 0.0
        %3694 = vmatprep.subr.mxu0 0.0
        %3695 = vmatpush1.xpose.msra.mxu0 0.0
        %3696 = vmatprep.subr.mxu0 0.0
        %3697 = vmatpush1.xpose.msra.mxu0 0.0
        %3698 = vmatprep.subr.mxu0 0.0
        %3699 = vmatpush1.xpose.msra.mxu0 0.0
        %3700 = vmatprep.subr.mxu0 0.0
        %3701 = vmatpush1.xpose.msra.mxu0 0.0
        %3702 = vmatprep.subr.mxu0 0.0
        %3703 = vmatpush1.xpose.msra.mxu0 0.0
        %3704 = vmatprep.subr.mxu0 0.0
        %3705 = vmatpush1.xpose.msra.mxu0 0.0
        %3706 = vmatprep.subr.mxu0 0.0
        %3707 = vmatpush1.xpose.msra.mxu0 0.0
        %3708 = vmatprep.subr.mxu0 0.0
        %3709 = vmatpush1.xpose.msra.mxu0 0.0
        %3710 = vmatprep.subr.mxu0 0.0
        %3711 = vmatpush1.xpose.msra.mxu0 0.0
        %3712 = vmatprep.subr.mxu0 0.0
        %3713 = vmatpush1.xpose.msra.mxu0 0.0
        %3714 = vmatprep.subr.mxu0 0.0
        %3715 = vmatpush1.xpose.msra.mxu0 0.0
        %3716 = vmatprep.subr.mxu0 0.0
        %3717 = vmatpush1.xpose.msra.mxu0 0.0
        %3718 = vmatprep.subr.mxu0 0.0
        %3719 = vmatpush1.xpose.msra.mxu0 0.0
        %3720 = vmatprep.subr.mxu0 0.0
        %3721 = vmatpush1.xpose.msra.mxu0 0.0
        %3722 = vmatprep.subr.mxu0 0.0
        %3723 = vmatpush1.xpose.msra.mxu0 0.0
        %3724 = vmatprep.subr.mxu0 0.0
        %3725 = vmatpush1.xpose.msra.mxu0 0.0
        %3726 = vmatprep.subr.mxu0 0.0
        %3727 = vmatpush1.xpose.msra.mxu0 0.0
        %3728 = vmatprep.subr.mxu0 0.0
        %3729 = vmatpush1.xpose.msra.mxu0 0.0
        %3730 = vmatprep.subr.mxu0 0.0
        %3731 = vmatpush1.xpose.msra.mxu0 0.0
        %3732 = vmatprep.mubr.f32.mxu0 0.0
        %3733 = vmatmul.mubr.f32.gmra.mrb[0].mxu0 %v3664
        %v3734 = vpop.f32.mrb[0].mxu0
        %v3735 = vadd.f32 %v3662, %v3734
        %v3736 = vpop.f32.mrb[0].mxu0
        %3737 = vdwg.mxu0
        %v3738 = vmul.f32 %v3735, 0.35355338
        %v3739 = vsel %vm1728, %v3738, -3.4028235e+38
        %v3740 = vsel %vm1646, %v3739, -inf
        %3741 = vmax.xlane.f32.xlu0 %v3740
        %v3742 = vpop.xlane.xlu0 %3741
        %v3743 = vsub.f32 %v3739, %v3742
        %v3744 = vmul.f32 %v3743, 1.442695
        %v3745 = vpow.pop %v3744
        %v3746 = vsel %vm1646, %v3745, 0.0
        %3747 = vadd.xlane.f32.xlu0 %v3746
        %v3748 = vpop.xlane.xlu0 %3747
        %v3749 = vrcp.pop %v3748
        %v3750 = vmul.f32 %v3745, %v3749
        %v3751 = vsel %vm1728, %v3750, 0.0
        %3752 = vrot.lane.b32.xlu0 %v3379, 56
        %v3753 = vpop.permute.xlu0 %3752
        %v3756 = vsel %vm1646, %v3751, 0
        %3758 = vmatprep.subr.mxu0 0.0
        %3759 = vmatpush1.msra.mxu0 %v3753
        %3760 = vmatprep.subr.mxu0 0.0
        %3761 = vmatpush1.msra.mxu0 0.0
        %3762 = vmatprep.subr.mxu0 0.0
        %3763 = vmatpush1.msra.mxu0 0.0
        %3764 = vmatprep.subr.mxu0 0.0
        %3765 = vmatpush1.msra.mxu0 0.0
        %3766 = vmatprep.subr.mxu0 0.0
        %3767 = vmatpush1.msra.mxu0 0.0
        %3768 = vmatprep.subr.mxu0 0.0
        %3769 = vmatpush1.msra.mxu0 0.0
        %3770 = vmatprep.subr.mxu0 0.0
        %3771 = vmatpush1.msra.mxu0 0.0
        %3772 = vmatprep.subr.mxu0 0.0
        %3773 = vmatpush1.msra.mxu0 0.0
        %3774 = vmatprep.subr.mxu0 0.0
        %3775 = vmatpush1.msra.mxu0 0.0
        %3776 = vmatprep.subr.mxu0 0.0
        %3777 = vmatpush1.msra.mxu0 0.0
        %3778 = vmatprep.subr.mxu0 0.0
        %3779 = vmatpush1.msra.mxu0 0.0
        %3780 = vmatprep.subr.mxu0 0.0
        %3781 = vmatpush1.msra.mxu0 0.0
        %3782 = vmatprep.subr.mxu0 0.0
        %3783 = vmatpush1.msra.mxu0 0.0
        %3784 = vmatprep.subr.mxu0 0.0
        %3785 = vmatpush1.msra.mxu0 0.0
        %3786 = vmatprep.subr.mxu0 0.0
        %3787 = vmatpush1.msra.mxu0 0.0
        %3788 = vmatprep.subr.mxu0 0.0
        %3789 = vmatpush1.msra.mxu0 0.0
        %3790 = vmatprep.subr.mxu0 0.0
        %3791 = vmatpush1.msra.mxu0 0.0
        %3792 = vmatprep.subr.mxu0 0.0
        %3793 = vmatpush1.msra.mxu0 0.0
        %3794 = vmatprep.subr.mxu0 0.0
        %3795 = vmatpush1.msra.mxu0 0.0
        %3796 = vmatprep.subr.mxu0 0.0
        %3797 = vmatpush1.msra.mxu0 0.0
        %3798 = vmatprep.subr.mxu0 0.0
        %3799 = vmatpush1.msra.mxu0 0.0
        %3800 = vmatprep.subr.mxu0 0.0
        %3801 = vmatpush1.msra.mxu0 0.0
        %3802 = vmatprep.subr.mxu0 0.0
        %3803 = vmatpush1.msra.mxu0 0.0
        %3804 = vmatprep.subr.mxu0 0.0
        %3805 = vmatpush1.msra.mxu0 0.0
        %3806 = vmatprep.subr.mxu0 0.0
        %3807 = vmatpush1.msra.mxu0 0.0
        %3808 = vmatprep.subr.mxu0 0.0
        %3809 = vmatpush1.msra.mxu0 0.0
        %3810 = vmatprep.subr.mxu0 0.0
        %3811 = vmatpush1.msra.mxu0 0.0
        %3812 = vmatprep.subr.mxu0 0.0
        %3813 = vmatpush1.msra.mxu0 0.0
        %3814 = vmatprep.subr.mxu0 0.0
        %3815 = vmatpush1.msra.mxu0 0.0
        %3816 = vmatprep.subr.mxu0 0.0
        %3817 = vmatpush1.msra.mxu0 0.0
        %3818 = vmatprep.subr.mxu0 0.0
        %3819 = vmatpush1.msra.mxu0 0.0
        %3820 = vmatprep.subr.mxu0 0.0
        %3821 = vmatpush1.msra.mxu0 0.0
        %3822 = vmatprep.mubr.f32.mxu0 0.0
        %3823 = vmatmul.mubr.f32.gmra.mrb[0].mxu0 %v3756
        %v3824 = vpop.f32.mrb[0].mxu0
        %v3825 = vadd.f32 0.0, %v3824
        %v3826 = vpop.f32.mrb[0].mxu0
        %3827 = vdwg.mxu0
        %3828 = vrot.lane.b32.xlu0 %v3390, 112
        %v3829 = vpop.permute.xlu0 %3828
        %3830 = vrot.lane.b32.xlu0 %v3379, 80
        %v3831 = vpop.permute.xlu0 %3830
        %3832 = vrot.lane.b32.xlu0 %v3485, 112
        %v3833 = vpop.permute.xlu0 %3832
        %v3835 = vsel %vm1646, %v3829, 0
        %v3837 = vsel %vm1646, %v3831, 0
        %3839 = vmatprep.subr.mxu0 0.0
        %3840 = vmatpush1.xpose.msra.mxu0 %v3837
        %3841 = vmatprep.subr.mxu0 0.0
        %3842 = vmatpush1.xpose.msra.mxu0 0.0
        %3843 = vmatprep.subr.mxu0 0.0
        %3844 = vmatpush1.xpose.msra.mxu0 0.0
        %3845 = vmatprep.subr.mxu0 0.0
        %3846 = vmatpush1.xpose.msra.mxu0 0.0
        %3847 = vmatprep.subr.mxu0 0.0
        %3848 = vmatpush1.xpose.msra.mxu0 0.0
        %3849 = vmatprep.subr.mxu0 0.0
        %3850 = vmatpush1.xpose.msra.mxu0 0.0
        %3851 = vmatprep.subr.mxu0 0.0
        %3852 = vmatpush1.xpose.msra.mxu0 0.0
        %3853 = vmatprep.subr.mxu0 0.0
        %3854 = vmatpush1.xpose.msra.mxu0 0.0
        %3855 = vmatprep.subr.mxu0 0.0
        %3856 = vmatpush1.xpose.msra.mxu0 0.0
        %3857 = vmatprep.subr.mxu0 0.0
        %3858 = vmatpush1.xpose.msra.mxu0 0.0
        %3859 = vmatprep.subr.mxu0 0.0
        %3860 = vmatpush1.xpose.msra.mxu0 0.0
        %3861 = vmatprep.subr.mxu0 0.0
        %3862 = vmatpush1.xpose.msra.mxu0 0.0
        %3863 = vmatprep.subr.mxu0 0.0
        %3864 = vmatpush1.xpose.msra.mxu0 0.0
        %3865 = vmatprep.subr.mxu0 0.0
        %3866 = vmatpush1.xpose.msra.mxu0 0.0
        %3867 = vmatprep.subr.mxu0 0.0
        %3868 = vmatpush1.xpose.msra.mxu0 0.0
        %3869 = vmatprep.subr.mxu0 0.0
        %3870 = vmatpush1.xpose.msra.mxu0 0.0
        %3871 = vmatprep.subr.mxu0 0.0
        %3872 = vmatpush1.xpose.msra.mxu0 0.0
        %3873 = vmatprep.subr.mxu0 0.0
        %3874 = vmatpush1.xpose.msra.mxu0 0.0
        %3875 = vmatprep.subr.mxu0 0.0
        %3876 = vmatpush1.xpose.msra.mxu0 0.0
        %3877 = vmatprep.subr.mxu0 0.0
        %3878 = vmatpush1.xpose.msra.mxu0 0.0
        %3879 = vmatprep.subr.mxu0 0.0
        %3880 = vmatpush1.xpose.msra.mxu0 0.0
        %3881 = vmatprep.subr.mxu0 0.0
        %3882 = vmatpush1.xpose.msra.mxu0 0.0
        %3883 = vmatprep.subr.mxu0 0.0
        %3884 = vmatpush1.xpose.msra.mxu0 0.0
        %3885 = vmatprep.subr.mxu0 0.0
        %3886 = vmatpush1.xpose.msra.mxu0 0.0
        %3887 = vmatprep.subr.mxu0 0.0
        %3888 = vmatpush1.xpose.msra.mxu0 0.0
        %3889 = vmatprep.subr.mxu0 0.0
        %3890 = vmatpush1.xpose.msra.mxu0 0.0
        %3891 = vmatprep.subr.mxu0 0.0
        %3892 = vmatpush1.xpose.msra.mxu0 0.0
        %3893 = vmatprep.subr.mxu0 0.0
        %3894 = vmatpush1.xpose.msra.mxu0 0.0
        %3895 = vmatprep.subr.mxu0 0.0
        %3896 = vmatpush1.xpose.msra.mxu0 0.0
        %3897 = vmatprep.subr.mxu0 0.0
        %3898 = vmatpush1.xpose.msra.mxu0 0.0
        %3899 = vmatprep.subr.mxu0 0.0
        %3900 = vmatpush1.xpose.msra.mxu0 0.0
        %3901 = vmatprep.subr.mxu0 0.0
        %3902 = vmatpush1.xpose.msra.mxu0 0.0
        %3903 = vmatprep.mubr.f32.mxu0 0.0
        %3904 = vmatmul.mubr.f32.gmra.mrb[0].mxu0 %v3835
        %v3905 = vpop.f32.mrb[0].mxu0
        %v3906 = vadd.f32 %v3833, %v3905
        %v3907 = vpop.f32.mrb[0].mxu0
        %3908 = vdwg.mxu0
        %v3909 = vmul.f32 %v3906, 0.35355338
        %v3910 = vsel %vm1728, %v3909, -3.4028235e+38
        %v3911 = vsel %vm1646, %v3910, -inf
        %3912 = vmax.xlane.f32.xlu0 %v3911
        %v3913 = vpop.xlane.xlu0 %3912
        %v3914 = vsub.f32 %v3910, %v3913
        %v3915 = vmul.f32 %v3914, 1.442695
        %v3916 = vpow.pop %v3915
        %v3917 = vsel %vm1646, %v3916, 0.0
        %3918 = vadd.xlane.f32.xlu0 %v3917
        %v3919 = vpop.xlane.xlu0 %3918
        %v3920 = vrcp.pop %v3919
        %v3921 = vmul.f32 %v3916, %v3920
        %v3922 = vsel %vm1728, %v3921, 0.0
        %3923 = vrot.lane.b32.xlu0 %v3379, 48
        %v3924 = vpop.permute.xlu0 %3923
        %v3927 = vsel %vm1646, %v3922, 0
        %3929 = vmatprep.subr.mxu0 0.0
        %3930 = vmatpush1.msra.mxu0 %v3924
        %3931 = vmatprep.subr.mxu0 0.0
        %3932 = vmatpush1.msra.mxu0 0.0
        %3933 = vmatprep.subr.mxu0 0.0
        %3934 = vmatpush1.msra.mxu0 0.0
        %3935 = vmatprep.subr.mxu0 0.0
        %3936 = vmatpush1.msra.mxu0 0.0
        %3937 = vmatprep.subr.mxu0 0.0
        %3938 = vmatpush1.msra.mxu0 0.0
        %3939 = vmatprep.subr.mxu0 0.0
        %3940 = vmatpush1.msra.mxu0 0.0
        %3941 = vmatprep.subr.mxu0 0.0
        %3942 = vmatpush1.msra.mxu0 0.0
        %3943 = vmatprep.subr.mxu0 0.0
        %3944 = vmatpush1.msra.mxu0 0.0
        %3945 = vmatprep.subr.mxu0 0.0
        %3946 = vmatpush1.msra.mxu0 0.0
        %3947 = vmatprep.subr.mxu0 0.0
        %3948 = vmatpush1.msra.mxu0 0.0
        %3949 = vmatprep.subr.mxu0 0.0
        %3950 = vmatpush1.msra.mxu0 0.0
        %3951 = vmatprep.subr.mxu0 0.0
        %3952 = vmatpush1.msra.mxu0 0.0
        %3953 = vmatprep.subr.mxu0 0.0
        %3954 = vmatpush1.msra.mxu0 0.0
        %3955 = vmatprep.subr.mxu0 0.0
        %3956 = vmatpush1.msra.mxu0 0.0
        %3957 = vmatprep.subr.mxu0 0.0
        %3958 = vmatpush1.msra.mxu0 0.0
        %3959 = vmatprep.subr.mxu0 0.0
        %3960 = vmatpush1.msra.mxu0 0.0
        %3961 = vmatprep.subr.mxu0 0.0
        %3962 = vmatpush1.msra.mxu0 0.0
        %3963 = vmatprep.subr.mxu0 0.0
        %3964 = vmatpush1.msra.mxu0 0.0
        %3965 = vmatprep.subr.mxu0 0.0
        %3966 = vmatpush1.msra.mxu0 0.0
        %3967 = vmatprep.subr.mxu0 0.0
        %3968 = vmatpush1.msra.mxu0 0.0
        %3969 = vmatprep.subr.mxu0 0.0
        %3970 = vmatpush1.msra.mxu0 0.0
        %3971 = vmatprep.subr.mxu0 0.0
        %3972 = vmatpush1.msra.mxu0 0.0
        %3973 = vmatprep.subr.mxu0 0.0
        %3974 = vmatpush1.msra.mxu0 0.0
        %3975 = vmatprep.subr.mxu0 0.0
        %3976 = vmatpush1.msra.mxu0 0.0
        %3977 = vmatprep.subr.mxu0 0.0
        %3978 = vmatpush1.msra.mxu0 0.0
        %3979 = vmatprep.subr.mxu0 0.0
        %3980 = vmatpush1.msra.mxu0 0.0
        %3981 = vmatprep.subr.mxu0 0.0
        %3982 = vmatpush1.msra.mxu0 0.0
        %3983 = vmatprep.subr.mxu0 0.0
        %3984 = vmatpush1.msra.mxu0 0.0
        %3985 = vmatprep.subr.mxu0 0.0
        %3986 = vmatpush1.msra.mxu0 0.0
        %3987 = vmatprep.subr.mxu0 0.0
        %3988 = vmatpush1.msra.mxu0 0.0
        %3989 = vmatprep.subr.mxu0 0.0
        %3990 = vmatpush1.msra.mxu0 0.0
        %3991 = vmatprep.subr.mxu0 0.0
        %3992 = vmatpush1.msra.mxu0 0.0
        %3993 = vmatprep.mubr.f32.mxu0 0.0
        %3994 = vmatmul.mubr.f32.gmra.mrb[0].mxu0 %v3927
        %v3995 = vpop.f32.mrb[0].mxu0
        %v3996 = vadd.f32 0.0, %v3995
        %v3997 = vpop.f32.mrb[0].mxu0
        %3998 = vdwg.mxu0
        %3999 = vrot.lane.b32.xlu0 %v3390, 104
        %v4000 = vpop.permute.xlu0 %3999
        %4001 = vrot.lane.b32.xlu0 %v3379, 72
        %v4002 = vpop.permute.xlu0 %4001
        %4003 = vrot.lane.b32.xlu0 %v3485, 104
        %v4004 = vpop.permute.xlu0 %4003
        %v4006 = vsel %vm1646, %v4000, 0
        %v4008 = vsel %vm1646, %v4002, 0
        %4010 = vmatprep.subr.mxu0 0.0
        %4011 = vmatpush1.xpose.msra.mxu0 %v4008
        %4012 = vmatprep.subr.mxu0 0.0
        %4013 = vmatpush1.xpose.msra.mxu0 0.0
        %4014 = vmatprep.subr.mxu0 0.0
        %4015 = vmatpush1.xpose.msra.mxu0 0.0
        %4016 = vmatprep.subr.mxu0 0.0
        %4017 = vmatpush1.xpose.msra.mxu0 0.0
        %4018 = vmatprep.subr.mxu0 0.0
        %4019 = vmatpush1.xpose.msra.mxu0 0.0
        %4020 = vmatprep.subr.mxu0 0.0
        %4021 = vmatpush1.xpose.msra.mxu0 0.0
        %4022 = vmatprep.subr.mxu0 0.0
        %4023 = vmatpush1.xpose.msra.mxu0 0.0
        %4024 = vmatprep.subr.mxu0 0.0
        %4025 = vmatpush1.xpose.msra.mxu0 0.0
        %4026 = vmatprep.subr.mxu0 0.0
        %4027 = vmatpush1.xpose.msra.mxu0 0.0
        %4028 = vmatprep.subr.mxu0 0.0
        %4029 = vmatpush1.xpose.msra.mxu0 0.0
        %4030 = vmatprep.subr.mxu0 0.0
        %4031 = vmatpush1.xpose.msra.mxu0 0.0
        %4032 = vmatprep.subr.mxu0 0.0
        %4033 = vmatpush1.xpose.msra.mxu0 0.0
        %4034 = vmatprep.subr.mxu0 0.0
        %4035 = vmatpush1.xpose.msra.mxu0 0.0
        %4036 = vmatprep.subr.mxu0 0.0
        %4037 = vmatpush1.xpose.msra.mxu0 0.0
        %4038 = vmatprep.subr.mxu0 0.0
        %4039 = vmatpush1.xpose.msra.mxu0 0.0
        %4040 = vmatprep.subr.mxu0 0.0
        %4041 = vmatpush1.xpose.msra.mxu0 0.0
        %4042 = vmatprep.subr.mxu0 0.0
        %4043 = vmatpush1.xpose.msra.mxu0 0.0
        %4044 = vmatprep.subr.mxu0 0.0
        %4045 = vmatpush1.xpose.msra.mxu0 0.0
        %4046 = vmatprep.subr.mxu0 0.0
        %4047 = vmatpush1.xpose.msra.mxu0 0.0
        %4048 = vmatprep.subr.mxu0 0.0
        %4049 = vmatpush1.xpose.msra.mxu0 0.0
        %4050 = vmatprep.subr.mxu0 0.0
        %4051 = vmatpush1.xpose.msra.mxu0 0.0
        %4052 = vmatprep.subr.mxu0 0.0
        %4053 = vmatpush1.xpose.msra.mxu0 0.0
        %4054 = vmatprep.subr.mxu0 0.0
        %4055 = vmatpush1.xpose.msra.mxu0 0.0
        %4056 = vmatprep.subr.mxu0 0.0
        %4057 = vmatpush1.xpose.msra.mxu0 0.0
        %4058 = vmatprep.subr.mxu0 0.0
        %4059 = vmatpush1.xpose.msra.mxu0 0.0
        %4060 = vmatprep.subr.mxu0 0.0
        %4061 = vmatpush1.xpose.msra.mxu0 0.0
        %4062 = vmatprep.subr.mxu0 0.0
        %4063 = vmatpush1.xpose.msra.mxu0 0.0
        %4064 = vmatprep.subr.mxu0 0.0
        %4065 = vmatpush1.xpose.msra.mxu0 0.0
        %4066 = vmatprep.subr.mxu0 0.0
        %4067 = vmatpush1.xpose.msra.mxu0 0.0
        %4068 = vmatprep.subr.mxu0 0.0
        %4069 = vmatpush1.xpose.msra.mxu0 0.0
        %4070 = vmatprep.subr.mxu0 0.0
        %4071 = vmatpush1.xpose.msra.mxu0 0.0
        %4072 = vmatprep.subr.mxu0 0.0
        %4073 = vmatpush1.xpose.msra.mxu0 0.0
        %4074 = vmatprep.mubr.f32.mxu0 0.0
        %4075 = vmatmul.mubr.f32.gmra.mrb[0].mxu0 %v4006
        %v4076 = vpop.f32.mrb[0].mxu0
        %v4077 = vadd.f32 %v4004, %v4076
        %v4078 = vpop.f32.mrb[0].mxu0
        %4079 = vdwg.mxu0
        %v4080 = vmul.f32 %v4077, 0.35355338
        %v4081 = vsel %vm1728, %v4080, -3.4028235e+38
        %v4082 = vsel %vm1646, %v4081, -inf
        %4083 = vmax.xlane.f32.xlu0 %v4082
        %v4084 = vpop.xlane.xlu0 %4083
        %v4085 = vsub.f32 %v4081, %v4084
        %v4086 = vmul.f32 %v4085, 1.442695
        %v4087 = vpow.pop %v4086
        %v4088 = vsel %vm1646, %v4087, 0.0
        %4089 = vadd.xlane.f32.xlu0 %v4088
        %v4090 = vpop.xlane.xlu0 %4089
        %v4091 = vrcp.pop %v4090
        %v4092 = vmul.f32 %v4087, %v4091
        %v4093 = vsel %vm1728, %v4092, 0.0
        %4094 = vrot.lane.b32.xlu0 %v3379, 40
        %v4095 = vpop.permute.xlu0 %4094
        %v4098 = vsel %vm1646, %v4093, 0
        %4100 = vmatprep.subr.mxu0 0.0
        %4101 = vmatpush1.msra.mxu0 %v4095
        %4102 = vmatprep.subr.mxu0 0.0
        %4103 = vmatpush1.msra.mxu0 0.0
        %4104 = vmatprep.subr.mxu0 0.0
        %4105 = vmatpush1.msra.mxu0 0.0
        %4106 = vmatprep.subr.mxu0 0.0
        %4107 = vmatpush1.msra.mxu0 0.0
        %4108 = vmatprep.subr.mxu0 0.0
        %4109 = vmatpush1.msra.mxu0 0.0
        %4110 = vmatprep.subr.mxu0 0.0
        %4111 = vmatpush1.msra.mxu0 0.0
        %4112 = vmatprep.subr.mxu0 0.0
        %4113 = vmatpush1.msra.mxu0 0.0
        %4114 = vmatprep.subr.mxu0 0.0
        %4115 = vmatpush1.msra.mxu0 0.0
        %4116 = vmatprep.subr.mxu0 0.0
        %4117 = vmatpush1.msra.mxu0 0.0
        %4118 = vmatprep.subr.mxu0 0.0
        %4119 = vmatpush1.msra.mxu0 0.0
        %4120 = vmatprep.subr.mxu0 0.0
        %4121 = vmatpush1.msra.mxu0 0.0
        %4122 = vmatprep.subr.mxu0 0.0
        %4123 = vmatpush1.msra.mxu0 0.0
        %4124 = vmatprep.subr.mxu0 0.0
        %4125 = vmatpush1.msra.mxu0 0.0
        %4126 = vmatprep.subr.mxu0 0.0
        %4127 = vmatpush1.msra.mxu0 0.0
        %4128 = vmatprep.subr.mxu0 0.0
        %4129 = vmatpush1.msra.mxu0 0.0
        %4130 = vmatprep.subr.mxu0 0.0
        %4131 = vmatpush1.msra.mxu0 0.0
        %4132 = vmatprep.subr.mxu0 0.0
        %4133 = vmatpush1.msra.mxu0 0.0
        %4134 = vmatprep.subr.mxu0 0.0
        %4135 = vmatpush1.msra.mxu0 0.0
        %4136 = vmatprep.subr.mxu0 0.0
        %4137 = vmatpush1.msra.mxu0 0.0
        %4138 = vmatprep.subr.mxu0 0.0
        %4139 = vmatpush1.msra.mxu0 0.0
        %4140 = vmatprep.subr.mxu0 0.0
        %4141 = vmatpush1.msra.mxu0 0.0
        %4142 = vmatprep.subr.mxu0 0.0
        %4143 = vmatpush1.msra.mxu0 0.0
        %4144 = vmatprep.subr.mxu0 0.0
        %4145 = vmatpush1.msra.mxu0 0.0
        %4146 = vmatprep.subr.mxu0 0.0
        %4147 = vmatpush1.msra.mxu0 0.0
        %4148 = vmatprep.subr.mxu0 0.0
        %4149 = vmatpush1.msra.mxu0 0.0
        %4150 = vmatprep.subr.mxu0 0.0
        %4151 = vmatpush1.msra.mxu0 0.0
        %4152 = vmatprep.subr.mxu0 0.0
        %4153 = vmatpush1.msra.mxu0 0.0
        %4154 = vmatprep.subr.mxu0 0.0
        %4155 = vmatpush1.msra.mxu0 0.0
        %4156 = vmatprep.subr.mxu0 0.0
        %4157 = vmatpush1.msra.mxu0 0.0
        %4158 = vmatprep.subr.mxu0 0.0
        %4159 = vmatpush1.msra.mxu0 0.0
        %4160 = vmatprep.subr.mxu0 0.0
        %4161 = vmatpush1.msra.mxu0 0.0
        %4162 = vmatprep.subr.mxu0 0.0
        %4163 = vmatpush1.msra.mxu0 0.0
        %4164 = vmatprep.mubr.f32.mxu0 0.0
        %4165 = vmatmul.mubr.f32.gmra.mrb[0].mxu0 %v4098
        %v4166 = vpop.f32.mrb[0].mxu0
        %v4167 = vadd.f32 0.0, %v4166
        %v4168 = vpop.f32.mrb[0].mxu0
        %4169 = vdwg.mxu0
        %4171 = vrot.lane.b32.xlu0 %v3825, 8
        %v4172 = vpop.permute.xlu0 %4171
        %4175 = vrot.lane.b32.xlu0 %v3996, 16
        %v4176 = vpop.permute.xlu0 %4175
        %4179 = vrot.lane.b32.xlu0 %v4167, 24
        %v4180 = vpop.permute.xlu0 %4179
        %v4182 = vsel %vm1646, %v3653, %v4172
        %v4183 = vsel %vm1092, %v4182, %v4176
        %v4184 = vsel %vm2346, %v4183, %v4180
        %s4185 = scalar_lea.vmem %s41, 32
        %v4186 = vld [vmem:[%s4185] sm:$0xff]
        %v4187 = vld [vmem:[%s4185 + $0x8] sm:$0xff]
        %v4188 = vld [vmem:[%s4185 + $0x10] sm:$0xff]
        %v4189 = vld [vmem:[%s4185 + $0x18] sm:$0xff]
        %v4191 = vsel %vm1167, %v4184, 0
        %4193 = vmatprep.subr.mxu0 0.0
        %4194 = vmatpush1.msra.mxu0 %v4186
        %4195 = vmatprep.subr.mxu0 0.0
        %4196 = vmatpush1.msra.mxu0 %v4187
        %4197 = vmatprep.subr.mxu0 0.0
        %4198 = vmatpush1.msra.mxu0 %v4188
        %4199 = vmatprep.subr.mxu0 0.0
        %4200 = vmatpush1.msra.mxu0 %v4189
        %4201 = vmatprep.subr.mxu0 0.0
        %4202 = vmatpush1.msra.mxu0 0.0
        %4203 = vmatprep.subr.mxu0 0.0
        %4204 = vmatpush1.msra.mxu0 0.0
        %4205 = vmatprep.subr.mxu0 0.0
        %4206 = vmatpush1.msra.mxu0 0.0
        %4207 = vmatprep.subr.mxu0 0.0
        %4208 = vmatpush1.msra.mxu0 0.0
        %4209 = vmatprep.subr.mxu0 0.0
        %4210 = vmatpush1.msra.mxu0 0.0
        %4211 = vmatprep.subr.mxu0 0.0
        %4212 = vmatpush1.msra.mxu0 0.0
        %4213 = vmatprep.subr.mxu0 0.0
        %4214 = vmatpush1.msra.mxu0 0.0
        %4215 = vmatprep.subr.mxu0 0.0
        %4216 = vmatpush1.msra.mxu0 0.0
        %4217 = vmatprep.subr.mxu0 0.0
        %4218 = vmatpush1.msra.mxu0 0.0
        %4219 = vmatprep.subr.mxu0 0.0
        %4220 = vmatpush1.msra.mxu0 0.0
        %4221 = vmatprep.subr.mxu0 0.0
        %4222 = vmatpush1.msra.mxu0 0.0
        %4223 = vmatprep.subr.mxu0 0.0
        %4224 = vmatpush1.msra.mxu0 0.0
        %4225 = vmatprep.subr.mxu0 0.0
        %4226 = vmatpush1.msra.mxu0 0.0
        %4227 = vmatprep.subr.mxu0 0.0
        %4228 = vmatpush1.msra.mxu0 0.0
        %4229 = vmatprep.subr.mxu0 0.0
        %4230 = vmatpush1.msra.mxu0 0.0
        %4231 = vmatprep.subr.mxu0 0.0
        %4232 = vmatpush1.msra.mxu0 0.0
        %4233 = vmatprep.subr.mxu0 0.0
        %4234 = vmatpush1.msra.mxu0 0.0
        %4235 = vmatprep.subr.mxu0 0.0
        %4236 = vmatpush1.msra.mxu0 0.0
        %4237 = vmatprep.subr.mxu0 0.0
        %4238 = vmatpush1.msra.mxu0 0.0
        %4239 = vmatprep.subr.mxu0 0.0
        %4240 = vmatpush1.msra.mxu0 0.0
        %4241 = vmatprep.subr.mxu0 0.0
        %4242 = vmatpush1.msra.mxu0 0.0
        %4243 = vmatprep.subr.mxu0 0.0
        %4244 = vmatpush1.msra.mxu0 0.0
        %4245 = vmatprep.subr.mxu0 0.0
        %4246 = vmatpush1.msra.mxu0 0.0
        %4247 = vmatprep.subr.mxu0 0.0
        %4248 = vmatpush1.msra.mxu0 0.0
        %4249 = vmatprep.subr.mxu0 0.0
        %4250 = vmatpush1.msra.mxu0 0.0
        %4251 = vmatprep.subr.mxu0 0.0
        %4252 = vmatpush1.msra.mxu0 0.0
        %4253 = vmatprep.subr.mxu0 0.0
        %4254 = vmatpush1.msra.mxu0 0.0
        %4255 = vmatprep.subr.mxu0 0.0
        %4256 = vmatpush1.msra.mxu0 0.0
        %4257 = vmatprep.mubr.f32.mxu0 0.0
        %4258 = vmatmul.mubr.f32.gmra.mrb[0].mxu0 %v4191
        %v4259 = vpop.f32.mrb[0].mxu0
        %v4260 = vadd.f32 0.0, %v4259
        %v4261 = vpop.f32.mrb[0].mxu0
        %4262 = vdwg.mxu0
        %v4263 = vadd.f32 %v3272, %v4260
        %s4264 = scalar_lea.vmem %s43, 1
        %v4265 = vld [vmem:[%s4264] sm:$0x1]
        %v4267 = vlaneseq
        %v4268 = vshrl.u32 %v4267, 7
        %v4269 = vsub.s32 0, %v4268
        %v4270 = vrot.slane %v4265, %v4269
        %v4272 = vadd.f32 %v4263, %v4270
        %v4273 = vsel %vm1167, %v4272, 0.0
        %4274 = vadd.xlane.f32.xlu0 %v4273
        %v4275 = vpop.xlane.xlu0 %4274
        %v4276 = vmul.f32 %v4275, %v1171
        %v4277 = vsub.f32 %v4272, %v4276
        %v4278 = vmul.f32 %v4277, %v4277
        %v4279 = vsel %vm1167, %v4278, 0.0
        %4280 = vadd.xlane.f32.xlu0 %v4279
        %v4281 = vpop.xlane.xlu0 %4280
        %v4282 = vmul.f32 %v4281, %v1171
        %v4283 = vadd.f32 %v4282, 1e-12
        %v4284 = vrsqrt.pop %v4283
        %v4285 = vmul.f32 %v4277, %v4284
        %v4286 = vlaneseq
        %v4287 = vshrl.u32 %v4286, 7
        %v4288 = vsub.s32 2, %v4287
        %v4289 = vrot.slane %v3062, %v4288
        %v4290 = vmul.f32 %v4285, %v4289
        %v4291 = vlaneseq
        %v4292 = vshrl.u32 %v4291, 7
        %v4293 = vsub.s32 2, %v4292
        %v4294 = vrot.slane %v3064, %v4293
        %v4295 = vadd.f32 %v4290, %v4294
        %s4296 = scalar_lea.vmem %s45, 32
        %v4297 = vld [vmem:[%s4296] sm:$0xff]
        %v4298 = vld [vmem:[%s4296 + $0x8] sm:$0xff]
        %v4299 = vld [vmem:[%s4296 + $0x10] sm:$0xff]
        %v4300 = vld [vmem:[%s4296 + $0x18] sm:$0xff]
        %s4301 = scalar_lea.vmem %s47, 1
        %v4302 = vld [vmem:[%s4301] sm:$0x1]
        %v4304 = vlaneseq
        %v4305 = vshrl.u32 %v4304, 7
        %v4306 = vsub.s32 0, %v4305
        %v4307 = vrot.slane %v4302, %v4306
        %v4310 = vsel %vm1167, %v4295, 0
        %4312 = vmatprep.subr.mxu0 0.0
        %4313 = vmatpush1.msra.mxu0 %v4297
        %4314 = vmatprep.subr.mxu0 0.0
        %4315 = vmatpush1.msra.mxu0 %v4298
        %4316 = vmatprep.subr.mxu0 0.0
        %4317 = vmatpush1.msra.mxu0 %v4299
        %4318 = vmatprep.subr.mxu0 0.0
        %4319 = vmatpush1.msra.mxu0 %v4300
        %4320 = vmatprep.subr.mxu0 0.0
        %4321 = vmatpush1.msra.mxu0 0.0
        %4322 = vmatprep.subr.mxu0 0.0
        %4323 = vmatpush1.msra.mxu0 0.0
        %4324 = vmatprep.subr.mxu0 0.0
        %4325 = vmatpush1.msra.mxu0 0.0
        %4326 = vmatprep.subr.mxu0 0.0
        %4327 = vmatpush1.msra.mxu0 0.0
        %4328 = vmatprep.subr.mxu0 0.0
        %4329 = vmatpush1.msra.mxu0 0.0
        %4330 = vmatprep.subr.mxu0 0.0
        %4331 = vmatpush1.msra.mxu0 0.0
        %4332 = vmatprep.subr.mxu0 0.0
        %4333 = vmatpush1.msra.mxu0 0.0
        %4334 = vmatprep.subr.mxu0 0.0
        %4335 = vmatpush1.msra.mxu0 0.0
        %4336 = vmatprep.subr.mxu0 0.0
        %4337 = vmatpush1.msra.mxu0 0.0
        %4338 = vmatprep.subr.mxu0 0.0
        %4339 = vmatpush1.msra.mxu0 0.0
        %4340 = vmatprep.subr.mxu0 0.0
        %4341 = vmatpush1.msra.mxu0 0.0
        %4342 = vmatprep.subr.mxu0 0.0
        %4343 = vmatpush1.msra.mxu0 0.0
        %4344 = vmatprep.subr.mxu0 0.0
        %4345 = vmatpush1.msra.mxu0 0.0
        %4346 = vmatprep.subr.mxu0 0.0
        %4347 = vmatpush1.msra.mxu0 0.0
        %4348 = vmatprep.subr.mxu0 0.0
        %4349 = vmatpush1.msra.mxu0 0.0
        %4350 = vmatprep.subr.mxu0 0.0
        %4351 = vmatpush1.msra.mxu0 0.0
        %4352 = vmatprep.subr.mxu0 0.0
        %4353 = vmatpush1.msra.mxu0 0.0
        %4354 = vmatprep.subr.mxu0 0.0
        %4355 = vmatpush1.msra.mxu0 0.0
        %4356 = vmatprep.subr.mxu0 0.0
        %4357 = vmatpush1.msra.mxu0 0.0
        %4358 = vmatprep.subr.mxu0 0.0
        %4359 = vmatpush1.msra.mxu0 0.0
        %4360 = vmatprep.subr.mxu0 0.0
        %4361 = vmatpush1.msra.mxu0 0.0
        %4362 = vmatprep.subr.mxu0 0.0
        %4363 = vmatpush1.msra.mxu0 0.0
        %4364 = vmatprep.subr.mxu0 0.0
        %4365 = vmatpush1.msra.mxu0 0.0
        %4366 = vmatprep.subr.mxu0 0.0
        %4367 = vmatpush1.msra.mxu0 0.0
        %4368 = vmatprep.subr.mxu0 0.0
        %4369 = vmatpush1.msra.mxu0 0.0
        %4370 = vmatprep.subr.mxu0 0.0
        %4371 = vmatpush1.msra.mxu0 0.0
        %4372 = vmatprep.subr.mxu0 0.0
        %4373 = vmatpush1.msra.mxu0 0.0
        %4374 = vmatprep.subr.mxu0 0.0
        %4375 = vmatpush1.msra.mxu0 0.0
        %4376 = vmatprep.mubr.f32.mxu0 0.0
        %4377 = vmatmul.mubr.f32.gmra.mrb[0].mxu0 %v4310
        %v4378 = vpop.f32.mrb[0].mxu0
        %v4379 = vadd.f32 %v4307, %v4378
        %v4380 = vpop.f32.mrb[0].mxu0
        %4381 = vdwg.mxu0
        %s4382 = scalar_lea.vmem %s49, 32
        %v4383 = vld [vmem:[%s4382] sm:$0xff]
        %v4384 = vld [vmem:[%s4382 + $0x8] sm:$0xff]
        %v4385 = vld [vmem:[%s4382 + $0x10] sm:$0xff]
        %v4386 = vld [vmem:[%s4382 + $0x18] sm:$0xff]
        %s4387 = scalar_lea.vmem %s51, 1
        %v4388 = vld [vmem:[%s4387] sm:$0x1]
        %v4390 = vlaneseq
        %v4391 = vshrl.u32 %v4390, 7
        %v4392 = vsub.s32 0, %v4391
        %v4393 = vrot.slane %v4388, %v4392
        %4395 = vmatprep.subr.mxu0 0.0
        %4396 = vmatpush1.msra.mxu0 %v4383
        %4397 = vmatprep.subr.mxu0 0.0
        %4398 = vmatpush1.msra.mxu0 %v4384
        %4399 = vmatprep.subr.mxu0 0.0
        %4400 = vmatpush1.msra.mxu0 %v4385
        %4401 = vmatprep.subr.mxu0 0.0
        %4402 = vmatpush1.msra.mxu0 %v4386
        %4403 = vmatprep.subr.mxu0 0.0
        %4404 = vmatpush1.msra.mxu0 0.0
        %4405 = vmatprep.subr.mxu0 0.0
        %4406 = vmatpush1.msra.mxu0 0.0
        %4407 = vmatprep.subr.mxu0 0.0
        %4408 = vmatpush1.msra.mxu0 0.0
        %4409 = vmatprep.subr.mxu0 0.0
        %4410 = vmatpush1.msra.mxu0 0.0
        %4411 = vmatprep.subr.mxu0 0.0
        %4412 = vmatpush1.msra.mxu0 0.0
        %4413 = vmatprep.subr.mxu0 0.0
        %4414 = vmatpush1.msra.mxu0 0.0
        %4415 = vmatprep.subr.mxu0 0.0
        %4416 = vmatpush1.msra.mxu0 0.0
        %4417 = vmatprep.subr.mxu0 0.0
        %4418 = vmatpush1.msra.mxu0 0.0
        %4419 = vmatprep.subr.mxu0 0.0
        %4420 = vmatpush1.msra.mxu0 0.0
        %4421 = vmatprep.subr.mxu0 0.0
        %4422 = vmatpush1.msra.mxu0 0.0
        %4423 = vmatprep.subr.mxu0 0.0
        %4424 = vmatpush1.msra.mxu0 0.0
        %4425 = vmatprep.subr.mxu0 0.0
        %4426 = vmatpush1.msra.mxu0 0.0
        %4427 = vmatprep.subr.mxu0 0.0
        %4428 = vmatpush1.msra.mxu0 0.0
        %4429 = vmatprep.subr.mxu0 0.0
        %4430 = vmatpush1.msra.mxu0 0.0
        %4431 = vmatprep.subr.mxu0 0.0
        %4432 = vmatpush1.msra.mxu0 0.0
        %4433 = vmatprep.subr.mxu0 0.0
        %4434 = vmatpush1.msra.mxu0 0.0
        %4435 = vmatprep.subr.mxu0 0.0
        %4436 = vmatpush1.msra.mxu0 0.0
        %4437 = vmatprep.subr.mxu0 0.0
        %4438 = vmatpush1.msra.mxu0 0.0
        %4439 = vmatprep.subr.mxu0 0.0
        %4440 = vmatpush1.msra.mxu0 0.0
        %4441 = vmatprep.subr.mxu0 0.0
        %4442 = vmatpush1.msra.mxu0 0.0
        %4443 = vmatprep.subr.mxu0 0.0
        %4444 = vmatpush1.msra.mxu0 0.0
        %4445 = vmatprep.subr.mxu0 0.0
        %4446 = vmatpush1.msra.mxu0 0.0
        %4447 = vmatprep.subr.mxu0 0.0
        %4448 = vmatpush1.msra.mxu0 0.0
        %4449 = vmatprep.subr.mxu0 0.0
        %4450 = vmatpush1.msra.mxu0 0.0
        %4451 = vmatprep.subr.mxu0 0.0
        %4452 = vmatpush1.msra.mxu0 0.0
        %4453 = vmatprep.subr.mxu0 0.0
        %4454 = vmatpush1.msra.mxu0 0.0
        %4455 = vmatprep.subr.mxu0 0.0
        %4456 = vmatpush1.msra.mxu0 0.0
        %4457 = vmatprep.subr.mxu0 0.0
        %4458 = vmatpush1.msra.mxu0 0.0
        %4459 = vmatprep.mubr.f32.mxu0 0.0
        %4460 = vmatmul.mubr.f32.gmra.mrb[0].mxu0 %v4310
        %v4461 = vpop.f32.mrb[0].mxu0
        %v4462 = vadd.f32 %v4393, %v4461
        %v4463 = vpop.f32.mrb[0].mxu0
        %4464 = vdwg.mxu0
        %v4465 = vxor.u32 %v4462, 2147483648
        %v4466 = vmul.f32 %v4465, 1.442695
        %v4467 = vpow.pop %v4466
        %v4468 = vadd.f32 %v4467, 1.0
        %v4469 = vrcp.pop %v4468
        %v4470 = vmul.f32 1.0, %v4469
        %v4471 = vmul.f32 %v4379, %v4470
        %v4473 = vrot.slane %v4471, 5
        %v4475 = vsel %vm2632, 0.0, %v4473
        %v4476 = vsel %vm2632, %v4473, 0.0
        %s4477 = scalar_lea.vmem %s53, 8
        %v4478 = vld [vmem:[%s4477] sm:$0x7f]
        %v4479 = vlaneseq
        %v4480 = vshrl.u32 %v4479, 7
        %v4481 = vsub.s32 0, %v4480
        %v4482 = vrot.slane %v4478, %v4481
        %v4483 = vmul.f32 %v4475, %v4482
        %v4484 = vadd.f32 %v4483, 0.0
        %v4485 = vlaneseq
        %v4486 = vshrl.u32 %v4485, 7
        %v4487 = vsub.s32 1, %v4486
        %v4488 = vrot.slane %v4478, %v4487
        %v4489 = vmul.f32 %v4475, %v4488
        %v4490 = vmul.f32 %v4476, %v4488
        %v4493 = vrot.slane %v4489, 1
        %v4494 = vrot.slane %v4490, 1
        %v4495 = vsel %vm2650, %v4493, %v4494
        %v4497 = vadd.f32 %v4484, %v4495
        %v4498 = vlaneseq
        %v4499 = vshrl.u32 %v4498, 7
        %v4500 = vsub.s32 2, %v4499
        %v4501 = vrot.slane %v4478, %v4500
        %v4502 = vmul.f32 %v4475, %v4501
        %v4503 = vmul.f32 %v4476, %v4501
        %v4506 = vrot.slane %v4502, 2
        %v4507 = vrot.slane %v4503, 2
        %v4508 = vsel %vm2664, %v4506, %v4507
        %v4510 = vadd.f32 %v4497, %v4508
        %v4511 = vlaneseq
        %v4512 = vshrl.u32 %v4511, 7
        %v4513 = vsub.s32 3, %v4512
        %v4514 = vrot.slane %v4478, %v4513
        %v4515 = vmul.f32 %v4475, %v4514
        %v4516 = vmul.f32 %v4476, %v4514
        %v4519 = vrot.slane %v4515, 3
        %v4520 = vrot.slane %v4516, 3
        %v4521 = vsel %vm2678, %v4519, %v4520
        %v4523 = vadd.f32 %v4510, %v4521
        %v4524 = vlaneseq
        %v4525 = vshrl.u32 %v4524, 7
        %v4526 = vsub.s32 4, %v4525
        %v4527 = vrot.slane %v4478, %v4526
        %v4528 = vmul.f32 %v4475, %v4527
        %v4529 = vmul.f32 %v4476, %v4527
        %v4532 = vrot.slane %v4528, 4
        %v4533 = vrot.slane %v4529, 4
        %v4534 = vsel %vm2692, %v4532, %v4533
        %v4536 = vadd.f32 %v4523, %v4534
        %v4537 = vlaneseq
        %v4538 = vshrl.u32 %v4537, 7
        %v4539 = vsub.s32 5, %v4538
        %v4540 = vrot.slane %v4478, %v4539
        %v4541 = vmul.f32 %v4475, %v4540
        %v4542 = vmul.f32 %v4476, %v4540
        %v4545 = vrot.slane %v4541, 5
        %v4546 = vrot.slane %v4542, 5
        %v4547 = vsel %vm2632, %v4545, %v4546
        %v4549 = vadd.f32 %v4536, %v4547
        %v4550 = vlaneseq
        %v4551 = vshrl.u32 %v4550, 7
        %v4552 = vsub.s32 6, %v4551
        %v4553 = vrot.slane %v4478, %v4552
        %v4554 = vmul.f32 %v4475, %v4553
        %v4555 = vmul.f32 %v4476, %v4553
        %v4558 = vrot.slane %v4554, 6
        %v4559 = vrot.slane %v4555, 6
        %v4560 = vsel %vm2719, %v4558, %v4559
        %v4562 = vadd.f32 %v4549, %v4560
        %s4563 = scalar_lea.vmem %s55, 1
        %v4564 = vld [vmem:[%s4563] sm:$0x1]
        %v4566 = vlaneseq
        %v4567 = vshrl.u32 %v4566, 7
        %v4568 = vsub.s32 0, %v4567
        %v4569 = vrot.slane %v4564, %v4568
        %v4571 = vmul.f32 %v4562, %v4569
        %s4572 = scalar_lea.vmem %s57, 1
        %v4573 = vld [vmem:[%s4572] sm:$0x1]
        %v4575 = vlaneseq
        %v4576 = vshrl.u32 %v4575, 7
        %v4577 = vsub.s32 0, %v4576
        %v4578 = vrot.slane %v4573, %v4577
        %v4580 = vadd.f32 %v4571, %v4578
        %v4581 = vxor.u32 %v4580, 2147483648
        %v4582 = vmul.f32 %v4581, 1.442695
        %v4583 = vpow.pop %v4582
        %v4584 = vadd.f32 %v4583, 1.0
        %v4585 = vrcp.pop %v4584
        %v4586 = vmul.f32 1.0, %v4585
        %v4587 = vmul.f32 %v4580, %v4586
        %s4588 = scalar_lea.vmem %s59, 32
        %v4589 = vld [vmem:[%s4588] sm:$0xff]
        %v4590 = vld [vmem:[%s4588 + $0x8] sm:$0xff]
        %v4591 = vld [vmem:[%s4588 + $0x10] sm:$0xff]
        %v4592 = vld [vmem:[%s4588 + $0x18] sm:$0xff]
        %v4594 = vsel %vm1167, %v4587, 0
        %4596 = vmatprep.subr.mxu0 0.0
        %4597 = vmatpush1.msra.mxu0 %v4589
        %4598 = vmatprep.subr.mxu0 0.0
        %4599 = vmatpush1.msra.mxu0 %v4590
        %4600 = vmatprep.subr.mxu0 0.0
        %4601 = vmatpush1.msra.mxu0 %v4591
        %4602 = vmatprep.subr.mxu0 0.0
        %4603 = vmatpush1.msra.mxu0 %v4592
        %4604 = vmatprep.subr.mxu0 0.0
        %4605 = vmatpush1.msra.mxu0 0.0
        %4606 = vmatprep.subr.mxu0 0.0
        %4607 = vmatpush1.msra.mxu0 0.0
        %4608 = vmatprep.subr.mxu0 0.0
        %4609 = vmatpush1.msra.mxu0 0.0
        %4610 = vmatprep.subr.mxu0 0.0
        %4611 = vmatpush1.msra.mxu0 0.0
        %4612 = vmatprep.subr.mxu0 0.0
        %4613 = vmatpush1.msra.mxu0 0.0
        %4614 = vmatprep.subr.mxu0 0.0
        %4615 = vmatpush1.msra.mxu0 0.0
        %4616 = vmatprep.subr.mxu0 0.0
        %4617 = vmatpush1.msra.mxu0 0.0
        %4618 = vmatprep.subr.mxu0 0.0
        %4619 = vmatpush1.msra.mxu0 0.0
        %4620 = vmatprep.subr.mxu0 0.0
        %4621 = vmatpush1.msra.mxu0 0.0
        %4622 = vmatprep.subr.mxu0 0.0
        %4623 = vmatpush1.msra.mxu0 0.0
        %4624 = vmatprep.subr.mxu0 0.0
        %4625 = vmatpush1.msra.mxu0 0.0
        %4626 = vmatprep.subr.mxu0 0.0
        %4627 = vmatpush1.msra.mxu0 0.0
        %4628 = vmatprep.subr.mxu0 0.0
        %4629 = vmatpush1.msra.mxu0 0.0
        %4630 = vmatprep.subr.mxu0 0.0
        %4631 = vmatpush1.msra.mxu0 0.0
        %4632 = vmatprep.subr.mxu0 0.0
        %4633 = vmatpush1.msra.mxu0 0.0
        %4634 = vmatprep.subr.mxu0 0.0
        %4635 = vmatpush1.msra.mxu0 0.0
        %4636 = vmatprep.subr.mxu0 0.0
        %4637 = vmatpush1.msra.mxu0 0.0
        %4638 = vmatprep.subr.mxu0 0.0
        %4639 = vmatpush1.msra.mxu0 0.0
        %4640 = vmatprep.subr.mxu0 0.0
        %4641 = vmatpush1.msra.mxu0 0.0
        %4642 = vmatprep.subr.mxu0 0.0
        %4643 = vmatpush1.msra.mxu0 0.0
        %4644 = vmatprep.subr.mxu0 0.0
        %4645 = vmatpush1.msra.mxu0 0.0
        %4646 = vmatprep.subr.mxu0 0.0
        %4647 = vmatpush1.msra.mxu0 0.0
        %4648 = vmatprep.subr.mxu0 0.0
        %4649 = vmatpush1.msra.mxu0 0.0
        %4650 = vmatprep.subr.mxu0 0.0
        %4651 = vmatpush1.msra.mxu0 0.0
        %4652 = vmatprep.subr.mxu0 0.0
        %4653 = vmatpush1.msra.mxu0 0.0
        %4654 = vmatprep.subr.mxu0 0.0
        %4655 = vmatpush1.msra.mxu0 0.0
        %4656 = vmatprep.subr.mxu0 0.0
        %4657 = vmatpush1.msra.mxu0 0.0
        %4658 = vmatprep.subr.mxu0 0.0
        %4659 = vmatpush1.msra.mxu0 0.0
        %4660 = vmatprep.mubr.f32.mxu0 0.0
        %4661 = vmatmul.mubr.f32.gmra.mrb[0].mxu0 %v4594
        %v4662 = vpop.f32.mrb[0].mxu0
        %v4663 = vadd.f32 0.0, %v4662
        %v4664 = vpop.f32.mrb[0].mxu0
        %4665 = vdwg.mxu0
        %v4666 = vadd.f32 %v4272, %v4663
        %s4667 = scalar_lea.vmem %s61, 1
        %v4668 = vld [vmem:[%s4667] sm:$0x1]
        %v4670 = vlaneseq
        %v4671 = vshrl.u32 %v4670, 7
        %v4672 = vsub.s32 0, %v4671
        %v4673 = vrot.slane %v4668, %v4672
        %v4675 = vadd.f32 %v4666, %v4673
        %v4676 = vsel %vm1167, %v4675, 0.0
        %4677 = vadd.xlane.f32.xlu0 %v4676
        %v4678 = vpop.xlane.xlu0 %4677
        %v4679 = vmul.f32 %v4678, %v1171
        %v4680 = vsub.f32 %v4675, %v4679
        %v4681 = vmul.f32 %v4680, %v4680
        %v4682 = vsel %vm1167, %v4681, 0.0
        %4683 = vadd.xlane.f32.xlu0 %v4682
        %v4684 = vpop.xlane.xlu0 %4683
        %v4685 = vmul.f32 %v4684, %v1171
        %v4686 = vadd.f32 %v4685, 1e-12
        %v4687 = vrsqrt.pop %v4686
        %v4688 = vmul.f32 %v4680, %v4687
        %v4689 = vlaneseq
        %v4690 = vshrl.u32 %v4689, 7
        %v4691 = vsub.s32 3, %v4690
        %v4692 = vrot.slane %v3062, %v4691
        %v4693 = vmul.f32 %v4688, %v4692
        %v4694 = vlaneseq
        %v4695 = vshrl.u32 %v4694, 7
        %v4696 = vsub.s32 3, %v4695
        %v4697 = vrot.slane %v3064, %v4696
        %v4698 = vadd.f32 %v4693, %v4697
        %s4699 = scalar_lea.vmem %s63, 32
        %v4700 = vld [vmem:[%s4699] sm:$0xff]
        %v4701 = vld [vmem:[%s4699 + $0x8] sm:$0xff]
        %v4702 = vld [vmem:[%s4699 + $0x10] sm:$0xff]
        %v4703 = vld [vmem:[%s4699 + $0x18] sm:$0xff]
        %s4704 = scalar_lea.vmem %s65, 1
        %v4705 = vld [vmem:[%s4704] sm:$0x1]
        %v4707 = vlaneseq
        %v4708 = vshrl.u32 %v4707, 7
        %v4709 = vsub.s32 0, %v4708
        %v4710 = vrot.slane %v4705, %v4709
        %v4713 = vsel %vm1167, %v4698, 0
        %4715 = vmatprep.subr.mxu0 0.0
        %4716 = vmatpush1.msra.mxu0 %v4700
        %4717 = vmatprep.subr.mxu0 0.0
        %4718 = vmatpush1.msra.mxu0 %v4701
        %4719 = vmatprep.subr.mxu0 0.0
        %4720 = vmatpush1.msra.mxu0 %v4702
        %4721 = vmatprep.subr.mxu0 0.0
        %4722 = vmatpush1.msra.mxu0 %v4703
        %4723 = vmatprep.subr.mxu0 0.0
        %4724 = vmatpush1.msra.mxu0 0.0
        %4725 = vmatprep.subr.mxu0 0.0
        %4726 = vmatpush1.msra.mxu0 0.0
        %4727 = vmatprep.subr.mxu0 0.0
        %4728 = vmatpush1.msra.mxu0 0.0
        %4729 = vmatprep.subr.mxu0 0.0
        %4730 = vmatpush1.msra.mxu0 0.0
        %4731 = vmatprep.subr.mxu0 0.0
        %4732 = vmatpush1.msra.mxu0 0.0
        %4733 = vmatprep.subr.mxu0 0.0
        %4734 = vmatpush1.msra.mxu0 0.0
        %4735 = vmatprep.subr.mxu0 0.0
        %4736 = vmatpush1.msra.mxu0 0.0
        %4737 = vmatprep.subr.mxu0 0.0
        %4738 = vmatpush1.msra.mxu0 0.0
        %4739 = vmatprep.subr.mxu0 0.0
        %4740 = vmatpush1.msra.mxu0 0.0
        %4741 = vmatprep.subr.mxu0 0.0
        %4742 = vmatpush1.msra.mxu0 0.0
        %4743 = vmatprep.subr.mxu0 0.0
        %4744 = vmatpush1.msra.mxu0 0.0
        %4745 = vmatprep.subr.mxu0 0.0
        %4746 = vmatpush1.msra.mxu0 0.0
        %4747 = vmatprep.subr.mxu0 0.0
        %4748 = vmatpush1.msra.mxu0 0.0
        %4749 = vmatprep.subr.mxu0 0.0
        %4750 = vmatpush1.msra.mxu0 0.0
        %4751 = vmatprep.subr.mxu0 0.0
        %4752 = vmatpush1.msra.mxu0 0.0
        %4753 = vmatprep.subr.mxu0 0.0
        %4754 = vmatpush1.msra.mxu0 0.0
        %4755 = vmatprep.subr.mxu0 0.0
        %4756 = vmatpush1.msra.mxu0 0.0
        %4757 = vmatprep.subr.mxu0 0.0
        %4758 = vmatpush1.msra.mxu0 0.0
        %4759 = vmatprep.subr.mxu0 0.0
        %4760 = vmatpush1.msra.mxu0 0.0
        %4761 = vmatprep.subr.mxu0 0.0
        %4762 = vmatpush1.msra.mxu0 0.0
        %4763 = vmatprep.subr.mxu0 0.0
        %4764 = vmatpush1.msra.mxu0 0.0
        %4765 = vmatprep.subr.mxu0 0.0
        %4766 = vmatpush1.msra.mxu0 0.0
        %4767 = vmatprep.subr.mxu0 0.0
        %4768 = vmatpush1.msra.mxu0 0.0
        %4769 = vmatprep.subr.mxu0 0.0
        %4770 = vmatpush1.msra.mxu0 0.0
        %4771 = vmatprep.subr.mxu0 0.0
        %4772 = vmatpush1.msra.mxu0 0.0
        %4773 = vmatprep.subr.mxu0 0.0
        %4774 = vmatpush1.msra.mxu0 0.0
        %4775 = vmatprep.subr.mxu0 0.0
        %4776 = vmatpush1.msra.mxu0 0.0
        %4777 = vmatprep.subr.mxu0 0.0
        %4778 = vmatpush1.msra.mxu0 0.0
        %4779 = vmatprep.mubr.f32.mxu0 0.0
        %4780 = vmatmul.mubr.f32.gmra.mrb[0].mxu0 %v4713
        %v4781 = vpop.f32.mrb[0].mxu0
        %v4782 = vadd.f32 %v4710, %v4781
        %v4783 = vpop.f32.mrb[0].mxu0
        %4784 = vdwg.mxu0
        %v4785 = vxor.u32 %v4782, 2147483648
        %v4786 = vmul.f32 %v4785, 1.442695
        %v4787 = vpow.pop %v4786
        %v4788 = vadd.f32 %v4787, 1.0
        %v4789 = vrcp.pop %v4788
        %v4790 = vmul.f32 1.0, %v4789
        %v4791 = vmul.f32 %v4782, %v4790
        %s4792 = scalar_lea.vmem %s67, 64
        %v4793 = vld [vmem:[%s4792] sm:$0xff]
        %v4794 = vld [vmem:[%s4792 + $0x8] sm:$0xff]
        %v4795 = vld [vmem:[%s4792 + $0x10] sm:$0xff]
        %v4796 = vld [vmem:[%s4792 + $0x18] sm:$0xff]
        %v4797 = vld [vmem:[%s4792 + $0x20] sm:$0xff]
        %v4798 = vld [vmem:[%s4792 + $0x28] sm:$0xff]
        %v4799 = vld [vmem:[%s4792 + $0x30] sm:$0xff]
        %v4800 = vld [vmem:[%s4792 + $0x38] sm:$0xff]
        %s4801 = scalar_lea.vmem %s69, 1
        %v4802 = vld [vmem:[%s4801] sm:$0x1]
        %v4804 = vlaneseq
        %v4805 = vshrl.u32 %v4804, 7
        %v4806 = vsub.s32 0, %v4805
        %v4807 = vrot.slane %v4802, %v4806
        %v4810 = vsel %vm1356, %v4791, 0
        %4812 = vmatprep.subr.mxu0 0.0
        %4813 = vmatpush1.msra.mxu0 %v4793
        %4814 = vmatprep.subr.mxu0 0.0
        %4815 = vmatpush1.msra.mxu0 %v4794
        %4816 = vmatprep.subr.mxu0 0.0
        %4817 = vmatpush1.msra.mxu0 %v4795
        %4818 = vmatprep.subr.mxu0 0.0
        %4819 = vmatpush1.msra.mxu0 %v4796
        %4820 = vmatprep.subr.mxu0 0.0
        %4821 = vmatpush1.msra.mxu0 %v4797
        %4822 = vmatprep.subr.mxu0 0.0
        %4823 = vmatpush1.msra.mxu0 %v4798
        %4824 = vmatprep.subr.mxu0 0.0
        %4825 = vmatpush1.msra.mxu0 %v4799
        %4826 = vmatprep.subr.mxu0 0.0
        %4827 = vmatpush1.msra.mxu0 %v4800
        %4828 = vmatprep.subr.mxu0 0.0
        %4829 = vmatpush1.msra.mxu0 0.0
        %4830 = vmatprep.subr.mxu0 0.0
        %4831 = vmatpush1.msra.mxu0 0.0
        %4832 = vmatprep.subr.mxu0 0.0
        %4833 = vmatpush1.msra.mxu0 0.0
        %4834 = vmatprep.subr.mxu0 0.0
        %4835 = vmatpush1.msra.mxu0 0.0
        %4836 = vmatprep.subr.mxu0 0.0
        %4837 = vmatpush1.msra.mxu0 0.0
        %4838 = vmatprep.subr.mxu0 0.0
        %4839 = vmatpush1.msra.mxu0 0.0
        %4840 = vmatprep.subr.mxu0 0.0
        %4841 = vmatpush1.msra.mxu0 0.0
        %4842 = vmatprep.subr.mxu0 0.0
        %4843 = vmatpush1.msra.mxu0 0.0
        %4844 = vmatprep.subr.mxu0 0.0
        %4845 = vmatpush1.msra.mxu0 0.0
        %4846 = vmatprep.subr.mxu0 0.0
        %4847 = vmatpush1.msra.mxu0 0.0
        %4848 = vmatprep.subr.mxu0 0.0
        %4849 = vmatpush1.msra.mxu0 0.0
        %4850 = vmatprep.subr.mxu0 0.0
        %4851 = vmatpush1.msra.mxu0 0.0
        %4852 = vmatprep.subr.mxu0 0.0
        %4853 = vmatpush1.msra.mxu0 0.0
        %4854 = vmatprep.subr.mxu0 0.0
        %4855 = vmatpush1.msra.mxu0 0.0
        %4856 = vmatprep.subr.mxu0 0.0
        %4857 = vmatpush1.msra.mxu0 0.0
        %4858 = vmatprep.subr.mxu0 0.0
        %4859 = vmatpush1.msra.mxu0 0.0
        %4860 = vmatprep.subr.mxu0 0.0
        %4861 = vmatpush1.msra.mxu0 0.0
        %4862 = vmatprep.subr.mxu0 0.0
        %4863 = vmatpush1.msra.mxu0 0.0
        %4864 = vmatprep.subr.mxu0 0.0
        %4865 = vmatpush1.msra.mxu0 0.0
        %4866 = vmatprep.subr.mxu0 0.0
        %4867 = vmatpush1.msra.mxu0 0.0
        %4868 = vmatprep.subr.mxu0 0.0
        %4869 = vmatpush1.msra.mxu0 0.0
        %4870 = vmatprep.subr.mxu0 0.0
        %4871 = vmatpush1.msra.mxu0 0.0
        %4872 = vmatprep.subr.mxu0 0.0
        %4873 = vmatpush1.msra.mxu0 0.0
        %4874 = vmatprep.subr.mxu0 0.0
        %4875 = vmatpush1.msra.mxu0 0.0
        %4876 = vmatprep.mubr.f32.mxu0 0.0
        %4877 = vmatmul.mubr.f32.gmra.mrb[0].mxu0 %v4810
        %v4878 = vpop.f32.mrb[0].mxu0
        %v4879 = vadd.f32 %v4807, %v4878
        %v4880 = vpop.f32.mrb[0].mxu0
        %4881 = vdwg.mxu0
        %v4882 = vmul.f32 %v4879, 0.5
        %v4883 = vadd.f32 %v4675, %v4882
        %v4884 = vsel %vm1167, %v4883, 0.0
        %4885 = vadd.xlane.f32.xlu0 %v4884
        %v4886 = vpop.xlane.xlu0 %4885
        %v4887 = vmul.f32 %v4886, %v1171
        %v4888 = vsub.f32 %v4883, %v4887
        %v4889 = vmul.f32 %v4888, %v4888
        %v4890 = vsel %vm1167, %v4889, 0.0
        %4891 = vadd.xlane.f32.xlu0 %v4890
        %v4892 = vpop.xlane.xlu0 %4891
        %v4893 = vmul.f32 %v4892, %v1171
        %v4894 = vadd.f32 %v4893, 1e-12
        %v4895 = vrsqrt.pop %v4894
        %v4896 = vmul.f32 %v4888, %v4895
        %v4897 = vlaneseq
        %v4898 = vshrl.u32 %v4897, 7
        %v4899 = vsub.s32 4, %v4898
        %v4900 = vrot.slane %v3062, %v4899
        %v4901 = vmul.f32 %v4896, %v4900
        %v4902 = vlaneseq
        %v4903 = vshrl.u32 %v4902, 7
        %v4904 = vsub.s32 4, %v4903
        %v4905 = vrot.slane %v3064, %v4904
        %v4906 = vadd.f32 %v4901, %v4905
        %v4907 = vld [vmem:[%s11] sm:$0x3]
        %v4908 = vsel %vm1167, %v4906, 0.0
        %4909 = vadd.xlane.f32.xlu0 %v4908
        %v4910 = vpop.xlane.xlu0 %4909
        %v4911 = vmul.f32 %v4910, %v1171
        %v4912 = vsub.f32 %v4906, %v4911
        %v4913 = vmul.f32 %v4912, %v4912
        %v4914 = vsel %vm1167, %v4913, 0.0
        %4915 = vadd.xlane.f32.xlu0 %v4914
        %v4916 = vpop.xlane.xlu0 %4915
        %v4917 = vmul.f32 %v4916, %v1171
        %v4918 = vadd.f32 %v4917, 1e-12
        %v4919 = vrsqrt.pop %v4918
        %v4920 = vmul.f32 %v4912, %v4919
        %v4921 = vlaneseq
        %v4922 = vshrl.u32 %v4921, 7
        %v4923 = vsub.s32 0, %v4922
        %v4924 = vrot.slane %v4907, %v4923
        %v4925 = vmul.f32 %v4920, %v4924
        %v4926 = vlaneseq
        %v4927 = vshrl.u32 %v4926, 7
        %v4928 = vsub.s32 1, %v4927
        %v4929 = vrot.slane %v4907, %v4928
        %v4930 = vadd.f32 %v4925, %v4929
        %v4931 = vld [vmem:[%s13] sm:$0xff]
        %v4932 = vld [vmem:[%s13 + $0x8] sm:$0xff]
        %v4933 = vld [vmem:[%s13 + $0x10] sm:$0xff]
        %v4934 = vld [vmem:[%s13 + $0x18] sm:$0xff]
        %v4935 = vld [vmem:[%s15] sm:$0x1]
        %v4937 = vlaneseq
        %v4938 = vshrl.u32 %v4937, 7
        %v4939 = vsub.s32 0, %v4938
        %v4940 = vrot.slane %v4935, %v4939
        %v4943 = vsel %vm1167, %v4930, 0
        %4945 = vmatprep.subr.mxu0 0.0
        %4946 = vmatpush1.msra.mxu0 %v4931
        %4947 = vmatprep.subr.mxu0 0.0
        %4948 = vmatpush1.msra.mxu0 %v4932
        %4949 = vmatprep.subr.mxu0 0.0
        %4950 = vmatpush1.msra.mxu0 %v4933
        %4951 = vmatprep.subr.mxu0 0.0
        %4952 = vmatpush1.msra.mxu0 %v4934
        %4953 = vmatprep.subr.mxu0 0.0
        %4954 = vmatpush1.msra.mxu0 0.0
        %4955 = vmatprep.subr.mxu0 0.0
        %4956 = vmatpush1.msra.mxu0 0.0
        %4957 = vmatprep.subr.mxu0 0.0
        %4958 = vmatpush1.msra.mxu0 0.0
        %4959 = vmatprep.subr.mxu0 0.0
        %4960 = vmatpush1.msra.mxu0 0.0
        %4961 = vmatprep.subr.mxu0 0.0
        %4962 = vmatpush1.msra.mxu0 0.0
        %4963 = vmatprep.subr.mxu0 0.0
        %4964 = vmatpush1.msra.mxu0 0.0
        %4965 = vmatprep.subr.mxu0 0.0
        %4966 = vmatpush1.msra.mxu0 0.0
        %4967 = vmatprep.subr.mxu0 0.0
        %4968 = vmatpush1.msra.mxu0 0.0
        %4969 = vmatprep.subr.mxu0 0.0
        %4970 = vmatpush1.msra.mxu0 0.0
        %4971 = vmatprep.subr.mxu0 0.0
        %4972 = vmatpush1.msra.mxu0 0.0
        %4973 = vmatprep.subr.mxu0 0.0
        %4974 = vmatpush1.msra.mxu0 0.0
        %4975 = vmatprep.subr.mxu0 0.0
        %4976 = vmatpush1.msra.mxu0 0.0
        %4977 = vmatprep.subr.mxu0 0.0
        %4978 = vmatpush1.msra.mxu0 0.0
        %4979 = vmatprep.subr.mxu0 0.0
        %4980 = vmatpush1.msra.mxu0 0.0
        %4981 = vmatprep.subr.mxu0 0.0
        %4982 = vmatpush1.msra.mxu0 0.0
        %4983 = vmatprep.subr.mxu0 0.0
        %4984 = vmatpush1.msra.mxu0 0.0
        %4985 = vmatprep.subr.mxu0 0.0
        %4986 = vmatpush1.msra.mxu0 0.0
        %4987 = vmatprep.subr.mxu0 0.0
        %4988 = vmatpush1.msra.mxu0 0.0
        %4989 = vmatprep.subr.mxu0 0.0
        %4990 = vmatpush1.msra.mxu0 0.0
        %4991 = vmatprep.subr.mxu0 0.0
        %4992 = vmatpush1.msra.mxu0 0.0
        %4993 = vmatprep.subr.mxu0 0.0
        %4994 = vmatpush1.msra.mxu0 0.0
        %4995 = vmatprep.subr.mxu0 0.0
        %4996 = vmatpush1.msra.mxu0 0.0
        %4997 = vmatprep.subr.mxu0 0.0
        %4998 = vmatpush1.msra.mxu0 0.0
        %4999 = vmatprep.subr.mxu0 0.0
        %5000 = vmatpush1.msra.mxu0 0.0
        %5001 = vmatprep.subr.mxu0 0.0
        %5002 = vmatpush1.msra.mxu0 0.0
        %5003 = vmatprep.subr.mxu0 0.0
        %5004 = vmatpush1.msra.mxu0 0.0
        %5005 = vmatprep.subr.mxu0 0.0
        %5006 = vmatpush1.msra.mxu0 0.0
        %5007 = vmatprep.subr.mxu0 0.0
        %5008 = vmatpush1.msra.mxu0 0.0
        %5009 = vmatprep.mubr.f32.mxu0 0.0
        %5010 = vmatmul.mubr.f32.gmra.mrb[0].mxu0 %v4943
        %v5011 = vpop.f32.mrb[0].mxu0
        %v5012 = vadd.f32 %v4940, %v5011
        %v5013 = vpop.f32.mrb[0].mxu0
        %5014 = vdwg.mxu0
        %5015 = vst.msk [vmem:[%s1072] sm:$0xff] %vm1092, %v5012
        %s5016 = sand.u32 %s838, 1
        %s5017 = scalar_lea.sflag [#allocation3], %s5016
        %s5018 = sand.u32 %s838, 1
        %s5019 = smul.addr %s5018, 8
        %s5020 = scalar_lea.vmem [#allocation2], %s5019
        // Predicated region
        $region161: #{conformer_forward.1} parent=159 // pred_check
          %p5021 = pneg %p848
        $region162: #{conformer_forward.1} parent=159 // pred_check_branch
          %5023 = sbr.rel (%p5021) target = $region164
        $region163: #{conformer_forward.1} parent=159 // pred_region
          %s5025 = ssub.s32 128, 128
          %5026 = vsyncadd %s5017, %s5025
          %s5027 = smul.addr %s85, 128
          %s5028 = scalar_lea.hbm %s71, %s5027
          %s5030 = sshll.u32 %s5020, 4
          %s5031 = int_to_ptr.vmem [resolvable:$true] %s5030
          %5033 = dma.vmem_to_hbm [thread:$0]  %s5031, 128, %s5028, %s5017
        $region164: #{conformer_forward.1} parent=159 // pred_fallthru
          _
      $region160: #{conformer_forward.1} parent=5 // pred_fallthru
        _
      %p5034 = scmp.le.s32.totalorder 2, %s80
      // Predicated region
      $region165: #{conformer_forward.1} parent=5 // pred_check
        %p5035 = pneg %p5034
      $region166: #{conformer_forward.1} parent=5 // pred_check_branch
        %5037 = sbr.rel (%p5035) target = $region168
      $region167: #{conformer_forward.1} parent=5 // pred_region
        %s5038 = ssub.s32 %s80, 2
        // Predicated region
        $region169: #{conformer_forward.1} parent=167 // pred_check
          %p5039 = pneg %p854
        $region170: #{conformer_forward.1} parent=167 // pred_check_branch
          %5041 = sbr.rel (%p5039) target = $region172
        $region171: #{conformer_forward.1} parent=167 // pred_region
          %s5042 = sand.u32 %s839, 1
          %s5043 = scalar_lea.sflag [#allocation3], %s5042
          %s5044 = sand.u32 %s839, 1
          %s5045 = smul.addr %s5044, 8
          %s5046 = scalar_lea.vmem [#allocation2], %s5045
          %5047 = dma.done %s5043, 128
        $region172: #{conformer_forward.1} parent=167 // pred_fallthru
          _
      $region168: #{conformer_forward.1} parent=5 // pred_fallthru
        _
    $region6: #{conformer_forward.1} parent=1 // loop_footer
      %s84 = sadd.s32 1, %s80
    $region7: #{conformer_forward.1} parent=1 // loop_footer_branch
      %79 = sbr.rel target = $region3
    $region8: #{conformer_forward.1} parent=1 // loop_exit
      _
    %5048 = vsyncpa [#allocation3], 1
    %s5049 = scalar_lea.sflag [#allocation3], 1
    %5050 = vsyncpa %s5049, 1

</llo_original>
